<compile_context>
chip_gen: v5e
topology: v5e:2x2
jax: 0.10.0
libtpu: 0.0.40
codegen_flags: <defaults>
</compile_context>

<pallas_src>
import functools
import math

import jax
import jax.numpy as jnp
from jax.experimental import pallas as pl
from jax.experimental.pallas import tpu as pltpu

_LANE = 128


def _round_up(x, m):
    return ((x + m - 1) // m) * m


def _compute_vmem_limit():
    """Per-generation scoped-VMEM limit (~80% of physical, capped)."""
    try:
        cap = int(pltpu.get_tpu_info().vmem_capacity_bytes)
        return min((cap * 4) // 5, 110 * 1024 * 1024)
    except Exception:
        return 48 * 1024 * 1024          # safe for every generation (incl. v7x 64 MiB/TC)


_VMEM_LIMIT = _compute_vmem_limit()


def _time_blocking(T, B, max_tb=32):
    """Pick TB (timesteps per grid step) with TB*B % 8 == 0, and padded Tp = k*TB."""
    req = max(1, 8 // math.gcd(B, 8))
    cands = list(range(req, max(max_tb, req) + 1, req))
    tb = min(cands, key=lambda c: (_round_up(T, c) - T, -c))
    return tb, _round_up(T, tb)


def _row_tiling(n, k_cols, max_tile=512):
    """(row_tile, padded_rows). Shrinks the tile when wide f32 out blocks would crowd
    VMEM (matters under v7x's 64 MiB/TC)."""
    while max_tile > 128 and 2 * max_tile * k_cols * 4 > _VMEM_LIMIT // 6:
        max_tile //= 2
    if n <= max_tile:
        return n, n
    return max_tile, _round_up(n, max_tile)


# ---------------------------------------------------------------------------
# Row-tiled linear kernels (hoisted input projection).  The two-operand variant
# consumes the fwd / bwd hidden halves directly (no concat).
# ---------------------------------------------------------------------------
def _linear1_kernel(x_ref, w_ref, b_ref, o_ref):
    o_ref[...] = (jnp.dot(x_ref[...], w_ref[...], preferred_element_type=jnp.float32)
                  + b_ref[...]).astype(o_ref.dtype)


def _linear2_kernel(xa_ref, xb_ref, w_ref, b_ref, o_ref):
    acc = jnp.dot(xa_ref[...], w_ref[0], preferred_element_type=jnp.float32)
    acc += jnp.dot(xb_ref[...], w_ref[1], preferred_element_type=jnp.float32)
    o_ref[...] = (acc + b_ref[...]).astype(o_ref.dtype)


def _row_matmul(xs, w, b):
    """xs: 1 or 2 bf16 operands of shape (N, F_i) whose features partition w's rows.
       w: (F, K) bf16  or  (2, F_i, K) bf16.  b: (1, K) f32.  Returns (N, K) f32."""
    N = xs[0].shape[0]
    K = b.shape[1]
    TN, Npad = _row_tiling(N, K)
    if Npad != N:
        xs = [jnp.pad(xv, ((0, Npad - N), (0, 0))) for xv in xs]

    x_specs = [pl.BlockSpec((TN, xv.shape[1]), lambda r: (r, 0)) for xv in xs]
    if len(xs) == 1:
        kern = _linear1_kernel
        w_spec = pl.BlockSpec(w.shape, lambda r: (0, 0))
    else:
        kern = _linear2_kernel
        w_spec = pl.BlockSpec(w.shape, lambda r: (0, 0, 0))

    out = pl.pallas_call(
        kern,
        out_shape=jax.ShapeDtypeStruct((Npad, K), jnp.float32),
        grid_spec=pltpu.PrefetchScalarGridSpec(
            num_scalar_prefetch=0,
            grid=(Npad // TN,),
            in_specs=x_specs + [w_spec, pl.BlockSpec((1, K), lambda r: (0, 0))],
            out_specs=pl.BlockSpec((TN, K), lambda r: (r, 0)),
        ),
        compiler_params=pltpu.CompilerParams(
            dimension_semantics=("parallel",),
            vmem_limit_bytes=_VMEM_LIMIT),
    )(*xs, w, b)
    return out[:N] if Npad != N else out


# ---------------------------------------------------------------------------
# Fused bidirectional LSTM recurrence: both directions per grid step.
# gx layout: (Tp*B, 8*HP) f32 time-major, columns = [fwd i,f,g,o | bwd i,f,g,o].
# Outputs: fwd hidden (Tp*B, HP) bf16 and bwd hidden (Tp*B, HP) bf16.
# ---------------------------------------------------------------------------
def _bilstm_rec_kernel(gxf_ref, gxb_ref, whh_ref, of_ref, ob_ref,
                       hf_ref, cf_ref, hb_ref, cb_ref, *, B, HP, TB, T, NT):
    tb = pl.program_id(0)

    @pl.when(tb == 0)
    def _():
        hf_ref[...] = jnp.zeros_like(hf_ref)
        cf_ref[...] = jnp.zeros_like(cf_ref)
        hb_ref[...] = jnp.zeros_like(hb_ref)
        cb_ref[...] = jnp.zeros_like(cb_ref)

    ragged = (NT * TB != T)          # static: padded tail timesteps exist

    def cell(gx, h, c, w):
        gates = gx + jnp.dot(h.astype(w.dtype), w, preferred_element_type=jnp.float32)
        i = jax.nn.sigmoid(gates[:, 0 * HP:1 * HP])
        f = jax.nn.sigmoid(gates[:, 1 * HP:2 * HP])
        g = jnp.tanh(gates[:, 2 * HP:3 * HP])
        o = jax.nn.sigmoid(gates[:, 3 * HP:4 * HP])
        c_new = f * c + i * g
        h_new = o * jnp.tanh(c_new)
        return h_new, c_new

    hf, cf = hf_ref[...], cf_ref[...]
    hb, cb = hb_ref[...], cb_ref[...]

    # Fully unrolled; the fwd and bwd chains are independent, so their MXU/EUP/VPU
    # latencies hide under each other on a single TensorCore.
    for s in range(TB):
        lf = s                       # forward walks 0..TB-1 inside the block
        lb = TB - 1 - s              # backward walks TB-1..0
        rf, rb = lf * B, lb * B      # static sublane row offsets
        hf_n, cf_n = cell(gxf_ref[rf:rf + B, :], hf, cf, whh_ref[0])
        hb_n, cb_n = cell(gxb_ref[rb:rb + B, :], hb, cb, whh_ref[1])
        if ragged:                   # keep state across padded (t >= T) steps
            fv = (tb * TB + lf) < T
            bv = ((NT - 1 - tb) * TB + lb) < T
            hf_n = jnp.where(fv, hf_n, hf)
            cf_n = jnp.where(fv, cf_n, cf)
            hb_n = jnp.where(bv, hb_n, hb)
            cb_n = jnp.where(bv, cb_n, cb)
        of_ref[rf:rf + B, :] = hf_n.astype(of_ref.dtype)
        ob_ref[rb:rb + B, :] = hb_n.astype(ob_ref.dtype)
        hf, cf, hb, cb = hf_n, cf_n, hb_n, cb_n

    hf_ref[...], cf_ref[...] = hf, cf
    hb_ref[...], cb_ref[...] = hb, cb


def bilstm_recurrence(gx, whh_stack, *, B, HP, TB, T):
    """gx: (Tp*B, 8*HP) f32.  whh_stack: (2, HP, 4*HP) bf16.
       Returns (fwd hidden, bwd hidden), each (Tp*B, HP) bf16."""
    TpB = gx.shape[0]
    NT = TpB // (TB * B)
    kernel = functools.partial(_bilstm_rec_kernel, B=B, HP=HP, TB=TB, T=T, NT=NT)
    out_f, out_b = pl.pallas_call(
        kernel,
        out_shape=(jax.ShapeDtypeStruct((TpB, HP), jnp.bfloat16),
                   jax.ShapeDtypeStruct((TpB, HP), jnp.bfloat16)),
        grid_spec=pltpu.PrefetchScalarGridSpec(
            num_scalar_prefetch=0,
            grid=(NT,),
            in_specs=[
                pl.BlockSpec((TB * B, 4 * HP), lambda tb: (tb, 0)),            # fwd gx
                pl.BlockSpec((TB * B, 4 * HP), lambda tb: (NT - 1 - tb, 1)),   # bwd gx
                pl.BlockSpec((2, HP, 4 * HP), lambda tb: (0, 0, 0)),           # whh (resident)
            ],
            out_specs=[
                pl.BlockSpec((TB * B, HP), lambda tb: (tb, 0)),
                pl.BlockSpec((TB * B, HP), lambda tb: (NT - 1 - tb, 0)),
            ],
            scratch_shapes=[
                pltpu.VMEM((B, HP), jnp.float32),   # h fwd
                pltpu.VMEM((B, HP), jnp.float32),   # c fwd
                pltpu.VMEM((B, HP), jnp.float32),   # h bwd
                pltpu.VMEM((B, HP), jnp.float32),   # c bwd
            ],
        ),
        compiler_params=pltpu.CompilerParams(
            dimension_semantics=("arbitrary",),
            vmem_limit_bytes=_VMEM_LIMIT),
    )(gx, gx, whh_stack)
    return out_f, out_b


# ---------------------------------------------------------------------------
# Fused FC + cross-entropy.  Per-tile loss is reduced in-kernel into a (1,1)
# accumulator (no masked (N,1) loss stores); labels arrive as an int32 column and
# are matched with a broadcasted iota.
# ---------------------------------------------------------------------------
def _fc_ce_kernel(xf_ref, xb_ref, w_ref, b_ref, lab_ref, logits_ref, loss_ref,
                  *, n_valid, tn):
    r = pl.program_id(0)
    logits = (jnp.dot(xf_ref[...], w_ref[0], preferred_element_type=jnp.float32)
              + jnp.dot(xb_ref[...], w_ref[1], preferred_element_type=jnp.float32)
              + b_ref[...])                                       # (TN, Lp) f32
    m = jnp.max(logits, axis=-1, keepdims=True)
    lse = m + jnp.log(jnp.sum(jnp.exp(logits - m), axis=-1, keepdims=True))
    classes = jax.lax.broadcasted_iota(jnp.int32, logits.shape, 1)
    picked = jnp.sum(jnp.where(classes == lab_ref[...], logits, 0.0),
                     axis=-1, keepdims=True)
    logits_ref[...] = logits.astype(logits_ref.dtype)

    row = r * tn + jax.lax.broadcasted_iota(jnp.int32, lse.shape, 0)
    partial = jnp.sum(jnp.where(row < n_valid, lse - picked, 0.0), keepdims=True)

    @pl.when(r == 0)
    def _():
        loss_ref[...] = jnp.zeros_like(loss_ref)

    loss_ref[...] += partial


def fc_cross_entropy(xf, xb, wT, b, labels, *, n_valid):
    """xf/xb: (N, HP) bf16, wT: (2, HP, Lp) bf16, b: (1, Lp) f32, labels: (N, 1) int32.
    Returns (logits (N, Lp) f32, loss_sum (1, 1) f32 over the first n_valid rows)."""
    N, HP = xf.shape
    Lp = wT.shape[2]
    TN, Npad = _row_tiling(N, Lp)
    if Npad != N:
        pad = ((0, Npad - N), (0, 0))
        xf, xb, labels = jnp.pad(xf, pad), jnp.pad(xb, pad), jnp.pad(labels, pad)

    kern = functools.partial(_fc_ce_kernel, n_valid=n_valid, tn=TN)
    logits, loss_sum = pl.pallas_call(
        kern,
        out_shape=(jax.ShapeDtypeStruct((Npad, Lp), jnp.float32),
                   jax.ShapeDtypeStruct((1, 1), jnp.float32)),
        grid_spec=pltpu.PrefetchScalarGridSpec(
            num_scalar_prefetch=0,
            grid=(Npad // TN,),
            in_specs=[
                pl.BlockSpec((TN, HP), lambda r: (r, 0)),
                pl.BlockSpec((TN, HP), lambda r: (r, 0)),
                pl.BlockSpec((2, HP, Lp), lambda r: (0, 0, 0)),
                pl.BlockSpec((1, Lp), lambda r: (0, 0)),
                pl.BlockSpec((TN, 1), lambda r: (r, 0)),
            ],
            out_specs=[
                pl.BlockSpec((TN, Lp), lambda r: (r, 0)),
                pl.BlockSpec((1, 1), lambda r: (0, 0)),          # resident loss accumulator
            ],
        ),
        compiler_params=pltpu.CompilerParams(
            dimension_semantics=("arbitrary",),
            vmem_limit_bytes=_VMEM_LIMIT),
    )(xf, xb, wT, b, labels)
    if Npad != N:
        logits = logits[:N]
    return logits, loss_sum


# ---------------------------------------------------------------------------
# Parameter preparation: PyTorch layout -> padded / transposed / bf16 kernel layout.
# Padded hidden units have zero weights & bias -> their h stays exactly 0.
# ---------------------------------------------------------------------------
def _pad_gates(w, H, HP):
    """w: (4H, ...) PyTorch gate order [i,f,g,o] -> (4*HP, ...), per-gate zero pad."""
    if HP == H:
        return w
    z = jnp.zeros((HP - H,) + w.shape[1:], w.dtype)
    return jnp.concatenate(
        [jnp.concatenate([w[k * H:(k + 1) * H], z], axis=0) for k in range(4)], axis=0)


def _pad_bidir_cols(w, H, HP):
    """w: (R, 2H) columns = [fwd(H) | bwd(H)] -> (R, 2*HP)."""
    if HP == H:
        return w
    z = jnp.zeros((w.shape[0], HP - H), w.dtype)
    return jnp.concatenate([w[:, :H], z, w[:, H:2 * H], z], axis=1)


def prepare_kernel_params(raw, rnn_hidden, num_labels):
    H = rnn_hidden // 2
    HP = _round_up(H, _LANE)
    Lp = _round_up(num_labels, _LANE)
    E = raw["embedding"].shape[1]
    Ep = _round_up(E, _LANE)

    emb = raw["embedding"]
    if Ep != E:
        emb = jnp.pad(emb, ((0, 0), (0, Ep - E)))          # lane-dense layer-0 input

    layers = []
    for li, lp in enumerate(raw["lstm"]):
        per_dir_wih, per_dir_whh, per_dir_b = [], [], []
        for dname in ("f", "b"):
            wih = _pad_gates(lp[f"w_ih_{dname}"], H, HP)          # (4HP, In)
            if li == 0:
                if Ep != E:
                    wih = jnp.pad(wih, ((0, 0), (0, Ep - E)))     # (4HP, Ep)
            else:
                wih = _pad_bidir_cols(wih, H, HP)                 # (4HP, 2HP)
            whh = _pad_gates(lp[f"w_hh_{dname}"], H, HP)          # (4HP, H)
            if HP != H:
                whh = jnp.concatenate(
                    [whh, jnp.zeros((4 * HP, HP - H), whh.dtype)], axis=1)
            bias = _pad_gates(lp[f"b_ih_{dname}"] + lp[f"b_hh_{dname}"], H, HP)
            per_dir_wih.append(wih)
            per_dir_whh.append(whh.T)                             # (HP, 4HP)
            per_dir_b.append(bias)
        wihT = jnp.concatenate(per_dir_wih, axis=0).T.astype(jnp.bfloat16)   # (In, 8HP)
        if li > 0:
            wihT = wihT.reshape(2, HP, 8 * HP)       # split into [fwd-h rows | bwd-h rows]
        whh = jnp.stack(per_dir_whh, axis=0).astype(jnp.bfloat16)            # (2, HP, 4HP)
        b_c = jnp.concatenate(per_dir_b, axis=0).reshape(1, 8 * HP).astype(jnp.float32)
        layers.append({"wih": wihT, "whh": whh, "b": b_c})

    fc_w = _pad_bidir_cols(raw["fc_w"], H, HP)                    # (L, 2HP)
    fc_w = jnp.concatenate(
        [fc_w, jnp.zeros((Lp - num_labels, 2 * HP), fc_w.dtype)], axis=0)
    fc_wT = fc_w.T.astype(jnp.bfloat16).reshape(2, HP, Lp)        # (2, HP, Lp)
    fc_b = jnp.concatenate(
        [raw["fc_b"], jnp.full((Lp - num_labels,), -1e30, jnp.float32)]).reshape(1, Lp)

    return {"embedding": emb.astype(jnp.bfloat16), "lstm": layers,
            "fc_wT": fc_wT, "fc_b": fc_b}


# ---------------------------------------------------------------------------
# Full BiLSTM forward (mode != 'train': returns (logits, loss))
# ---------------------------------------------------------------------------
def bilstm_forward(params, input_ids, label_ids, num_labels):
    HP = params["lstm"][0]["whh"].shape[1]                        # static (from shape)
    B, T = input_ids.shape
    TB, Tp = _time_blocking(T, B)

    # Embedding gather (XLA glue) -> time-major (Tp*B, Ep) bf16.
    emb = jnp.take(params["embedding"], input_ids, axis=0)        # (B, T, Ep) bf16
    x = jnp.transpose(emb, (1, 0, 2))                             # (T, B, Ep)
    if Tp != T:
        x = jnp.pad(x, ((0, Tp - T), (0, 0), (0, 0)))
    x = x.reshape(Tp * B, -1)

    xf = xb = None
    for li, lw in enumerate(params["lstm"]):
        lhs = [x] if li == 0 else [xf, xb]
        # Hoisted input projection for BOTH directions: one row-tiled MXU pass.
        gx = _row_matmul(lhs, lw["wih"], lw["b"])                  # (Tp*B, 8HP) f32
        # Fused bidirectional recurrence -> bf16 fwd/bwd hidden halves.
        xf, xb = bilstm_recurrence(gx, lw["whh"], B=B, HP=HP, TB=TB, T=T)

    # nn.Dropout in eval mode is identity (inference semantics).

    labels_tm = jnp.transpose(label_ids).reshape(T * B, 1).astype(jnp.int32)
    if Tp != T:
        labels_tm = jnp.pad(labels_tm, ((0, (Tp - T) * B), (0, 0)))

    logits_tm, loss_sum = fc_cross_entropy(
        xf, xb, params["fc_wT"], params["fc_b"], labels_tm, n_valid=T * B)

    logits = logits_tm.reshape(Tp, B, -1)[:T, :, :num_labels]     # drop padded time & classes
    logits = jnp.transpose(logits, (1, 0, 2))                     # (B, T, L)
    loss = loss_sum[0, 0] / (T * B)                               # CrossEntropyLoss 'mean'
    # TODO(synk): no ignore_index / padding-token masking, matching the module defaults.
    return logits, loss


# ---------------------------------------------------------------------------
# Deterministic parameter construction (synthetic, PyTorch layout)
# ---------------------------------------------------------------------------
def make_params(key, vocab, emb_dim, rnn_hidden, num_layers, num_labels):
    H = rnn_hidden // 2
    keys = iter(jax.random.split(key, 4 + num_layers * 16))

    def unif(shape, scale=0.1):
        return jax.random.uniform(next(keys), shape, jnp.float32, -scale, scale)

    params = {
        "embedding": jax.random.normal(next(keys), (vocab, emb_dim), jnp.float32) * 0.1,
        "fc_w": unif((num_labels, rnn_hidden)),
        "fc_b": unif((num_labels,)),
        "lstm": [],
    }
    for layer in range(num_layers):
        in_size = emb_dim if layer == 0 else rnn_hidden
        params["lstm"].append({
            "w_ih_f": unif((4 * H, in_size)), "w_hh_f": unif((4 * H, H)),
            "b_ih_f": unif((4 * H,)),         "b_hh_f": unif((4 * H,)),
            "w_ih_b": unif((4 * H, in_size)), "w_hh_b": unif((4 * H, H)),
            "b_ih_b": unif((4 * H,)),         "b_hh_b": unif((4 * H,)),
        })
    return params


if __name__ == "__main__":
    VOCAB = 50
    EMB_DIM = 32          # args.hidden_size
    RNN_HIDDEN = 32       # args.rnn_hidden (per direction H = 16 -> padded HP = 128)
    NUM_LAYERS = 2        # args.num_layers
    NUM_LABELS = 8        # args.num_labels
    B, T = 2, 8

    root = jax.random.PRNGKey(0)
    k_params, k_ids, k_labels = jax.random.split(root, 3)

    raw = make_params(k_params, VOCAB, EMB_DIM, RNN_HIDDEN, NUM_LAYERS, NUM_LABELS)
    params = prepare_kernel_params(raw, RNN_HIDDEN, NUM_LABELS)
    input_ids = jax.random.randint(k_ids, (B, T), 0, VOCAB, dtype=jnp.int32)
    label_ids = jax.random.randint(k_labels, (B, T), 0, NUM_LABELS, dtype=jnp.int32)

    fwd = jax.jit(functools.partial(bilstm_forward, num_labels=NUM_LABELS))
    logits, loss = fwd(params, input_ids, label_ids)
    jax.block_until_ready((logits, loss))

    assert logits.shape == (B, T, NUM_LABELS)
    assert loss.shape == ()
    assert bool(jnp.isfinite(loss))
    print("KERNEL_OK")
</pallas_src>

<mosaic_0001>
module attributes {stable_mosaic.version = 11 : i64} {
  func.func @_linear1_kernel(%arg0: i32, %arg1: memref<16x128xbf16, #tpu.memory_space<vmem>>, %arg2: memref<128x1024xbf16, #tpu.memory_space<vmem>>, %arg3: memref<1x1024xf32, #tpu.memory_space<vmem>>, %arg4: memref<16x1024xf32, #tpu.memory_space<vmem>>) attributes {dimension_semantics = [#tpu.dimension_semantics<parallel>], iteration_bounds = array<i64: 1>, scalar_prefetch = 0 : i64, scratch_operands = 0 : i64, tpu.core_type = #tpu.core_type<tc>, window_params = [{transform_indices = @transform_0, window_bounds = array<i64: 16, 128>}, {pipeline_mode = #tpu.pipeline_mode<synchronous>, transform_indices = @transform_1, window_bounds = array<i64: 128, 1024>}, {pipeline_mode = #tpu.pipeline_mode<synchronous>, transform_indices = @transform_2, window_bounds = array<i64: 1, 1024>}, {transform_indices = @transform_3, window_bounds = array<i64: 16, 1024>}]} {
    %c0 = arith.constant 0 : index
    %c0_0 = arith.constant 0 : index
    %0 = vector.load %arg1[%c0, %c0_0] : memref<16x128xbf16, #tpu.memory_space<vmem>>, vector<16x128xbf16>
    %c0_1 = arith.constant 0 : index
    %c0_2 = arith.constant 0 : index
    %1 = vector.load %arg2[%c0_1, %c0_2] : memref<128x1024xbf16, #tpu.memory_space<vmem>>, vector<128x1024xbf16>
    %cst = arith.constant dense<0.000000e+00> : vector<16x1024xf32>
    %2 = tpu.matmul %0, %1, %cst {dimension_numbers = #tpu.dot_dimension_numbers<[1], [0], [0], [1], [0, 0, 1, 1], [], []>} : vector<16x128xbf16>, vector<128x1024xbf16>, vector<16x1024xf32> -> vector<16x1024xf32>
    %c0_3 = arith.constant 0 : index
    %c0_4 = arith.constant 0 : index
    %3 = vector.load %arg3[%c0_3, %c0_4] : memref<1x1024xf32, #tpu.memory_space<vmem>>, vector<1x1024xf32>
    %4 = vector.broadcast %3 : vector<1x1024xf32> to vector<16x1024xf32>
    %5 = arith.addf %2, %4 : vector<16x1024xf32>
    %c0_5 = arith.constant 0 : index
    %c0_6 = arith.constant 0 : index
    %6 = vector.load %arg4[%c0_5, %c0_6] : memref<16x1024xf32, #tpu.memory_space<vmem>>, vector<16x1024xf32>
    tpu.vector_store %arg4[%c0_5, %c0_6], %5 {strides = array<i32>} : memref<16x1024xf32, #tpu.memory_space<vmem>>, vector<16x1024xf32>,
    return
  }
  func.func @transform_0(%arg0: i32) -> (i32, i32) {
    %c0_i32 = arith.constant 0 : i32
    %c0_i32_0 = arith.constant 0 : i32
    return %arg0, %c0_i32 : i32, i32
  }
  func.func @transform_1(%arg0: i32) -> (i32, i32) {
    %c0_i32 = arith.constant 0 : i32
    %c0_i32_0 = arith.constant 0 : i32
    %c0_i32_1 = arith.constant 0 : i32
    return %c0_i32, %c0_i32_0 : i32, i32
  }
  func.func @transform_2(%arg0: i32) -> (i32, i32) {
    %c0_i32 = arith.constant 0 : i32
    %c0_i32_0 = arith.constant 0 : i32
    %c0_i32_1 = arith.constant 0 : i32
    return %c0_i32, %c0_i32_0 : i32, i32
  }
  func.func @transform_3(%arg0: i32) -> (i32, i32) {
    %c0_i32 = arith.constant 0 : i32
    %c0_i32_0 = arith.constant 0 : i32
    return %arg0, %c0_i32 : i32, i32
  }
}

module attributes {stable_mosaic.version = 11 : i64} {
  func.func @_linear2_kernel(%arg0: i32, %arg1: memref<16x128xbf16, #tpu.memory_space<vmem>>, %arg2: memref<16x128xbf16, #tpu.memory_space<vmem>>, %arg3: memref<2x128x1024xbf16, #tpu.memory_space<vmem>>, %arg4: memref<1x1024xf32, #tpu.memory_space<vmem>>, %arg5: memref<16x1024xf32, #tpu.memory_space<vmem>>) attributes {dimension_semantics = [#tpu.dimension_semantics<parallel>], iteration_bounds = array<i64: 1>, scalar_prefetch = 0 : i64, scratch_operands = 0 : i64, tpu.core_type = #tpu.core_type<tc>, window_params = [{transform_indices = @transform_0, window_bounds = array<i64: 16, 128>}, {transform_indices = @transform_1, window_bounds = array<i64: 16, 128>}, {pipeline_mode = #tpu.pipeline_mode<synchronous>, transform_indices = @transform_2, window_bounds = array<i64: 2, 128, 1024>}, {pipeline_mode = #tpu.pipeline_mode<synchronous>, transform_indices = @transform_3, window_bounds = array<i64: 1, 1024>}, {transform_indices = @transform_4, window_bounds = array<i64: 16, 1024>}]} {
    %c0 = arith.constant 0 : index
    %c0_0 = arith.constant 0 : index
    %0 = vector.load %arg1[%c0, %c0_0] : memref<16x128xbf16, #tpu.memory_space<vmem>>, vector<16x128xbf16>
    %c0_1 = arith.constant 0 : index
    %c0_2 = arith.constant 0 : index
    %c0_3 = arith.constant 0 : index
    %1 = vector.load %arg3[%c0_1, %c0_2, %c0_3] : memref<2x128x1024xbf16, #tpu.memory_space<vmem>>, vector<1x128x1024xbf16>
    %2 = vector.shape_cast %1 : vector<1x128x1024xbf16> to vector<128x1024xbf16>
    %cst = arith.constant dense<0.000000e+00> : vector<16x1024xf32>
    %3 = tpu.matmul %0, %2, %cst {dimension_numbers = #tpu.dot_dimension_numbers<[1], [0], [0], [1], [0, 0, 1, 1], [], []>} : vector<16x128xbf16>, vector<128x1024xbf16>, vector<16x1024xf32> -> vector<16x1024xf32>
    %c0_4 = arith.constant 0 : index
    %c0_5 = arith.constant 0 : index
    %4 = vector.load %arg2[%c0_4, %c0_5] : memref<16x128xbf16, #tpu.memory_space<vmem>>, vector<16x128xbf16>
    %c1 = arith.constant 1 : index
    %c0_6 = arith.constant 0 : index
    %c0_7 = arith.constant 0 : index
    %5 = vector.load %arg3[%c1, %c0_6, %c0_7] : memref<2x128x1024xbf16, #tpu.memory_space<vmem>>, vector<1x128x1024xbf16>
    %6 = vector.shape_cast %5 : vector<1x128x1024xbf16> to vector<128x1024xbf16>
    %cst_8 = arith.constant dense<0.000000e+00> : vector<16x1024xf32>
    %7 = tpu.matmul %4, %6, %cst_8 {dimension_numbers = #tpu.dot_dimension_numbers<[1], [0], [0], [1], [0, 0, 1, 1], [], []>} : vector<16x128xbf16>, vector<128x1024xbf16>, vector<16x1024xf32> -> vector<16x1024xf32>
    %8 = arith.addf %3, %7 : vector<16x1024xf32>
    %c0_9 = arith.constant 0 : index
    %c0_10 = arith.constant 0 : index
    %9 = vector.load %arg4[%c0_9, %c0_10] : memref<1x1024xf32, #tpu.memory_space<vmem>>, vector<1x1024xf32>
    %10 = vector.broadcast %9 : vector<1x1024xf32> to vector<16x1024xf32>
    %11 = arith.addf %8, %10 : vector<16x1024xf32>
    %c0_11 = arith.constant 0 : index
    %c0_12 = arith.constant 0 : index
    %12 = vector.load %arg5[%c0_11, %c0_12] : memref<16x1024xf32, #tpu.memory_space<vmem>>, vector<16x1024xf32>
    tpu.vector_store %arg5[%c0_11, %c0_12], %11 {strides = array<i32>} : memref<16x1024xf32, #tpu.memory_space<vmem>>, vector<16x1024xf32>,
    return
  }
  func.func @transform_0(%arg0: i32) -> (i32, i32) {
    %c0_i32 = arith.constant 0 : i32
    %c0_i32_0 = arith.constant 0 : i32
    return %arg0, %c0_i32 : i32, i32
  }
  func.func @transform_1(%arg0: i32) -> (i32, i32) {
    %c0_i32 = arith.constant 0 : i32
    %c0_i32_0 = arith.constant 0 : i32
    return %arg0, %c0_i32 : i32, i32
  }
  func.func @transform_2(%arg0: i32) -> (i32, i32, i32) {
    %c0_i32 = arith.constant 0 : i32
    %c0_i32_0 = arith.constant 0 : i32
    %c0_i32_1 = arith.constant 0 : i32
    %c0_i32_2 = arith.constant 0 : i32
    return %c0_i32, %c0_i32_0, %c0_i32_1 : i32, i32, i32
  }
  func.func @transform_3(%arg0: i32) -> (i32, i32) {
    %c0_i32 = arith.constant 0 : i32
    %c0_i32_0 = arith.constant 0 : i32
    %c0_i32_1 = arith.constant 0 : i32
    return %c0_i32, %c0_i32_0 : i32, i32
  }
  func.func @transform_4(%arg0: i32) -> (i32, i32) {
    %c0_i32 = arith.constant 0 : i32
    %c0_i32_0 = arith.constant 0 : i32
    return %arg0, %c0_i32 : i32, i32
  }
}

module attributes {stable_mosaic.version = 11 : i64} {
  func.func @_bilstm_rec_kernel(%arg0: i32, %arg1: memref<16x512xf32, #tpu.memory_space<vmem>>, %arg2: memref<16x512xf32, #tpu.memory_space<vmem>>, %arg3: memref<2x128x512xbf16, #tpu.memory_space<vmem>>, %arg4: memref<16x128xbf16, #tpu.memory_space<vmem>>, %arg5: memref<16x128xbf16, #tpu.memory_space<vmem>>, %arg6: memref<2x128xf32, #tpu.memory_space<vmem>>, %arg7: memref<2x128xf32, #tpu.memory_space<vmem>>, %arg8: memref<2x128xf32, #tpu.memory_space<vmem>>, %arg9: memref<2x128xf32, #tpu.memory_space<vmem>>) attributes {dimension_semantics = [#tpu.dimension_semantics<arbitrary>], iteration_bounds = array<i64: 1>, scalar_prefetch = 0 : i64, scratch_operands = 4 : i64, tpu.core_type = #tpu.core_type<tc>, window_params = [{transform_indices = @transform_0, window_bounds = array<i64: 16, 512>}, {transform_indices = @transform_1, window_bounds = array<i64: 16, 512>}, {pipeline_mode = #tpu.pipeline_mode<synchronous>, transform_indices = @transform_2, window_bounds = array<i64: 2, 128, 512>}, {transform_indices = @transform_3, window_bounds = array<i64: 16, 128>}, {transform_indices = @transform_4, window_bounds = array<i64: 16, 128>}]} {
    %c0_i32 = arith.constant 0 : i32
    %0 = arith.cmpi eq, %arg0, %c0_i32 : i32
    %1 = arith.extui %0 : i1 to i32
    %c0_i32_0 = arith.constant 0 : i32
    %2 = arith.cmpi ne, %1, %c0_i32_0 : i32
    scf.if %2 {
      %cst_183 = arith.constant 0.000000e+00 : f32
      %539 = vector.broadcast %cst_183 : f32 to vector<2x128xf32>
      %c0_184 = arith.constant 0 : index
      %c0_185 = arith.constant 0 : index
      %540 = vector.load %arg6[%c0_184, %c0_185] : memref<2x128xf32, #tpu.memory_space<vmem>>, vector<2x128xf32>
      tpu.vector_store %arg6[%c0_184, %c0_185], %539 {strides = array<i32>} : memref<2x128xf32, #tpu.memory_space<vmem>>, vector<2x128xf32>,
      %cst_186 = arith.constant 0.000000e+00 : f32
      %541 = vector.broadcast %cst_186 : f32 to vector<2x128xf32>
      %c0_187 = arith.constant 0 : index
      %c0_188 = arith.constant 0 : index
      %542 = vector.load %arg7[%c0_187, %c0_188] : memref<2x128xf32, #tpu.memory_space<vmem>>, vector<2x128xf32>
      tpu.vector_store %arg7[%c0_187, %c0_188], %541 {strides = array<i32>} : memref<2x128xf32, #tpu.memory_space<vmem>>, vector<2x128xf32>,
      %cst_189 = arith.constant 0.000000e+00 : f32
      %543 = vector.broadcast %cst_189 : f32 to vector<2x128xf32>
      %c0_190 = arith.constant 0 : index
      %c0_191 = arith.constant 0 : index
      %544 = vector.load %arg8[%c0_190, %c0_191] : memref<2x128xf32, #tpu.memory_space<vmem>>, vector<2x128xf32>
      tpu.vector_store %arg8[%c0_190, %c0_191], %543 {strides = array<i32>} : memref<2x128xf32, #tpu.memory_space<vmem>>, vector<2x128xf32>,
      %cst_192 = arith.constant 0.000000e+00 : f32
      %545 = vector.broadcast %cst_192 : f32 to vector<2x128xf32>
      %c0_193 = arith.constant 0 : index
      %c0_194 = arith.constant 0 : index
      %546 = vector.load %arg9[%c0_193, %c0_194] : memref<2x128xf32, #tpu.memory_space<vmem>>, vector<2x128xf32>
      tpu.vector_store %arg9[%c0_193, %c0_194], %545 {strides = array<i32>} : memref<2x128xf32, #tpu.memory_space<vmem>>, vector<2x128xf32>,
    } else {
    }
    %c0 = arith.constant 0 : index
    %c0_1 = arith.constant 0 : index
    %3 = vector.load %arg6[%c0, %c0_1] : memref<2x128xf32, #tpu.memory_space<vmem>>, vector<2x128xf32>
    %c0_2 = arith.constant 0 : index
    %c0_3 = arith.constant 0 : index
    %4 = vector.load %arg7[%c0_2, %c0_3] : memref<2x128xf32, #tpu.memory_space<vmem>>, vector<2x128xf32>
    %c0_4 = arith.constant 0 : index
    %c0_5 = arith.constant 0 : index
    %5 = vector.load %arg8[%c0_4, %c0_5] : memref<2x128xf32, #tpu.memory_space<vmem>>, vector<2x128xf32>
    %c0_6 = arith.constant 0 : index
    %c0_7 = arith.constant 0 : index
    %6 = vector.load %arg9[%c0_6, %c0_7] : memref<2x128xf32, #tpu.memory_space<vmem>>, vector<2x128xf32>
    %c0_8 = arith.constant 0 : index
    %c0_9 = arith.constant 0 : index
    %7 = vector.load %arg1[%c0_8, %c0_9] : memref<16x512xf32, #tpu.memory_space<vmem>>, vector<2x512xf32>
    %c0_10 = arith.constant 0 : index
    %c0_11 = arith.constant 0 : index
    %c0_12 = arith.constant 0 : index
    %8 = vector.load %arg3[%c0_10, %c0_11, %c0_12] : memref<2x128x512xbf16, #tpu.memory_space<vmem>>, vector<1x128x512xbf16>
    %9 = vector.shape_cast %8 : vector<1x128x512xbf16> to vector<128x512xbf16>
    %10 = arith.truncf %3 : vector<2x128xf32> to vector<2x128xbf16>
    %cst = arith.constant dense<0.000000e+00> : vector<2x512xf32>
    %11 = tpu.matmul %10, %9, %cst {dimension_numbers = #tpu.dot_dimension_numbers<[1], [0], [0], [1], [0, 0, 1, 1], [], []>} : vector<2x128xbf16>, vector<128x512xbf16>, vector<2x512xf32> -> vector<2x512xf32>
    %12 = arith.addf %7, %11 : vector<2x512xf32>
    %13 = vector.extract_strided_slice %12 {offsets = [0, 0], sizes = [2, 128], strides = [1, 1]} : vector<2x512xf32> to vector<2x128xf32>
    %14 = arith.negf %13 : vector<2x128xf32>
    %15 = math.exp %14 : vector<2x128xf32>
    %cst_13 = arith.constant 1.000000e+00 : f32
    %16 = vector.broadcast %cst_13 : f32 to vector<2x128xf32>
    %17 = arith.addf %16, %15 : vector<2x128xf32>
    %18 = arith.divf %16, %17 : vector<2x128xf32>
    %19 = vector.extract_strided_slice %12 {offsets = [0, 128], sizes = [2, 128], strides = [1, 1]} : vector<2x512xf32> to vector<2x128xf32>
    %20 = arith.negf %19 : vector<2x128xf32>
    %21 = math.exp %20 : vector<2x128xf32>
    %cst_14 = arith.constant 1.000000e+00 : f32
    %22 = vector.broadcast %cst_14 : f32 to vector<2x128xf32>
    %23 = arith.addf %22, %21 : vector<2x128xf32>
    %24 = arith.divf %22, %23 : vector<2x128xf32>
    %25 = vector.extract_strided_slice %12 {offsets = [0, 256], sizes = [2, 128], strides = [1, 1]} : vector<2x512xf32> to vector<2x128xf32>
    %26 = math.tanh %25 : vector<2x128xf32>
    %27 = vector.extract_strided_slice %12 {offsets = [0, 384], sizes = [2, 128], strides = [1, 1]} : vector<2x512xf32> to vector<2x128xf32>
    %28 = arith.negf %27 : vector<2x128xf32>
    %29 = math.exp %28 : vector<2x128xf32>
    %cst_15 = arith.constant 1.000000e+00 : f32
    %30 = vector.broadcast %cst_15 : f32 to vector<2x128xf32>
    %31 = arith.addf %30, %29 : vector<2x128xf32>
    %32 = arith.divf %30, %31 : vector<2x128xf32>
    %33 = arith.mulf %24, %4 : vector<2x128xf32>
    %34 = arith.mulf %18, %26 : vector<2x128xf32>
    %35 = arith.addf %33, %34 : vector<2x128xf32>
    %36 = math.tanh %35 : vector<2x128xf32>
    %37 = arith.mulf %32, %36 : vector<2x128xf32>
    %c14 = arith.constant 14 : index
    %c0_16 = arith.constant 0 : index
    %38 = vector.load %arg2[%c14, %c0_16] : memref<16x512xf32, #tpu.memory_space<vmem>>, vector<2x512xf32>
    %c1 = arith.constant 1 : index
    %c0_17 = arith.constant 0 : index
    %c0_18 = arith.constant 0 : index
    %39 = vector.load %arg3[%c1, %c0_17, %c0_18] : memref<2x128x512xbf16, #tpu.memory_space<vmem>>, vector<1x128x512xbf16>
    %40 = vector.shape_cast %39 : vector<1x128x512xbf16> to vector<128x512xbf16>
    %41 = arith.truncf %5 : vector<2x128xf32> to vector<2x128xbf16>
    %cst_19 = arith.constant dense<0.000000e+00> : vector<2x512xf32>
    %42 = tpu.matmul %41, %40, %cst_19 {dimension_numbers = #tpu.dot_dimension_numbers<[1], [0], [0], [1], [0, 0, 1, 1], [], []>} : vector<2x128xbf16>, vector<128x512xbf16>, vector<2x512xf32> -> vector<2x512xf32>
    %43 = arith.addf %38, %42 : vector<2x512xf32>
    %44 = vector.extract_strided_slice %43 {offsets = [0, 0], sizes = [2, 128], strides = [1, 1]} : vector<2x512xf32> to vector<2x128xf32>
    %45 = arith.negf %44 : vector<2x128xf32>
    %46 = math.exp %45 : vector<2x128xf32>
    %cst_20 = arith.constant 1.000000e+00 : f32
    %47 = vector.broadcast %cst_20 : f32 to vector<2x128xf32>
    %48 = arith.addf %47, %46 : vector<2x128xf32>
    %49 = arith.divf %47, %48 : vector<2x128xf32>
    %50 = vector.extract_strided_slice %43 {offsets = [0, 128], sizes = [2, 128], strides = [1, 1]} : vector<2x512xf32> to vector<2x128xf32>
    %51 = arith.negf %50 : vector<2x128xf32>
    %52 = math.exp %51 : vector<2x128xf32>
    %cst_21 = arith.constant 1.000000e+00 : f32
    %53 = vector.broadcast %cst_21 : f32 to vector<2x128xf32>
    %54 = arith.addf %53, %52 : vector<2x128xf32>
    %55 = arith.divf %53, %54 : vector<2x128xf32>
    %56 = vector.extract_strided_slice %43 {offsets = [0, 256], sizes = [2, 128], strides = [1, 1]} : vector<2x512xf32> to vector<2x128xf32>
    %57 = math.tanh %56 : vector<2x128xf32>
    %58 = vector.extract_strided_slice %43 {offsets = [0, 384], sizes = [2, 128], strides = [1, 1]} : vector<2x512xf32> to vector<2x128xf32>
    %59 = arith.negf %58 : vector<2x128xf32>
    %60 = math.exp %59 : vector<2x128xf32>
    %cst_22 = arith.constant 1.000000e+00 : f32
    %61 = vector.broadcast %cst_22 : f32 to vector<2x128xf32>
    %62 = arith.addf %61, %60 : vector<2x128xf32>
    %63 = arith.divf %61, %62 : vector<2x128xf32>
    %64 = arith.mulf %55, %6 : vector<2x128xf32>
    %65 = arith.mulf %49, %57 : vector<2x128xf32>
    %66 = arith.addf %64, %65 : vector<2x128xf32>
    %67 = math.tanh %66 : vector<2x128xf32>
    %68 = arith.mulf %63, %67 : vector<2x128xf32>
    %69 = arith.truncf %37 : vector<2x128xf32> to vector<2x128xbf16>
    %c0_23 = arith.constant 0 : index
    %c0_24 = arith.constant 0 : index
    %70 = vector.load %arg4[%c0_23, %c0_24] : memref<16x128xbf16, #tpu.memory_space<vmem>>, vector<2x128xbf16>
    tpu.vector_store %arg4[%c0_23, %c0_24], %69 {strides = array<i32>} : memref<16x128xbf16, #tpu.memory_space<vmem>>, vector<2x128xbf16>,
    %71 = arith.truncf %68 : vector<2x128xf32> to vector<2x128xbf16>
    %c14_25 = arith.constant 14 : index
    %c0_26 = arith.constant 0 : index
    %72 = vector.load %arg5[%c14_25, %c0_26] : memref<16x128xbf16, #tpu.memory_space<vmem>>, vector<2x128xbf16>
    tpu.vector_store %arg5[%c14_25, %c0_26], %71 {strides = array<i32>} : memref<16x128xbf16, #tpu.memory_space<vmem>>, vector<2x128xbf16>,
    %c2 = arith.constant 2 : index
    %c0_27 = arith.constant 0 : index
    %73 = vector.load %arg1[%c2, %c0_27] : memref<16x512xf32, #tpu.memory_space<vmem>>, vector<2x512xf32>
    %c0_28 = arith.constant 0 : index
    %c0_29 = arith.constant 0 : index
    %c0_30 = arith.constant 0 : index
    %74 = vector.load %arg3[%c0_28, %c0_29, %c0_30] : memref<2x128x512xbf16, #tpu.memory_space<vmem>>, vector<1x128x512xbf16>
    %75 = vector.shape_cast %74 : vector<1x128x512xbf16> to vector<128x512xbf16>
    %76 = arith.truncf %37 : vector<2x128xf32> to vector<2x128xbf16>
    %cst_31 = arith.constant dense<0.000000e+00> : vector<2x512xf32>
    %77 = tpu.matmul %76, %75, %cst_31 {dimension_numbers = #tpu.dot_dimension_numbers<[1], [0], [0], [1], [0, 0, 1, 1], [], []>} : vector<2x128xbf16>, vector<128x512xbf16>, vector<2x512xf32> -> vector<2x512xf32>
    %78 = arith.addf %73, %77 : vector<2x512xf32>
    %79 = vector.extract_strided_slice %78 {offsets = [0, 0], sizes = [2, 128], strides = [1, 1]} : vector<2x512xf32> to vector<2x128xf32>
    %80 = arith.negf %79 : vector<2x128xf32>
    %81 = math.exp %80 : vector<2x128xf32>
    %cst_32 = arith.constant 1.000000e+00 : f32
    %82 = vector.broadcast %cst_32 : f32 to vector<2x128xf32>
    %83 = arith.addf %82, %81 : vector<2x128xf32>
    %84 = arith.divf %82, %83 : vector<2x128xf32>
    %85 = vector.extract_strided_slice %78 {offsets = [0, 128], sizes = [2, 128], strides = [1, 1]} : vector<2x512xf32> to vector<2x128xf32>
    %86 = arith.negf %85 : vector<2x128xf32>
    %87 = math.exp %86 : vector<2x128xf32>
    %cst_33 = arith.constant 1.000000e+00 : f32
    %88 = vector.broadcast %cst_33 : f32 to vector<2x128xf32>
    %89 = arith.addf %88, %87 : vector<2x128xf32>
    %90 = arith.divf %88, %89 : vector<2x128xf32>
    %91 = vector.extract_strided_slice %78 {offsets = [0, 256], sizes = [2, 128], strides = [1, 1]} : vector<2x512xf32> to vector<2x128xf32>
    %92 = math.tanh %91 : vector<2x128xf32>
    %93 = vector.extract_strided_slice %78 {offsets = [0, 384], sizes = [2, 128], strides = [1, 1]} : vector<2x512xf32> to vector<2x128xf32>
    %94 = arith.negf %93 : vector<2x128xf32>
    %95 = math.exp %94 : vector<2x128xf32>
    %cst_34 = arith.constant 1.000000e+00 : f32
    %96 = vector.broadcast %cst_34 : f32 to vector<2x128xf32>
    %97 = arith.addf %96, %95 : vector<2x128xf32>
    %98 = arith.divf %96, %97 : vector<2x128xf32>
    %99 = arith.mulf %90, %35 : vector<2x128xf32>
    %100 = arith.mulf %84, %92 : vector<2x128xf32>
    %101 = arith.addf %99, %100 : vector<2x128xf32>
    %102 = math.tanh %101 : vector<2x128xf32>
    %103 = arith.mulf %98, %102 : vector<2x128xf32>
    %c12 = arith.constant 12 : index
    %c0_35 = arith.constant 0 : index
    %104 = vector.load %arg2[%c12, %c0_35] : memref<16x512xf32, #tpu.memory_space<vmem>>, vector<2x512xf32>
    %c1_36 = arith.constant 1 : index
    %c0_37 = arith.constant 0 : index
    %c0_38 = arith.constant 0 : index
    %105 = vector.load %arg3[%c1_36, %c0_37, %c0_38] : memref<2x128x512xbf16, #tpu.memory_space<vmem>>, vector<1x128x512xbf16>
    %106 = vector.shape_cast %105 : vector<1x128x512xbf16> to vector<128x512xbf16>
    %107 = arith.truncf %68 : vector<2x128xf32> to vector<2x128xbf16>
    %cst_39 = arith.constant dense<0.000000e+00> : vector<2x512xf32>
    %108 = tpu.matmul %107, %106, %cst_39 {dimension_numbers = #tpu.dot_dimension_numbers<[1], [0], [0], [1], [0, 0, 1, 1], [], []>} : vector<2x128xbf16>, vector<128x512xbf16>, vector<2x512xf32> -> vector<2x512xf32>
    %109 = arith.addf %104, %108 : vector<2x512xf32>
    %110 = vector.extract_strided_slice %109 {offsets = [0, 0], sizes = [2, 128], strides = [1, 1]} : vector<2x512xf32> to vector<2x128xf32>
    %111 = arith.negf %110 : vector<2x128xf32>
    %112 = math.exp %111 : vector<2x128xf32>
    %cst_40 = arith.constant 1.000000e+00 : f32
    %113 = vector.broadcast %cst_40 : f32 to vector<2x128xf32>
    %114 = arith.addf %113, %112 : vector<2x128xf32>
    %115 = arith.divf %113, %114 : vector<2x128xf32>
    %116 = vector.extract_strided_slice %109 {offsets = [0, 128], sizes = [2, 128], strides = [1, 1]} : vector<2x512xf32> to vector<2x128xf32>
    %117 = arith.negf %116 : vector<2x128xf32>
    %118 = math.exp %117 : vector<2x128xf32>
    %cst_41 = arith.constant 1.000000e+00 : f32
    %119 = vector.broadcast %cst_41 : f32 to vector<2x128xf32>
    %120 = arith.addf %119, %118 : vector<2x128xf32>
    %121 = arith.divf %119, %120 : vector<2x128xf32>
    %122 = vector.extract_strided_slice %109 {offsets = [0, 256], sizes = [2, 128], strides = [1, 1]} : vector<2x512xf32> to vector<2x128xf32>
    %123 = math.tanh %122 : vector<2x128xf32>
    %124 = vector.extract_strided_slice %109 {offsets = [0, 384], sizes = [2, 128], strides = [1, 1]} : vector<2x512xf32> to vector<2x128xf32>
    %125 = arith.negf %124 : vector<2x128xf32>
    %126 = math.exp %125 : vector<2x128xf32>
    %cst_42 = arith.constant 1.000000e+00 : f32
    %127 = vector.broadcast %cst_42 : f32 to vector<2x128xf32>
    %128 = arith.addf %127, %126 : vector<2x128xf32>
    %129 = arith.divf %127, %128 : vector<2x128xf32>
    %130 = arith.mulf %121, %66 : vector<2x128xf32>
    %131 = arith.mulf %115, %123 : vector<2x128xf32>
    %132 = arith.addf %130, %131 : vector<2x128xf32>
    %133 = math.tanh %132 : vector<2x128xf32>
    %134 = arith.mulf %129, %133 : vector<2x128xf32>
    %135 = arith.truncf %103 : vector<2x128xf32> to vector<2x128xbf16>
    %c2_43 = arith.constant 2 : index
    %c0_44 = arith.constant 0 : index
    %136 = vector.load %arg4[%c2_43, %c0_44] : memref<16x128xbf16, #tpu.memory_space<vmem>>, vector<2x128xbf16>
    tpu.vector_store %arg4[%c2_43, %c0_44], %135 {strides = array<i32>} : memref<16x128xbf16, #tpu.memory_space<vmem>>, vector<2x128xbf16>,
    %137 = arith.truncf %134 : vector<2x128xf32> to vector<2x128xbf16>
    %c12_45 = arith.constant 12 : index
    %c0_46 = arith.constant 0 : index
    %138 = vector.load %arg5[%c12_45, %c0_46] : memref<16x128xbf16, #tpu.memory_space<vmem>>, vector<2x128xbf16>
    tpu.vector_store %arg5[%c12_45, %c0_46], %137 {strides = array<i32>} : memref<16x128xbf16, #tpu.memory_space<vmem>>, vector<2x128xbf16>,
    %c4 = arith.constant 4 : index
    %c0_47 = arith.constant 0 : index
    %139 = vector.load %arg1[%c4, %c0_47] : memref<16x512xf32, #tpu.memory_space<vmem>>, vector<2x512xf32>
    %c0_48 = arith.constant 0 : index
    %c0_49 = arith.constant 0 : index
    %c0_50 = arith.constant 0 : index
    %140 = vector.load %arg3[%c0_48, %c0_49, %c0_50] : memref<2x128x512xbf16, #tpu.memory_space<vmem>>, vector<1x128x512xbf16>
    %141 = vector.shape_cast %140 : vector<1x128x512xbf16> to vector<128x512xbf16>
    %142 = arith.truncf %103 : vector<2x128xf32> to vector<2x128xbf16>
    %cst_51 = arith.constant dense<0.000000e+00> : vector<2x512xf32>
    %143 = tpu.matmul %142, %141, %cst_51 {dimension_numbers = #tpu.dot_dimension_numbers<[1], [0], [0], [1], [0, 0, 1, 1], [], []>} : vector<2x128xbf16>, vector<128x512xbf16>, vector<2x512xf32> -> vector<2x512xf32>
    %144 = arith.addf %139, %143 : vector<2x512xf32>
    %145 = vector.extract_strided_slice %144 {offsets = [0, 0], sizes = [2, 128], strides = [1, 1]} : vector<2x512xf32> to vector<2x128xf32>
    %146 = arith.negf %145 : vector<2x128xf32>
    %147 = math.exp %146 : vector<2x128xf32>
    %cst_52 = arith.constant 1.000000e+00 : f32
    %148 = vector.broadcast %cst_52 : f32 to vector<2x128xf32>
    %149 = arith.addf %148, %147 : vector<2x128xf32>
    %150 = arith.divf %148, %149 : vector<2x128xf32>
    %151 = vector.extract_strided_slice %144 {offsets = [0, 128], sizes = [2, 128], strides = [1, 1]} : vector<2x512xf32> to vector<2x128xf32>
    %152 = arith.negf %151 : vector<2x128xf32>
    %153 = math.exp %152 : vector<2x128xf32>
    %cst_53 = arith.constant 1.000000e+00 : f32
    %154 = vector.broadcast %cst_53 : f32 to vector<2x128xf32>
    %155 = arith.addf %154, %153 : vector<2x128xf32>
    %156 = arith.divf %154, %155 : vector<2x128xf32>
    %157 = vector.extract_strided_slice %144 {offsets = [0, 256], sizes = [2, 128], strides = [1, 1]} : vector<2x512xf32> to vector<2x128xf32>
    %158 = math.tanh %157 : vector<2x128xf32>
    %159 = vector.extract_strided_slice %144 {offsets = [0, 384], sizes = [2, 128], strides = [1, 1]} : vector<2x512xf32> to vector<2x128xf32>
    %160 = arith.negf %159 : vector<2x128xf32>
    %161 = math.exp %160 : vector<2x128xf32>
    %cst_54 = arith.constant 1.000000e+00 : f32
    %162 = vector.broadcast %cst_54 : f32 to vector<2x128xf32>
    %163 = arith.addf %162, %161 : vector<2x128xf32>
    %164 = arith.divf %162, %163 : vector<2x128xf32>
    %165 = arith.mulf %156, %101 : vector<2x128xf32>
    %166 = arith.mulf %150, %158 : vector<2x128xf32>
    %167 = arith.addf %165, %166 : vector<2x128xf32>
    %168 = math.tanh %167 : vector<2x128xf32>
    %169 = arith.mulf %164, %168 : vector<2x128xf32>
    %c10 = arith.constant 10 : index
    %c0_55 = arith.constant 0 : index
    %170 = vector.load %arg2[%c10, %c0_55] : memref<16x512xf32, #tpu.memory_space<vmem>>, vector<2x512xf32>
    %c1_56 = arith.constant 1 : index
    %c0_57 = arith.constant 0 : index
    %c0_58 = arith.constant 0 : index
    %171 = vector.load %arg3[%c1_56, %c0_57, %c0_58] : memref<2x128x512xbf16, #tpu.memory_space<vmem>>, vector<1x128x512xbf16>
    %172 = vector.shape_cast %171 : vector<1x128x512xbf16> to vector<128x512xbf16>
    %173 = arith.truncf %134 : vector<2x128xf32> to vector<2x128xbf16>
    %cst_59 = arith.constant dense<0.000000e+00> : vector<2x512xf32>
    %174 = tpu.matmul %173, %172, %cst_59 {dimension_numbers = #tpu.dot_dimension_numbers<[1], [0], [0], [1], [0, 0, 1, 1], [], []>} : vector<2x128xbf16>, vector<128x512xbf16>, vector<2x512xf32> -> vector<2x512xf32>
    %175 = arith.addf %170, %174 : vector<2x512xf32>
    %176 = vector.extract_strided_slice %175 {offsets = [0, 0], sizes = [2, 128], strides = [1, 1]} : vector<2x512xf32> to vector<2x128xf32>
    %177 = arith.negf %176 : vector<2x128xf32>
    %178 = math.exp %177 : vector<2x128xf32>
    %cst_60 = arith.constant 1.000000e+00 : f32
    %179 = vector.broadcast %cst_60 : f32 to vector<2x128xf32>
    %180 = arith.addf %179, %178 : vector<2x128xf32>
    %181 = arith.divf %179, %180 : vector<2x128xf32>
    %182 = vector.extract_strided_slice %175 {offsets = [0, 128], sizes = [2, 128], strides = [1, 1]} : vector<2x512xf32> to vector<2x128xf32>
    %183 = arith.negf %182 : vector<2x128xf32>
    %184 = math.exp %183 : vector<2x128xf32>
    %cst_61 = arith.constant 1.000000e+00 : f32
    %185 = vector.broadcast %cst_61 : f32 to vector<2x128xf32>
    %186 = arith.addf %185, %184 : vector<2x128xf32>
    %187 = arith.divf %185, %186 : vector<2x128xf32>
    %188 = vector.extract_strided_slice %175 {offsets = [0, 256], sizes = [2, 128], strides = [1, 1]} : vector<2x512xf32> to vector<2x128xf32>
    %189 = math.tanh %188 : vector<2x128xf32>
    %190 = vector.extract_strided_slice %175 {offsets = [0, 384], sizes = [2, 128], strides = [1, 1]} : vector<2x512xf32> to vector<2x128xf32>
    %191 = arith.negf %190 : vector<2x128xf32>
    %192 = math.exp %191 : vector<2x128xf32>
    %cst_62 = arith.constant 1.000000e+00 : f32
    %193 = vector.broadcast %cst_62 : f32 to vector<2x128xf32>
    %194 = arith.addf %193, %192 : vector<2x128xf32>
    %195 = arith.divf %193, %194 : vector<2x128xf32>
    %196 = arith.mulf %187, %132 : vector<2x128xf32>
    %197 = arith.mulf %181, %189 : vector<2x128xf32>
    %198 = arith.addf %196, %197 : vector<2x128xf32>
    %199 = math.tanh %198 : vector<2x128xf32>
    %200 = arith.mulf %195, %199 : vector<2x128xf32>
    %201 = arith.truncf %169 : vector<2x128xf32> to vector<2x128xbf16>
    %c4_63 = arith.constant 4 : index
    %c0_64 = arith.constant 0 : index
    %202 = vector.load %arg4[%c4_63, %c0_64] : memref<16x128xbf16, #tpu.memory_space<vmem>>, vector<2x128xbf16>
    tpu.vector_store %arg4[%c4_63, %c0_64], %201 {strides = array<i32>} : memref<16x128xbf16, #tpu.memory_space<vmem>>, vector<2x128xbf16>,
    %203 = arith.truncf %200 : vector<2x128xf32> to vector<2x128xbf16>
    %c10_65 = arith.constant 10 : index
    %c0_66 = arith.constant 0 : index
    %204 = vector.load %arg5[%c10_65, %c0_66] : memref<16x128xbf16, #tpu.memory_space<vmem>>, vector<2x128xbf16>
    tpu.vector_store %arg5[%c10_65, %c0_66], %203 {strides = array<i32>} : memref<16x128xbf16, #tpu.memory_space<vmem>>, vector<2x128xbf16>,
    %c6 = arith.constant 6 : index
    %c0_67 = arith.constant 0 : index
    %205 = vector.load %arg1[%c6, %c0_67] : memref<16x512xf32, #tpu.memory_space<vmem>>, vector<2x512xf32>
    %c0_68 = arith.constant 0 : index
    %c0_69 = arith.constant 0 : index
    %c0_70 = arith.constant 0 : index
    %206 = vector.load %arg3[%c0_68, %c0_69, %c0_70] : memref<2x128x512xbf16, #tpu.memory_space<vmem>>, vector<1x128x512xbf16>
    %207 = vector.shape_cast %206 : vector<1x128x512xbf16> to vector<128x512xbf16>
    %208 = arith.truncf %169 : vector<2x128xf32> to vector<2x128xbf16>
    %cst_71 = arith.constant dense<0.000000e+00> : vector<2x512xf32>
    %209 = tpu.matmul %208, %207, %cst_71 {dimension_numbers = #tpu.dot_dimension_numbers<[1], [0], [0], [1], [0, 0, 1, 1], [], []>} : vector<2x128xbf16>, vector<128x512xbf16>, vector<2x512xf32> -> vector<2x512xf32>
    %210 = arith.addf %205, %209 : vector<2x512xf32>
    %211 = vector.extract_strided_slice %210 {offsets = [0, 0], sizes = [2, 128], strides = [1, 1]} : vector<2x512xf32> to vector<2x128xf32>
    %212 = arith.negf %211 : vector<2x128xf32>
    %213 = math.exp %212 : vector<2x128xf32>
    %cst_72 = arith.constant 1.000000e+00 : f32
    %214 = vector.broadcast %cst_72 : f32 to vector<2x128xf32>
    %215 = arith.addf %214, %213 : vector<2x128xf32>
    %216 = arith.divf %214, %215 : vector<2x128xf32>
    %217 = vector.extract_strided_slice %210 {offsets = [0, 128], sizes = [2, 128], strides = [1, 1]} : vector<2x512xf32> to vector<2x128xf32>
    %218 = arith.negf %217 : vector<2x128xf32>
    %219 = math.exp %218 : vector<2x128xf32>
    %cst_73 = arith.constant 1.000000e+00 : f32
    %220 = vector.broadcast %cst_73 : f32 to vector<2x128xf32>
    %221 = arith.addf %220, %219 : vector<2x128xf32>
    %222 = arith.divf %220, %221 : vector<2x128xf32>
    %223 = vector.extract_strided_slice %210 {offsets = [0, 256], sizes = [2, 128], strides = [1, 1]} : vector<2x512xf32> to vector<2x128xf32>
    %224 = math.tanh %223 : vector<2x128xf32>
    %225 = vector.extract_strided_slice %210 {offsets = [0, 384], sizes = [2, 128], strides = [1, 1]} : vector<2x512xf32> to vector<2x128xf32>
    %226 = arith.negf %225 : vector<2x128xf32>
    %227 = math.exp %226 : vector<2x128xf32>
    %cst_74 = arith.constant 1.000000e+00 : f32
    %228 = vector.broadcast %cst_74 : f32 to vector<2x128xf32>
    %229 = arith.addf %228, %227 : vector<2x128xf32>
    %230 = arith.divf %228, %229 : vector<2x128xf32>
    %231 = arith.mulf %222, %167 : vector<2x128xf32>
    %232 = arith.mulf %216, %224 : vector<2x128xf32>
    %233 = arith.addf %231, %232 : vector<2x128xf32>
    %234 = math.tanh %233 : vector<2x128xf32>
    %235 = arith.mulf %230, %234 : vector<2x128xf32>
    %c8 = arith.constant 8 : index
    %c0_75 = arith.constant 0 : index
    %236 = vector.load %arg2[%c8, %c0_75] : memref<16x512xf32, #tpu.memory_space<vmem>>, vector<2x512xf32>
    %c1_76 = arith.constant 1 : index
    %c0_77 = arith.constant 0 : index
    %c0_78 = arith.constant 0 : index
    %237 = vector.load %arg3[%c1_76, %c0_77, %c0_78] : memref<2x128x512xbf16, #tpu.memory_space<vmem>>, vector<1x128x512xbf16>
    %238 = vector.shape_cast %237 : vector<1x128x512xbf16> to vector<128x512xbf16>
    %239 = arith.truncf %200 : vector<2x128xf32> to vector<2x128xbf16>
    %cst_79 = arith.constant dense<0.000000e+00> : vector<2x512xf32>
    %240 = tpu.matmul %239, %238, %cst_79 {dimension_numbers = #tpu.dot_dimension_numbers<[1], [0], [0], [1], [0, 0, 1, 1], [], []>} : vector<2x128xbf16>, vector<128x512xbf16>, vector<2x512xf32> -> vector<2x512xf32>
    %241 = arith.addf %236, %240 : vector<2x512xf32>
    %242 = vector.extract_strided_slice %241 {offsets = [0, 0], sizes = [2, 128], strides = [1, 1]} : vector<2x512xf32> to vector<2x128xf32>
    %243 = arith.negf %242 : vector<2x128xf32>
    %244 = math.exp %243 : vector<2x128xf32>
    %cst_80 = arith.constant 1.000000e+00 : f32
    %245 = vector.broadcast %cst_80 : f32 to vector<2x128xf32>
    %246 = arith.addf %245, %244 : vector<2x128xf32>
    %247 = arith.divf %245, %246 : vector<2x128xf32>
    %248 = vector.extract_strided_slice %241 {offsets = [0, 128], sizes = [2, 128], strides = [1, 1]} : vector<2x512xf32> to vector<2x128xf32>
    %249 = arith.negf %248 : vector<2x128xf32>
    %250 = math.exp %249 : vector<2x128xf32>
    %cst_81 = arith.constant 1.000000e+00 : f32
    %251 = vector.broadcast %cst_81 : f32 to vector<2x128xf32>
    %252 = arith.addf %251, %250 : vector<2x128xf32>
    %253 = arith.divf %251, %252 : vector<2x128xf32>
    %254 = vector.extract_strided_slice %241 {offsets = [0, 256], sizes = [2, 128], strides = [1, 1]} : vector<2x512xf32> to vector<2x128xf32>
    %255 = math.tanh %254 : vector<2x128xf32>
    %256 = vector.extract_strided_slice %241 {offsets = [0, 384], sizes = [2, 128], strides = [1, 1]} : vector<2x512xf32> to vector<2x128xf32>
    %257 = arith.negf %256 : vector<2x128xf32>
    %258 = math.exp %257 : vector<2x128xf32>
    %cst_82 = arith.constant 1.000000e+00 : f32
    %259 = vector.broadcast %cst_82 : f32 to vector<2x128xf32>
    %260 = arith.addf %259, %258 : vector<2x128xf32>
    %261 = arith.divf %259, %260 : vector<2x128xf32>
    %262 = arith.mulf %253, %198 : vector<2x128xf32>
    %263 = arith.mulf %247, %255 : vector<2x128xf32>
    %264 = arith.addf %262, %263 : vector<2x128xf32>
    %265 = math.tanh %264 : vector<2x128xf32>
    %266 = arith.mulf %261, %265 : vector<2x128xf32>
    %267 = arith.truncf %235 : vector<2x128xf32> to vector<2x128xbf16>
    %c6_83 = arith.constant 6 : index
    %c0_84 = arith.constant 0 : index
    %268 = vector.load %arg4[%c6_83, %c0_84] : memref<16x128xbf16, #tpu.memory_space<vmem>>, vector<2x128xbf16>
    tpu.vector_store %arg4[%c6_83, %c0_84], %267 {strides = array<i32>} : memref<16x128xbf16, #tpu.memory_space<vmem>>, vector<2x128xbf16>,
    %269 = arith.truncf %266 : vector<2x128xf32> to vector<2x128xbf16>
    %c8_85 = arith.constant 8 : index
    %c0_86 = arith.constant 0 : index
    %270 = vector.load %arg5[%c8_85, %c0_86] : memref<16x128xbf16, #tpu.memory_space<vmem>>, vector<2x128xbf16>
    tpu.vector_store %arg5[%c8_85, %c0_86], %269 {strides = array<i32>} : memref<16x128xbf16, #tpu.memory_space<vmem>>, vector<2x128xbf16>,
    %c8_87 = arith.constant 8 : index
    %c0_88 = arith.constant 0 : index
    %271 = vector.load %arg1[%c8_87, %c0_88] : memref<16x512xf32, #tpu.memory_space<vmem>>, vector<2x512xf32>
    %c0_89 = arith.constant 0 : index
    %c0_90 = arith.constant 0 : index
    %c0_91 = arith.constant 0 : index
    %272 = vector.load %arg3[%c0_89, %c0_90, %c0_91] : memref<2x128x512xbf16, #tpu.memory_space<vmem>>, vector<1x128x512xbf16>
    %273 = vector.shape_cast %272 : vector<1x128x512xbf16> to vector<128x512xbf16>
    %274 = arith.truncf %235 : vector<2x128xf32> to vector<2x128xbf16>
    %cst_92 = arith.constant dense<0.000000e+00> : vector<2x512xf32>
    %275 = tpu.matmul %274, %273, %cst_92 {dimension_numbers = #tpu.dot_dimension_numbers<[1], [0], [0], [1], [0, 0, 1, 1], [], []>} : vector<2x128xbf16>, vector<128x512xbf16>, vector<2x512xf32> -> vector<2x512xf32>
    %276 = arith.addf %271, %275 : vector<2x512xf32>
    %277 = vector.extract_strided_slice %276 {offsets = [0, 0], sizes = [2, 128], strides = [1, 1]} : vector<2x512xf32> to vector<2x128xf32>
    %278 = arith.negf %277 : vector<2x128xf32>
    %279 = math.exp %278 : vector<2x128xf32>
    %cst_93 = arith.constant 1.000000e+00 : f32
    %280 = vector.broadcast %cst_93 : f32 to vector<2x128xf32>
    %281 = arith.addf %280, %279 : vector<2x128xf32>
    %282 = arith.divf %280, %281 : vector<2x128xf32>
    %283 = vector.extract_strided_slice %276 {offsets = [0, 128], sizes = [2, 128], strides = [1, 1]} : vector<2x512xf32> to vector<2x128xf32>
    %284 = arith.negf %283 : vector<2x128xf32>
    %285 = math.exp %284 : vector<2x128xf32>
    %cst_94 = arith.constant 1.000000e+00 : f32
    %286 = vector.broadcast %cst_94 : f32 to vector<2x128xf32>
    %287 = arith.addf %286, %285 : vector<2x128xf32>
    %288 = arith.divf %286, %287 : vector<2x128xf32>
    %289 = vector.extract_strided_slice %276 {offsets = [0, 256], sizes = [2, 128], strides = [1, 1]} : vector<2x512xf32> to vector<2x128xf32>
    %290 = math.tanh %289 : vector<2x128xf32>
    %291 = vector.extract_strided_slice %276 {offsets = [0, 384], sizes = [2, 128], strides = [1, 1]} : vector<2x512xf32> to vector<2x128xf32>
    %292 = arith.negf %291 : vector<2x128xf32>
    %293 = math.exp %292 : vector<2x128xf32>
    %cst_95 = arith.constant 1.000000e+00 : f32
    %294 = vector.broadcast %cst_95 : f32 to vector<2x128xf32>
    %295 = arith.addf %294, %293 : vector<2x128xf32>
    %296 = arith.divf %294, %295 : vector<2x128xf32>
    %297 = arith.mulf %288, %233 : vector<2x128xf32>
    %298 = arith.mulf %282, %290 : vector<2x128xf32>
    %299 = arith.addf %297, %298 : vector<2x128xf32>
    %300 = math.tanh %299 : vector<2x128xf32>
    %301 = arith.mulf %296, %300 : vector<2x128xf32>
    %c6_96 = arith.constant 6 : index
    %c0_97 = arith.constant 0 : index
    %302 = vector.load %arg2[%c6_96, %c0_97] : memref<16x512xf32, #tpu.memory_space<vmem>>, vector<2x512xf32>
    %c1_98 = arith.constant 1 : index
    %c0_99 = arith.constant 0 : index
    %c0_100 = arith.constant 0 : index
    %303 = vector.load %arg3[%c1_98, %c0_99, %c0_100] : memref<2x128x512xbf16, #tpu.memory_space<vmem>>, vector<1x128x512xbf16>
    %304 = vector.shape_cast %303 : vector<1x128x512xbf16> to vector<128x512xbf16>
    %305 = arith.truncf %266 : vector<2x128xf32> to vector<2x128xbf16>
    %cst_101 = arith.constant dense<0.000000e+00> : vector<2x512xf32>
    %306 = tpu.matmul %305, %304, %cst_101 {dimension_numbers = #tpu.dot_dimension_numbers<[1], [0], [0], [1], [0, 0, 1, 1], [], []>} : vector<2x128xbf16>, vector<128x512xbf16>, vector<2x512xf32> -> vector<2x512xf32>
    %307 = arith.addf %302, %306 : vector<2x512xf32>
    %308 = vector.extract_strided_slice %307 {offsets = [0, 0], sizes = [2, 128], strides = [1, 1]} : vector<2x512xf32> to vector<2x128xf32>
    %309 = arith.negf %308 : vector<2x128xf32>
    %310 = math.exp %309 : vector<2x128xf32>
    %cst_102 = arith.constant 1.000000e+00 : f32
    %311 = vector.broadcast %cst_102 : f32 to vector<2x128xf32>
    %312 = arith.addf %311, %310 : vector<2x128xf32>
    %313 = arith.divf %311, %312 : vector<2x128xf32>
    %314 = vector.extract_strided_slice %307 {offsets = [0, 128], sizes = [2, 128], strides = [1, 1]} : vector<2x512xf32> to vector<2x128xf32>
    %315 = arith.negf %314 : vector<2x128xf32>
    %316 = math.exp %315 : vector<2x128xf32>
    %cst_103 = arith.constant 1.000000e+00 : f32
    %317 = vector.broadcast %cst_103 : f32 to vector<2x128xf32>
    %318 = arith.addf %317, %316 : vector<2x128xf32>
    %319 = arith.divf %317, %318 : vector<2x128xf32>
    %320 = vector.extract_strided_slice %307 {offsets = [0, 256], sizes = [2, 128], strides = [1, 1]} : vector<2x512xf32> to vector<2x128xf32>
    %321 = math.tanh %320 : vector<2x128xf32>
    %322 = vector.extract_strided_slice %307 {offsets = [0, 384], sizes = [2, 128], strides = [1, 1]} : vector<2x512xf32> to vector<2x128xf32>
    %323 = arith.negf %322 : vector<2x128xf32>
    %324 = math.exp %323 : vector<2x128xf32>
    %cst_104 = arith.constant 1.000000e+00 : f32
    %325 = vector.broadcast %cst_104 : f32 to vector<2x128xf32>
    %326 = arith.addf %325, %324 : vector<2x128xf32>
    %327 = arith.divf %325, %326 : vector<2x128xf32>
    %328 = arith.mulf %319, %264 : vector<2x128xf32>
    %329 = arith.mulf %313, %321 : vector<2x128xf32>
    %330 = arith.addf %328, %329 : vector<2x128xf32>
    %331 = math.tanh %330 : vector<2x128xf32>
    %332 = arith.mulf %327, %331 : vector<2x128xf32>
    %333 = arith.truncf %301 : vector<2x128xf32> to vector<2x128xbf16>
    %c8_105 = arith.constant 8 : index
    %c0_106 = arith.constant 0 : index
    %334 = vector.load %arg4[%c8_105, %c0_106] : memref<16x128xbf16, #tpu.memory_space<vmem>>, vector<2x128xbf16>
    tpu.vector_store %arg4[%c8_105, %c0_106], %333 {strides = array<i32>} : memref<16x128xbf16, #tpu.memory_space<vmem>>, vector<2x128xbf16>,
    %335 = arith.truncf %332 : vector<2x128xf32> to vector<2x128xbf16>
    %c6_107 = arith.constant 6 : index
    %c0_108 = arith.constant 0 : index
    %336 = vector.load %arg5[%c6_107, %c0_108] : memref<16x128xbf16, #tpu.memory_space<vmem>>, vector<2x128xbf16>
    tpu.vector_store %arg5[%c6_107, %c0_108], %335 {strides = array<i32>} : memref<16x128xbf16, #tpu.memory_space<vmem>>, vector<2x128xbf16>,
    %c10_109 = arith.constant 10 : index
    %c0_110 = arith.constant 0 : index
    %337 = vector.load %arg1[%c10_109, %c0_110] : memref<16x512xf32, #tpu.memory_space<vmem>>, vector<2x512xf32>
    %c0_111 = arith.constant 0 : index
    %c0_112 = arith.constant 0 : index
    %c0_113 = arith.constant 0 : index
    %338 = vector.load %arg3[%c0_111, %c0_112, %c0_113] : memref<2x128x512xbf16, #tpu.memory_space<vmem>>, vector<1x128x512xbf16>
    %339 = vector.shape_cast %338 : vector<1x128x512xbf16> to vector<128x512xbf16>
    %340 = arith.truncf %301 : vector<2x128xf32> to vector<2x128xbf16>
    %cst_114 = arith.constant dense<0.000000e+00> : vector<2x512xf32>
    %341 = tpu.matmul %340, %339, %cst_114 {dimension_numbers = #tpu.dot_dimension_numbers<[1], [0], [0], [1], [0, 0, 1, 1], [], []>} : vector<2x128xbf16>, vector<128x512xbf16>, vector<2x512xf32> -> vector<2x512xf32>
    %342 = arith.addf %337, %341 : vector<2x512xf32>
    %343 = vector.extract_strided_slice %342 {offsets = [0, 0], sizes = [2, 128], strides = [1, 1]} : vector<2x512xf32> to vector<2x128xf32>
    %344 = arith.negf %343 : vector<2x128xf32>
    %345 = math.exp %344 : vector<2x128xf32>
    %cst_115 = arith.constant 1.000000e+00 : f32
    %346 = vector.broadcast %cst_115 : f32 to vector<2x128xf32>
    %347 = arith.addf %346, %345 : vector<2x128xf32>
    %348 = arith.divf %346, %347 : vector<2x128xf32>
    %349 = vector.extract_strided_slice %342 {offsets = [0, 128], sizes = [2, 128], strides = [1, 1]} : vector<2x512xf32> to vector<2x128xf32>
    %350 = arith.negf %349 : vector<2x128xf32>
    %351 = math.exp %350 : vector<2x128xf32>
    %cst_116 = arith.constant 1.000000e+00 : f32
    %352 = vector.broadcast %cst_116 : f32 to vector<2x128xf32>
    %353 = arith.addf %352, %351 : vector<2x128xf32>
    %354 = arith.divf %352, %353 : vector<2x128xf32>
    %355 = vector.extract_strided_slice %342 {offsets = [0, 256], sizes = [2, 128], strides = [1, 1]} : vector<2x512xf32> to vector<2x128xf32>
    %356 = math.tanh %355 : vector<2x128xf32>
    %357 = vector.extract_strided_slice %342 {offsets = [0, 384], sizes = [2, 128], strides = [1, 1]} : vector<2x512xf32> to vector<2x128xf32>
    %358 = arith.negf %357 : vector<2x128xf32>
    %359 = math.exp %358 : vector<2x128xf32>
    %cst_117 = arith.constant 1.000000e+00 : f32
    %360 = vector.broadcast %cst_117 : f32 to vector<2x128xf32>
    %361 = arith.addf %360, %359 : vector<2x128xf32>
    %362 = arith.divf %360, %361 : vector<2x128xf32>
    %363 = arith.mulf %354, %299 : vector<2x128xf32>
    %364 = arith.mulf %348, %356 : vector<2x128xf32>
    %365 = arith.addf %363, %364 : vector<2x128xf32>
    %366 = math.tanh %365 : vector<2x128xf32>
    %367 = arith.mulf %362, %366 : vector<2x128xf32>
    %c4_118 = arith.constant 4 : index
    %c0_119 = arith.constant 0 : index
    %368 = vector.load %arg2[%c4_118, %c0_119] : memref<16x512xf32, #tpu.memory_space<vmem>>, vector<2x512xf32>
    %c1_120 = arith.constant 1 : index
    %c0_121 = arith.constant 0 : index
    %c0_122 = arith.constant 0 : index
    %369 = vector.load %arg3[%c1_120, %c0_121, %c0_122] : memref<2x128x512xbf16, #tpu.memory_space<vmem>>, vector<1x128x512xbf16>
    %370 = vector.shape_cast %369 : vector<1x128x512xbf16> to vector<128x512xbf16>
    %371 = arith.truncf %332 : vector<2x128xf32> to vector<2x128xbf16>
    %cst_123 = arith.constant dense<0.000000e+00> : vector<2x512xf32>
    %372 = tpu.matmul %371, %370, %cst_123 {dimension_numbers = #tpu.dot_dimension_numbers<[1], [0], [0], [1], [0, 0, 1, 1], [], []>} : vector<2x128xbf16>, vector<128x512xbf16>, vector<2x512xf32> -> vector<2x512xf32>
    %373 = arith.addf %368, %372 : vector<2x512xf32>
    %374 = vector.extract_strided_slice %373 {offsets = [0, 0], sizes = [2, 128], strides = [1, 1]} : vector<2x512xf32> to vector<2x128xf32>
    %375 = arith.negf %374 : vector<2x128xf32>
    %376 = math.exp %375 : vector<2x128xf32>
    %cst_124 = arith.constant 1.000000e+00 : f32
    %377 = vector.broadcast %cst_124 : f32 to vector<2x128xf32>
    %378 = arith.addf %377, %376 : vector<2x128xf32>
    %379 = arith.divf %377, %378 : vector<2x128xf32>
    %380 = vector.extract_strided_slice %373 {offsets = [0, 128], sizes = [2, 128], strides = [1, 1]} : vector<2x512xf32> to vector<2x128xf32>
    %381 = arith.negf %380 : vector<2x128xf32>
    %382 = math.exp %381 : vector<2x128xf32>
    %cst_125 = arith.constant 1.000000e+00 : f32
    %383 = vector.broadcast %cst_125 : f32 to vector<2x128xf32>
    %384 = arith.addf %383, %382 : vector<2x128xf32>
    %385 = arith.divf %383, %384 : vector<2x128xf32>
    %386 = vector.extract_strided_slice %373 {offsets = [0, 256], sizes = [2, 128], strides = [1, 1]} : vector<2x512xf32> to vector<2x128xf32>
    %387 = math.tanh %386 : vector<2x128xf32>
    %388 = vector.extract_strided_slice %373 {offsets = [0, 384], sizes = [2, 128], strides = [1, 1]} : vector<2x512xf32> to vector<2x128xf32>
    %389 = arith.negf %388 : vector<2x128xf32>
    %390 = math.exp %389 : vector<2x128xf32>
    %cst_126 = arith.constant 1.000000e+00 : f32
    %391 = vector.broadcast %cst_126 : f32 to vector<2x128xf32>
    %392 = arith.addf %391, %390 : vector<2x128xf32>
    %393 = arith.divf %391, %392 : vector<2x128xf32>
    %394 = arith.mulf %385, %330 : vector<2x128xf32>
    %395 = arith.mulf %379, %387 : vector<2x128xf32>
    %396 = arith.addf %394, %395 : vector<2x128xf32>
    %397 = math.tanh %396 : vector<2x128xf32>
    %398 = arith.mulf %393, %397 : vector<2x128xf32>
    %399 = arith.truncf %367 : vector<2x128xf32> to vector<2x128xbf16>
    %c10_127 = arith.constant 10 : index
    %c0_128 = arith.constant 0 : index
    %400 = vector.load %arg4[%c10_127, %c0_128] : memref<16x128xbf16, #tpu.memory_space<vmem>>, vector<2x128xbf16>
    tpu.vector_store %arg4[%c10_127, %c0_128], %399 {strides = array<i32>} : memref<16x128xbf16, #tpu.memory_space<vmem>>, vector<2x128xbf16>,
    %401 = arith.truncf %398 : vector<2x128xf32> to vector<2x128xbf16>
    %c4_129 = arith.constant 4 : index
    %c0_130 = arith.constant 0 : index
    %402 = vector.load %arg5[%c4_129, %c0_130] : memref<16x128xbf16, #tpu.memory_space<vmem>>, vector<2x128xbf16>
    tpu.vector_store %arg5[%c4_129, %c0_130], %401 {strides = array<i32>} : memref<16x128xbf16, #tpu.memory_space<vmem>>, vector<2x128xbf16>,
    %c12_131 = arith.constant 12 : index
    %c0_132 = arith.constant 0 : index
    %403 = vector.load %arg1[%c12_131, %c0_132] : memref<16x512xf32, #tpu.memory_space<vmem>>, vector<2x512xf32>
    %c0_133 = arith.constant 0 : index
    %c0_134 = arith.constant 0 : index
    %c0_135 = arith.constant 0 : index
    %404 = vector.load %arg3[%c0_133, %c0_134, %c0_135] : memref<2x128x512xbf16, #tpu.memory_space<vmem>>, vector<1x128x512xbf16>
    %405 = vector.shape_cast %404 : vector<1x128x512xbf16> to vector<128x512xbf16>
    %406 = arith.truncf %367 : vector<2x128xf32> to vector<2x128xbf16>
    %cst_136 = arith.constant dense<0.000000e+00> : vector<2x512xf32>
    %407 = tpu.matmul %406, %405, %cst_136 {dimension_numbers = #tpu.dot_dimension_numbers<[1], [0], [0], [1], [0, 0, 1, 1], [], []>} : vector<2x128xbf16>, vector<128x512xbf16>, vector<2x512xf32> -> vector<2x512xf32>
    %408 = arith.addf %403, %407 : vector<2x512xf32>
    %409 = vector.extract_strided_slice %408 {offsets = [0, 0], sizes = [2, 128], strides = [1, 1]} : vector<2x512xf32> to vector<2x128xf32>
    %410 = arith.negf %409 : vector<2x128xf32>
    %411 = math.exp %410 : vector<2x128xf32>
    %cst_137 = arith.constant 1.000000e+00 : f32
    %412 = vector.broadcast %cst_137 : f32 to vector<2x128xf32>
    %413 = arith.addf %412, %411 : vector<2x128xf32>
    %414 = arith.divf %412, %413 : vector<2x128xf32>
    %415 = vector.extract_strided_slice %408 {offsets = [0, 128], sizes = [2, 128], strides = [1, 1]} : vector<2x512xf32> to vector<2x128xf32>
    %416 = arith.negf %415 : vector<2x128xf32>
    %417 = math.exp %416 : vector<2x128xf32>
    %cst_138 = arith.constant 1.000000e+00 : f32
    %418 = vector.broadcast %cst_138 : f32 to vector<2x128xf32>
    %419 = arith.addf %418, %417 : vector<2x128xf32>
    %420 = arith.divf %418, %419 : vector<2x128xf32>
    %421 = vector.extract_strided_slice %408 {offsets = [0, 256], sizes = [2, 128], strides = [1, 1]} : vector<2x512xf32> to vector<2x128xf32>
    %422 = math.tanh %421 : vector<2x128xf32>
    %423 = vector.extract_strided_slice %408 {offsets = [0, 384], sizes = [2, 128], strides = [1, 1]} : vector<2x512xf32> to vector<2x128xf32>
    %424 = arith.negf %423 : vector<2x128xf32>
    %425 = math.exp %424 : vector<2x128xf32>
    %cst_139 = arith.constant 1.000000e+00 : f32
    %426 = vector.broadcast %cst_139 : f32 to vector<2x128xf32>
    %427 = arith.addf %426, %425 : vector<2x128xf32>
    %428 = arith.divf %426, %427 : vector<2x128xf32>
    %429 = arith.mulf %420, %365 : vector<2x128xf32>
    %430 = arith.mulf %414, %422 : vector<2x128xf32>
    %431 = arith.addf %429, %430 : vector<2x128xf32>
    %432 = math.tanh %431 : vector<2x128xf32>
    %433 = arith.mulf %428, %432 : vector<2x128xf32>
    %c2_140 = arith.constant 2 : index
    %c0_141 = arith.constant 0 : index
    %434 = vector.load %arg2[%c2_140, %c0_141] : memref<16x512xf32, #tpu.memory_space<vmem>>, vector<2x512xf32>
    %c1_142 = arith.constant 1 : index
    %c0_143 = arith.constant 0 : index
    %c0_144 = arith.constant 0 : index
    %435 = vector.load %arg3[%c1_142, %c0_143, %c0_144] : memref<2x128x512xbf16, #tpu.memory_space<vmem>>, vector<1x128x512xbf16>
    %436 = vector.shape_cast %435 : vector<1x128x512xbf16> to vector<128x512xbf16>
    %437 = arith.truncf %398 : vector<2x128xf32> to vector<2x128xbf16>
    %cst_145 = arith.constant dense<0.000000e+00> : vector<2x512xf32>
    %438 = tpu.matmul %437, %436, %cst_145 {dimension_numbers = #tpu.dot_dimension_numbers<[1], [0], [0], [1], [0, 0, 1, 1], [], []>} : vector<2x128xbf16>, vector<128x512xbf16>, vector<2x512xf32> -> vector<2x512xf32>
    %439 = arith.addf %434, %438 : vector<2x512xf32>
    %440 = vector.extract_strided_slice %439 {offsets = [0, 0], sizes = [2, 128], strides = [1, 1]} : vector<2x512xf32> to vector<2x128xf32>
    %441 = arith.negf %440 : vector<2x128xf32>
    %442 = math.exp %441 : vector<2x128xf32>
    %cst_146 = arith.constant 1.000000e+00 : f32
    %443 = vector.broadcast %cst_146 : f32 to vector<2x128xf32>
    %444 = arith.addf %443, %442 : vector<2x128xf32>
    %445 = arith.divf %443, %444 : vector<2x128xf32>
    %446 = vector.extract_strided_slice %439 {offsets = [0, 128], sizes = [2, 128], strides = [1, 1]} : vector<2x512xf32> to vector<2x128xf32>
    %447 = arith.negf %446 : vector<2x128xf32>
    %448 = math.exp %447 : vector<2x128xf32>
    %cst_147 = arith.constant 1.000000e+00 : f32
    %449 = vector.broadcast %cst_147 : f32 to vector<2x128xf32>
    %450 = arith.addf %449, %448 : vector<2x128xf32>
    %451 = arith.divf %449, %450 : vector<2x128xf32>
    %452 = vector.extract_strided_slice %439 {offsets = [0, 256], sizes = [2, 128], strides = [1, 1]} : vector<2x512xf32> to vector<2x128xf32>
    %453 = math.tanh %452 : vector<2x128xf32>
    %454 = vector.extract_strided_slice %439 {offsets = [0, 384], sizes = [2, 128], strides = [1, 1]} : vector<2x512xf32> to vector<2x128xf32>
    %455 = arith.negf %454 : vector<2x128xf32>
    %456 = math.exp %455 : vector<2x128xf32>
    %cst_148 = arith.constant 1.000000e+00 : f32
    %457 = vector.broadcast %cst_148 : f32 to vector<2x128xf32>
    %458 = arith.addf %457, %456 : vector<2x128xf32>
    %459 = arith.divf %457, %458 : vector<2x128xf32>
    %460 = arith.mulf %451, %396 : vector<2x128xf32>
    %461 = arith.mulf %445, %453 : vector<2x128xf32>
    %462 = arith.addf %460, %461 : vector<2x128xf32>
    %463 = math.tanh %462 : vector<2x128xf32>
    %464 = arith.mulf %459, %463 : vector<2x128xf32>
    %465 = arith.truncf %433 : vector<2x128xf32> to vector<2x128xbf16>
    %c12_149 = arith.constant 12 : index
    %c0_150 = arith.constant 0 : index
    %466 = vector.load %arg4[%c12_149, %c0_150] : memref<16x128xbf16, #tpu.memory_space<vmem>>, vector<2x128xbf16>
    tpu.vector_store %arg4[%c12_149, %c0_150], %465 {strides = array<i32>} : memref<16x128xbf16, #tpu.memory_space<vmem>>, vector<2x128xbf16>,
    %467 = arith.truncf %464 : vector<2x128xf32> to vector<2x128xbf16>
    %c2_151 = arith.constant 2 : index
    %c0_152 = arith.constant 0 : index
    %468 = vector.load %arg5[%c2_151, %c0_152] : memref<16x128xbf16, #tpu.memory_space<vmem>>, vector<2x128xbf16>
    tpu.vector_store %arg5[%c2_151, %c0_152], %467 {strides = array<i32>} : memref<16x128xbf16, #tpu.memory_space<vmem>>, vector<2x128xbf16>,
    %c14_153 = arith.constant 14 : index
    %c0_154 = arith.constant 0 : index
    %469 = vector.load %arg1[%c14_153, %c0_154] : memref<16x512xf32, #tpu.memory_space<vmem>>, vector<2x512xf32>
    %c0_155 = arith.constant 0 : index
    %c0_156 = arith.constant 0 : index
    %c0_157 = arith.constant 0 : index
    %470 = vector.load %arg3[%c0_155, %c0_156, %c0_157] : memref<2x128x512xbf16, #tpu.memory_space<vmem>>, vector<1x128x512xbf16>
    %471 = vector.shape_cast %470 : vector<1x128x512xbf16> to vector<128x512xbf16>
    %472 = arith.truncf %433 : vector<2x128xf32> to vector<2x128xbf16>
    %cst_158 = arith.constant dense<0.000000e+00> : vector<2x512xf32>
    %473 = tpu.matmul %472, %471, %cst_158 {dimension_numbers = #tpu.dot_dimension_numbers<[1], [0], [0], [1], [0, 0, 1, 1], [], []>} : vector<2x128xbf16>, vector<128x512xbf16>, vector<2x512xf32> -> vector<2x512xf32>
    %474 = arith.addf %469, %473 : vector<2x512xf32>
    %475 = vector.extract_strided_slice %474 {offsets = [0, 0], sizes = [2, 128], strides = [1, 1]} : vector<2x512xf32> to vector<2x128xf32>
    %476 = arith.negf %475 : vector<2x128xf32>
    %477 = math.exp %476 : vector<2x128xf32>
    %cst_159 = arith.constant 1.000000e+00 : f32
    %478 = vector.broadcast %cst_159 : f32 to vector<2x128xf32>
    %479 = arith.addf %478, %477 : vector<2x128xf32>
    %480 = arith.divf %478, %479 : vector<2x128xf32>
    %481 = vector.extract_strided_slice %474 {offsets = [0, 128], sizes = [2, 128], strides = [1, 1]} : vector<2x512xf32> to vector<2x128xf32>
    %482 = arith.negf %481 : vector<2x128xf32>
    %483 = math.exp %482 : vector<2x128xf32>
    %cst_160 = arith.constant 1.000000e+00 : f32
    %484 = vector.broadcast %cst_160 : f32 to vector<2x128xf32>
    %485 = arith.addf %484, %483 : vector<2x128xf32>
    %486 = arith.divf %484, %485 : vector<2x128xf32>
    %487 = vector.extract_strided_slice %474 {offsets = [0, 256], sizes = [2, 128], strides = [1, 1]} : vector<2x512xf32> to vector<2x128xf32>
    %488 = math.tanh %487 : vector<2x128xf32>
    %489 = vector.extract_strided_slice %474 {offsets = [0, 384], sizes = [2, 128], strides = [1, 1]} : vector<2x512xf32> to vector<2x128xf32>
    %490 = arith.negf %489 : vector<2x128xf32>
    %491 = math.exp %490 : vector<2x128xf32>
    %cst_161 = arith.constant 1.000000e+00 : f32
    %492 = vector.broadcast %cst_161 : f32 to vector<2x128xf32>
    %493 = arith.addf %492, %491 : vector<2x128xf32>
    %494 = arith.divf %492, %493 : vector<2x128xf32>
    %495 = arith.mulf %486, %431 : vector<2x128xf32>
    %496 = arith.mulf %480, %488 : vector<2x128xf32>
    %497 = arith.addf %495, %496 : vector<2x128xf32>
    %498 = math.tanh %497 : vector<2x128xf32>
    %499 = arith.mulf %494, %498 : vector<2x128xf32>
    %c0_162 = arith.constant 0 : index
    %c0_163 = arith.constant 0 : index
    %500 = vector.load %arg2[%c0_162, %c0_163] : memref<16x512xf32, #tpu.memory_space<vmem>>, vector<2x512xf32>
    %c1_164 = arith.constant 1 : index
    %c0_165 = arith.constant 0 : index
    %c0_166 = arith.constant 0 : index
    %501 = vector.load %arg3[%c1_164, %c0_165, %c0_166] : memref<2x128x512xbf16, #tpu.memory_space<vmem>>, vector<1x128x512xbf16>
    %502 = vector.shape_cast %501 : vector<1x128x512xbf16> to vector<128x512xbf16>
    %503 = arith.truncf %464 : vector<2x128xf32> to vector<2x128xbf16>
    %cst_167 = arith.constant dense<0.000000e+00> : vector<2x512xf32>
    %504 = tpu.matmul %503, %502, %cst_167 {dimension_numbers = #tpu.dot_dimension_numbers<[1], [0], [0], [1], [0, 0, 1, 1], [], []>} : vector<2x128xbf16>, vector<128x512xbf16>, vector<2x512xf32> -> vector<2x512xf32>
    %505 = arith.addf %500, %504 : vector<2x512xf32>
    %506 = vector.extract_strided_slice %505 {offsets = [0, 0], sizes = [2, 128], strides = [1, 1]} : vector<2x512xf32> to vector<2x128xf32>
    %507 = arith.negf %506 : vector<2x128xf32>
    %508 = math.exp %507 : vector<2x128xf32>
    %cst_168 = arith.constant 1.000000e+00 : f32
    %509 = vector.broadcast %cst_168 : f32 to vector<2x128xf32>
    %510 = arith.addf %509, %508 : vector<2x128xf32>
    %511 = arith.divf %509, %510 : vector<2x128xf32>
    %512 = vector.extract_strided_slice %505 {offsets = [0, 128], sizes = [2, 128], strides = [1, 1]} : vector<2x512xf32> to vector<2x128xf32>
    %513 = arith.negf %512 : vector<2x128xf32>
    %514 = math.exp %513 : vector<2x128xf32>
    %cst_169 = arith.constant 1.000000e+00 : f32
    %515 = vector.broadcast %cst_169 : f32 to vector<2x128xf32>
    %516 = arith.addf %515, %514 : vector<2x128xf32>
    %517 = arith.divf %515, %516 : vector<2x128xf32>
    %518 = vector.extract_strided_slice %505 {offsets = [0, 256], sizes = [2, 128], strides = [1, 1]} : vector<2x512xf32> to vector<2x128xf32>
    %519 = math.tanh %518 : vector<2x128xf32>
    %520 = vector.extract_strided_slice %505 {offsets = [0, 384], sizes = [2, 128], strides = [1, 1]} : vector<2x512xf32> to vector<2x128xf32>
    %521 = arith.negf %520 : vector<2x128xf32>
    %522 = math.exp %521 : vector<2x128xf32>
    %cst_170 = arith.constant 1.000000e+00 : f32
    %523 = vector.broadcast %cst_170 : f32 to vector<2x128xf32>
    %524 = arith.addf %523, %522 : vector<2x128xf32>
    %525 = arith.divf %523, %524 : vector<2x128xf32>
    %526 = arith.mulf %517, %462 : vector<2x128xf32>
    %527 = arith.mulf %511, %519 : vector<2x128xf32>
    %528 = arith.addf %526, %527 : vector<2x128xf32>
    %529 = math.tanh %528 : vector<2x128xf32>
    %530 = arith.mulf %525, %529 : vector<2x128xf32>
    %531 = arith.truncf %499 : vector<2x128xf32> to vector<2x128xbf16>
    %c14_171 = arith.constant 14 : index
    %c0_172 = arith.constant 0 : index
    %532 = vector.load %arg4[%c14_171, %c0_172] : memref<16x128xbf16, #tpu.memory_space<vmem>>, vector<2x128xbf16>
    tpu.vector_store %arg4[%c14_171, %c0_172], %531 {strides = array<i32>} : memref<16x128xbf16, #tpu.memory_space<vmem>>, vector<2x128xbf16>,
    %533 = arith.truncf %530 : vector<2x128xf32> to vector<2x128xbf16>
    %c0_173 = arith.constant 0 : index
    %c0_174 = arith.constant 0 : index
    %534 = vector.load %arg5[%c0_173, %c0_174] : memref<16x128xbf16, #tpu.memory_space<vmem>>, vector<2x128xbf16>
    tpu.vector_store %arg5[%c0_173, %c0_174], %533 {strides = array<i32>} : memref<16x128xbf16, #tpu.memory_space<vmem>>, vector<2x128xbf16>,
    %c0_175 = arith.constant 0 : index
    %c0_176 = arith.constant 0 : index
    %535 = vector.load %arg6[%c0_175, %c0_176] : memref<2x128xf32, #tpu.memory_space<vmem>>, vector<2x128xf32>
    tpu.vector_store %arg6[%c0_175, %c0_176], %499 {strides = array<i32>} : memref<2x128xf32, #tpu.memory_space<vmem>>, vector<2x128xf32>,
    %c0_177 = arith.constant 0 : index
    %c0_178 = arith.constant 0 : index
    %536 = vector.load %arg7[%c0_177, %c0_178] : memref<2x128xf32, #tpu.memory_space<vmem>>, vector<2x128xf32>
    tpu.vector_store %arg7[%c0_177, %c0_178], %497 {strides = array<i32>} : memref<2x128xf32, #tpu.memory_space<vmem>>, vector<2x128xf32>,
    %c0_179 = arith.constant 0 : index
    %c0_180 = arith.constant 0 : index
    %537 = vector.load %arg8[%c0_179, %c0_180] : memref<2x128xf32, #tpu.memory_space<vmem>>, vector<2x128xf32>
    tpu.vector_store %arg8[%c0_179, %c0_180], %530 {strides = array<i32>} : memref<2x128xf32, #tpu.memory_space<vmem>>, vector<2x128xf32>,
    %c0_181 = arith.constant 0 : index
    %c0_182 = arith.constant 0 : index
    %538 = vector.load %arg9[%c0_181, %c0_182] : memref<2x128xf32, #tpu.memory_space<vmem>>, vector<2x128xf32>
    tpu.vector_store %arg9[%c0_181, %c0_182], %528 {strides = array<i32>} : memref<2x128xf32, #tpu.memory_space<vmem>>, vector<2x128xf32>,
    return
  }
  func.func @transform_0(%arg0: i32) -> (i32, i32) {
    %c0_i32 = arith.constant 0 : i32
    %c0_i32_0 = arith.constant 0 : i32
    return %arg0, %c0_i32 : i32, i32
  }
  func.func @transform_1(%arg0: i32) -> (i32, i32) {
    %c0_i32 = arith.constant 0 : i32
    %0 = arith.subi %c0_i32, %arg0 : i32
    %c1_i32 = arith.constant 1 : i32
    %c0_i32_0 = arith.constant 0 : i32
    return %0, %c1_i32 : i32, i32
  }
  func.func @transform_2(%arg0: i32) -> (i32, i32, i32) {
    %c0_i32 = arith.constant 0 : i32
    %c0_i32_0 = arith.constant 0 : i32
    %c0_i32_1 = arith.constant 0 : i32
    %c0_i32_2 = arith.constant 0 : i32
    return %c0_i32, %c0_i32_0, %c0_i32_1 : i32, i32, i32
  }
  func.func @transform_3(%arg0: i32) -> (i32, i32) {
    %c0_i32 = arith.constant 0 : i32
    %c0_i32_0 = arith.constant 0 : i32
    return %arg0, %c0_i32 : i32, i32
  }
  func.func @transform_4(%arg0: i32) -> (i32, i32) {
    %c0_i32 = arith.constant 0 : i32
    %0 = arith.subi %c0_i32, %arg0 : i32
    %c0_i32_0 = arith.constant 0 : i32
    %c0_i32_1 = arith.constant 0 : i32
    return %0, %c0_i32_0 : i32, i32
  }
}

module attributes {stable_mosaic.version = 11 : i64} {
  func.func @_fc_ce_kernel(%arg0: i32, %arg1: memref<16x128xbf16, #tpu.memory_space<vmem>>, %arg2: memref<16x128xbf16, #tpu.memory_space<vmem>>, %arg3: memref<2x128x128xbf16, #tpu.memory_space<vmem>>, %arg4: memref<1x128xf32, #tpu.memory_space<vmem>>, %arg5: memref<16x1xi32, #tpu.memory_space<vmem>>, %arg6: memref<16x128xf32, #tpu.memory_space<vmem>>, %arg7: memref<1x1xf32, #tpu.memory_space<vmem>>) attributes {dimension_semantics = [#tpu.dimension_semantics<arbitrary>], iteration_bounds = array<i64: 1>, scalar_prefetch = 0 : i64, scratch_operands = 0 : i64, tpu.core_type = #tpu.core_type<tc>, window_params = [{transform_indices = @transform_0, window_bounds = array<i64: 16, 128>}, {transform_indices = @transform_1, window_bounds = array<i64: 16, 128>}, {pipeline_mode = #tpu.pipeline_mode<synchronous>, transform_indices = @transform_2, window_bounds = array<i64: 2, 128, 128>}, {pipeline_mode = #tpu.pipeline_mode<synchronous>, transform_indices = @transform_3, window_bounds = array<i64: 1, 128>}, {transform_indices = @transform_4, window_bounds = array<i64: 16, 1>}, {transform_indices = @transform_5, window_bounds = array<i64: 16, 128>}, {pipeline_mode = #tpu.pipeline_mode<synchronous>, transform_indices = @transform_6, window_bounds = array<i64: 1, 1>}]} {
    %c0 = arith.constant 0 : index
    %c0_0 = arith.constant 0 : index
    %0 = vector.load %arg1[%c0, %c0_0] : memref<16x128xbf16, #tpu.memory_space<vmem>>, vector<16x128xbf16>
    %c0_1 = arith.constant 0 : index
    %c0_2 = arith.constant 0 : index
    %c0_3 = arith.constant 0 : index
    %1 = vector.load %arg3[%c0_1, %c0_2, %c0_3] : memref<2x128x128xbf16, #tpu.memory_space<vmem>>, vector<1x128x128xbf16>
    %2 = vector.shape_cast %1 : vector<1x128x128xbf16> to vector<128x128xbf16>
    %cst = arith.constant dense<0.000000e+00> : vector<16x128xf32>
    %3 = tpu.matmul %0, %2, %cst {dimension_numbers = #tpu.dot_dimension_numbers<[1], [0], [0], [1], [0, 0, 1, 1], [], []>} : vector<16x128xbf16>, vector<128x128xbf16>, vector<16x128xf32> -> vector<16x128xf32>
    %c0_4 = arith.constant 0 : index
    %c0_5 = arith.constant 0 : index
    %4 = vector.load %arg2[%c0_4, %c0_5] : memref<16x128xbf16, #tpu.memory_space<vmem>>, vector<16x128xbf16>
    %c1 = arith.constant 1 : index
    %c0_6 = arith.constant 0 : index
    %c0_7 = arith.constant 0 : index
    %5 = vector.load %arg3[%c1, %c0_6, %c0_7] : memref<2x128x128xbf16, #tpu.memory_space<vmem>>, vector<1x128x128xbf16>
    %6 = vector.shape_cast %5 : vector<1x128x128xbf16> to vector<128x128xbf16>
    %cst_8 = arith.constant dense<0.000000e+00> : vector<16x128xf32>
    %7 = tpu.matmul %4, %6, %cst_8 {dimension_numbers = #tpu.dot_dimension_numbers<[1], [0], [0], [1], [0, 0, 1, 1], [], []>} : vector<16x128xbf16>, vector<128x128xbf16>, vector<16x128xf32> -> vector<16x128xf32>
    %8 = arith.addf %3, %7 : vector<16x128xf32>
    %c0_9 = arith.constant 0 : index
    %c0_10 = arith.constant 0 : index
    %9 = vector.load %arg4[%c0_9, %c0_10] : memref<1x128xf32, #tpu.memory_space<vmem>>, vector<1x128xf32>
    %10 = vector.broadcast %9 : vector<1x128xf32> to vector<16x128xf32>
    %11 = arith.addf %8, %10 : vector<16x128xf32>
    %cst_11 = arith.constant dense<0xFF800000> : vector<16xf32>
    %12 = vector.multi_reduction <maximumf>, %11, %cst_11 [1] : vector<16x128xf32> to vector<16xf32>
    %13 = vector.shape_cast %12 : vector<16xf32> to vector<16x1xf32>
    %14 = vector.broadcast %13 : vector<16x1xf32> to vector<16x128xf32>
    %15 = arith.subf %11, %14 : vector<16x128xf32>
    %16 = math.exp %15 : vector<16x128xf32>
    %cst_12 = arith.constant dense<0.000000e+00> : vector<16xf32>
    %17 = vector.multi_reduction <add>, %16, %cst_12 [1] : vector<16x128xf32> to vector<16xf32>
    %18 = vector.shape_cast %17 : vector<16xf32> to vector<16x1xf32>
    %19 = math.log %18 : vector<16x1xf32>
    %20 = arith.addf %13, %19 : vector<16x1xf32>
    %21 = tpu.iota {dimensions = array<i32: 1>} : vector<16x128xi32>
    %c0_13 = arith.constant 0 : index
    %c0_14 = arith.constant 0 : index
    %22 = vector.load %arg5[%c0_13, %c0_14] : memref<16x1xi32, #tpu.memory_space<vmem>>, vector<16x1xi32>
    %23 = vector.broadcast %22 : vector<16x1xi32> to vector<16x128xi32>
    %24 = arith.cmpi eq, %21, %23 : vector<16x128xi32>
    %cst_15 = arith.constant 0.000000e+00 : f32
    %25 = vector.broadcast %cst_15 : f32 to vector<16x128xf32>
    %26 = arith.select %24, %11, %25 : vector<16x128xi1>, vector<16x128xf32>
    %cst_16 = arith.constant dense<0.000000e+00> : vector<16xf32>
    %27 = vector.multi_reduction <add>, %26, %cst_16 [1] : vector<16x128xf32> to vector<16xf32>
    %28 = vector.shape_cast %27 : vector<16xf32> to vector<16x1xf32>
    %c0_17 = arith.constant 0 : index
    %c0_18 = arith.constant 0 : index
    %29 = vector.load %arg6[%c0_17, %c0_18] : memref<16x128xf32, #tpu.memory_space<vmem>>, vector<16x128xf32>
    tpu.vector_store %arg6[%c0_17, %c0_18], %11 {strides = array<i32>} : memref<16x128xf32, #tpu.memory_space<vmem>>, vector<16x128xf32>,
    %c16_i32 = arith.constant 16 : i32
    %30 = arith.muli %arg0, %c16_i32 : i32
    %31 = tpu.iota {dimensions = array<i32: 0>} : vector<16x1xi32>
    %32 = vector.broadcast %30 : i32 to vector<16x1xi32>
    %33 = arith.addi %32, %31 : vector<16x1xi32>
    %c16_i32_19 = arith.constant 16 : i32
    %34 = vector.broadcast %c16_i32_19 : i32 to vector<16x1xi32>
    %35 = arith.cmpi slt, %33, %34 : vector<16x1xi32>
    %36 = arith.subf %20, %28 : vector<16x1xf32>
    %cst_20 = arith.constant 0.000000e+00 : f32
    %37 = vector.broadcast %cst_20 : f32 to vector<16x1xf32>
    %38 = arith.select %35, %36, %37 : vector<16x1xi1>, vector<16x1xf32>
    %39 = vector.shape_cast %38 : vector<16x1xf32> to vector<1x16x1xf32>
    %cst_21 = arith.constant dense<0.000000e+00> : vector<1xf32>
    %40 = vector.multi_reduction <add>, %39, %cst_21 [1, 2] : vector<1x16x1xf32> to vector<1xf32>
    %41 = vector.shape_cast %40 : vector<1xf32> to vector<1x1x1xf32>
    %42 = vector.extract %41[0, 0, 0] : f32 from vector<1x1x1xf32>
    %43 = vector.broadcast %42 : f32 to vector<1x1xf32>
    %c0_i32 = arith.constant 0 : i32
    %44 = arith.cmpi eq, %arg0, %c0_i32 : i32
    %45 = arith.extui %44 : i1 to i32
    %c0_i32_22 = arith.constant 0 : i32
    %46 = arith.cmpi ne, %45, %c0_i32_22 : i32
    scf.if %46 {
      %cst_27 = arith.constant 0.000000e+00 : f32
      %50 = vector.broadcast %cst_27 : f32 to vector<1x1xf32>
      %c0_28 = arith.constant 0 : index
      %c0_29 = arith.constant 0 : index
      %51 = vector.load %arg7[%c0_28, %c0_29] : memref<1x1xf32, #tpu.memory_space<vmem>>, vector<1x1xf32>
      tpu.vector_store %arg7[%c0_28, %c0_29], %50 {strides = array<i32>} : memref<1x1xf32, #tpu.memory_space<vmem>>, vector<1x1xf32>,
    } else {
    }
    %c0_23 = arith.constant 0 : index
    %c0_24 = arith.constant 0 : index
    %47 = vector.load %arg7[%c0_23, %c0_24] : memref<1x1xf32, #tpu.memory_space<vmem>>, vector<1x1xf32>
    %48 = arith.addf %47, %43 : vector<1x1xf32>
    %c0_25 = arith.constant 0 : index
    %c0_26 = arith.constant 0 : index
    %49 = vector.load %arg7[%c0_25, %c0_26] : memref<1x1xf32, #tpu.memory_space<vmem>>, vector<1x1xf32>
    tpu.vector_store %arg7[%c0_25, %c0_26], %48 {strides = array<i32>} : memref<1x1xf32, #tpu.memory_space<vmem>>, vector<1x1xf32>,
    return
  }
  func.func @transform_0(%arg0: i32) -> (i32, i32) {
    %c0_i32 = arith.constant 0 : i32
    %c0_i32_0 = arith.constant 0 : i32
    return %arg0, %c0_i32 : i32, i32
  }
  func.func @transform_1(%arg0: i32) -> (i32, i32) {
    %c0_i32 = arith.constant 0 : i32
    %c0_i32_0 = arith.constant 0 : i32
    return %arg0, %c0_i32 : i32, i32
  }
  func.func @transform_2(%arg0: i32) -> (i32, i32, i32) {
    %c0_i32 = arith.constant 0 : i32
    %c0_i32_0 = arith.constant 0 : i32
    %c0_i32_1 = arith.constant 0 : i32
    %c0_i32_2 = arith.constant 0 : i32
    return %c0_i32, %c0_i32_0, %c0_i32_1 : i32, i32, i32
  }
  func.func @transform_3(%arg0: i32) -> (i32, i32) {
    %c0_i32 = arith.constant 0 : i32
    %c0_i32_0 = arith.constant 0 : i32
    %c0_i32_1 = arith.constant 0 : i32
    return %c0_i32, %c0_i32_0 : i32, i32
  }
  func.func @transform_4(%arg0: i32) -> (i32, i32) {
    %c0_i32 = arith.constant 0 : i32
    %c0_i32_0 = arith.constant 0 : i32
    return %arg0, %c0_i32 : i32, i32
  }
  func.func @transform_5(%arg0: i32) -> (i32, i32) {
    %c0_i32 = arith.constant 0 : i32
    %c0_i32_0 = arith.constant 0 : i32
    return %arg0, %c0_i32 : i32, i32
  }
  func.func @transform_6(%arg0: i32) -> (i32, i32) {
    %c0_i32 = arith.constant 0 : i32
    %c0_i32_0 = arith.constant 0 : i32
    %c0_i32_1 = arith.constant 0 : i32
    return %c0_i32, %c0_i32_0 : i32, i32
  }
}

</mosaic_0001>

<llo_original>
// kernel: bilstm_forward.5
$region0: #{bilstm_forward.5}
  #allocation0 [shape = 'u32[]', space=smem, size = 0x4, offset = 0x4, fixed_abs, tag = 'smem constant byte address 0x4 - core index']
  #allocation1 [shape = 'u32[72,128]{1,0:T(1,128)}', space=vmem, size = 0x9000, scoped, tag = 'internal scratch']
  %s0 = inlined_call_operand.vmem [shape: bf16[16,128], index: 0, kind: input, shape index: {}]
  %s1 = inlined_call_operand.hbm [shape: bf16[128,1024], index: 1, kind: input, shape index: {}]
  %s2 = inlined_call_operand.vmem [shape: f32[1,1024], index: 2, kind: input, shape index: {}]
  %s3 = inlined_call_operand.vmem [shape: f32[16,1024], index: 3, kind: output, shape index: {}]
  %s4 = sld [smem:[#allocation0]]
  $region26: #{bilstm_forward.5} parent=0
    _
  %s6 = ssub.s32 1, %s4
  %s7 = scalar_select 0, %s6, %s4
  $region1: #{bilstm_forward.5} parent=0
    #allocation2 [shape = 'u8[262144]{0}', space=vmem, size = 0x40000, scoped, tag = 'input window, operand 1, single buffered']
    #allocation3 [shape = 's32[1]{0}', space=sflag, size = 0x4, scoped, tag = 'scoped memory for bilstm_forward.5']
    %8 = vsyncpa [#allocation3], 0
    // Predicated region
    $region2: #{bilstm_forward.5} parent=1 // pred_check
      _
    $region3: #{bilstm_forward.5} parent=1 // pred_check_branch
      %10 = sbr.rel (0) target = $region5
    $region4: #{bilstm_forward.5} parent=1 // pred_region
      _
    $region5: #{bilstm_forward.5} parent=1 // pred_fallthru
      _
    // Predicated region
    $region6: #{bilstm_forward.5} parent=1 // pred_check
      _
    $region7: #{bilstm_forward.5} parent=1 // pred_check_branch
      %12 = sbr.rel (0) target = $region9
    $region8: #{bilstm_forward.5} parent=1 // pred_region
      %14 = vsyncadd [#allocation3], 0
      %s15 = sshll.u32 %s1, 4
      %s16 = int_to_ptr.hbm [resolvable:$true] %s15
      %s17 = sshll.u32 [#allocation2], 4
      %s18 = int_to_ptr.vmem [resolvable:$true] %s17
      %23 = dma.hbm_to_vmem [thread:$0]  %s16, 8192, %s18, [#allocation3], 512, 512, 32
    $region9: #{bilstm_forward.5} parent=1 // pred_fallthru
      _
    // Predicated region
    $region10: #{bilstm_forward.5} parent=1 // pred_check
      _
    $region11: #{bilstm_forward.5} parent=1 // pred_check_branch
      %25 = sbr.rel (0) target = $region13
    $region12: #{bilstm_forward.5} parent=1 // pred_region
      _
    $region13: #{bilstm_forward.5} parent=1 // pred_fallthru
      _
    // Predicated region
    $region14: #{bilstm_forward.5} parent=1 // pred_check
      _
    $region15: #{bilstm_forward.5} parent=1 // pred_check_branch
      %27 = sbr.rel (0) target = $region17
    $region16: #{bilstm_forward.5} parent=1 // pred_region
      %29 = dma.done [#allocation3], 8192
    $region17: #{bilstm_forward.5} parent=1 // pred_fallthru
      _
    %v30 = vld [vmem:[%s0] sm:$0xf]
    %v31 = vld [vmem:[%s0 + $0x4] sm:$0xf]
    %v32 = vld [vmem:[#allocation2] sm:$0xff]
    %v33 = vld [vmem:[#allocation2 + $0x8] sm:$0xff]
    %v34 = vld [vmem:[#allocation2 + $0x10] sm:$0xff]
    %v35 = vld [vmem:[#allocation2 + $0x18] sm:$0xff]
    %v36 = vld [vmem:[#allocation2 + $0x20] sm:$0xff]
    %v37 = vld [vmem:[#allocation2 + $0x28] sm:$0xff]
    %v38 = vld [vmem:[#allocation2 + $0x30] sm:$0xff]
    %v39 = vld [vmem:[#allocation2 + $0x38] sm:$0xff]
    %v40 = vld [vmem:[#allocation2 + $0x40] sm:$0xff]
    %v41 = vld [vmem:[#allocation2 + $0x48] sm:$0xff]
    %v42 = vld [vmem:[#allocation2 + $0x50] sm:$0xff]
    %v43 = vld [vmem:[#allocation2 + $0x58] sm:$0xff]
    %v44 = vld [vmem:[#allocation2 + $0x60] sm:$0xff]
    %v45 = vld [vmem:[#allocation2 + $0x68] sm:$0xff]
    %v46 = vld [vmem:[#allocation2 + $0x70] sm:$0xff]
    %v47 = vld [vmem:[#allocation2 + $0x78] sm:$0xff]
    %v48 = vld [vmem:[#allocation2 + $0x80] sm:$0xff]
    %v49 = vld [vmem:[#allocation2 + $0x88] sm:$0xff]
    %v50 = vld [vmem:[#allocation2 + $0x90] sm:$0xff]
    %v51 = vld [vmem:[#allocation2 + $0x98] sm:$0xff]
    %v52 = vld [vmem:[#allocation2 + $0xa0] sm:$0xff]
    %v53 = vld [vmem:[#allocation2 + $0xa8] sm:$0xff]
    %v54 = vld [vmem:[#allocation2 + $0xb0] sm:$0xff]
    %v55 = vld [vmem:[#allocation2 + $0xb8] sm:$0xff]
    %v56 = vld [vmem:[#allocation2 + $0xc0] sm:$0xff]
    %v57 = vld [vmem:[#allocation2 + $0xc8] sm:$0xff]
    %v58 = vld [vmem:[#allocation2 + $0xd0] sm:$0xff]
    %v59 = vld [vmem:[#allocation2 + $0xd8] sm:$0xff]
    %v60 = vld [vmem:[#allocation2 + $0xe0] sm:$0xff]
    %v61 = vld [vmem:[#allocation2 + $0xe8] sm:$0xff]
    %v62 = vld [vmem:[#allocation2 + $0xf0] sm:$0xff]
    %v63 = vld [vmem:[#allocation2 + $0xf8] sm:$0xff]
    %v64 = vld [vmem:[#allocation2 + $0x100] sm:$0xff]
    %v65 = vld [vmem:[#allocation2 + $0x108] sm:$0xff]
    %v66 = vld [vmem:[#allocation2 + $0x110] sm:$0xff]
    %v67 = vld [vmem:[#allocation2 + $0x118] sm:$0xff]
    %v68 = vld [vmem:[#allocation2 + $0x120] sm:$0xff]
    %v69 = vld [vmem:[#allocation2 + $0x128] sm:$0xff]
    %v70 = vld [vmem:[#allocation2 + $0x130] sm:$0xff]
    %v71 = vld [vmem:[#allocation2 + $0x138] sm:$0xff]
    %v72 = vld [vmem:[#allocation2 + $0x140] sm:$0xff]
    %v73 = vld [vmem:[#allocation2 + $0x148] sm:$0xff]
    %v74 = vld [vmem:[#allocation2 + $0x150] sm:$0xff]
    %v75 = vld [vmem:[#allocation2 + $0x158] sm:$0xff]
    %v76 = vld [vmem:[#allocation2 + $0x160] sm:$0xff]
    %v77 = vld [vmem:[#allocation2 + $0x168] sm:$0xff]
    %v78 = vld [vmem:[#allocation2 + $0x170] sm:$0xff]
    %v79 = vld [vmem:[#allocation2 + $0x178] sm:$0xff]
    %v80 = vld [vmem:[#allocation2 + $0x180] sm:$0xff]
    %v81 = vld [vmem:[#allocation2 + $0x188] sm:$0xff]
    %v82 = vld [vmem:[#allocation2 + $0x190] sm:$0xff]
    %v83 = vld [vmem:[#allocation2 + $0x198] sm:$0xff]
    %v84 = vld [vmem:[#allocation2 + $0x1a0] sm:$0xff]
    %v85 = vld [vmem:[#allocation2 + $0x1a8] sm:$0xff]
    %v86 = vld [vmem:[#allocation2 + $0x1b0] sm:$0xff]
    %v87 = vld [vmem:[#allocation2 + $0x1b8] sm:$0xff]
    %v88 = vld [vmem:[#allocation2 + $0x1c0] sm:$0xff]
    %v89 = vld [vmem:[#allocation2 + $0x1c8] sm:$0xff]
    %v90 = vld [vmem:[#allocation2 + $0x1d0] sm:$0xff]
    %v91 = vld [vmem:[#allocation2 + $0x1d8] sm:$0xff]
    %v92 = vld [vmem:[#allocation2 + $0x1e0] sm:$0xff]
    %v93 = vld [vmem:[#allocation2 + $0x1e8] sm:$0xff]
    %v94 = vld [vmem:[#allocation2 + $0x1f0] sm:$0xff]
    %v95 = vld [vmem:[#allocation2 + $0x1f8] sm:$0xff]
    %v96 = vld [vmem:[%s2] sm:$0xff]
    %v98 = vperm.slane %v96, 0
    %v99 = vperm.slane %v96, 1
    %v100 = vperm.slane %v96, 2
    %v101 = vperm.slane %v96, 3
    %v102 = vperm.slane %v96, 4
    %v103 = vperm.slane %v96, 5
    %v104 = vperm.slane %v96, 6
    %v105 = vperm.slane %v96, 7
    %v116 = vunpack.c.l.b16 %v30
    %v117 = vunpack.c.l.b16 %v31
    %v118 = vpack.c.b16 %v117, %v116
    %v184 = vunpack.c.l.b16 %v32
    %v185 = vunpack.c.h.b16 %v32
    %v186 = vunpack.c.l.b16 %v33
    %v187 = vunpack.c.h.b16 %v33
    %v188 = vunpack.c.l.b16 %v34
    %v189 = vunpack.c.h.b16 %v34
    %v190 = vunpack.c.l.b16 %v35
    %v191 = vunpack.c.h.b16 %v35
    %v192 = vunpack.c.l.b16 %v36
    %v193 = vunpack.c.h.b16 %v36
    %v194 = vunpack.c.l.b16 %v37
    %v195 = vunpack.c.h.b16 %v37
    %v196 = vunpack.c.l.b16 %v38
    %v197 = vunpack.c.h.b16 %v38
    %v198 = vunpack.c.l.b16 %v39
    %v199 = vunpack.c.h.b16 %v39
    %v200 = vunpack.c.l.b16 %v40
    %v201 = vunpack.c.h.b16 %v40
    %v202 = vunpack.c.l.b16 %v41
    %v203 = vunpack.c.h.b16 %v41
    %v204 = vunpack.c.l.b16 %v42
    %v205 = vunpack.c.h.b16 %v42
    %v206 = vunpack.c.l.b16 %v43
    %v207 = vunpack.c.h.b16 %v43
    %v208 = vunpack.c.l.b16 %v44
    %v209 = vunpack.c.h.b16 %v44
    %v210 = vunpack.c.l.b16 %v45
    %v211 = vunpack.c.h.b16 %v45
    %v212 = vunpack.c.l.b16 %v46
    %v213 = vunpack.c.h.b16 %v46
    %v214 = vunpack.c.l.b16 %v47
    %v215 = vunpack.c.h.b16 %v47
    %v216 = vunpack.c.l.b16 %v48
    %v217 = vunpack.c.h.b16 %v48
    %v218 = vunpack.c.l.b16 %v49
    %v219 = vunpack.c.h.b16 %v49
    %v220 = vunpack.c.l.b16 %v50
    %v221 = vunpack.c.h.b16 %v50
    %v222 = vunpack.c.l.b16 %v51
    %v223 = vunpack.c.h.b16 %v51
    %v224 = vunpack.c.l.b16 %v52
    %v225 = vunpack.c.h.b16 %v52
    %v226 = vunpack.c.l.b16 %v53
    %v227 = vunpack.c.h.b16 %v53
    %v228 = vunpack.c.l.b16 %v54
    %v229 = vunpack.c.h.b16 %v54
    %v230 = vunpack.c.l.b16 %v55
    %v231 = vunpack.c.h.b16 %v55
    %v232 = vunpack.c.l.b16 %v56
    %v233 = vunpack.c.h.b16 %v56
    %v234 = vunpack.c.l.b16 %v57
    %v235 = vunpack.c.h.b16 %v57
    %v236 = vunpack.c.l.b16 %v58
    %v237 = vunpack.c.h.b16 %v58
    %v238 = vunpack.c.l.b16 %v59
    %v239 = vunpack.c.h.b16 %v59
    %v240 = vunpack.c.l.b16 %v60
    %v241 = vunpack.c.h.b16 %v60
    %v242 = vunpack.c.l.b16 %v61
    %v243 = vunpack.c.h.b16 %v61
    %v244 = vunpack.c.l.b16 %v62
    %v245 = vunpack.c.h.b16 %v62
    %v246 = vunpack.c.l.b16 %v63
    %v247 = vunpack.c.h.b16 %v63
    %v248 = vunpack.c.l.b16 %v64
    %v249 = vunpack.c.h.b16 %v64
    %v250 = vunpack.c.l.b16 %v65
    %v251 = vunpack.c.h.b16 %v65
    %v252 = vunpack.c.l.b16 %v66
    %v253 = vunpack.c.h.b16 %v66
    %v254 = vunpack.c.l.b16 %v67
    %v255 = vunpack.c.h.b16 %v67
    %v256 = vunpack.c.l.b16 %v68
    %v257 = vunpack.c.h.b16 %v68
    %v258 = vunpack.c.l.b16 %v69
    %v259 = vunpack.c.h.b16 %v69
    %v260 = vunpack.c.l.b16 %v70
    %v261 = vunpack.c.h.b16 %v70
    %v262 = vunpack.c.l.b16 %v71
    %v263 = vunpack.c.h.b16 %v71
    %v264 = vunpack.c.l.b16 %v72
    %v265 = vunpack.c.h.b16 %v72
    %v266 = vunpack.c.l.b16 %v73
    %v267 = vunpack.c.h.b16 %v73
    %v268 = vunpack.c.l.b16 %v74
    %v269 = vunpack.c.h.b16 %v74
    %v270 = vunpack.c.l.b16 %v75
    %v271 = vunpack.c.h.b16 %v75
    %v272 = vunpack.c.l.b16 %v76
    %v273 = vunpack.c.h.b16 %v76
    %v274 = vunpack.c.l.b16 %v77
    %v275 = vunpack.c.h.b16 %v77
    %v276 = vunpack.c.l.b16 %v78
    %v277 = vunpack.c.h.b16 %v78
    %v278 = vunpack.c.l.b16 %v79
    %v279 = vunpack.c.h.b16 %v79
    %v280 = vunpack.c.l.b16 %v80
    %v281 = vunpack.c.h.b16 %v80
    %v282 = vunpack.c.l.b16 %v81
    %v283 = vunpack.c.h.b16 %v81
    %v284 = vunpack.c.l.b16 %v82
    %v285 = vunpack.c.h.b16 %v82
    %v286 = vunpack.c.l.b16 %v83
    %v287 = vunpack.c.h.b16 %v83
    %v288 = vunpack.c.l.b16 %v84
    %v289 = vunpack.c.h.b16 %v84
    %v290 = vunpack.c.l.b16 %v85
    %v291 = vunpack.c.h.b16 %v85
    %v292 = vunpack.c.l.b16 %v86
    %v293 = vunpack.c.h.b16 %v86
    %v294 = vunpack.c.l.b16 %v87
    %v295 = vunpack.c.h.b16 %v87
    %v296 = vunpack.c.l.b16 %v88
    %v297 = vunpack.c.h.b16 %v88
    %v298 = vunpack.c.l.b16 %v89
    %v299 = vunpack.c.h.b16 %v89
    %v300 = vunpack.c.l.b16 %v90
    %v301 = vunpack.c.h.b16 %v90
    %v302 = vunpack.c.l.b16 %v91
    %v303 = vunpack.c.h.b16 %v91
    %v304 = vunpack.c.l.b16 %v92
    %v305 = vunpack.c.h.b16 %v92
    %v306 = vunpack.c.l.b16 %v93
    %v307 = vunpack.c.h.b16 %v93
    %v308 = vunpack.c.l.b16 %v94
    %v309 = vunpack.c.h.b16 %v94
    %v310 = vunpack.c.l.b16 %v95
    %v311 = vunpack.c.h.b16 %v95
    %v312 = vpack.c.b16 %v192, %v184
    %v313 = vpack.c.b16 %v193, %v185
    %v314 = vpack.c.b16 %v194, %v186
    %v315 = vpack.c.b16 %v195, %v187
    %v316 = vpack.c.b16 %v196, %v188
    %v317 = vpack.c.b16 %v197, %v189
    %v318 = vpack.c.b16 %v198, %v190
    %v319 = vpack.c.b16 %v199, %v191
    %v320 = vpack.c.b16 %v208, %v200
    %v321 = vpack.c.b16 %v209, %v201
    %v322 = vpack.c.b16 %v210, %v202
    %v323 = vpack.c.b16 %v211, %v203
    %v324 = vpack.c.b16 %v212, %v204
    %v325 = vpack.c.b16 %v213, %v205
    %v326 = vpack.c.b16 %v214, %v206
    %v327 = vpack.c.b16 %v215, %v207
    %v328 = vpack.c.b16 %v224, %v216
    %v329 = vpack.c.b16 %v225, %v217
    %v330 = vpack.c.b16 %v226, %v218
    %v331 = vpack.c.b16 %v227, %v219
    %v332 = vpack.c.b16 %v228, %v220
    %v333 = vpack.c.b16 %v229, %v221
    %v334 = vpack.c.b16 %v230, %v222
    %v335 = vpack.c.b16 %v231, %v223
    %v336 = vpack.c.b16 %v240, %v232
    %v337 = vpack.c.b16 %v241, %v233
    %v338 = vpack.c.b16 %v242, %v234
    %v339 = vpack.c.b16 %v243, %v235
    %v340 = vpack.c.b16 %v244, %v236
    %v341 = vpack.c.b16 %v245, %v237
    %v342 = vpack.c.b16 %v246, %v238
    %v343 = vpack.c.b16 %v247, %v239
    %v344 = vpack.c.b16 %v256, %v248
    %v345 = vpack.c.b16 %v257, %v249
    %v346 = vpack.c.b16 %v258, %v250
    %v347 = vpack.c.b16 %v259, %v251
    %v348 = vpack.c.b16 %v260, %v252
    %v349 = vpack.c.b16 %v261, %v253
    %v350 = vpack.c.b16 %v262, %v254
    %v351 = vpack.c.b16 %v263, %v255
    %v352 = vpack.c.b16 %v272, %v264
    %v353 = vpack.c.b16 %v273, %v265
    %v354 = vpack.c.b16 %v274, %v266
    %v355 = vpack.c.b16 %v275, %v267
    %v356 = vpack.c.b16 %v276, %v268
    %v357 = vpack.c.b16 %v277, %v269
    %v358 = vpack.c.b16 %v278, %v270
    %v359 = vpack.c.b16 %v279, %v271
    %v360 = vpack.c.b16 %v288, %v280
    %v361 = vpack.c.b16 %v289, %v281
    %v362 = vpack.c.b16 %v290, %v282
    %v363 = vpack.c.b16 %v291, %v283
    %v364 = vpack.c.b16 %v292, %v284
    %v365 = vpack.c.b16 %v293, %v285
    %v366 = vpack.c.b16 %v294, %v286
    %v367 = vpack.c.b16 %v295, %v287
    %v368 = vpack.c.b16 %v304, %v296
    %v369 = vpack.c.b16 %v305, %v297
    %v370 = vpack.c.b16 %v306, %v298
    %v371 = vpack.c.b16 %v307, %v299
    %v372 = vpack.c.b16 %v308, %v300
    %v373 = vpack.c.b16 %v309, %v301
    %v374 = vpack.c.b16 %v310, %v302
    %v375 = vpack.c.b16 %v311, %v303
    %440 = vmatpush.bf16.msra.mxu0 %v368
    %441 = vmatpush.bf16.msra.mxu0 %v360
    %442 = vmatpush.bf16.msra.mxu0 %v352
    %443 = vmatpush.bf16.msra.mxu0 %v344
    %444 = vmatpush.bf16.msra.mxu0 %v336
    %445 = vmatpush.bf16.msra.mxu0 %v328
    %446 = vmatpush.bf16.msra.mxu0 %v320
    %447 = vmatpush.bf16.msra.mxu0 %v312
    %448 = vmatmul.bf16.gmra.mxu0 %v118
    %v449 = vpop.f32.mrf.mxu0
    %v450 = vadd.f32 %v98, %v449
    %v451 = vpop.f32.mrf.mxu0
    %v452 = vadd.f32 %v98, %v451
    %453 = vdwg.mxu0
    %454 = vmatpush.bf16.msra.mxu0 %v369
    %455 = vmatpush.bf16.msra.mxu0 %v361
    %456 = vmatpush.bf16.msra.mxu0 %v353
    %457 = vmatpush.bf16.msra.mxu0 %v345
    %458 = vmatpush.bf16.msra.mxu0 %v337
    %459 = vmatpush.bf16.msra.mxu0 %v329
    %460 = vmatpush.bf16.msra.mxu0 %v321
    %461 = vmatpush.bf16.msra.mxu0 %v313
    %462 = vmatmul.bf16.gmra.mxu0 %v118
    %v463 = vpop.f32.mrf.mxu0
    %v464 = vadd.f32 %v99, %v463
    %v465 = vpop.f32.mrf.mxu0
    %v466 = vadd.f32 %v99, %v465
    %467 = vdwg.mxu0
    %468 = vmatpush.bf16.msra.mxu0 %v370
    %469 = vmatpush.bf16.msra.mxu0 %v362
    %470 = vmatpush.bf16.msra.mxu0 %v354
    %471 = vmatpush.bf16.msra.mxu0 %v346
    %472 = vmatpush.bf16.msra.mxu0 %v338
    %473 = vmatpush.bf16.msra.mxu0 %v330
    %474 = vmatpush.bf16.msra.mxu0 %v322
    %475 = vmatpush.bf16.msra.mxu0 %v314
    %476 = vmatmul.bf16.gmra.mxu0 %v118
    %v477 = vpop.f32.mrf.mxu0
    %v478 = vadd.f32 %v100, %v477
    %v479 = vpop.f32.mrf.mxu0
    %v480 = vadd.f32 %v100, %v479
    %481 = vdwg.mxu0
    %482 = vmatpush.bf16.msra.mxu0 %v371
    %483 = vmatpush.bf16.msra.mxu0 %v363
    %484 = vmatpush.bf16.msra.mxu0 %v355
    %485 = vmatpush.bf16.msra.mxu0 %v347
    %486 = vmatpush.bf16.msra.mxu0 %v339
    %487 = vmatpush.bf16.msra.mxu0 %v331
    %488 = vmatpush.bf16.msra.mxu0 %v323
    %489 = vmatpush.bf16.msra.mxu0 %v315
    %490 = vmatmul.bf16.gmra.mxu0 %v118
    %v491 = vpop.f32.mrf.mxu0
    %v492 = vadd.f32 %v101, %v491
    %v493 = vpop.f32.mrf.mxu0
    %v494 = vadd.f32 %v101, %v493
    %495 = vdwg.mxu0
    %496 = vmatpush.bf16.msra.mxu0 %v372
    %497 = vmatpush.bf16.msra.mxu0 %v364
    %498 = vmatpush.bf16.msra.mxu0 %v356
    %499 = vmatpush.bf16.msra.mxu0 %v348
    %500 = vmatpush.bf16.msra.mxu0 %v340
    %501 = vmatpush.bf16.msra.mxu0 %v332
    %502 = vmatpush.bf16.msra.mxu0 %v324
    %503 = vmatpush.bf16.msra.mxu0 %v316
    %504 = vmatmul.bf16.gmra.mxu0 %v118
    %v505 = vpop.f32.mrf.mxu0
    %v506 = vadd.f32 %v102, %v505
    %v507 = vpop.f32.mrf.mxu0
    %v508 = vadd.f32 %v102, %v507
    %509 = vdwg.mxu0
    %510 = vmatpush.bf16.msra.mxu0 %v373
    %511 = vmatpush.bf16.msra.mxu0 %v365
    %512 = vmatpush.bf16.msra.mxu0 %v357
    %513 = vmatpush.bf16.msra.mxu0 %v349
    %514 = vmatpush.bf16.msra.mxu0 %v341
    %515 = vmatpush.bf16.msra.mxu0 %v333
    %516 = vmatpush.bf16.msra.mxu0 %v325
    %517 = vmatpush.bf16.msra.mxu0 %v317
    %518 = vmatmul.bf16.gmra.mxu0 %v118
    %v519 = vpop.f32.mrf.mxu0
    %v520 = vadd.f32 %v103, %v519
    %v521 = vpop.f32.mrf.mxu0
    %v522 = vadd.f32 %v103, %v521
    %523 = vdwg.mxu0
    %524 = vmatpush.bf16.msra.mxu0 %v374
    %525 = vmatpush.bf16.msra.mxu0 %v366
    %526 = vmatpush.bf16.msra.mxu0 %v358
    %527 = vmatpush.bf16.msra.mxu0 %v350
    %528 = vmatpush.bf16.msra.mxu0 %v342
    %529 = vmatpush.bf16.msra.mxu0 %v334
    %530 = vmatpush.bf16.msra.mxu0 %v326
    %531 = vmatpush.bf16.msra.mxu0 %v318
    %532 = vmatmul.bf16.gmra.mxu0 %v118
    %v533 = vpop.f32.mrf.mxu0
    %v534 = vadd.f32 %v104, %v533
    %v535 = vpop.f32.mrf.mxu0
    %v536 = vadd.f32 %v104, %v535
    %537 = vdwg.mxu0
    %538 = vmatpush.bf16.msra.mxu0 %v375
    %539 = vmatpush.bf16.msra.mxu0 %v367
    %540 = vmatpush.bf16.msra.mxu0 %v359
    %541 = vmatpush.bf16.msra.mxu0 %v351
    %542 = vmatpush.bf16.msra.mxu0 %v343
    %543 = vmatpush.bf16.msra.mxu0 %v335
    %544 = vmatpush.bf16.msra.mxu0 %v327
    %545 = vmatpush.bf16.msra.mxu0 %v319
    %546 = vmatmul.bf16.gmra.mxu0 %v118
    %v547 = vpop.f32.mrf.mxu0
    %v548 = vadd.f32 %v105, %v547
    %v549 = vpop.f32.mrf.mxu0
    %v550 = vadd.f32 %v105, %v549
    %551 = vdwg.mxu0
    %552 = vst [vmem:[%s3] sm:$0xff] %v450
    %553 = vst [vmem:[%s3 + $0x8] sm:$0xff] %v464
    %554 = vst [vmem:[%s3 + $0x10] sm:$0xff] %v478
    %555 = vst [vmem:[%s3 + $0x18] sm:$0xff] %v492
    %556 = vst [vmem:[%s3 + $0x20] sm:$0xff] %v506
    %557 = vst [vmem:[%s3 + $0x28] sm:$0xff] %v520
    %558 = vst [vmem:[%s3 + $0x30] sm:$0xff] %v534
    %559 = vst [vmem:[%s3 + $0x38] sm:$0xff] %v548
    %560 = vst [vmem:[%s3 + $0x40] sm:$0xff] %v452
    %561 = vst [vmem:[%s3 + $0x48] sm:$0xff] %v466
    %562 = vst [vmem:[%s3 + $0x50] sm:$0xff] %v480
    %563 = vst [vmem:[%s3 + $0x58] sm:$0xff] %v494
    %564 = vst [vmem:[%s3 + $0x60] sm:$0xff] %v508
    %565 = vst [vmem:[%s3 + $0x68] sm:$0xff] %v522
    %566 = vst [vmem:[%s3 + $0x70] sm:$0xff] %v536
    %567 = vst [vmem:[%s3 + $0x78] sm:$0xff] %v550
    // Predicated region
    $region18: #{bilstm_forward.5} parent=1 // pred_check
      _
    $region19: #{bilstm_forward.5} parent=1 // pred_check_branch
      %569 = sbr.rel (0) target = $region21
    $region20: #{bilstm_forward.5} parent=1 // pred_region
      _
    $region21: #{bilstm_forward.5} parent=1 // pred_fallthru
      _
    // Predicated region
    $region22: #{bilstm_forward.5} parent=1 // pred_check
      _
    $region23: #{bilstm_forward.5} parent=1 // pred_check_branch
      %571 = sbr.rel (0) target = $region25
    $region24: #{bilstm_forward.5} parent=1 // pred_region
      _
    $region25: #{bilstm_forward.5} parent=1 // pred_fallthru
      _
    %572 = vsyncpa [#allocation3], 1

// kernel: bilstm_forward.7
$region0: #{bilstm_forward.7}
  #allocation0 [shape = 'u32[]', space=smem, size = 0x4, offset = 0x4, fixed_abs, tag = 'smem constant byte address 0x4 - core index']
  #allocation1 [shape = 'u32[72,128]{1,0:T(1,128)}', space=vmem, size = 0x9000, scoped, tag = 'internal scratch']
  %s0 = inlined_call_operand.vmem [shape: bf16[16,128], index: 0, kind: input, shape index: {}]
  %s1 = inlined_call_operand.vmem [shape: bf16[16,128], index: 1, kind: input, shape index: {}]
  %s2 = inlined_call_operand.hbm [shape: bf16[2,128,1024], index: 2, kind: input, shape index: {}]
  %s3 = inlined_call_operand.vmem [shape: f32[1,1024], index: 3, kind: input, shape index: {}]
  %s4 = inlined_call_operand.vmem [shape: f32[16,1024], index: 4, kind: output, shape index: {}]
  %s5 = sld [smem:[#allocation0]]
  $region30: #{bilstm_forward.7} parent=0
    _
  %s7 = ssub.s32 1, %s5
  %s8 = scalar_select 0, %s7, %s5
  $region1: #{bilstm_forward.7} parent=0
    #allocation2 [shape = 'u8[524288]{0}', space=vmem, size = 0x80000, scoped, tag = 'input window, operand 2, single buffered']
    #allocation3 [shape = 's32[1]{0}', space=sflag, size = 0x4, scoped, tag = 'scoped memory for bilstm_forward.7']
    %9 = vsyncpa [#allocation3], 0
    // Predicated region
    $region2: #{bilstm_forward.7} parent=1 // pred_check
      _
    $region3: #{bilstm_forward.7} parent=1 // pred_check_branch
      %11 = sbr.rel (0) target = $region5
    $region4: #{bilstm_forward.7} parent=1 // pred_region
      _
    $region5: #{bilstm_forward.7} parent=1 // pred_fallthru
      _
    // Predicated region
    $region6: #{bilstm_forward.7} parent=1 // pred_check
      _
    $region7: #{bilstm_forward.7} parent=1 // pred_check_branch
      %13 = sbr.rel (0) target = $region9
    $region8: #{bilstm_forward.7} parent=1 // pred_region
      _
    $region9: #{bilstm_forward.7} parent=1 // pred_fallthru
      _
    // Predicated region
    $region10: #{bilstm_forward.7} parent=1 // pred_check
      _
    $region11: #{bilstm_forward.7} parent=1 // pred_check_branch
      %15 = sbr.rel (0) target = $region13
    $region12: #{bilstm_forward.7} parent=1 // pred_region
      %17 = vsyncadd [#allocation3], 0
      %s18 = sshll.u32 %s2, 4
      %s19 = int_to_ptr.hbm [resolvable:$true] %s18
      %s20 = sshll.u32 [#allocation2], 4
      %s21 = int_to_ptr.vmem [resolvable:$true] %s20
      %26 = dma.hbm_to_vmem [thread:$0]  %s19, 16384, %s21, [#allocation3], 512, 512, 32
    $region13: #{bilstm_forward.7} parent=1 // pred_fallthru
      _
    // Predicated region
    $region14: #{bilstm_forward.7} parent=1 // pred_check
      _
    $region15: #{bilstm_forward.7} parent=1 // pred_check_branch
      %28 = sbr.rel (0) target = $region17
    $region16: #{bilstm_forward.7} parent=1 // pred_region
      _
    $region17: #{bilstm_forward.7} parent=1 // pred_fallthru
      _
    // Predicated region
    $region18: #{bilstm_forward.7} parent=1 // pred_check
      _
    $region19: #{bilstm_forward.7} parent=1 // pred_check_branch
      %30 = sbr.rel (0) target = $region21
    $region20: #{bilstm_forward.7} parent=1 // pred_region
      %32 = dma.done [#allocation3], 16384
    $region21: #{bilstm_forward.7} parent=1 // pred_fallthru
      _
    %v33 = vld [vmem:[%s0] sm:$0xf]
    %v34 = vld [vmem:[%s0 + $0x4] sm:$0xf]
    %v35 = vld [vmem:[#allocation2] sm:$0xff]
    %v36 = vld [vmem:[#allocation2 + $0x8] sm:$0xff]
    %v37 = vld [vmem:[#allocation2 + $0x10] sm:$0xff]
    %v38 = vld [vmem:[#allocation2 + $0x18] sm:$0xff]
    %v39 = vld [vmem:[#allocation2 + $0x20] sm:$0xff]
    %v40 = vld [vmem:[#allocation2 + $0x28] sm:$0xff]
    %v41 = vld [vmem:[#allocation2 + $0x30] sm:$0xff]
    %v42 = vld [vmem:[#allocation2 + $0x38] sm:$0xff]
    %v43 = vld [vmem:[#allocation2 + $0x40] sm:$0xff]
    %v44 = vld [vmem:[#allocation2 + $0x48] sm:$0xff]
    %v45 = vld [vmem:[#allocation2 + $0x50] sm:$0xff]
    %v46 = vld [vmem:[#allocation2 + $0x58] sm:$0xff]
    %v47 = vld [vmem:[#allocation2 + $0x60] sm:$0xff]
    %v48 = vld [vmem:[#allocation2 + $0x68] sm:$0xff]
    %v49 = vld [vmem:[#allocation2 + $0x70] sm:$0xff]
    %v50 = vld [vmem:[#allocation2 + $0x78] sm:$0xff]
    %v51 = vld [vmem:[#allocation2 + $0x80] sm:$0xff]
    %v52 = vld [vmem:[#allocation2 + $0x88] sm:$0xff]
    %v53 = vld [vmem:[#allocation2 + $0x90] sm:$0xff]
    %v54 = vld [vmem:[#allocation2 + $0x98] sm:$0xff]
    %v55 = vld [vmem:[#allocation2 + $0xa0] sm:$0xff]
    %v56 = vld [vmem:[#allocation2 + $0xa8] sm:$0xff]
    %v57 = vld [vmem:[#allocation2 + $0xb0] sm:$0xff]
    %v58 = vld [vmem:[#allocation2 + $0xb8] sm:$0xff]
    %v59 = vld [vmem:[#allocation2 + $0xc0] sm:$0xff]
    %v60 = vld [vmem:[#allocation2 + $0xc8] sm:$0xff]
    %v61 = vld [vmem:[#allocation2 + $0xd0] sm:$0xff]
    %v62 = vld [vmem:[#allocation2 + $0xd8] sm:$0xff]
    %v63 = vld [vmem:[#allocation2 + $0xe0] sm:$0xff]
    %v64 = vld [vmem:[#allocation2 + $0xe8] sm:$0xff]
    %v65 = vld [vmem:[#allocation2 + $0xf0] sm:$0xff]
    %v66 = vld [vmem:[#allocation2 + $0xf8] sm:$0xff]
    %v67 = vld [vmem:[#allocation2 + $0x100] sm:$0xff]
    %v68 = vld [vmem:[#allocation2 + $0x108] sm:$0xff]
    %v69 = vld [vmem:[#allocation2 + $0x110] sm:$0xff]
    %v70 = vld [vmem:[#allocation2 + $0x118] sm:$0xff]
    %v71 = vld [vmem:[#allocation2 + $0x120] sm:$0xff]
    %v72 = vld [vmem:[#allocation2 + $0x128] sm:$0xff]
    %v73 = vld [vmem:[#allocation2 + $0x130] sm:$0xff]
    %v74 = vld [vmem:[#allocation2 + $0x138] sm:$0xff]
    %v75 = vld [vmem:[#allocation2 + $0x140] sm:$0xff]
    %v76 = vld [vmem:[#allocation2 + $0x148] sm:$0xff]
    %v77 = vld [vmem:[#allocation2 + $0x150] sm:$0xff]
    %v78 = vld [vmem:[#allocation2 + $0x158] sm:$0xff]
    %v79 = vld [vmem:[#allocation2 + $0x160] sm:$0xff]
    %v80 = vld [vmem:[#allocation2 + $0x168] sm:$0xff]
    %v81 = vld [vmem:[#allocation2 + $0x170] sm:$0xff]
    %v82 = vld [vmem:[#allocation2 + $0x178] sm:$0xff]
    %v83 = vld [vmem:[#allocation2 + $0x180] sm:$0xff]
    %v84 = vld [vmem:[#allocation2 + $0x188] sm:$0xff]
    %v85 = vld [vmem:[#allocation2 + $0x190] sm:$0xff]
    %v86 = vld [vmem:[#allocation2 + $0x198] sm:$0xff]
    %v87 = vld [vmem:[#allocation2 + $0x1a0] sm:$0xff]
    %v88 = vld [vmem:[#allocation2 + $0x1a8] sm:$0xff]
    %v89 = vld [vmem:[#allocation2 + $0x1b0] sm:$0xff]
    %v90 = vld [vmem:[#allocation2 + $0x1b8] sm:$0xff]
    %v91 = vld [vmem:[#allocation2 + $0x1c0] sm:$0xff]
    %v92 = vld [vmem:[#allocation2 + $0x1c8] sm:$0xff]
    %v93 = vld [vmem:[#allocation2 + $0x1d0] sm:$0xff]
    %v94 = vld [vmem:[#allocation2 + $0x1d8] sm:$0xff]
    %v95 = vld [vmem:[#allocation2 + $0x1e0] sm:$0xff]
    %v96 = vld [vmem:[#allocation2 + $0x1e8] sm:$0xff]
    %v97 = vld [vmem:[#allocation2 + $0x1f0] sm:$0xff]
    %v98 = vld [vmem:[#allocation2 + $0x1f8] sm:$0xff]
    %v99 = vld [vmem:[%s1] sm:$0xf]
    %v100 = vld [vmem:[%s1 + $0x4] sm:$0xf]
    %s101 = scalar_lea.vmem [#allocation2], 512
    %v102 = vld [vmem:[%s101] sm:$0xff]
    %v103 = vld [vmem:[%s101 + $0x8] sm:$0xff]
    %v104 = vld [vmem:[%s101 + $0x10] sm:$0xff]
    %v105 = vld [vmem:[%s101 + $0x18] sm:$0xff]
    %v106 = vld [vmem:[%s101 + $0x20] sm:$0xff]
    %v107 = vld [vmem:[%s101 + $0x28] sm:$0xff]
    %v108 = vld [vmem:[%s101 + $0x30] sm:$0xff]
    %v109 = vld [vmem:[%s101 + $0x38] sm:$0xff]
    %v110 = vld [vmem:[%s101 + $0x40] sm:$0xff]
    %v111 = vld [vmem:[%s101 + $0x48] sm:$0xff]
    %v112 = vld [vmem:[%s101 + $0x50] sm:$0xff]
    %v113 = vld [vmem:[%s101 + $0x58] sm:$0xff]
    %v114 = vld [vmem:[%s101 + $0x60] sm:$0xff]
    %v115 = vld [vmem:[%s101 + $0x68] sm:$0xff]
    %v116 = vld [vmem:[%s101 + $0x70] sm:$0xff]
    %v117 = vld [vmem:[%s101 + $0x78] sm:$0xff]
    %v118 = vld [vmem:[%s101 + $0x80] sm:$0xff]
    %v119 = vld [vmem:[%s101 + $0x88] sm:$0xff]
    %v120 = vld [vmem:[%s101 + $0x90] sm:$0xff]
    %v121 = vld [vmem:[%s101 + $0x98] sm:$0xff]
    %v122 = vld [vmem:[%s101 + $0xa0] sm:$0xff]
    %v123 = vld [vmem:[%s101 + $0xa8] sm:$0xff]
    %v124 = vld [vmem:[%s101 + $0xb0] sm:$0xff]
    %v125 = vld [vmem:[%s101 + $0xb8] sm:$0xff]
    %v126 = vld [vmem:[%s101 + $0xc0] sm:$0xff]
    %v127 = vld [vmem:[%s101 + $0xc8] sm:$0xff]
    %v128 = vld [vmem:[%s101 + $0xd0] sm:$0xff]
    %v129 = vld [vmem:[%s101 + $0xd8] sm:$0xff]
    %v130 = vld [vmem:[%s101 + $0xe0] sm:$0xff]
    %v131 = vld [vmem:[%s101 + $0xe8] sm:$0xff]
    %v132 = vld [vmem:[%s101 + $0xf0] sm:$0xff]
    %v133 = vld [vmem:[%s101 + $0xf8] sm:$0xff]
    %v134 = vld [vmem:[%s101 + $0x100] sm:$0xff]
    %v135 = vld [vmem:[%s101 + $0x108] sm:$0xff]
    %v136 = vld [vmem:[%s101 + $0x110] sm:$0xff]
    %v137 = vld [vmem:[%s101 + $0x118] sm:$0xff]
    %v138 = vld [vmem:[%s101 + $0x120] sm:$0xff]
    %v139 = vld [vmem:[%s101 + $0x128] sm:$0xff]
    %v140 = vld [vmem:[%s101 + $0x130] sm:$0xff]
    %v141 = vld [vmem:[%s101 + $0x138] sm:$0xff]
    %v142 = vld [vmem:[%s101 + $0x140] sm:$0xff]
    %v143 = vld [vmem:[%s101 + $0x148] sm:$0xff]
    %v144 = vld [vmem:[%s101 + $0x150] sm:$0xff]
    %v145 = vld [vmem:[%s101 + $0x158] sm:$0xff]
    %v146 = vld [vmem:[%s101 + $0x160] sm:$0xff]
    %v147 = vld [vmem:[%s101 + $0x168] sm:$0xff]
    %v148 = vld [vmem:[%s101 + $0x170] sm:$0xff]
    %v149 = vld [vmem:[%s101 + $0x178] sm:$0xff]
    %v150 = vld [vmem:[%s101 + $0x180] sm:$0xff]
    %v151 = vld [vmem:[%s101 + $0x188] sm:$0xff]
    %v152 = vld [vmem:[%s101 + $0x190] sm:$0xff]
    %v153 = vld [vmem:[%s101 + $0x198] sm:$0xff]
    %v154 = vld [vmem:[%s101 + $0x1a0] sm:$0xff]
    %v155 = vld [vmem:[%s101 + $0x1a8] sm:$0xff]
    %v156 = vld [vmem:[%s101 + $0x1b0] sm:$0xff]
    %v157 = vld [vmem:[%s101 + $0x1b8] sm:$0xff]
    %v158 = vld [vmem:[%s101 + $0x1c0] sm:$0xff]
    %v159 = vld [vmem:[%s101 + $0x1c8] sm:$0xff]
    %v160 = vld [vmem:[%s101 + $0x1d0] sm:$0xff]
    %v161 = vld [vmem:[%s101 + $0x1d8] sm:$0xff]
    %v162 = vld [vmem:[%s101 + $0x1e0] sm:$0xff]
    %v163 = vld [vmem:[%s101 + $0x1e8] sm:$0xff]
    %v164 = vld [vmem:[%s101 + $0x1f0] sm:$0xff]
    %v165 = vld [vmem:[%s101 + $0x1f8] sm:$0xff]
    %v168 = vunpack.c.l.b16 %v99
    %v169 = vunpack.c.l.b16 %v100
    %v170 = vpack.c.b16 %v169, %v168
    %v236 = vunpack.c.l.b16 %v102
    %v237 = vunpack.c.h.b16 %v102
    %v238 = vunpack.c.l.b16 %v103
    %v239 = vunpack.c.h.b16 %v103
    %v240 = vunpack.c.l.b16 %v104
    %v241 = vunpack.c.h.b16 %v104
    %v242 = vunpack.c.l.b16 %v105
    %v243 = vunpack.c.h.b16 %v105
    %v244 = vunpack.c.l.b16 %v106
    %v245 = vunpack.c.h.b16 %v106
    %v246 = vunpack.c.l.b16 %v107
    %v247 = vunpack.c.h.b16 %v107
    %v248 = vunpack.c.l.b16 %v108
    %v249 = vunpack.c.h.b16 %v108
    %v250 = vunpack.c.l.b16 %v109
    %v251 = vunpack.c.h.b16 %v109
    %v252 = vunpack.c.l.b16 %v110
    %v253 = vunpack.c.h.b16 %v110
    %v254 = vunpack.c.l.b16 %v111
    %v255 = vunpack.c.h.b16 %v111
    %v256 = vunpack.c.l.b16 %v112
    %v257 = vunpack.c.h.b16 %v112
    %v258 = vunpack.c.l.b16 %v113
    %v259 = vunpack.c.h.b16 %v113
    %v260 = vunpack.c.l.b16 %v114
    %v261 = vunpack.c.h.b16 %v114
    %v262 = vunpack.c.l.b16 %v115
    %v263 = vunpack.c.h.b16 %v115
    %v264 = vunpack.c.l.b16 %v116
    %v265 = vunpack.c.h.b16 %v116
    %v266 = vunpack.c.l.b16 %v117
    %v267 = vunpack.c.h.b16 %v117
    %v268 = vunpack.c.l.b16 %v118
    %v269 = vunpack.c.h.b16 %v118
    %v270 = vunpack.c.l.b16 %v119
    %v271 = vunpack.c.h.b16 %v119
    %v272 = vunpack.c.l.b16 %v120
    %v273 = vunpack.c.h.b16 %v120
    %v274 = vunpack.c.l.b16 %v121
    %v275 = vunpack.c.h.b16 %v121
    %v276 = vunpack.c.l.b16 %v122
    %v277 = vunpack.c.h.b16 %v122
    %v278 = vunpack.c.l.b16 %v123
    %v279 = vunpack.c.h.b16 %v123
    %v280 = vunpack.c.l.b16 %v124
    %v281 = vunpack.c.h.b16 %v124
    %v282 = vunpack.c.l.b16 %v125
    %v283 = vunpack.c.h.b16 %v125
    %v284 = vunpack.c.l.b16 %v126
    %v285 = vunpack.c.h.b16 %v126
    %v286 = vunpack.c.l.b16 %v127
    %v287 = vunpack.c.h.b16 %v127
    %v288 = vunpack.c.l.b16 %v128
    %v289 = vunpack.c.h.b16 %v128
    %v290 = vunpack.c.l.b16 %v129
    %v291 = vunpack.c.h.b16 %v129
    %v292 = vunpack.c.l.b16 %v130
    %v293 = vunpack.c.h.b16 %v130
    %v294 = vunpack.c.l.b16 %v131
    %v295 = vunpack.c.h.b16 %v131
    %v296 = vunpack.c.l.b16 %v132
    %v297 = vunpack.c.h.b16 %v132
    %v298 = vunpack.c.l.b16 %v133
    %v299 = vunpack.c.h.b16 %v133
    %v300 = vunpack.c.l.b16 %v134
    %v301 = vunpack.c.h.b16 %v134
    %v302 = vunpack.c.l.b16 %v135
    %v303 = vunpack.c.h.b16 %v135
    %v304 = vunpack.c.l.b16 %v136
    %v305 = vunpack.c.h.b16 %v136
    %v306 = vunpack.c.l.b16 %v137
    %v307 = vunpack.c.h.b16 %v137
    %v308 = vunpack.c.l.b16 %v138
    %v309 = vunpack.c.h.b16 %v138
    %v310 = vunpack.c.l.b16 %v139
    %v311 = vunpack.c.h.b16 %v139
    %v312 = vunpack.c.l.b16 %v140
    %v313 = vunpack.c.h.b16 %v140
    %v314 = vunpack.c.l.b16 %v141
    %v315 = vunpack.c.h.b16 %v141
    %v316 = vunpack.c.l.b16 %v142
    %v317 = vunpack.c.h.b16 %v142
    %v318 = vunpack.c.l.b16 %v143
    %v319 = vunpack.c.h.b16 %v143
    %v320 = vunpack.c.l.b16 %v144
    %v321 = vunpack.c.h.b16 %v144
    %v322 = vunpack.c.l.b16 %v145
    %v323 = vunpack.c.h.b16 %v145
    %v324 = vunpack.c.l.b16 %v146
    %v325 = vunpack.c.h.b16 %v146
    %v326 = vunpack.c.l.b16 %v147
    %v327 = vunpack.c.h.b16 %v147
    %v328 = vunpack.c.l.b16 %v148
    %v329 = vunpack.c.h.b16 %v148
    %v330 = vunpack.c.l.b16 %v149
    %v331 = vunpack.c.h.b16 %v149
    %v332 = vunpack.c.l.b16 %v150
    %v333 = vunpack.c.h.b16 %v150
    %v334 = vunpack.c.l.b16 %v151
    %v335 = vunpack.c.h.b16 %v151
    %v336 = vunpack.c.l.b16 %v152
    %v337 = vunpack.c.h.b16 %v152
    %v338 = vunpack.c.l.b16 %v153
    %v339 = vunpack.c.h.b16 %v153
    %v340 = vunpack.c.l.b16 %v154
    %v341 = vunpack.c.h.b16 %v154
    %v342 = vunpack.c.l.b16 %v155
    %v343 = vunpack.c.h.b16 %v155
    %v344 = vunpack.c.l.b16 %v156
    %v345 = vunpack.c.h.b16 %v156
    %v346 = vunpack.c.l.b16 %v157
    %v347 = vunpack.c.h.b16 %v157
    %v348 = vunpack.c.l.b16 %v158
    %v349 = vunpack.c.h.b16 %v158
    %v350 = vunpack.c.l.b16 %v159
    %v351 = vunpack.c.h.b16 %v159
    %v352 = vunpack.c.l.b16 %v160
    %v353 = vunpack.c.h.b16 %v160
    %v354 = vunpack.c.l.b16 %v161
    %v355 = vunpack.c.h.b16 %v161
    %v356 = vunpack.c.l.b16 %v162
    %v357 = vunpack.c.h.b16 %v162
    %v358 = vunpack.c.l.b16 %v163
    %v359 = vunpack.c.h.b16 %v163
    %v360 = vunpack.c.l.b16 %v164
    %v361 = vunpack.c.h.b16 %v164
    %v362 = vunpack.c.l.b16 %v165
    %v363 = vunpack.c.h.b16 %v165
    %v364 = vpack.c.b16 %v244, %v236
    %v365 = vpack.c.b16 %v245, %v237
    %v366 = vpack.c.b16 %v246, %v238
    %v367 = vpack.c.b16 %v247, %v239
    %v368 = vpack.c.b16 %v248, %v240
    %v369 = vpack.c.b16 %v249, %v241
    %v370 = vpack.c.b16 %v250, %v242
    %v371 = vpack.c.b16 %v251, %v243
    %v372 = vpack.c.b16 %v260, %v252
    %v373 = vpack.c.b16 %v261, %v253
    %v374 = vpack.c.b16 %v262, %v254
    %v375 = vpack.c.b16 %v263, %v255
    %v376 = vpack.c.b16 %v264, %v256
    %v377 = vpack.c.b16 %v265, %v257
    %v378 = vpack.c.b16 %v266, %v258
    %v379 = vpack.c.b16 %v267, %v259
    %v380 = vpack.c.b16 %v276, %v268
    %v381 = vpack.c.b16 %v277, %v269
    %v382 = vpack.c.b16 %v278, %v270
    %v383 = vpack.c.b16 %v279, %v271
    %v384 = vpack.c.b16 %v280, %v272
    %v385 = vpack.c.b16 %v281, %v273
    %v386 = vpack.c.b16 %v282, %v274
    %v387 = vpack.c.b16 %v283, %v275
    %v388 = vpack.c.b16 %v292, %v284
    %v389 = vpack.c.b16 %v293, %v285
    %v390 = vpack.c.b16 %v294, %v286
    %v391 = vpack.c.b16 %v295, %v287
    %v392 = vpack.c.b16 %v296, %v288
    %v393 = vpack.c.b16 %v297, %v289
    %v394 = vpack.c.b16 %v298, %v290
    %v395 = vpack.c.b16 %v299, %v291
    %v396 = vpack.c.b16 %v308, %v300
    %v397 = vpack.c.b16 %v309, %v301
    %v398 = vpack.c.b16 %v310, %v302
    %v399 = vpack.c.b16 %v311, %v303
    %v400 = vpack.c.b16 %v312, %v304
    %v401 = vpack.c.b16 %v313, %v305
    %v402 = vpack.c.b16 %v314, %v306
    %v403 = vpack.c.b16 %v315, %v307
    %v404 = vpack.c.b16 %v324, %v316
    %v405 = vpack.c.b16 %v325, %v317
    %v406 = vpack.c.b16 %v326, %v318
    %v407 = vpack.c.b16 %v327, %v319
    %v408 = vpack.c.b16 %v328, %v320
    %v409 = vpack.c.b16 %v329, %v321
    %v410 = vpack.c.b16 %v330, %v322
    %v411 = vpack.c.b16 %v331, %v323
    %v412 = vpack.c.b16 %v340, %v332
    %v413 = vpack.c.b16 %v341, %v333
    %v414 = vpack.c.b16 %v342, %v334
    %v415 = vpack.c.b16 %v343, %v335
    %v416 = vpack.c.b16 %v344, %v336
    %v417 = vpack.c.b16 %v345, %v337
    %v418 = vpack.c.b16 %v346, %v338
    %v419 = vpack.c.b16 %v347, %v339
    %v420 = vpack.c.b16 %v356, %v348
    %v421 = vpack.c.b16 %v357, %v349
    %v422 = vpack.c.b16 %v358, %v350
    %v423 = vpack.c.b16 %v359, %v351
    %v424 = vpack.c.b16 %v360, %v352
    %v425 = vpack.c.b16 %v361, %v353
    %v426 = vpack.c.b16 %v362, %v354
    %v427 = vpack.c.b16 %v363, %v355
    %492 = vmatpush.bf16.msra.mxu0 %v420
    %493 = vmatpush.bf16.msra.mxu0 %v412
    %494 = vmatpush.bf16.msra.mxu0 %v404
    %495 = vmatpush.bf16.msra.mxu0 %v396
    %496 = vmatpush.bf16.msra.mxu0 %v388
    %497 = vmatpush.bf16.msra.mxu0 %v380
    %498 = vmatpush.bf16.msra.mxu0 %v372
    %499 = vmatpush.bf16.msra.mxu0 %v364
    %500 = vmatmul.bf16.gmra.mxu0 %v170
    %v501 = vpop.f32.mrf.mxu0
    %v502 = vadd.f32 0.0, %v501
    %v503 = vpop.f32.mrf.mxu0
    %v504 = vadd.f32 0.0, %v503
    %505 = vdwg.mxu0
    %506 = vmatpush.bf16.msra.mxu0 %v421
    %507 = vmatpush.bf16.msra.mxu0 %v413
    %508 = vmatpush.bf16.msra.mxu0 %v405
    %509 = vmatpush.bf16.msra.mxu0 %v397
    %510 = vmatpush.bf16.msra.mxu0 %v389
    %511 = vmatpush.bf16.msra.mxu0 %v381
    %512 = vmatpush.bf16.msra.mxu0 %v373
    %513 = vmatpush.bf16.msra.mxu0 %v365
    %514 = vmatmul.bf16.gmra.mxu0 %v170
    %v515 = vpop.f32.mrf.mxu0
    %v516 = vadd.f32 0.0, %v515
    %v517 = vpop.f32.mrf.mxu0
    %v518 = vadd.f32 0.0, %v517
    %519 = vdwg.mxu0
    %520 = vmatpush.bf16.msra.mxu0 %v422
    %521 = vmatpush.bf16.msra.mxu0 %v414
    %522 = vmatpush.bf16.msra.mxu0 %v406
    %523 = vmatpush.bf16.msra.mxu0 %v398
    %524 = vmatpush.bf16.msra.mxu0 %v390
    %525 = vmatpush.bf16.msra.mxu0 %v382
    %526 = vmatpush.bf16.msra.mxu0 %v374
    %527 = vmatpush.bf16.msra.mxu0 %v366
    %528 = vmatmul.bf16.gmra.mxu0 %v170
    %v529 = vpop.f32.mrf.mxu0
    %v530 = vadd.f32 0.0, %v529
    %v531 = vpop.f32.mrf.mxu0
    %v532 = vadd.f32 0.0, %v531
    %533 = vdwg.mxu0
    %534 = vmatpush.bf16.msra.mxu0 %v423
    %535 = vmatpush.bf16.msra.mxu0 %v415
    %536 = vmatpush.bf16.msra.mxu0 %v407
    %537 = vmatpush.bf16.msra.mxu0 %v399
    %538 = vmatpush.bf16.msra.mxu0 %v391
    %539 = vmatpush.bf16.msra.mxu0 %v383
    %540 = vmatpush.bf16.msra.mxu0 %v375
    %541 = vmatpush.bf16.msra.mxu0 %v367
    %542 = vmatmul.bf16.gmra.mxu0 %v170
    %v543 = vpop.f32.mrf.mxu0
    %v544 = vadd.f32 0.0, %v543
    %v545 = vpop.f32.mrf.mxu0
    %v546 = vadd.f32 0.0, %v545
    %547 = vdwg.mxu0
    %548 = vmatpush.bf16.msra.mxu0 %v424
    %549 = vmatpush.bf16.msra.mxu0 %v416
    %550 = vmatpush.bf16.msra.mxu0 %v408
    %551 = vmatpush.bf16.msra.mxu0 %v400
    %552 = vmatpush.bf16.msra.mxu0 %v392
    %553 = vmatpush.bf16.msra.mxu0 %v384
    %554 = vmatpush.bf16.msra.mxu0 %v376
    %555 = vmatpush.bf16.msra.mxu0 %v368
    %556 = vmatmul.bf16.gmra.mxu0 %v170
    %v557 = vpop.f32.mrf.mxu0
    %v558 = vadd.f32 0.0, %v557
    %v559 = vpop.f32.mrf.mxu0
    %v560 = vadd.f32 0.0, %v559
    %561 = vdwg.mxu0
    %562 = vmatpush.bf16.msra.mxu0 %v425
    %563 = vmatpush.bf16.msra.mxu0 %v417
    %564 = vmatpush.bf16.msra.mxu0 %v409
    %565 = vmatpush.bf16.msra.mxu0 %v401
    %566 = vmatpush.bf16.msra.mxu0 %v393
    %567 = vmatpush.bf16.msra.mxu0 %v385
    %568 = vmatpush.bf16.msra.mxu0 %v377
    %569 = vmatpush.bf16.msra.mxu0 %v369
    %570 = vmatmul.bf16.gmra.mxu0 %v170
    %v571 = vpop.f32.mrf.mxu0
    %v572 = vadd.f32 0.0, %v571
    %v573 = vpop.f32.mrf.mxu0
    %v574 = vadd.f32 0.0, %v573
    %575 = vdwg.mxu0
    %576 = vmatpush.bf16.msra.mxu0 %v426
    %577 = vmatpush.bf16.msra.mxu0 %v418
    %578 = vmatpush.bf16.msra.mxu0 %v410
    %579 = vmatpush.bf16.msra.mxu0 %v402
    %580 = vmatpush.bf16.msra.mxu0 %v394
    %581 = vmatpush.bf16.msra.mxu0 %v386
    %582 = vmatpush.bf16.msra.mxu0 %v378
    %583 = vmatpush.bf16.msra.mxu0 %v370
    %584 = vmatmul.bf16.gmra.mxu0 %v170
    %v585 = vpop.f32.mrf.mxu0
    %v586 = vadd.f32 0.0, %v585
    %v587 = vpop.f32.mrf.mxu0
    %v588 = vadd.f32 0.0, %v587
    %589 = vdwg.mxu0
    %590 = vmatpush.bf16.msra.mxu0 %v427
    %591 = vmatpush.bf16.msra.mxu0 %v419
    %592 = vmatpush.bf16.msra.mxu0 %v411
    %593 = vmatpush.bf16.msra.mxu0 %v403
    %594 = vmatpush.bf16.msra.mxu0 %v395
    %595 = vmatpush.bf16.msra.mxu0 %v387
    %596 = vmatpush.bf16.msra.mxu0 %v379
    %597 = vmatpush.bf16.msra.mxu0 %v371
    %598 = vmatmul.bf16.gmra.mxu0 %v170
    %v599 = vpop.f32.mrf.mxu0
    %v600 = vadd.f32 0.0, %v599
    %v601 = vpop.f32.mrf.mxu0
    %v602 = vadd.f32 0.0, %v601
    %603 = vdwg.mxu0
    %v606 = vunpack.c.l.b16 %v33
    %v607 = vunpack.c.l.b16 %v34
    %v608 = vpack.c.b16 %v607, %v606
    %v674 = vunpack.c.l.b16 %v35
    %v675 = vunpack.c.h.b16 %v35
    %v676 = vunpack.c.l.b16 %v36
    %v677 = vunpack.c.h.b16 %v36
    %v678 = vunpack.c.l.b16 %v37
    %v679 = vunpack.c.h.b16 %v37
    %v680 = vunpack.c.l.b16 %v38
    %v681 = vunpack.c.h.b16 %v38
    %v682 = vunpack.c.l.b16 %v39
    %v683 = vunpack.c.h.b16 %v39
    %v684 = vunpack.c.l.b16 %v40
    %v685 = vunpack.c.h.b16 %v40
    %v686 = vunpack.c.l.b16 %v41
    %v687 = vunpack.c.h.b16 %v41
    %v688 = vunpack.c.l.b16 %v42
    %v689 = vunpack.c.h.b16 %v42
    %v690 = vunpack.c.l.b16 %v43
    %v691 = vunpack.c.h.b16 %v43
    %v692 = vunpack.c.l.b16 %v44
    %v693 = vunpack.c.h.b16 %v44
    %v694 = vunpack.c.l.b16 %v45
    %v695 = vunpack.c.h.b16 %v45
    %v696 = vunpack.c.l.b16 %v46
    %v697 = vunpack.c.h.b16 %v46
    %v698 = vunpack.c.l.b16 %v47
    %v699 = vunpack.c.h.b16 %v47
    %v700 = vunpack.c.l.b16 %v48
    %v701 = vunpack.c.h.b16 %v48
    %v702 = vunpack.c.l.b16 %v49
    %v703 = vunpack.c.h.b16 %v49
    %v704 = vunpack.c.l.b16 %v50
    %v705 = vunpack.c.h.b16 %v50
    %v706 = vunpack.c.l.b16 %v51
    %v707 = vunpack.c.h.b16 %v51
    %v708 = vunpack.c.l.b16 %v52
    %v709 = vunpack.c.h.b16 %v52
    %v710 = vunpack.c.l.b16 %v53
    %v711 = vunpack.c.h.b16 %v53
    %v712 = vunpack.c.l.b16 %v54
    %v713 = vunpack.c.h.b16 %v54
    %v714 = vunpack.c.l.b16 %v55
    %v715 = vunpack.c.h.b16 %v55
    %v716 = vunpack.c.l.b16 %v56
    %v717 = vunpack.c.h.b16 %v56
    %v718 = vunpack.c.l.b16 %v57
    %v719 = vunpack.c.h.b16 %v57
    %v720 = vunpack.c.l.b16 %v58
    %v721 = vunpack.c.h.b16 %v58
    %v722 = vunpack.c.l.b16 %v59
    %v723 = vunpack.c.h.b16 %v59
    %v724 = vunpack.c.l.b16 %v60
    %v725 = vunpack.c.h.b16 %v60
    %v726 = vunpack.c.l.b16 %v61
    %v727 = vunpack.c.h.b16 %v61
    %v728 = vunpack.c.l.b16 %v62
    %v729 = vunpack.c.h.b16 %v62
    %v730 = vunpack.c.l.b16 %v63
    %v731 = vunpack.c.h.b16 %v63
    %v732 = vunpack.c.l.b16 %v64
    %v733 = vunpack.c.h.b16 %v64
    %v734 = vunpack.c.l.b16 %v65
    %v735 = vunpack.c.h.b16 %v65
    %v736 = vunpack.c.l.b16 %v66
    %v737 = vunpack.c.h.b16 %v66
    %v738 = vunpack.c.l.b16 %v67
    %v739 = vunpack.c.h.b16 %v67
    %v740 = vunpack.c.l.b16 %v68
    %v741 = vunpack.c.h.b16 %v68
    %v742 = vunpack.c.l.b16 %v69
    %v743 = vunpack.c.h.b16 %v69
    %v744 = vunpack.c.l.b16 %v70
    %v745 = vunpack.c.h.b16 %v70
    %v746 = vunpack.c.l.b16 %v71
    %v747 = vunpack.c.h.b16 %v71
    %v748 = vunpack.c.l.b16 %v72
    %v749 = vunpack.c.h.b16 %v72
    %v750 = vunpack.c.l.b16 %v73
    %v751 = vunpack.c.h.b16 %v73
    %v752 = vunpack.c.l.b16 %v74
    %v753 = vunpack.c.h.b16 %v74
    %v754 = vunpack.c.l.b16 %v75
    %v755 = vunpack.c.h.b16 %v75
    %v756 = vunpack.c.l.b16 %v76
    %v757 = vunpack.c.h.b16 %v76
    %v758 = vunpack.c.l.b16 %v77
    %v759 = vunpack.c.h.b16 %v77
    %v760 = vunpack.c.l.b16 %v78
    %v761 = vunpack.c.h.b16 %v78
    %v762 = vunpack.c.l.b16 %v79
    %v763 = vunpack.c.h.b16 %v79
    %v764 = vunpack.c.l.b16 %v80
    %v765 = vunpack.c.h.b16 %v80
    %v766 = vunpack.c.l.b16 %v81
    %v767 = vunpack.c.h.b16 %v81
    %v768 = vunpack.c.l.b16 %v82
    %v769 = vunpack.c.h.b16 %v82
    %v770 = vunpack.c.l.b16 %v83
    %v771 = vunpack.c.h.b16 %v83
    %v772 = vunpack.c.l.b16 %v84
    %v773 = vunpack.c.h.b16 %v84
    %v774 = vunpack.c.l.b16 %v85
    %v775 = vunpack.c.h.b16 %v85
    %v776 = vunpack.c.l.b16 %v86
    %v777 = vunpack.c.h.b16 %v86
    %v778 = vunpack.c.l.b16 %v87
    %v779 = vunpack.c.h.b16 %v87
    %v780 = vunpack.c.l.b16 %v88
    %v781 = vunpack.c.h.b16 %v88
    %v782 = vunpack.c.l.b16 %v89
    %v783 = vunpack.c.h.b16 %v89
    %v784 = vunpack.c.l.b16 %v90
    %v785 = vunpack.c.h.b16 %v90
    %v786 = vunpack.c.l.b16 %v91
    %v787 = vunpack.c.h.b16 %v91
    %v788 = vunpack.c.l.b16 %v92
    %v789 = vunpack.c.h.b16 %v92
    %v790 = vunpack.c.l.b16 %v93
    %v791 = vunpack.c.h.b16 %v93
    %v792 = vunpack.c.l.b16 %v94
    %v793 = vunpack.c.h.b16 %v94
    %v794 = vunpack.c.l.b16 %v95
    %v795 = vunpack.c.h.b16 %v95
    %v796 = vunpack.c.l.b16 %v96
    %v797 = vunpack.c.h.b16 %v96
    %v798 = vunpack.c.l.b16 %v97
    %v799 = vunpack.c.h.b16 %v97
    %v800 = vunpack.c.l.b16 %v98
    %v801 = vunpack.c.h.b16 %v98
    %v802 = vpack.c.b16 %v682, %v674
    %v803 = vpack.c.b16 %v683, %v675
    %v804 = vpack.c.b16 %v684, %v676
    %v805 = vpack.c.b16 %v685, %v677
    %v806 = vpack.c.b16 %v686, %v678
    %v807 = vpack.c.b16 %v687, %v679
    %v808 = vpack.c.b16 %v688, %v680
    %v809 = vpack.c.b16 %v689, %v681
    %v810 = vpack.c.b16 %v698, %v690
    %v811 = vpack.c.b16 %v699, %v691
    %v812 = vpack.c.b16 %v700, %v692
    %v813 = vpack.c.b16 %v701, %v693
    %v814 = vpack.c.b16 %v702, %v694
    %v815 = vpack.c.b16 %v703, %v695
    %v816 = vpack.c.b16 %v704, %v696
    %v817 = vpack.c.b16 %v705, %v697
    %v818 = vpack.c.b16 %v714, %v706
    %v819 = vpack.c.b16 %v715, %v707
    %v820 = vpack.c.b16 %v716, %v708
    %v821 = vpack.c.b16 %v717, %v709
    %v822 = vpack.c.b16 %v718, %v710
    %v823 = vpack.c.b16 %v719, %v711
    %v824 = vpack.c.b16 %v720, %v712
    %v825 = vpack.c.b16 %v721, %v713
    %v826 = vpack.c.b16 %v730, %v722
    %v827 = vpack.c.b16 %v731, %v723
    %v828 = vpack.c.b16 %v732, %v724
    %v829 = vpack.c.b16 %v733, %v725
    %v830 = vpack.c.b16 %v734, %v726
    %v831 = vpack.c.b16 %v735, %v727
    %v832 = vpack.c.b16 %v736, %v728
    %v833 = vpack.c.b16 %v737, %v729
    %v834 = vpack.c.b16 %v746, %v738
    %v835 = vpack.c.b16 %v747, %v739
    %v836 = vpack.c.b16 %v748, %v740
    %v837 = vpack.c.b16 %v749, %v741
    %v838 = vpack.c.b16 %v750, %v742
    %v839 = vpack.c.b16 %v751, %v743
    %v840 = vpack.c.b16 %v752, %v744
    %v841 = vpack.c.b16 %v753, %v745
    %v842 = vpack.c.b16 %v762, %v754
    %v843 = vpack.c.b16 %v763, %v755
    %v844 = vpack.c.b16 %v764, %v756
    %v845 = vpack.c.b16 %v765, %v757
    %v846 = vpack.c.b16 %v766, %v758
    %v847 = vpack.c.b16 %v767, %v759
    %v848 = vpack.c.b16 %v768, %v760
    %v849 = vpack.c.b16 %v769, %v761
    %v850 = vpack.c.b16 %v778, %v770
    %v851 = vpack.c.b16 %v779, %v771
    %v852 = vpack.c.b16 %v780, %v772
    %v853 = vpack.c.b16 %v781, %v773
    %v854 = vpack.c.b16 %v782, %v774
    %v855 = vpack.c.b16 %v783, %v775
    %v856 = vpack.c.b16 %v784, %v776
    %v857 = vpack.c.b16 %v785, %v777
    %v858 = vpack.c.b16 %v794, %v786
    %v859 = vpack.c.b16 %v795, %v787
    %v860 = vpack.c.b16 %v796, %v788
    %v861 = vpack.c.b16 %v797, %v789
    %v862 = vpack.c.b16 %v798, %v790
    %v863 = vpack.c.b16 %v799, %v791
    %v864 = vpack.c.b16 %v800, %v792
    %v865 = vpack.c.b16 %v801, %v793
    %930 = vmatpush.bf16.msra.mxu0 %v858
    %931 = vmatpush.bf16.msra.mxu0 %v850
    %932 = vmatpush.bf16.msra.mxu0 %v842
    %933 = vmatpush.bf16.msra.mxu0 %v834
    %934 = vmatpush.bf16.msra.mxu0 %v826
    %935 = vmatpush.bf16.msra.mxu0 %v818
    %936 = vmatpush.bf16.msra.mxu0 %v810
    %937 = vmatpush.bf16.msra.mxu0 %v802
    %938 = vmatmul.bf16.gmra.mxu0 %v608
    %v939 = vpop.f32.mrf.mxu0
    %v940 = vadd.f32 %v502, %v939
    %v941 = vpop.f32.mrf.mxu0
    %v942 = vadd.f32 %v504, %v941
    %943 = vdwg.mxu0
    %944 = vmatpush.bf16.msra.mxu0 %v859
    %945 = vmatpush.bf16.msra.mxu0 %v851
    %946 = vmatpush.bf16.msra.mxu0 %v843
    %947 = vmatpush.bf16.msra.mxu0 %v835
    %948 = vmatpush.bf16.msra.mxu0 %v827
    %949 = vmatpush.bf16.msra.mxu0 %v819
    %950 = vmatpush.bf16.msra.mxu0 %v811
    %951 = vmatpush.bf16.msra.mxu0 %v803
    %952 = vmatmul.bf16.gmra.mxu0 %v608
    %v953 = vpop.f32.mrf.mxu0
    %v954 = vadd.f32 %v516, %v953
    %v955 = vpop.f32.mrf.mxu0
    %v956 = vadd.f32 %v518, %v955
    %957 = vdwg.mxu0
    %958 = vmatpush.bf16.msra.mxu0 %v860
    %959 = vmatpush.bf16.msra.mxu0 %v852
    %960 = vmatpush.bf16.msra.mxu0 %v844
    %961 = vmatpush.bf16.msra.mxu0 %v836
    %962 = vmatpush.bf16.msra.mxu0 %v828
    %963 = vmatpush.bf16.msra.mxu0 %v820
    %964 = vmatpush.bf16.msra.mxu0 %v812
    %965 = vmatpush.bf16.msra.mxu0 %v804
    %966 = vmatmul.bf16.gmra.mxu0 %v608
    %v967 = vpop.f32.mrf.mxu0
    %v968 = vadd.f32 %v530, %v967
    %v969 = vpop.f32.mrf.mxu0
    %v970 = vadd.f32 %v532, %v969
    %971 = vdwg.mxu0
    %972 = vmatpush.bf16.msra.mxu0 %v861
    %973 = vmatpush.bf16.msra.mxu0 %v853
    %974 = vmatpush.bf16.msra.mxu0 %v845
    %975 = vmatpush.bf16.msra.mxu0 %v837
    %976 = vmatpush.bf16.msra.mxu0 %v829
    %977 = vmatpush.bf16.msra.mxu0 %v821
    %978 = vmatpush.bf16.msra.mxu0 %v813
    %979 = vmatpush.bf16.msra.mxu0 %v805
    %980 = vmatmul.bf16.gmra.mxu0 %v608
    %v981 = vpop.f32.mrf.mxu0
    %v982 = vadd.f32 %v544, %v981
    %v983 = vpop.f32.mrf.mxu0
    %v984 = vadd.f32 %v546, %v983
    %985 = vdwg.mxu0
    %986 = vmatpush.bf16.msra.mxu0 %v862
    %987 = vmatpush.bf16.msra.mxu0 %v854
    %988 = vmatpush.bf16.msra.mxu0 %v846
    %989 = vmatpush.bf16.msra.mxu0 %v838
    %990 = vmatpush.bf16.msra.mxu0 %v830
    %991 = vmatpush.bf16.msra.mxu0 %v822
    %992 = vmatpush.bf16.msra.mxu0 %v814
    %993 = vmatpush.bf16.msra.mxu0 %v806
    %994 = vmatmul.bf16.gmra.mxu0 %v608
    %v995 = vpop.f32.mrf.mxu0
    %v996 = vadd.f32 %v558, %v995
    %v997 = vpop.f32.mrf.mxu0
    %v998 = vadd.f32 %v560, %v997
    %999 = vdwg.mxu0
    %1000 = vmatpush.bf16.msra.mxu0 %v863
    %1001 = vmatpush.bf16.msra.mxu0 %v855
    %1002 = vmatpush.bf16.msra.mxu0 %v847
    %1003 = vmatpush.bf16.msra.mxu0 %v839
    %1004 = vmatpush.bf16.msra.mxu0 %v831
    %1005 = vmatpush.bf16.msra.mxu0 %v823
    %1006 = vmatpush.bf16.msra.mxu0 %v815
    %1007 = vmatpush.bf16.msra.mxu0 %v807
    %1008 = vmatmul.bf16.gmra.mxu0 %v608
    %v1009 = vpop.f32.mrf.mxu0
    %v1010 = vadd.f32 %v572, %v1009
    %v1011 = vpop.f32.mrf.mxu0
    %v1012 = vadd.f32 %v574, %v1011
    %1013 = vdwg.mxu0
    %1014 = vmatpush.bf16.msra.mxu0 %v864
    %1015 = vmatpush.bf16.msra.mxu0 %v856
    %1016 = vmatpush.bf16.msra.mxu0 %v848
    %1017 = vmatpush.bf16.msra.mxu0 %v840
    %1018 = vmatpush.bf16.msra.mxu0 %v832
    %1019 = vmatpush.bf16.msra.mxu0 %v824
    %1020 = vmatpush.bf16.msra.mxu0 %v816
    %1021 = vmatpush.bf16.msra.mxu0 %v808
    %1022 = vmatmul.bf16.gmra.mxu0 %v608
    %v1023 = vpop.f32.mrf.mxu0
    %v1024 = vadd.f32 %v586, %v1023
    %v1025 = vpop.f32.mrf.mxu0
    %v1026 = vadd.f32 %v588, %v1025
    %1027 = vdwg.mxu0
    %1028 = vmatpush.bf16.msra.mxu0 %v865
    %1029 = vmatpush.bf16.msra.mxu0 %v857
    %1030 = vmatpush.bf16.msra.mxu0 %v849
    %1031 = vmatpush.bf16.msra.mxu0 %v841
    %1032 = vmatpush.bf16.msra.mxu0 %v833
    %1033 = vmatpush.bf16.msra.mxu0 %v825
    %1034 = vmatpush.bf16.msra.mxu0 %v817
    %1035 = vmatpush.bf16.msra.mxu0 %v809
    %1036 = vmatmul.bf16.gmra.mxu0 %v608
    %v1037 = vpop.f32.mrf.mxu0
    %v1038 = vadd.f32 %v600, %v1037
    %v1039 = vpop.f32.mrf.mxu0
    %v1040 = vadd.f32 %v602, %v1039
    %1041 = vdwg.mxu0
    %v1042 = vld [vmem:[%s3] sm:$0xff]
    %v1044 = vperm.slane %v1042, 0
    %v1045 = vperm.slane %v1042, 1
    %v1046 = vperm.slane %v1042, 2
    %v1047 = vperm.slane %v1042, 3
    %v1048 = vperm.slane %v1042, 4
    %v1049 = vperm.slane %v1042, 5
    %v1050 = vperm.slane %v1042, 6
    %v1051 = vperm.slane %v1042, 7
    %v1060 = vadd.f32 %v940, %v1044
    %v1061 = vadd.f32 %v954, %v1045
    %v1062 = vadd.f32 %v968, %v1046
    %v1063 = vadd.f32 %v982, %v1047
    %v1064 = vadd.f32 %v996, %v1048
    %v1065 = vadd.f32 %v1010, %v1049
    %v1066 = vadd.f32 %v1024, %v1050
    %v1067 = vadd.f32 %v1038, %v1051
    %v1068 = vadd.f32 %v942, %v1044
    %v1069 = vadd.f32 %v956, %v1045
    %v1070 = vadd.f32 %v970, %v1046
    %v1071 = vadd.f32 %v984, %v1047
    %v1072 = vadd.f32 %v998, %v1048
    %v1073 = vadd.f32 %v1012, %v1049
    %v1074 = vadd.f32 %v1026, %v1050
    %v1075 = vadd.f32 %v1040, %v1051
    %1076 = vst [vmem:[%s4] sm:$0xff] %v1060
    %1077 = vst [vmem:[%s4 + $0x8] sm:$0xff] %v1061
    %1078 = vst [vmem:[%s4 + $0x10] sm:$0xff] %v1062
    %1079 = vst [vmem:[%s4 + $0x18] sm:$0xff] %v1063
    %1080 = vst [vmem:[%s4 + $0x20] sm:$0xff] %v1064
    %1081 = vst [vmem:[%s4 + $0x28] sm:$0xff] %v1065
    %1082 = vst [vmem:[%s4 + $0x30] sm:$0xff] %v1066
    %1083 = vst [vmem:[%s4 + $0x38] sm:$0xff] %v1067
    %1084 = vst [vmem:[%s4 + $0x40] sm:$0xff] %v1068
    %1085 = vst [vmem:[%s4 + $0x48] sm:$0xff] %v1069
    %1086 = vst [vmem:[%s4 + $0x50] sm:$0xff] %v1070
    %1087 = vst [vmem:[%s4 + $0x58] sm:$0xff] %v1071
    %1088 = vst [vmem:[%s4 + $0x60] sm:$0xff] %v1072
    %1089 = vst [vmem:[%s4 + $0x68] sm:$0xff] %v1073
    %1090 = vst [vmem:[%s4 + $0x70] sm:$0xff] %v1074
    %1091 = vst [vmem:[%s4 + $0x78] sm:$0xff] %v1075
    // Predicated region
    $region22: #{bilstm_forward.7} parent=1 // pred_check
      _
    $region23: #{bilstm_forward.7} parent=1 // pred_check_branch
      %1093 = sbr.rel (0) target = $region25
    $region24: #{bilstm_forward.7} parent=1 // pred_region
      _
    $region25: #{bilstm_forward.7} parent=1 // pred_fallthru
      _
    // Predicated region
    $region26: #{bilstm_forward.7} parent=1 // pred_check
      _
    $region27: #{bilstm_forward.7} parent=1 // pred_check_branch
      %1095 = sbr.rel (0) target = $region29
    $region28: #{bilstm_forward.7} parent=1 // pred_region
      _
    $region29: #{bilstm_forward.7} parent=1 // pred_fallthru
      _
    %1096 = vsyncpa [#allocation3], 1

// kernel: bilstm_forward.9
$region0: #{bilstm_forward.9}
  #allocation0 [shape = 'u32[]', space=smem, size = 0x4, offset = 0x4, fixed_abs, tag = 'smem constant byte address 0x4 - core index']
  #allocation1 [shape = 'u32[72,128]{1,0:T(1,128)}', space=vmem, size = 0x9000, scoped, tag = 'internal scratch']
  %s0 = inlined_call_operand.vmem [shape: bf16[16,128], index: 0, kind: input, shape index: {}]
  %s1 = inlined_call_operand.vmem [shape: bf16[16,128], index: 1, kind: input, shape index: {}]
  %s2 = inlined_call_operand.hbm [shape: bf16[2,128,128], index: 2, kind: input, shape index: {}]
  %s3 = inlined_call_operand.vmem [shape: f32[1,128], index: 3, kind: input, shape index: {}]
  %s4 = inlined_call_operand.vmem [shape: s32[16,1], index: 4, kind: input, shape index: {}]
  %s5 = inlined_call_operand.vmem [shape: f32[16,128], index: 5, kind: output, shape index: {0}]
  %s6 = inlined_call_operand.hbm [shape: f32[1,1], index: 6, kind: output, shape index: {1}]
  %7 = xla_tuple %s5, %s6
  %s8 = sld [smem:[#allocation0]]
  $region46: #{bilstm_forward.9} parent=0
    _
  %s10 = ssub.s32 1, %s8
  %s11 = scalar_select 0, %s10, %s8
  $region1: #{bilstm_forward.9} parent=0
    #allocation2 [shape = 'u8[65536]{0}', space=vmem, size = 0x10000, scoped, tag = 'input window, operand 2, single buffered']
    #allocation3 [shape = 's32[1]{0}', space=sflag, size = 0x4, scoped, tag = 'scoped memory for bilstm_forward.9']
    #allocation4 [shape = 's32[1]{0}', space=sflag, size = 0x4, scoped, tag = 'scoped memory for bilstm_forward.9']
    #allocation5 [shape = 'u8[512]{0}', space=vmem, size = 0x400, scoped, tag = 'output window, operand 1, single buffered']
    %12 = vsyncpa [#allocation3], 0
    %13 = vsyncpa [#allocation4], 0
    // Predicated region
    $region2: #{bilstm_forward.9} parent=1 // pred_check
      _
    $region3: #{bilstm_forward.9} parent=1 // pred_check_branch
      %15 = sbr.rel (0) target = $region5
    $region4: #{bilstm_forward.9} parent=1 // pred_region
      _
    $region5: #{bilstm_forward.9} parent=1 // pred_fallthru
      _
    // Predicated region
    $region6: #{bilstm_forward.9} parent=1 // pred_check
      _
    $region7: #{bilstm_forward.9} parent=1 // pred_check_branch
      %17 = sbr.rel (0) target = $region9
    $region8: #{bilstm_forward.9} parent=1 // pred_region
      _
    $region9: #{bilstm_forward.9} parent=1 // pred_fallthru
      _
    // Predicated region
    $region10: #{bilstm_forward.9} parent=1 // pred_check
      _
    $region11: #{bilstm_forward.9} parent=1 // pred_check_branch
      %19 = sbr.rel (0) target = $region13
    $region12: #{bilstm_forward.9} parent=1 // pred_region
      %21 = vsyncadd [#allocation3], 0
      %s22 = sshll.u32 %s2, 4
      %s23 = int_to_ptr.hbm [resolvable:$true] %s22
      %s24 = sshll.u32 [#allocation2], 4
      %s25 = int_to_ptr.vmem [resolvable:$true] %s24
      %30 = dma.hbm_to_vmem [thread:$0]  %s23, 2048, %s25, [#allocation3], 64, 64, 4
    $region13: #{bilstm_forward.9} parent=1 // pred_fallthru
      _
    // Predicated region
    $region14: #{bilstm_forward.9} parent=1 // pred_check
      _
    $region15: #{bilstm_forward.9} parent=1 // pred_check_branch
      %32 = sbr.rel (0) target = $region17
    $region16: #{bilstm_forward.9} parent=1 // pred_region
      _
    $region17: #{bilstm_forward.9} parent=1 // pred_fallthru
      _
    // Predicated region
    $region18: #{bilstm_forward.9} parent=1 // pred_check
      _
    $region19: #{bilstm_forward.9} parent=1 // pred_check_branch
      %34 = sbr.rel (0) target = $region21
    $region20: #{bilstm_forward.9} parent=1 // pred_region
      _
    $region21: #{bilstm_forward.9} parent=1 // pred_fallthru
      _
    // Predicated region
    $region22: #{bilstm_forward.9} parent=1 // pred_check
      _
    $region23: #{bilstm_forward.9} parent=1 // pred_check_branch
      %36 = sbr.rel (0) target = $region25
    $region24: #{bilstm_forward.9} parent=1 // pred_region
      %38 = dma.done [#allocation3], 2048
    $region25: #{bilstm_forward.9} parent=1 // pred_fallthru
      _
    %v39 = vld [vmem:[%s0] sm:$0xf]
    %v40 = vld [vmem:[%s0 + $0x4] sm:$0xf]
    %v41 = vld [vmem:[#allocation2] sm:$0xf]
    %v42 = vld [vmem:[#allocation2 + $0x4] sm:$0xf]
    %v43 = vld [vmem:[#allocation2 + $0x8] sm:$0xf]
    %v44 = vld [vmem:[#allocation2 + $0xc] sm:$0xf]
    %v45 = vld [vmem:[#allocation2 + $0x10] sm:$0xf]
    %v46 = vld [vmem:[#allocation2 + $0x14] sm:$0xf]
    %v47 = vld [vmem:[#allocation2 + $0x18] sm:$0xf]
    %v48 = vld [vmem:[#allocation2 + $0x1c] sm:$0xf]
    %v49 = vld [vmem:[#allocation2 + $0x20] sm:$0xf]
    %v50 = vld [vmem:[#allocation2 + $0x24] sm:$0xf]
    %v51 = vld [vmem:[#allocation2 + $0x28] sm:$0xf]
    %v52 = vld [vmem:[#allocation2 + $0x2c] sm:$0xf]
    %v53 = vld [vmem:[#allocation2 + $0x30] sm:$0xf]
    %v54 = vld [vmem:[#allocation2 + $0x34] sm:$0xf]
    %v55 = vld [vmem:[#allocation2 + $0x38] sm:$0xf]
    %v56 = vld [vmem:[#allocation2 + $0x3c] sm:$0xf]
    %v57 = vld [vmem:[%s1] sm:$0xf]
    %v58 = vld [vmem:[%s1 + $0x4] sm:$0xf]
    %s59 = scalar_lea.vmem [#allocation2], 64
    %v60 = vld [vmem:[%s59] sm:$0xf]
    %v61 = vld [vmem:[%s59 + $0x4] sm:$0xf]
    %v62 = vld [vmem:[%s59 + $0x8] sm:$0xf]
    %v63 = vld [vmem:[%s59 + $0xc] sm:$0xf]
    %v64 = vld [vmem:[%s59 + $0x10] sm:$0xf]
    %v65 = vld [vmem:[%s59 + $0x14] sm:$0xf]
    %v66 = vld [vmem:[%s59 + $0x18] sm:$0xf]
    %v67 = vld [vmem:[%s59 + $0x1c] sm:$0xf]
    %v68 = vld [vmem:[%s59 + $0x20] sm:$0xf]
    %v69 = vld [vmem:[%s59 + $0x24] sm:$0xf]
    %v70 = vld [vmem:[%s59 + $0x28] sm:$0xf]
    %v71 = vld [vmem:[%s59 + $0x2c] sm:$0xf]
    %v72 = vld [vmem:[%s59 + $0x30] sm:$0xf]
    %v73 = vld [vmem:[%s59 + $0x34] sm:$0xf]
    %v74 = vld [vmem:[%s59 + $0x38] sm:$0xf]
    %v75 = vld [vmem:[%s59 + $0x3c] sm:$0xf]
    %v78 = vunpack.c.l.b16 %v57
    %v79 = vunpack.c.l.b16 %v58
    %v80 = vpack.c.b16 %v79, %v78
    %v98 = vunpack.c.l.b16 %v60
    %v99 = vunpack.c.l.b16 %v61
    %v100 = vunpack.c.l.b16 %v62
    %v101 = vunpack.c.l.b16 %v63
    %v102 = vunpack.c.l.b16 %v64
    %v103 = vunpack.c.l.b16 %v65
    %v104 = vunpack.c.l.b16 %v66
    %v105 = vunpack.c.l.b16 %v67
    %v106 = vunpack.c.l.b16 %v68
    %v107 = vunpack.c.l.b16 %v69
    %v108 = vunpack.c.l.b16 %v70
    %v109 = vunpack.c.l.b16 %v71
    %v110 = vunpack.c.l.b16 %v72
    %v111 = vunpack.c.l.b16 %v73
    %v112 = vunpack.c.l.b16 %v74
    %v113 = vunpack.c.l.b16 %v75
    %v114 = vpack.c.b16 %v99, %v98
    %v115 = vpack.c.b16 %v101, %v100
    %v116 = vpack.c.b16 %v103, %v102
    %v117 = vpack.c.b16 %v105, %v104
    %v118 = vpack.c.b16 %v107, %v106
    %v119 = vpack.c.b16 %v109, %v108
    %v120 = vpack.c.b16 %v111, %v110
    %v121 = vpack.c.b16 %v113, %v112
    %130 = vmatpush.bf16.msra.mxu0 %v121
    %131 = vmatpush.bf16.msra.mxu0 %v120
    %132 = vmatpush.bf16.msra.mxu0 %v119
    %133 = vmatpush.bf16.msra.mxu0 %v118
    %134 = vmatpush.bf16.msra.mxu0 %v117
    %135 = vmatpush.bf16.msra.mxu0 %v116
    %136 = vmatpush.bf16.msra.mxu0 %v115
    %137 = vmatpush.bf16.msra.mxu0 %v114
    %138 = vmatmul.bf16.gmra.mxu0 %v80
    %v139 = vpop.f32.mrf.mxu0
    %v140 = vadd.f32 0.0, %v139
    %v141 = vpop.f32.mrf.mxu0
    %v142 = vadd.f32 0.0, %v141
    %143 = vdwg.mxu0
    %v146 = vunpack.c.l.b16 %v39
    %v147 = vunpack.c.l.b16 %v40
    %v148 = vpack.c.b16 %v147, %v146
    %v166 = vunpack.c.l.b16 %v41
    %v167 = vunpack.c.l.b16 %v42
    %v168 = vunpack.c.l.b16 %v43
    %v169 = vunpack.c.l.b16 %v44
    %v170 = vunpack.c.l.b16 %v45
    %v171 = vunpack.c.l.b16 %v46
    %v172 = vunpack.c.l.b16 %v47
    %v173 = vunpack.c.l.b16 %v48
    %v174 = vunpack.c.l.b16 %v49
    %v175 = vunpack.c.l.b16 %v50
    %v176 = vunpack.c.l.b16 %v51
    %v177 = vunpack.c.l.b16 %v52
    %v178 = vunpack.c.l.b16 %v53
    %v179 = vunpack.c.l.b16 %v54
    %v180 = vunpack.c.l.b16 %v55
    %v181 = vunpack.c.l.b16 %v56
    %v182 = vpack.c.b16 %v167, %v166
    %v183 = vpack.c.b16 %v169, %v168
    %v184 = vpack.c.b16 %v171, %v170
    %v185 = vpack.c.b16 %v173, %v172
    %v186 = vpack.c.b16 %v175, %v174
    %v187 = vpack.c.b16 %v177, %v176
    %v188 = vpack.c.b16 %v179, %v178
    %v189 = vpack.c.b16 %v181, %v180
    %198 = vmatpush.bf16.msra.mxu0 %v189
    %199 = vmatpush.bf16.msra.mxu0 %v188
    %200 = vmatpush.bf16.msra.mxu0 %v187
    %201 = vmatpush.bf16.msra.mxu0 %v186
    %202 = vmatpush.bf16.msra.mxu0 %v185
    %203 = vmatpush.bf16.msra.mxu0 %v184
    %204 = vmatpush.bf16.msra.mxu0 %v183
    %205 = vmatpush.bf16.msra.mxu0 %v182
    %206 = vmatmul.bf16.gmra.mxu0 %v148
    %v207 = vpop.f32.mrf.mxu0
    %v208 = vadd.f32 %v140, %v207
    %v209 = vpop.f32.mrf.mxu0
    %v210 = vadd.f32 %v142, %v209
    %211 = vdwg.mxu0
    %v212 = vld [vmem:[%s3] sm:$0x1]
    %v214 = vperm.slane %v212, 0
    %v216 = vadd.f32 %v208, %v214
    %v217 = vadd.f32 %v210, %v214
    %218 = vmax.xlane.f32.xlu0 %v216
    %v219 = vpop.xlane.xlu0 %218
    %220 = vmax.xlane.f32.xlu0 %v217
    %v221 = vpop.xlane.xlu0 %220
    %v222 = vsub.f32 %v216, %v219
    %v223 = vsub.f32 %v217, %v221
    %v224 = vmul.f32 %v222, 1.442695
    %v225 = vpow.pop %v224
    %v226 = vmul.f32 %v223, 1.442695
    %v227 = vpow.pop %v226
    %228 = vadd.xlane.f32.xlu0 %v225
    %v229 = vpop.xlane.xlu0 %228
    %230 = vadd.xlane.f32.xlu0 %v227
    %v231 = vpop.xlane.xlu0 %230
    %v232 = vlog2.pop %v229
    %v233 = vmul.f32 %v232, 0.6931472
    %v234 = vlog2.pop %v231
    %v235 = vmul.f32 %v234, 0.6931472
    %v236 = vadd.f32 %v219, %v233
    %v237 = vadd.f32 %v221, %v235
    %v238 = vlaneseq
    %v239 = vand.u32 %v238, 127
    %v240 = vld [vmem:[%s4] sm:$0xff]
    %v241 = vld [vmem:[%s4 + $0x8] sm:$0xff]
    %242 = vset.pattern.permute.xlu0 0
    %243 = vperm.xlu0 %242, %v240
    %v244 = vpop.permute.xlu0 %243
    %245 = vset.pattern.permute.xlu0 0
    %246 = vperm.xlu0 %245, %v241
    %v247 = vpop.permute.xlu0 %246
    %vm248 = vcmp.eq.s32.totalorder %v239, %v244
    %vm249 = vcmp.eq.s32.totalorder %v239, %v247
    %v250 = vsel %vm248, %v216, 0.0
    %v251 = vsel %vm249, %v217, 0.0
    %252 = vadd.xlane.f32.xlu0 %v250
    %v253 = vpop.xlane.xlu0 %252
    %254 = vadd.xlane.f32.xlu0 %v251
    %v255 = vpop.xlane.xlu0 %254
    %256 = vst [vmem:[%s5] sm:$0xff] %v216
    %257 = vst [vmem:[%s5 + $0x8] sm:$0xff] %v217
    %s258 = smul.u32 0, 16
    %v259 = vlaneseq
    %v260 = vshrl.u32 %v259, 7
    %v261 = vadd.s32 %v260, 8
    %v262 = vstv %s258
    %v263 = vadd.s32 %v262, %v260
    %v264 = vadd.s32 %v262, %v261
    %vm265 = vcmp.lt.s32.totalorder %v263, 16
    %vm266 = vcmp.lt.s32.totalorder %v264, 16
    %v267 = vsub.f32 %v236, %v253
    %v268 = vsub.f32 %v237, %v255
    %v269 = vsel %vm265, %v267, 0.0
    %v270 = vsel %vm266, %v268, 0.0
    %vm271 = vcmask 7168
    %v272 = vsel %vm271, %v269, 0.0
    %v273 = vsel %vm271, %v270, 0.0
    %v274 = vadd.f32 %v272, %v273
    %275 = vadd.xlane.f32.xlu0 %v274
    %v276 = vpop.xlane.xlu0 %275
    %v277 = vrot.slane %v276, 4
    %v278 = vadd.f32 %v276, %v277
    %v279 = vrot.slane %v278, 2
    %v280 = vadd.f32 %v278, %v279
    %v281 = vrot.slane %v280, 1
    %v282 = vadd.f32 %v280, %v281
    %s283 = vtos %v282
    %v284 = vstv %s283
    %p285 = scmp.eq.s32.totalorder 0, 0
    // Predicated region
    $region26: #{bilstm_forward.9} parent=1 // pred_check
      %p286 = pneg %p285
    $region27: #{bilstm_forward.9} parent=1 // pred_check_branch
      %288 = sbr.rel (%p286) target = $region29
    $region28: #{bilstm_forward.9} parent=1 // pred_region
      %vm289 = vcmask 0
      %290 = vst.msk [vmem:[#allocation5] sm:$0x1] %vm289, 0.0
    $region29: #{bilstm_forward.9} parent=1 // pred_fallthru
      _
    %v291 = vld [vmem:[#allocation5] sm:$0x1]
    %v292 = vadd.f32 %v291, %v284
    %vm293 = vcmask 0
    %294 = vst.msk [vmem:[#allocation5] sm:$0x1] %vm293, %v292
    // Predicated region
    $region30: #{bilstm_forward.9} parent=1 // pred_check
      _
    $region31: #{bilstm_forward.9} parent=1 // pred_check_branch
      %296 = sbr.rel (0) target = $region33
    $region32: #{bilstm_forward.9} parent=1 // pred_region
      _
    $region33: #{bilstm_forward.9} parent=1 // pred_fallthru
      _
    // Predicated region
    $region34: #{bilstm_forward.9} parent=1 // pred_check
      _
    $region35: #{bilstm_forward.9} parent=1 // pred_check_branch
      %298 = sbr.rel (0) target = $region37
    $region36: #{bilstm_forward.9} parent=1 // pred_region
      %300 = vsyncadd [#allocation4], 0
      %s302 = sshll.u32 [#allocation5], 4
      %s303 = int_to_ptr.vmem [resolvable:$true] %s302
      %s304 = sshll.u32 %s6, 4
      %s305 = int_to_ptr.hbm [resolvable:$true] %s304
      %307 = dma.vmem_to_hbm [thread:$0]  %s303, 16, %s305, [#allocation4]
    $region37: #{bilstm_forward.9} parent=1 // pred_fallthru
      _
    // Predicated region
    $region38: #{bilstm_forward.9} parent=1 // pred_check
      _
    $region39: #{bilstm_forward.9} parent=1 // pred_check_branch
      %309 = sbr.rel (0) target = $region41
    $region40: #{bilstm_forward.9} parent=1 // pred_region
      _
    $region41: #{bilstm_forward.9} parent=1 // pred_fallthru
      _
    // Predicated region
    $region42: #{bilstm_forward.9} parent=1 // pred_check
      _
    $region43: #{bilstm_forward.9} parent=1 // pred_check_branch
      %311 = sbr.rel (0) target = $region45
    $region44: #{bilstm_forward.9} parent=1 // pred_region
      %313 = dma.done [#allocation4], 16
    $region45: #{bilstm_forward.9} parent=1 // pred_fallthru
      _
    %314 = vsyncpa [#allocation3], 1
    %315 = vsyncpa [#allocation4], 1

// kernel: bilstm_forward.6
$region0: #{bilstm_forward.6}
  #allocation0 [shape = 'u32[]', space=smem, size = 0x4, offset = 0x4, fixed_abs, tag = 'smem constant byte address 0x4 - core index']
  #allocation1 [shape = 'u32[72,128]{1,0:T(1,128)}', space=vmem, size = 0x9000, scoped, tag = 'internal scratch']
  #allocation2 [shape = 'f32[2,128]{1,0:T(2,128)}', space=vmem, size = 0x400, scoped, tag = 'scratch operand']
  #allocation3 [shape = 'f32[2,128]{1,0:T(2,128)}', space=vmem, size = 0x400, scoped, tag = 'scratch operand']
  #allocation4 [shape = 'f32[2,128]{1,0:T(2,128)}', space=vmem, size = 0x400, scoped, tag = 'scratch operand']
  #allocation5 [shape = 'f32[2,128]{1,0:T(2,128)}', space=vmem, size = 0x400, scoped, tag = 'scratch operand']
  %s0 = inlined_call_operand.vmem [shape: f32[16,1024], index: 0, kind: input, shape index: {}, may-alias: {0,1}]
  %s1 = inlined_call_operand.vmem [shape: f32[16,1024], index: 1, kind: input, shape index: {}, may-alias: {0,1}]
  %s2 = inlined_call_operand.hbm [shape: bf16[2,128,512], index: 2, kind: input, shape index: {}]
  %s3 = inlined_call_operand.vmem [shape: bf16[16,128], index: 3, kind: output, shape index: {0}]
  %s4 = inlined_call_operand.vmem [shape: bf16[16,128], index: 4, kind: output, shape index: {1}]
  %5 = xla_tuple %s3, %s4
  %s6 = sld [smem:[#allocation0]]
  $region84: #{bilstm_forward.6} parent=0
    _
  %s8 = ssub.s32 1, %s6
  %s9 = scalar_select 0, %s8, %s6
  $region1: #{bilstm_forward.6} parent=0
    #allocation6 [shape = 'u8[32768]{0}', space=vmem, size = 0x8000, scoped, tag = 'input window, operand 0, single buffered']
    #allocation7 [shape = 'u8[32768]{0}', space=vmem, size = 0x8000, scoped, tag = 'input window, operand 1, single buffered']
    #allocation8 [shape = 'u8[262144]{0}', space=vmem, size = 0x40000, scoped, tag = 'input window, operand 2, single buffered']
    #allocation9 [shape = 's32[1]{0}', space=sflag, size = 0x4, scoped, tag = 'scoped memory for bilstm_forward.6']
    %10 = vsyncpa [#allocation9], 0
    // Predicated region
    $region2: #{bilstm_forward.6} parent=1 // pred_check
      _
    $region3: #{bilstm_forward.6} parent=1 // pred_check_branch
      %12 = sbr.rel (0) target = $region5
    $region4: #{bilstm_forward.6} parent=1 // pred_region
      // Predicated region
      $region6: #{bilstm_forward.6} parent=4 // pred_check
        _
      $region7: #{bilstm_forward.6} parent=4 // pred_check_branch
        %14 = sbr.rel (0) target = $region9
      $region8: #{bilstm_forward.6} parent=4 // pred_region
        // Predicated region
        $region10: #{bilstm_forward.6} parent=8 // pred_check
          _
        $region11: #{bilstm_forward.6} parent=8 // pred_check_branch
          %16 = sbr.rel (0) target = $region13
        $region12: #{bilstm_forward.6} parent=8 // pred_region
          loop: start=0, step=1, limit=1
          $region14: #{bilstm_forward.6} parent=12 // loop_pre_header
            _
          $region15: #{bilstm_forward.6} parent=12 // loop_header
            %s18 = sphi 0, %s22
            %p19 = scmp.ge.s32.totalorder %s18, 1
            %s23 = sphi %s0, %s0
            %s24 = sphi [#allocation6], [#allocation6]
          $region16: #{bilstm_forward.6} parent=12 // loop_header_branch
            %21 = sbr.rel (%p19) target = $region20
          $region17: #{bilstm_forward.6} parent=12 // loop_body
            %v25 = vld [vmem:[%s23] sm:$0xff]
            %26 = vst [vmem:[%s24] sm:$0xff] %v25
            %v27 = vld [vmem:[%s23 + $0x8] sm:$0xff]
            %28 = vst [vmem:[%s24 + $0x8] sm:$0xff] %v27
            %v29 = vld [vmem:[%s23 + $0x10] sm:$0xff]
            %30 = vst [vmem:[%s24 + $0x10] sm:$0xff] %v29
            %v31 = vld [vmem:[%s23 + $0x18] sm:$0xff]
            %32 = vst [vmem:[%s24 + $0x18] sm:$0xff] %v31
            %v33 = vld [vmem:[%s23 + $0x40] sm:$0xff]
            %34 = vst [vmem:[%s24 + $0x20] sm:$0xff] %v33
            %v35 = vld [vmem:[%s23 + $0x48] sm:$0xff]
            %36 = vst [vmem:[%s24 + $0x28] sm:$0xff] %v35
            %v37 = vld [vmem:[%s23 + $0x50] sm:$0xff]
            %38 = vst [vmem:[%s24 + $0x30] sm:$0xff] %v37
            %v39 = vld [vmem:[%s23 + $0x58] sm:$0xff]
            %40 = vst [vmem:[%s24 + $0x38] sm:$0xff] %v39
          $region18: #{bilstm_forward.6} parent=12 // loop_footer
            %s22 = sadd.s32 1, %s18
          $region19: #{bilstm_forward.6} parent=12 // loop_footer_branch
            %17 = sbr.rel target = $region15
          $region20: #{bilstm_forward.6} parent=12 // loop_exit
            _
        $region13: #{bilstm_forward.6} parent=8 // pred_fallthru
          _
        // Predicated region
        $region21: #{bilstm_forward.6} parent=8 // pred_check
          _
        $region22: #{bilstm_forward.6} parent=8 // pred_check_branch
          %42 = sbr.rel target = $region24
        $region23: #{bilstm_forward.6} parent=8 // pred_region
          _
        $region24: #{bilstm_forward.6} parent=8 // pred_fallthru
          _
      $region9: #{bilstm_forward.6} parent=4 // pred_fallthru
        _
      %43 = vnop
    $region5: #{bilstm_forward.6} parent=1 // pred_fallthru
      _
    // Predicated region
    $region25: #{bilstm_forward.6} parent=1 // pred_check
      _
    $region26: #{bilstm_forward.6} parent=1 // pred_check_branch
      %45 = sbr.rel (0) target = $region28
    $region27: #{bilstm_forward.6} parent=1 // pred_region
      %s46 = ssub.s32 0, 0
      %s47 = smul.u32 2, %s46
      %s48 = smul.addr %s47, 8
      %s49 = sadd.s32 4, %s48
      %s50 = smul.addr %s49, 8
      %s51 = scalar_lea.vmem %s1, %s50
      // Predicated region
      $region29: #{bilstm_forward.6} parent=27 // pred_check
        _
      $region30: #{bilstm_forward.6} parent=27 // pred_check_branch
        %53 = sbr.rel (0) target = $region32
      $region31: #{bilstm_forward.6} parent=27 // pred_region
        // Predicated region
        $region33: #{bilstm_forward.6} parent=31 // pred_check
          _
        $region34: #{bilstm_forward.6} parent=31 // pred_check_branch
          %55 = sbr.rel (0) target = $region36
        $region35: #{bilstm_forward.6} parent=31 // pred_region
          loop: start=0, step=1, limit=1
          $region37: #{bilstm_forward.6} parent=35 // loop_pre_header
            _
          $region38: #{bilstm_forward.6} parent=35 // loop_header
            %s57 = sphi 0, %s61
            %p58 = scmp.ge.s32.totalorder %s57, 1
            %s62 = sphi %s51, %s51
            %s63 = sphi [#allocation7], [#allocation7]
          $region39: #{bilstm_forward.6} parent=35 // loop_header_branch
            %60 = sbr.rel (%p58) target = $region43
          $region40: #{bilstm_forward.6} parent=35 // loop_body
            %v64 = vld [vmem:[%s62] sm:$0xff]
            %65 = vst [vmem:[%s63] sm:$0xff] %v64
            %v66 = vld [vmem:[%s62 + $0x8] sm:$0xff]
            %67 = vst [vmem:[%s63 + $0x8] sm:$0xff] %v66
            %v68 = vld [vmem:[%s62 + $0x10] sm:$0xff]
            %69 = vst [vmem:[%s63 + $0x10] sm:$0xff] %v68
            %v70 = vld [vmem:[%s62 + $0x18] sm:$0xff]
            %71 = vst [vmem:[%s63 + $0x18] sm:$0xff] %v70
            %v72 = vld [vmem:[%s62 + $0x40] sm:$0xff]
            %73 = vst [vmem:[%s63 + $0x20] sm:$0xff] %v72
            %v74 = vld [vmem:[%s62 + $0x48] sm:$0xff]
            %75 = vst [vmem:[%s63 + $0x28] sm:$0xff] %v74
            %v76 = vld [vmem:[%s62 + $0x50] sm:$0xff]
            %77 = vst [vmem:[%s63 + $0x30] sm:$0xff] %v76
            %v78 = vld [vmem:[%s62 + $0x58] sm:$0xff]
            %79 = vst [vmem:[%s63 + $0x38] sm:$0xff] %v78
          $region41: #{bilstm_forward.6} parent=35 // loop_footer
            %s61 = sadd.s32 1, %s57
          $region42: #{bilstm_forward.6} parent=35 // loop_footer_branch
            %56 = sbr.rel target = $region38
          $region43: #{bilstm_forward.6} parent=35 // loop_exit
            _
        $region36: #{bilstm_forward.6} parent=31 // pred_fallthru
          _
        // Predicated region
        $region44: #{bilstm_forward.6} parent=31 // pred_check
          _
        $region45: #{bilstm_forward.6} parent=31 // pred_check_branch
          %81 = sbr.rel target = $region47
        $region46: #{bilstm_forward.6} parent=31 // pred_region
          _
        $region47: #{bilstm_forward.6} parent=31 // pred_fallthru
          _
      $region32: #{bilstm_forward.6} parent=27 // pred_fallthru
        _
      %82 = vnop
    $region28: #{bilstm_forward.6} parent=1 // pred_fallthru
      _
    // Predicated region
    $region48: #{bilstm_forward.6} parent=1 // pred_check
      _
    $region49: #{bilstm_forward.6} parent=1 // pred_check_branch
      %84 = sbr.rel (0) target = $region51
    $region50: #{bilstm_forward.6} parent=1 // pred_region
      %86 = vsyncadd [#allocation9], 0
      %s87 = sshll.u32 %s2, 4
      %s88 = int_to_ptr.hbm [resolvable:$true] %s87
      %s89 = sshll.u32 [#allocation8], 4
      %s90 = int_to_ptr.vmem [resolvable:$true] %s89
      %95 = dma.hbm_to_vmem [thread:$0]  %s88, 8192, %s90, [#allocation9], 256, 256, 16
    $region51: #{bilstm_forward.6} parent=1 // pred_fallthru
      _
    // Predicated region
    $region52: #{bilstm_forward.6} parent=1 // pred_check
      _
    $region53: #{bilstm_forward.6} parent=1 // pred_check_branch
      %97 = sbr.rel (0) target = $region55
    $region54: #{bilstm_forward.6} parent=1 // pred_region
      _
    $region55: #{bilstm_forward.6} parent=1 // pred_fallthru
      _
    // Predicated region
    $region56: #{bilstm_forward.6} parent=1 // pred_check
      _
    $region57: #{bilstm_forward.6} parent=1 // pred_check_branch
      %99 = sbr.rel (0) target = $region59
    $region58: #{bilstm_forward.6} parent=1 // pred_region
      _
    $region59: #{bilstm_forward.6} parent=1 // pred_fallthru
      _
    // Predicated region
    $region60: #{bilstm_forward.6} parent=1 // pred_check
      _
    $region61: #{bilstm_forward.6} parent=1 // pred_check_branch
      %101 = sbr.rel (0) target = $region63
    $region62: #{bilstm_forward.6} parent=1 // pred_region
      %103 = dma.done [#allocation9], 8192
    $region63: #{bilstm_forward.6} parent=1 // pred_fallthru
      _
    %s104 = ssub.s32 0, 0
    %s105 = smul.u32 2, %s104
    %p106 = scmp.lt.s32.totalorder %s105, 1
    %s107 = scalar_select %p106, %s105, 1
    %s108 = smul.addr %s107, 4
    %s109 = scalar_lea.vmem %s4, %s108
    %s110 = ssub.s32 0, 0
    %s111 = smul.u32 2, %s110
    %s112 = ssub.s32 0, 0
    %s113 = smul.u32 2, %s112
    %p114 = scmp.lt.s32.totalorder %s113, 1
    %s115 = scalar_select %p114, %s113, 1
    %s116 = smul.addr %s115, 4
    %s117 = scalar_lea.vmem %s4, %s116
    %s118 = ssub.s32 0, 0
    %s119 = smul.u32 2, %s118
    %p120 = scmp.eq.s32.totalorder 0, 0
    // Predicated region
    $region64: #{bilstm_forward.6} parent=1 // pred_check
      %p121 = pneg %p120
    $region65: #{bilstm_forward.6} parent=1 // pred_check_branch
      %123 = sbr.rel (%p121) target = $region67
    $region66: #{bilstm_forward.6} parent=1 // pred_region
      %124 = vst [vmem:[#allocation2] sm:$0x3] 0.0
      %125 = vst [vmem:[#allocation3] sm:$0x3] 0.0
      %126 = vst [vmem:[#allocation4] sm:$0x3] 0.0
      %127 = vst [vmem:[#allocation5] sm:$0x3] 0.0
    $region67: #{bilstm_forward.6} parent=1 // pred_fallthru
      _
    %v128 = vld [vmem:[#allocation2] sm:$0x3]
    %v129 = vld [vmem:[#allocation3] sm:$0x3]
    %v130 = vld [vmem:[#allocation4] sm:$0x3]
    %v131 = vld [vmem:[#allocation5] sm:$0x3]
    %v132 = vld [vmem:[#allocation6] sm:$0x3]
    %v133 = vld [vmem:[#allocation6 + $0x8] sm:$0x3]
    %v134 = vld [vmem:[#allocation6 + $0x10] sm:$0x3]
    %v135 = vld [vmem:[#allocation6 + $0x18] sm:$0x3]
    %v136 = vld [vmem:[#allocation8] sm:$0xff]
    %v137 = vld [vmem:[#allocation8 + $0x8] sm:$0xff]
    %v138 = vld [vmem:[#allocation8 + $0x10] sm:$0xff]
    %v139 = vld [vmem:[#allocation8 + $0x18] sm:$0xff]
    %v140 = vld [vmem:[#allocation8 + $0x20] sm:$0xff]
    %v141 = vld [vmem:[#allocation8 + $0x28] sm:$0xff]
    %v142 = vld [vmem:[#allocation8 + $0x30] sm:$0xff]
    %v143 = vld [vmem:[#allocation8 + $0x38] sm:$0xff]
    %v144 = vld [vmem:[#allocation8 + $0x40] sm:$0xff]
    %v145 = vld [vmem:[#allocation8 + $0x48] sm:$0xff]
    %v146 = vld [vmem:[#allocation8 + $0x50] sm:$0xff]
    %v147 = vld [vmem:[#allocation8 + $0x58] sm:$0xff]
    %v148 = vld [vmem:[#allocation8 + $0x60] sm:$0xff]
    %v149 = vld [vmem:[#allocation8 + $0x68] sm:$0xff]
    %v150 = vld [vmem:[#allocation8 + $0x70] sm:$0xff]
    %v151 = vld [vmem:[#allocation8 + $0x78] sm:$0xff]
    %v152 = vld [vmem:[#allocation8 + $0x80] sm:$0xff]
    %v153 = vld [vmem:[#allocation8 + $0x88] sm:$0xff]
    %v154 = vld [vmem:[#allocation8 + $0x90] sm:$0xff]
    %v155 = vld [vmem:[#allocation8 + $0x98] sm:$0xff]
    %v156 = vld [vmem:[#allocation8 + $0xa0] sm:$0xff]
    %v157 = vld [vmem:[#allocation8 + $0xa8] sm:$0xff]
    %v158 = vld [vmem:[#allocation8 + $0xb0] sm:$0xff]
    %v159 = vld [vmem:[#allocation8 + $0xb8] sm:$0xff]
    %v160 = vld [vmem:[#allocation8 + $0xc0] sm:$0xff]
    %v161 = vld [vmem:[#allocation8 + $0xc8] sm:$0xff]
    %v162 = vld [vmem:[#allocation8 + $0xd0] sm:$0xff]
    %v163 = vld [vmem:[#allocation8 + $0xd8] sm:$0xff]
    %v164 = vld [vmem:[#allocation8 + $0xe0] sm:$0xff]
    %v165 = vld [vmem:[#allocation8 + $0xe8] sm:$0xff]
    %v166 = vld [vmem:[#allocation8 + $0xf0] sm:$0xff]
    %v167 = vld [vmem:[#allocation8 + $0xf8] sm:$0xff]
    %v168 = vpack.c.bf16 %v128, %v128
    %v201 = vunpack.c.l.b16 %v136
    %v202 = vunpack.c.h.b16 %v136
    %v203 = vunpack.c.l.b16 %v137
    %v204 = vunpack.c.h.b16 %v137
    %v205 = vunpack.c.l.b16 %v138
    %v206 = vunpack.c.h.b16 %v138
    %v207 = vunpack.c.l.b16 %v139
    %v208 = vunpack.c.h.b16 %v139
    %v209 = vunpack.c.l.b16 %v140
    %v210 = vunpack.c.h.b16 %v140
    %v211 = vunpack.c.l.b16 %v141
    %v212 = vunpack.c.h.b16 %v141
    %v213 = vunpack.c.l.b16 %v142
    %v214 = vunpack.c.h.b16 %v142
    %v215 = vunpack.c.l.b16 %v143
    %v216 = vunpack.c.h.b16 %v143
    %v217 = vunpack.c.l.b16 %v144
    %v218 = vunpack.c.h.b16 %v144
    %v219 = vunpack.c.l.b16 %v145
    %v220 = vunpack.c.h.b16 %v145
    %v221 = vunpack.c.l.b16 %v146
    %v222 = vunpack.c.h.b16 %v146
    %v223 = vunpack.c.l.b16 %v147
    %v224 = vunpack.c.h.b16 %v147
    %v225 = vunpack.c.l.b16 %v148
    %v226 = vunpack.c.h.b16 %v148
    %v227 = vunpack.c.l.b16 %v149
    %v228 = vunpack.c.h.b16 %v149
    %v229 = vunpack.c.l.b16 %v150
    %v230 = vunpack.c.h.b16 %v150
    %v231 = vunpack.c.l.b16 %v151
    %v232 = vunpack.c.h.b16 %v151
    %v233 = vunpack.c.l.b16 %v152
    %v234 = vunpack.c.h.b16 %v152
    %v235 = vunpack.c.l.b16 %v153
    %v236 = vunpack.c.h.b16 %v153
    %v237 = vunpack.c.l.b16 %v154
    %v238 = vunpack.c.h.b16 %v154
    %v239 = vunpack.c.l.b16 %v155
    %v240 = vunpack.c.h.b16 %v155
    %v241 = vunpack.c.l.b16 %v156
    %v242 = vunpack.c.h.b16 %v156
    %v243 = vunpack.c.l.b16 %v157
    %v244 = vunpack.c.h.b16 %v157
    %v245 = vunpack.c.l.b16 %v158
    %v246 = vunpack.c.h.b16 %v158
    %v247 = vunpack.c.l.b16 %v159
    %v248 = vunpack.c.h.b16 %v159
    %v249 = vunpack.c.l.b16 %v160
    %v250 = vunpack.c.h.b16 %v160
    %v251 = vunpack.c.l.b16 %v161
    %v252 = vunpack.c.h.b16 %v161
    %v253 = vunpack.c.l.b16 %v162
    %v254 = vunpack.c.h.b16 %v162
    %v255 = vunpack.c.l.b16 %v163
    %v256 = vunpack.c.h.b16 %v163
    %v257 = vunpack.c.l.b16 %v164
    %v258 = vunpack.c.h.b16 %v164
    %v259 = vunpack.c.l.b16 %v165
    %v260 = vunpack.c.h.b16 %v165
    %v261 = vunpack.c.l.b16 %v166
    %v262 = vunpack.c.h.b16 %v166
    %v263 = vunpack.c.l.b16 %v167
    %v264 = vunpack.c.h.b16 %v167
    %v265 = vpack.c.b16 %v205, %v201
    %v266 = vpack.c.b16 %v206, %v202
    %v267 = vpack.c.b16 %v207, %v203
    %v268 = vpack.c.b16 %v208, %v204
    %v269 = vpack.c.b16 %v213, %v209
    %v270 = vpack.c.b16 %v214, %v210
    %v271 = vpack.c.b16 %v215, %v211
    %v272 = vpack.c.b16 %v216, %v212
    %v273 = vpack.c.b16 %v221, %v217
    %v274 = vpack.c.b16 %v222, %v218
    %v275 = vpack.c.b16 %v223, %v219
    %v276 = vpack.c.b16 %v224, %v220
    %v277 = vpack.c.b16 %v229, %v225
    %v278 = vpack.c.b16 %v230, %v226
    %v279 = vpack.c.b16 %v231, %v227
    %v280 = vpack.c.b16 %v232, %v228
    %v281 = vpack.c.b16 %v237, %v233
    %v282 = vpack.c.b16 %v238, %v234
    %v283 = vpack.c.b16 %v239, %v235
    %v284 = vpack.c.b16 %v240, %v236
    %v285 = vpack.c.b16 %v245, %v241
    %v286 = vpack.c.b16 %v246, %v242
    %v287 = vpack.c.b16 %v247, %v243
    %v288 = vpack.c.b16 %v248, %v244
    %v289 = vpack.c.b16 %v253, %v249
    %v290 = vpack.c.b16 %v254, %v250
    %v291 = vpack.c.b16 %v255, %v251
    %v292 = vpack.c.b16 %v256, %v252
    %v293 = vpack.c.b16 %v261, %v257
    %v294 = vpack.c.b16 %v262, %v258
    %v295 = vpack.c.b16 %v263, %v259
    %v296 = vpack.c.b16 %v264, %v260
    %329 = vmatpush.bf16.msra.mxu0 %v293
    %330 = vmatpush.bf16.msra.mxu0 %v289
    %331 = vmatpush.bf16.msra.mxu0 %v285
    %332 = vmatpush.bf16.msra.mxu0 %v281
    %333 = vmatpush.bf16.msra.mxu0 %v277
    %334 = vmatpush.bf16.msra.mxu0 %v273
    %335 = vmatpush.bf16.msra.mxu0 %v269
    %336 = vmatpush.bf16.msra.mxu0 %v265
    %337 = vmatmul.bf16.gmra.mxu0 %v168
    %v338 = vpop.f32.mrf.mxu0
    %v339 = vadd.f32 0.0, %v338
    %v340 = vpop.f32.mrf.mxu0
    %341 = vdwg.mxu0
    %342 = vmatpush.bf16.msra.mxu0 %v294
    %343 = vmatpush.bf16.msra.mxu0 %v290
    %344 = vmatpush.bf16.msra.mxu0 %v286
    %345 = vmatpush.bf16.msra.mxu0 %v282
    %346 = vmatpush.bf16.msra.mxu0 %v278
    %347 = vmatpush.bf16.msra.mxu0 %v274
    %348 = vmatpush.bf16.msra.mxu0 %v270
    %349 = vmatpush.bf16.msra.mxu0 %v266
    %350 = vmatmul.bf16.gmra.mxu0 %v168
    %v351 = vpop.f32.mrf.mxu0
    %v352 = vadd.f32 0.0, %v351
    %v353 = vpop.f32.mrf.mxu0
    %354 = vdwg.mxu0
    %355 = vmatpush.bf16.msra.mxu0 %v295
    %356 = vmatpush.bf16.msra.mxu0 %v291
    %357 = vmatpush.bf16.msra.mxu0 %v287
    %358 = vmatpush.bf16.msra.mxu0 %v283
    %359 = vmatpush.bf16.msra.mxu0 %v279
    %360 = vmatpush.bf16.msra.mxu0 %v275
    %361 = vmatpush.bf16.msra.mxu0 %v271
    %362 = vmatpush.bf16.msra.mxu0 %v267
    %363 = vmatmul.bf16.gmra.mxu0 %v168
    %v364 = vpop.f32.mrf.mxu0
    %v365 = vadd.f32 0.0, %v364
    %v366 = vpop.f32.mrf.mxu0
    %367 = vdwg.mxu0
    %368 = vmatpush.bf16.msra.mxu0 %v296
    %369 = vmatpush.bf16.msra.mxu0 %v292
    %370 = vmatpush.bf16.msra.mxu0 %v288
    %371 = vmatpush.bf16.msra.mxu0 %v284
    %372 = vmatpush.bf16.msra.mxu0 %v280
    %373 = vmatpush.bf16.msra.mxu0 %v276
    %374 = vmatpush.bf16.msra.mxu0 %v272
    %375 = vmatpush.bf16.msra.mxu0 %v268
    %376 = vmatmul.bf16.gmra.mxu0 %v168
    %v377 = vpop.f32.mrf.mxu0
    %v378 = vadd.f32 0.0, %v377
    %v379 = vpop.f32.mrf.mxu0
    %380 = vdwg.mxu0
    %v381 = vadd.f32 %v132, %v339
    %v382 = vadd.f32 %v133, %v352
    %v383 = vadd.f32 %v134, %v365
    %v384 = vadd.f32 %v135, %v378
    %v385 = vxor.u32 %v381, 2147483648
    %v386 = vmul.f32 %v385, 1.442695
    %v387 = vpow.pop %v386
    %v388 = vadd.f32 %v387, 1.0
    %v389 = vrcp.pop %v388
    %v390 = vmul.f32 %v388, %v389
    %v391 = vsub.f32 1.0, %v390
    %v392 = vmul.f32 %v389, %v391
    %v393 = vadd.f32 %v389, %v392
    %vm394 = vweird.f32 %v388
    %vm395 = vweird.f32 %v389
    %vm396 = vmor %vm394, %vm395
    %v397 = vsel %vm396, %v389, %v393
    %v398 = vand.u32 2147483647, %v388
    %vm399 = vcmp.eq.f32.partialorder %v398, 8.507059e+37
    %v400 = vand.u32 %v388, 2147483648
    %v401 = vor.u32 1.1754944e-38, %v400
    %v402 = vsel %vm399, %v401, %v397
    %v403 = vmul.f32 1.0, %v402
    %v404 = vxor.u32 %v382, 2147483648
    %v405 = vmul.f32 %v404, 1.442695
    %v406 = vpow.pop %v405
    %v407 = vadd.f32 %v406, 1.0
    %v408 = vrcp.pop %v407
    %v409 = vmul.f32 %v407, %v408
    %v410 = vsub.f32 1.0, %v409
    %v411 = vmul.f32 %v408, %v410
    %v412 = vadd.f32 %v408, %v411
    %vm413 = vweird.f32 %v407
    %vm414 = vweird.f32 %v408
    %vm415 = vmor %vm413, %vm414
    %v416 = vsel %vm415, %v408, %v412
    %v417 = vand.u32 2147483647, %v407
    %vm418 = vcmp.eq.f32.partialorder %v417, 8.507059e+37
    %v419 = vand.u32 %v407, 2147483648
    %v420 = vor.u32 1.1754944e-38, %v419
    %v421 = vsel %vm418, %v420, %v416
    %v422 = vmul.f32 1.0, %v421
    %v423 = vtanh.pop %v383
    %v424 = vxor.u32 %v384, 2147483648
    %v425 = vmul.f32 %v424, 1.442695
    %v426 = vpow.pop %v425
    %v427 = vadd.f32 %v426, 1.0
    %v428 = vrcp.pop %v427
    %v429 = vmul.f32 %v427, %v428
    %v430 = vsub.f32 1.0, %v429
    %v431 = vmul.f32 %v428, %v430
    %v432 = vadd.f32 %v428, %v431
    %vm433 = vweird.f32 %v427
    %vm434 = vweird.f32 %v428
    %vm435 = vmor %vm433, %vm434
    %v436 = vsel %vm435, %v428, %v432
    %v437 = vand.u32 2147483647, %v427
    %vm438 = vcmp.eq.f32.partialorder %v437, 8.507059e+37
    %v439 = vand.u32 %v427, 2147483648
    %v440 = vor.u32 1.1754944e-38, %v439
    %v441 = vsel %vm438, %v440, %v436
    %v442 = vmul.f32 1.0, %v441
    %v443 = vmul.f32 %v422, %v129
    %v444 = vmul.f32 %v403, %v423
    %v445 = vadd.f32 %v443, %v444
    %v446 = vtanh.pop %v445
    %v447 = vmul.f32 %v442, %v446
    %v448 = vld [vmem:[#allocation7 + $0x20] sm:$0xc0]
    %v449 = vld [vmem:[#allocation7 + $0x28] sm:$0xc0]
    %v450 = vld [vmem:[#allocation7 + $0x30] sm:$0xc0]
    %v451 = vld [vmem:[#allocation7 + $0x38] sm:$0xc0]
    %s452 = scalar_lea.vmem [#allocation8], 256
    %v453 = vld [vmem:[%s452] sm:$0xff]
    %v454 = vld [vmem:[%s452 + $0x8] sm:$0xff]
    %v455 = vld [vmem:[%s452 + $0x10] sm:$0xff]
    %v456 = vld [vmem:[%s452 + $0x18] sm:$0xff]
    %v457 = vld [vmem:[%s452 + $0x20] sm:$0xff]
    %v458 = vld [vmem:[%s452 + $0x28] sm:$0xff]
    %v459 = vld [vmem:[%s452 + $0x30] sm:$0xff]
    %v460 = vld [vmem:[%s452 + $0x38] sm:$0xff]
    %v461 = vld [vmem:[%s452 + $0x40] sm:$0xff]
    %v462 = vld [vmem:[%s452 + $0x48] sm:$0xff]
    %v463 = vld [vmem:[%s452 + $0x50] sm:$0xff]
    %v464 = vld [vmem:[%s452 + $0x58] sm:$0xff]
    %v465 = vld [vmem:[%s452 + $0x60] sm:$0xff]
    %v466 = vld [vmem:[%s452 + $0x68] sm:$0xff]
    %v467 = vld [vmem:[%s452 + $0x70] sm:$0xff]
    %v468 = vld [vmem:[%s452 + $0x78] sm:$0xff]
    %v469 = vld [vmem:[%s452 + $0x80] sm:$0xff]
    %v470 = vld [vmem:[%s452 + $0x88] sm:$0xff]
    %v471 = vld [vmem:[%s452 + $0x90] sm:$0xff]
    %v472 = vld [vmem:[%s452 + $0x98] sm:$0xff]
    %v473 = vld [vmem:[%s452 + $0xa0] sm:$0xff]
    %v474 = vld [vmem:[%s452 + $0xa8] sm:$0xff]
    %v475 = vld [vmem:[%s452 + $0xb0] sm:$0xff]
    %v476 = vld [vmem:[%s452 + $0xb8] sm:$0xff]
    %v477 = vld [vmem:[%s452 + $0xc0] sm:$0xff]
    %v478 = vld [vmem:[%s452 + $0xc8] sm:$0xff]
    %v479 = vld [vmem:[%s452 + $0xd0] sm:$0xff]
    %v480 = vld [vmem:[%s452 + $0xd8] sm:$0xff]
    %v481 = vld [vmem:[%s452 + $0xe0] sm:$0xff]
    %v482 = vld [vmem:[%s452 + $0xe8] sm:$0xff]
    %v483 = vld [vmem:[%s452 + $0xf0] sm:$0xff]
    %v484 = vld [vmem:[%s452 + $0xf8] sm:$0xff]
    %v485 = vpack.c.bf16 %v130, %v130
    %v518 = vunpack.c.l.b16 %v453
    %v519 = vunpack.c.h.b16 %v453
    %v520 = vunpack.c.l.b16 %v454
    %v521 = vunpack.c.h.b16 %v454
    %v522 = vunpack.c.l.b16 %v455
    %v523 = vunpack.c.h.b16 %v455
    %v524 = vunpack.c.l.b16 %v456
    %v525 = vunpack.c.h.b16 %v456
    %v526 = vunpack.c.l.b16 %v457
    %v527 = vunpack.c.h.b16 %v457
    %v528 = vunpack.c.l.b16 %v458
    %v529 = vunpack.c.h.b16 %v458
    %v530 = vunpack.c.l.b16 %v459
    %v531 = vunpack.c.h.b16 %v459
    %v532 = vunpack.c.l.b16 %v460
    %v533 = vunpack.c.h.b16 %v460
    %v534 = vunpack.c.l.b16 %v461
    %v535 = vunpack.c.h.b16 %v461
    %v536 = vunpack.c.l.b16 %v462
    %v537 = vunpack.c.h.b16 %v462
    %v538 = vunpack.c.l.b16 %v463
    %v539 = vunpack.c.h.b16 %v463
    %v540 = vunpack.c.l.b16 %v464
    %v541 = vunpack.c.h.b16 %v464
    %v542 = vunpack.c.l.b16 %v465
    %v543 = vunpack.c.h.b16 %v465
    %v544 = vunpack.c.l.b16 %v466
    %v545 = vunpack.c.h.b16 %v466
    %v546 = vunpack.c.l.b16 %v467
    %v547 = vunpack.c.h.b16 %v467
    %v548 = vunpack.c.l.b16 %v468
    %v549 = vunpack.c.h.b16 %v468
    %v550 = vunpack.c.l.b16 %v469
    %v551 = vunpack.c.h.b16 %v469
    %v552 = vunpack.c.l.b16 %v470
    %v553 = vunpack.c.h.b16 %v470
    %v554 = vunpack.c.l.b16 %v471
    %v555 = vunpack.c.h.b16 %v471
    %v556 = vunpack.c.l.b16 %v472
    %v557 = vunpack.c.h.b16 %v472
    %v558 = vunpack.c.l.b16 %v473
    %v559 = vunpack.c.h.b16 %v473
    %v560 = vunpack.c.l.b16 %v474
    %v561 = vunpack.c.h.b16 %v474
    %v562 = vunpack.c.l.b16 %v475
    %v563 = vunpack.c.h.b16 %v475
    %v564 = vunpack.c.l.b16 %v476
    %v565 = vunpack.c.h.b16 %v476
    %v566 = vunpack.c.l.b16 %v477
    %v567 = vunpack.c.h.b16 %v477
    %v568 = vunpack.c.l.b16 %v478
    %v569 = vunpack.c.h.b16 %v478
    %v570 = vunpack.c.l.b16 %v479
    %v571 = vunpack.c.h.b16 %v479
    %v572 = vunpack.c.l.b16 %v480
    %v573 = vunpack.c.h.b16 %v480
    %v574 = vunpack.c.l.b16 %v481
    %v575 = vunpack.c.h.b16 %v481
    %v576 = vunpack.c.l.b16 %v482
    %v577 = vunpack.c.h.b16 %v482
    %v578 = vunpack.c.l.b16 %v483
    %v579 = vunpack.c.h.b16 %v483
    %v580 = vunpack.c.l.b16 %v484
    %v581 = vunpack.c.h.b16 %v484
    %v582 = vpack.c.b16 %v522, %v518
    %v583 = vpack.c.b16 %v523, %v519
    %v584 = vpack.c.b16 %v524, %v520
    %v585 = vpack.c.b16 %v525, %v521
    %v586 = vpack.c.b16 %v530, %v526
    %v587 = vpack.c.b16 %v531, %v527
    %v588 = vpack.c.b16 %v532, %v528
    %v589 = vpack.c.b16 %v533, %v529
    %v590 = vpack.c.b16 %v538, %v534
    %v591 = vpack.c.b16 %v539, %v535
    %v592 = vpack.c.b16 %v540, %v536
    %v593 = vpack.c.b16 %v541, %v537
    %v594 = vpack.c.b16 %v546, %v542
    %v595 = vpack.c.b16 %v547, %v543
    %v596 = vpack.c.b16 %v548, %v544
    %v597 = vpack.c.b16 %v549, %v545
    %v598 = vpack.c.b16 %v554, %v550
    %v599 = vpack.c.b16 %v555, %v551
    %v600 = vpack.c.b16 %v556, %v552
    %v601 = vpack.c.b16 %v557, %v553
    %v602 = vpack.c.b16 %v562, %v558
    %v603 = vpack.c.b16 %v563, %v559
    %v604 = vpack.c.b16 %v564, %v560
    %v605 = vpack.c.b16 %v565, %v561
    %v606 = vpack.c.b16 %v570, %v566
    %v607 = vpack.c.b16 %v571, %v567
    %v608 = vpack.c.b16 %v572, %v568
    %v609 = vpack.c.b16 %v573, %v569
    %v610 = vpack.c.b16 %v578, %v574
    %v611 = vpack.c.b16 %v579, %v575
    %v612 = vpack.c.b16 %v580, %v576
    %v613 = vpack.c.b16 %v581, %v577
    %646 = vmatpush.bf16.msra.mxu0 %v610
    %647 = vmatpush.bf16.msra.mxu0 %v606
    %648 = vmatpush.bf16.msra.mxu0 %v602
    %649 = vmatpush.bf16.msra.mxu0 %v598
    %650 = vmatpush.bf16.msra.mxu0 %v594
    %651 = vmatpush.bf16.msra.mxu0 %v590
    %652 = vmatpush.bf16.msra.mxu0 %v586
    %653 = vmatpush.bf16.msra.mxu0 %v582
    %654 = vmatmul.bf16.gmra.mxu0 %v485
    %v655 = vpop.f32.mrf.mxu0
    %v656 = vadd.f32 0.0, %v655
    %v657 = vpop.f32.mrf.mxu0
    %658 = vdwg.mxu0
    %659 = vmatpush.bf16.msra.mxu0 %v611
    %660 = vmatpush.bf16.msra.mxu0 %v607
    %661 = vmatpush.bf16.msra.mxu0 %v603
    %662 = vmatpush.bf16.msra.mxu0 %v599
    %663 = vmatpush.bf16.msra.mxu0 %v595
    %664 = vmatpush.bf16.msra.mxu0 %v591
    %665 = vmatpush.bf16.msra.mxu0 %v587
    %666 = vmatpush.bf16.msra.mxu0 %v583
    %667 = vmatmul.bf16.gmra.mxu0 %v485
    %v668 = vpop.f32.mrf.mxu0
    %v669 = vadd.f32 0.0, %v668
    %v670 = vpop.f32.mrf.mxu0
    %671 = vdwg.mxu0
    %672 = vmatpush.bf16.msra.mxu0 %v612
    %673 = vmatpush.bf16.msra.mxu0 %v608
    %674 = vmatpush.bf16.msra.mxu0 %v604
    %675 = vmatpush.bf16.msra.mxu0 %v600
    %676 = vmatpush.bf16.msra.mxu0 %v596
    %677 = vmatpush.bf16.msra.mxu0 %v592
    %678 = vmatpush.bf16.msra.mxu0 %v588
    %679 = vmatpush.bf16.msra.mxu0 %v584
    %680 = vmatmul.bf16.gmra.mxu0 %v485
    %v681 = vpop.f32.mrf.mxu0
    %v682 = vadd.f32 0.0, %v681
    %v683 = vpop.f32.mrf.mxu0
    %684 = vdwg.mxu0
    %685 = vmatpush.bf16.msra.mxu0 %v613
    %686 = vmatpush.bf16.msra.mxu0 %v609
    %687 = vmatpush.bf16.msra.mxu0 %v605
    %688 = vmatpush.bf16.msra.mxu0 %v601
    %689 = vmatpush.bf16.msra.mxu0 %v597
    %690 = vmatpush.bf16.msra.mxu0 %v593
    %691 = vmatpush.bf16.msra.mxu0 %v589
    %692 = vmatpush.bf16.msra.mxu0 %v585
    %693 = vmatmul.bf16.gmra.mxu0 %v485
    %v694 = vpop.f32.mrf.mxu0
    %v695 = vadd.f32 0.0, %v694
    %v696 = vpop.f32.mrf.mxu0
    %697 = vdwg.mxu0
    %v702 = vrot.slane %v656, 2
    %v703 = vrot.slane %v669, 2
    %v704 = vrot.slane %v682, 2
    %v705 = vrot.slane %v695, 2
    %v710 = vadd.f32 %v448, %v702
    %v711 = vadd.f32 %v449, %v703
    %v712 = vadd.f32 %v450, %v704
    %v713 = vadd.f32 %v451, %v705
    %v714 = vxor.u32 %v710, 2147483648
    %v715 = vmul.f32 %v714, 1.442695
    %v716 = vpow.pop %v715
    %v717 = vadd.f32 %v716, 1.0
    %v718 = vrcp.pop %v717
    %v719 = vmul.f32 %v717, %v718
    %v720 = vsub.f32 1.0, %v719
    %v721 = vmul.f32 %v718, %v720
    %v722 = vadd.f32 %v718, %v721
    %vm723 = vweird.f32 %v717
    %vm724 = vweird.f32 %v718
    %vm725 = vmor %vm723, %vm724
    %v726 = vsel %vm725, %v718, %v722
    %v727 = vand.u32 2147483647, %v717
    %vm728 = vcmp.eq.f32.partialorder %v727, 8.507059e+37
    %v729 = vand.u32 %v717, 2147483648
    %v730 = vor.u32 1.1754944e-38, %v729
    %v731 = vsel %vm728, %v730, %v726
    %v732 = vmul.f32 1.0, %v731
    %v733 = vxor.u32 %v711, 2147483648
    %v734 = vmul.f32 %v733, 1.442695
    %v735 = vpow.pop %v734
    %v736 = vadd.f32 %v735, 1.0
    %v737 = vrcp.pop %v736
    %v738 = vmul.f32 %v736, %v737
    %v739 = vsub.f32 1.0, %v738
    %v740 = vmul.f32 %v737, %v739
    %v741 = vadd.f32 %v737, %v740
    %vm742 = vweird.f32 %v736
    %vm743 = vweird.f32 %v737
    %vm744 = vmor %vm742, %vm743
    %v745 = vsel %vm744, %v737, %v741
    %v746 = vand.u32 2147483647, %v736
    %vm747 = vcmp.eq.f32.partialorder %v746, 8.507059e+37
    %v748 = vand.u32 %v736, 2147483648
    %v749 = vor.u32 1.1754944e-38, %v748
    %v750 = vsel %vm747, %v749, %v745
    %v751 = vmul.f32 1.0, %v750
    %v752 = vtanh.pop %v712
    %v753 = vxor.u32 %v713, 2147483648
    %v754 = vmul.f32 %v753, 1.442695
    %v755 = vpow.pop %v754
    %v756 = vadd.f32 %v755, 1.0
    %v757 = vrcp.pop %v756
    %v758 = vmul.f32 %v756, %v757
    %v759 = vsub.f32 1.0, %v758
    %v760 = vmul.f32 %v757, %v759
    %v761 = vadd.f32 %v757, %v760
    %vm762 = vweird.f32 %v756
    %vm763 = vweird.f32 %v757
    %vm764 = vmor %vm762, %vm763
    %v765 = vsel %vm764, %v757, %v761
    %v766 = vand.u32 2147483647, %v756
    %vm767 = vcmp.eq.f32.partialorder %v766, 8.507059e+37
    %v768 = vand.u32 %v756, 2147483648
    %v769 = vor.u32 1.1754944e-38, %v768
    %v770 = vsel %vm767, %v769, %v765
    %v771 = vmul.f32 1.0, %v770
    %v773 = vrot.slane %v131, 2
    %v775 = vmul.f32 %v751, %v773
    %v776 = vmul.f32 %v732, %v752
    %v777 = vadd.f32 %v775, %v776
    %v778 = vtanh.pop %v777
    %v779 = vmul.f32 %v771, %v778
    %v780 = vpack.c.bf16 %v447, %v447
    %781 = vst [vmem:[%s3] sm:$0x1] %v780
    %v782 = vpack.c.bf16 %v779, %v779
    %783 = vst [vmem:[%s117 + $0x4] sm:$0x8] %v782
    %v784 = vld [vmem:[#allocation6] sm:$0xc]
    %v785 = vld [vmem:[#allocation6 + $0x8] sm:$0xc]
    %v786 = vld [vmem:[#allocation6 + $0x10] sm:$0xc]
    %v787 = vld [vmem:[#allocation6 + $0x18] sm:$0xc]
    %v788 = vld [vmem:[#allocation8] sm:$0xff]
    %v789 = vld [vmem:[#allocation8 + $0x8] sm:$0xff]
    %v790 = vld [vmem:[#allocation8 + $0x10] sm:$0xff]
    %v791 = vld [vmem:[#allocation8 + $0x18] sm:$0xff]
    %v792 = vld [vmem:[#allocation8 + $0x20] sm:$0xff]
    %v793 = vld [vmem:[#allocation8 + $0x28] sm:$0xff]
    %v794 = vld [vmem:[#allocation8 + $0x30] sm:$0xff]
    %v795 = vld [vmem:[#allocation8 + $0x38] sm:$0xff]
    %v796 = vld [vmem:[#allocation8 + $0x40] sm:$0xff]
    %v797 = vld [vmem:[#allocation8 + $0x48] sm:$0xff]
    %v798 = vld [vmem:[#allocation8 + $0x50] sm:$0xff]
    %v799 = vld [vmem:[#allocation8 + $0x58] sm:$0xff]
    %v800 = vld [vmem:[#allocation8 + $0x60] sm:$0xff]
    %v801 = vld [vmem:[#allocation8 + $0x68] sm:$0xff]
    %v802 = vld [vmem:[#allocation8 + $0x70] sm:$0xff]
    %v803 = vld [vmem:[#allocation8 + $0x78] sm:$0xff]
    %v804 = vld [vmem:[#allocation8 + $0x80] sm:$0xff]
    %v805 = vld [vmem:[#allocation8 + $0x88] sm:$0xff]
    %v806 = vld [vmem:[#allocation8 + $0x90] sm:$0xff]
    %v807 = vld [vmem:[#allocation8 + $0x98] sm:$0xff]
    %v808 = vld [vmem:[#allocation8 + $0xa0] sm:$0xff]
    %v809 = vld [vmem:[#allocation8 + $0xa8] sm:$0xff]
    %v810 = vld [vmem:[#allocation8 + $0xb0] sm:$0xff]
    %v811 = vld [vmem:[#allocation8 + $0xb8] sm:$0xff]
    %v812 = vld [vmem:[#allocation8 + $0xc0] sm:$0xff]
    %v813 = vld [vmem:[#allocation8 + $0xc8] sm:$0xff]
    %v814 = vld [vmem:[#allocation8 + $0xd0] sm:$0xff]
    %v815 = vld [vmem:[#allocation8 + $0xd8] sm:$0xff]
    %v816 = vld [vmem:[#allocation8 + $0xe0] sm:$0xff]
    %v817 = vld [vmem:[#allocation8 + $0xe8] sm:$0xff]
    %v818 = vld [vmem:[#allocation8 + $0xf0] sm:$0xff]
    %v819 = vld [vmem:[#allocation8 + $0xf8] sm:$0xff]
    %v852 = vunpack.c.l.b16 %v788
    %v853 = vunpack.c.h.b16 %v788
    %v854 = vunpack.c.l.b16 %v789
    %v855 = vunpack.c.h.b16 %v789
    %v856 = vunpack.c.l.b16 %v790
    %v857 = vunpack.c.h.b16 %v790
    %v858 = vunpack.c.l.b16 %v791
    %v859 = vunpack.c.h.b16 %v791
    %v860 = vunpack.c.l.b16 %v792
    %v861 = vunpack.c.h.b16 %v792
    %v862 = vunpack.c.l.b16 %v793
    %v863 = vunpack.c.h.b16 %v793
    %v864 = vunpack.c.l.b16 %v794
    %v865 = vunpack.c.h.b16 %v794
    %v866 = vunpack.c.l.b16 %v795
    %v867 = vunpack.c.h.b16 %v795
    %v868 = vunpack.c.l.b16 %v796
    %v869 = vunpack.c.h.b16 %v796
    %v870 = vunpack.c.l.b16 %v797
    %v871 = vunpack.c.h.b16 %v797
    %v872 = vunpack.c.l.b16 %v798
    %v873 = vunpack.c.h.b16 %v798
    %v874 = vunpack.c.l.b16 %v799
    %v875 = vunpack.c.h.b16 %v799
    %v876 = vunpack.c.l.b16 %v800
    %v877 = vunpack.c.h.b16 %v800
    %v878 = vunpack.c.l.b16 %v801
    %v879 = vunpack.c.h.b16 %v801
    %v880 = vunpack.c.l.b16 %v802
    %v881 = vunpack.c.h.b16 %v802
    %v882 = vunpack.c.l.b16 %v803
    %v883 = vunpack.c.h.b16 %v803
    %v884 = vunpack.c.l.b16 %v804
    %v885 = vunpack.c.h.b16 %v804
    %v886 = vunpack.c.l.b16 %v805
    %v887 = vunpack.c.h.b16 %v805
    %v888 = vunpack.c.l.b16 %v806
    %v889 = vunpack.c.h.b16 %v806
    %v890 = vunpack.c.l.b16 %v807
    %v891 = vunpack.c.h.b16 %v807
    %v892 = vunpack.c.l.b16 %v808
    %v893 = vunpack.c.h.b16 %v808
    %v894 = vunpack.c.l.b16 %v809
    %v895 = vunpack.c.h.b16 %v809
    %v896 = vunpack.c.l.b16 %v810
    %v897 = vunpack.c.h.b16 %v810
    %v898 = vunpack.c.l.b16 %v811
    %v899 = vunpack.c.h.b16 %v811
    %v900 = vunpack.c.l.b16 %v812
    %v901 = vunpack.c.h.b16 %v812
    %v902 = vunpack.c.l.b16 %v813
    %v903 = vunpack.c.h.b16 %v813
    %v904 = vunpack.c.l.b16 %v814
    %v905 = vunpack.c.h.b16 %v814
    %v906 = vunpack.c.l.b16 %v815
    %v907 = vunpack.c.h.b16 %v815
    %v908 = vunpack.c.l.b16 %v816
    %v909 = vunpack.c.h.b16 %v816
    %v910 = vunpack.c.l.b16 %v817
    %v911 = vunpack.c.h.b16 %v817
    %v912 = vunpack.c.l.b16 %v818
    %v913 = vunpack.c.h.b16 %v818
    %v914 = vunpack.c.l.b16 %v819
    %v915 = vunpack.c.h.b16 %v819
    %v916 = vpack.c.b16 %v856, %v852
    %v917 = vpack.c.b16 %v857, %v853
    %v918 = vpack.c.b16 %v858, %v854
    %v919 = vpack.c.b16 %v859, %v855
    %v920 = vpack.c.b16 %v864, %v860
    %v921 = vpack.c.b16 %v865, %v861
    %v922 = vpack.c.b16 %v866, %v862
    %v923 = vpack.c.b16 %v867, %v863
    %v924 = vpack.c.b16 %v872, %v868
    %v925 = vpack.c.b16 %v873, %v869
    %v926 = vpack.c.b16 %v874, %v870
    %v927 = vpack.c.b16 %v875, %v871
    %v928 = vpack.c.b16 %v880, %v876
    %v929 = vpack.c.b16 %v881, %v877
    %v930 = vpack.c.b16 %v882, %v878
    %v931 = vpack.c.b16 %v883, %v879
    %v932 = vpack.c.b16 %v888, %v884
    %v933 = vpack.c.b16 %v889, %v885
    %v934 = vpack.c.b16 %v890, %v886
    %v935 = vpack.c.b16 %v891, %v887
    %v936 = vpack.c.b16 %v896, %v892
    %v937 = vpack.c.b16 %v897, %v893
    %v938 = vpack.c.b16 %v898, %v894
    %v939 = vpack.c.b16 %v899, %v895
    %v940 = vpack.c.b16 %v904, %v900
    %v941 = vpack.c.b16 %v905, %v901
    %v942 = vpack.c.b16 %v906, %v902
    %v943 = vpack.c.b16 %v907, %v903
    %v944 = vpack.c.b16 %v912, %v908
    %v945 = vpack.c.b16 %v913, %v909
    %v946 = vpack.c.b16 %v914, %v910
    %v947 = vpack.c.b16 %v915, %v911
    %980 = vmatpush.bf16.msra.mxu0 %v944
    %981 = vmatpush.bf16.msra.mxu0 %v940
    %982 = vmatpush.bf16.msra.mxu0 %v936
    %983 = vmatpush.bf16.msra.mxu0 %v932
    %984 = vmatpush.bf16.msra.mxu0 %v928
    %985 = vmatpush.bf16.msra.mxu0 %v924
    %986 = vmatpush.bf16.msra.mxu0 %v920
    %987 = vmatpush.bf16.msra.mxu0 %v916
    %988 = vmatmul.bf16.gmra.mxu0 %v780
    %v989 = vpop.f32.mrf.mxu0
    %v990 = vadd.f32 0.0, %v989
    %v991 = vpop.f32.mrf.mxu0
    %992 = vdwg.mxu0
    %993 = vmatpush.bf16.msra.mxu0 %v945
    %994 = vmatpush.bf16.msra.mxu0 %v941
    %995 = vmatpush.bf16.msra.mxu0 %v937
    %996 = vmatpush.bf16.msra.mxu0 %v933
    %997 = vmatpush.bf16.msra.mxu0 %v929
    %998 = vmatpush.bf16.msra.mxu0 %v925
    %999 = vmatpush.bf16.msra.mxu0 %v921
    %1000 = vmatpush.bf16.msra.mxu0 %v917
    %1001 = vmatmul.bf16.gmra.mxu0 %v780
    %v1002 = vpop.f32.mrf.mxu0
    %v1003 = vadd.f32 0.0, %v1002
    %v1004 = vpop.f32.mrf.mxu0
    %1005 = vdwg.mxu0
    %1006 = vmatpush.bf16.msra.mxu0 %v946
    %1007 = vmatpush.bf16.msra.mxu0 %v942
    %1008 = vmatpush.bf16.msra.mxu0 %v938
    %1009 = vmatpush.bf16.msra.mxu0 %v934
    %1010 = vmatpush.bf16.msra.mxu0 %v930
    %1011 = vmatpush.bf16.msra.mxu0 %v926
    %1012 = vmatpush.bf16.msra.mxu0 %v922
    %1013 = vmatpush.bf16.msra.mxu0 %v918
    %1014 = vmatmul.bf16.gmra.mxu0 %v780
    %v1015 = vpop.f32.mrf.mxu0
    %v1016 = vadd.f32 0.0, %v1015
    %v1017 = vpop.f32.mrf.mxu0
    %1018 = vdwg.mxu0
    %1019 = vmatpush.bf16.msra.mxu0 %v947
    %1020 = vmatpush.bf16.msra.mxu0 %v943
    %1021 = vmatpush.bf16.msra.mxu0 %v939
    %1022 = vmatpush.bf16.msra.mxu0 %v935
    %1023 = vmatpush.bf16.msra.mxu0 %v931
    %1024 = vmatpush.bf16.msra.mxu0 %v927
    %1025 = vmatpush.bf16.msra.mxu0 %v923
    %1026 = vmatpush.bf16.msra.mxu0 %v919
    %1027 = vmatmul.bf16.gmra.mxu0 %v780
    %v1028 = vpop.f32.mrf.mxu0
    %v1029 = vadd.f32 0.0, %v1028
    %v1030 = vpop.f32.mrf.mxu0
    %1031 = vdwg.mxu0
    %v1036 = vrot.slane %v990, 6
    %v1037 = vrot.slane %v1003, 6
    %v1038 = vrot.slane %v1016, 6
    %v1039 = vrot.slane %v1029, 6
    %v1044 = vadd.f32 %v784, %v1036
    %v1045 = vadd.f32 %v785, %v1037
    %v1046 = vadd.f32 %v786, %v1038
    %v1047 = vadd.f32 %v787, %v1039
    %v1048 = vxor.u32 %v1044, 2147483648
    %v1049 = vmul.f32 %v1048, 1.442695
    %v1050 = vpow.pop %v1049
    %v1051 = vadd.f32 %v1050, 1.0
    %v1052 = vrcp.pop %v1051
    %v1053 = vmul.f32 %v1051, %v1052
    %v1054 = vsub.f32 1.0, %v1053
    %v1055 = vmul.f32 %v1052, %v1054
    %v1056 = vadd.f32 %v1052, %v1055
    %vm1057 = vweird.f32 %v1051
    %vm1058 = vweird.f32 %v1052
    %vm1059 = vmor %vm1057, %vm1058
    %v1060 = vsel %vm1059, %v1052, %v1056
    %v1061 = vand.u32 2147483647, %v1051
    %vm1062 = vcmp.eq.f32.partialorder %v1061, 8.507059e+37
    %v1063 = vand.u32 %v1051, 2147483648
    %v1064 = vor.u32 1.1754944e-38, %v1063
    %v1065 = vsel %vm1062, %v1064, %v1060
    %v1066 = vmul.f32 1.0, %v1065
    %v1067 = vxor.u32 %v1045, 2147483648
    %v1068 = vmul.f32 %v1067, 1.442695
    %v1069 = vpow.pop %v1068
    %v1070 = vadd.f32 %v1069, 1.0
    %v1071 = vrcp.pop %v1070
    %v1072 = vmul.f32 %v1070, %v1071
    %v1073 = vsub.f32 1.0, %v1072
    %v1074 = vmul.f32 %v1071, %v1073
    %v1075 = vadd.f32 %v1071, %v1074
    %vm1076 = vweird.f32 %v1070
    %vm1077 = vweird.f32 %v1071
    %vm1078 = vmor %vm1076, %vm1077
    %v1079 = vsel %vm1078, %v1071, %v1075
    %v1080 = vand.u32 2147483647, %v1070
    %vm1081 = vcmp.eq.f32.partialorder %v1080, 8.507059e+37
    %v1082 = vand.u32 %v1070, 2147483648
    %v1083 = vor.u32 1.1754944e-38, %v1082
    %v1084 = vsel %vm1081, %v1083, %v1079
    %v1085 = vmul.f32 1.0, %v1084
    %v1086 = vtanh.pop %v1046
    %v1087 = vxor.u32 %v1047, 2147483648
    %v1088 = vmul.f32 %v1087, 1.442695
    %v1089 = vpow.pop %v1088
    %v1090 = vadd.f32 %v1089, 1.0
    %v1091 = vrcp.pop %v1090
    %v1092 = vmul.f32 %v1090, %v1091
    %v1093 = vsub.f32 1.0, %v1092
    %v1094 = vmul.f32 %v1091, %v1093
    %v1095 = vadd.f32 %v1091, %v1094
    %vm1096 = vweird.f32 %v1090
    %vm1097 = vweird.f32 %v1091
    %vm1098 = vmor %vm1096, %vm1097
    %v1099 = vsel %vm1098, %v1091, %v1095
    %v1100 = vand.u32 2147483647, %v1090
    %vm1101 = vcmp.eq.f32.partialorder %v1100, 8.507059e+37
    %v1102 = vand.u32 %v1090, 2147483648
    %v1103 = vor.u32 1.1754944e-38, %v1102
    %v1104 = vsel %vm1101, %v1103, %v1099
    %v1105 = vmul.f32 1.0, %v1104
    %v1107 = vrot.slane %v445, 6
    %v1109 = vmul.f32 %v1085, %v1107
    %v1110 = vmul.f32 %v1066, %v1086
    %v1111 = vadd.f32 %v1109, %v1110
    %v1112 = vtanh.pop %v1111
    %v1113 = vmul.f32 %v1105, %v1112
    %v1114 = vld [vmem:[#allocation7 + $0x20] sm:$0x30]
    %v1115 = vld [vmem:[#allocation7 + $0x28] sm:$0x30]
    %v1116 = vld [vmem:[#allocation7 + $0x30] sm:$0x30]
    %v1117 = vld [vmem:[#allocation7 + $0x38] sm:$0x30]
    %v1118 = vld [vmem:[%s452] sm:$0xff]
    %v1119 = vld [vmem:[%s452 + $0x8] sm:$0xff]
    %v1120 = vld [vmem:[%s452 + $0x10] sm:$0xff]
    %v1121 = vld [vmem:[%s452 + $0x18] sm:$0xff]
    %v1122 = vld [vmem:[%s452 + $0x20] sm:$0xff]
    %v1123 = vld [vmem:[%s452 + $0x28] sm:$0xff]
    %v1124 = vld [vmem:[%s452 + $0x30] sm:$0xff]
    %v1125 = vld [vmem:[%s452 + $0x38] sm:$0xff]
    %v1126 = vld [vmem:[%s452 + $0x40] sm:$0xff]
    %v1127 = vld [vmem:[%s452 + $0x48] sm:$0xff]
    %v1128 = vld [vmem:[%s452 + $0x50] sm:$0xff]
    %v1129 = vld [vmem:[%s452 + $0x58] sm:$0xff]
    %v1130 = vld [vmem:[%s452 + $0x60] sm:$0xff]
    %v1131 = vld [vmem:[%s452 + $0x68] sm:$0xff]
    %v1132 = vld [vmem:[%s452 + $0x70] sm:$0xff]
    %v1133 = vld [vmem:[%s452 + $0x78] sm:$0xff]
    %v1134 = vld [vmem:[%s452 + $0x80] sm:$0xff]
    %v1135 = vld [vmem:[%s452 + $0x88] sm:$0xff]
    %v1136 = vld [vmem:[%s452 + $0x90] sm:$0xff]
    %v1137 = vld [vmem:[%s452 + $0x98] sm:$0xff]
    %v1138 = vld [vmem:[%s452 + $0xa0] sm:$0xff]
    %v1139 = vld [vmem:[%s452 + $0xa8] sm:$0xff]
    %v1140 = vld [vmem:[%s452 + $0xb0] sm:$0xff]
    %v1141 = vld [vmem:[%s452 + $0xb8] sm:$0xff]
    %v1142 = vld [vmem:[%s452 + $0xc0] sm:$0xff]
    %v1143 = vld [vmem:[%s452 + $0xc8] sm:$0xff]
    %v1144 = vld [vmem:[%s452 + $0xd0] sm:$0xff]
    %v1145 = vld [vmem:[%s452 + $0xd8] sm:$0xff]
    %v1146 = vld [vmem:[%s452 + $0xe0] sm:$0xff]
    %v1147 = vld [vmem:[%s452 + $0xe8] sm:$0xff]
    %v1148 = vld [vmem:[%s452 + $0xf0] sm:$0xff]
    %v1149 = vld [vmem:[%s452 + $0xf8] sm:$0xff]
    %v1151 = vunpack.c.l.b16 %v782
    %v1152 = vpack.c.b16 %v1151, %v1151
    %v1153 = vrot.slane %v1152, 3
    %v1187 = vunpack.c.l.b16 %v1118
    %v1188 = vunpack.c.h.b16 %v1118
    %v1189 = vunpack.c.l.b16 %v1119
    %v1190 = vunpack.c.h.b16 %v1119
    %v1191 = vunpack.c.l.b16 %v1120
    %v1192 = vunpack.c.h.b16 %v1120
    %v1193 = vunpack.c.l.b16 %v1121
    %v1194 = vunpack.c.h.b16 %v1121
    %v1195 = vunpack.c.l.b16 %v1122
    %v1196 = vunpack.c.h.b16 %v1122
    %v1197 = vunpack.c.l.b16 %v1123
    %v1198 = vunpack.c.h.b16 %v1123
    %v1199 = vunpack.c.l.b16 %v1124
    %v1200 = vunpack.c.h.b16 %v1124
    %v1201 = vunpack.c.l.b16 %v1125
    %v1202 = vunpack.c.h.b16 %v1125
    %v1203 = vunpack.c.l.b16 %v1126
    %v1204 = vunpack.c.h.b16 %v1126
    %v1205 = vunpack.c.l.b16 %v1127
    %v1206 = vunpack.c.h.b16 %v1127
    %v1207 = vunpack.c.l.b16 %v1128
    %v1208 = vunpack.c.h.b16 %v1128
    %v1209 = vunpack.c.l.b16 %v1129
    %v1210 = vunpack.c.h.b16 %v1129
    %v1211 = vunpack.c.l.b16 %v1130
    %v1212 = vunpack.c.h.b16 %v1130
    %v1213 = vunpack.c.l.b16 %v1131
    %v1214 = vunpack.c.h.b16 %v1131
    %v1215 = vunpack.c.l.b16 %v1132
    %v1216 = vunpack.c.h.b16 %v1132
    %v1217 = vunpack.c.l.b16 %v1133
    %v1218 = vunpack.c.h.b16 %v1133
    %v1219 = vunpack.c.l.b16 %v1134
    %v1220 = vunpack.c.h.b16 %v1134
    %v1221 = vunpack.c.l.b16 %v1135
    %v1222 = vunpack.c.h.b16 %v1135
    %v1223 = vunpack.c.l.b16 %v1136
    %v1224 = vunpack.c.h.b16 %v1136
    %v1225 = vunpack.c.l.b16 %v1137
    %v1226 = vunpack.c.h.b16 %v1137
    %v1227 = vunpack.c.l.b16 %v1138
    %v1228 = vunpack.c.h.b16 %v1138
    %v1229 = vunpack.c.l.b16 %v1139
    %v1230 = vunpack.c.h.b16 %v1139
    %v1231 = vunpack.c.l.b16 %v1140
    %v1232 = vunpack.c.h.b16 %v1140
    %v1233 = vunpack.c.l.b16 %v1141
    %v1234 = vunpack.c.h.b16 %v1141
    %v1235 = vunpack.c.l.b16 %v1142
    %v1236 = vunpack.c.h.b16 %v1142
    %v1237 = vunpack.c.l.b16 %v1143
    %v1238 = vunpack.c.h.b16 %v1143
    %v1239 = vunpack.c.l.b16 %v1144
    %v1240 = vunpack.c.h.b16 %v1144
    %v1241 = vunpack.c.l.b16 %v1145
    %v1242 = vunpack.c.h.b16 %v1145
    %v1243 = vunpack.c.l.b16 %v1146
    %v1244 = vunpack.c.h.b16 %v1146
    %v1245 = vunpack.c.l.b16 %v1147
    %v1246 = vunpack.c.h.b16 %v1147
    %v1247 = vunpack.c.l.b16 %v1148
    %v1248 = vunpack.c.h.b16 %v1148
    %v1249 = vunpack.c.l.b16 %v1149
    %v1250 = vunpack.c.h.b16 %v1149
    %v1251 = vpack.c.b16 %v1191, %v1187
    %v1252 = vpack.c.b16 %v1192, %v1188
    %v1253 = vpack.c.b16 %v1193, %v1189
    %v1254 = vpack.c.b16 %v1194, %v1190
    %v1255 = vpack.c.b16 %v1199, %v1195
    %v1256 = vpack.c.b16 %v1200, %v1196
    %v1257 = vpack.c.b16 %v1201, %v1197
    %v1258 = vpack.c.b16 %v1202, %v1198
    %v1259 = vpack.c.b16 %v1207, %v1203
    %v1260 = vpack.c.b16 %v1208, %v1204
    %v1261 = vpack.c.b16 %v1209, %v1205
    %v1262 = vpack.c.b16 %v1210, %v1206
    %v1263 = vpack.c.b16 %v1215, %v1211
    %v1264 = vpack.c.b16 %v1216, %v1212
    %v1265 = vpack.c.b16 %v1217, %v1213
    %v1266 = vpack.c.b16 %v1218, %v1214
    %v1267 = vpack.c.b16 %v1223, %v1219
    %v1268 = vpack.c.b16 %v1224, %v1220
    %v1269 = vpack.c.b16 %v1225, %v1221
    %v1270 = vpack.c.b16 %v1226, %v1222
    %v1271 = vpack.c.b16 %v1231, %v1227
    %v1272 = vpack.c.b16 %v1232, %v1228
    %v1273 = vpack.c.b16 %v1233, %v1229
    %v1274 = vpack.c.b16 %v1234, %v1230
    %v1275 = vpack.c.b16 %v1239, %v1235
    %v1276 = vpack.c.b16 %v1240, %v1236
    %v1277 = vpack.c.b16 %v1241, %v1237
    %v1278 = vpack.c.b16 %v1242, %v1238
    %v1279 = vpack.c.b16 %v1247, %v1243
    %v1280 = vpack.c.b16 %v1248, %v1244
    %v1281 = vpack.c.b16 %v1249, %v1245
    %v1282 = vpack.c.b16 %v1250, %v1246
    %1315 = vmatpush.bf16.msra.mxu0 %v1279
    %1316 = vmatpush.bf16.msra.mxu0 %v1275
    %1317 = vmatpush.bf16.msra.mxu0 %v1271
    %1318 = vmatpush.bf16.msra.mxu0 %v1267
    %1319 = vmatpush.bf16.msra.mxu0 %v1263
    %1320 = vmatpush.bf16.msra.mxu0 %v1259
    %1321 = vmatpush.bf16.msra.mxu0 %v1255
    %1322 = vmatpush.bf16.msra.mxu0 %v1251
    %1323 = vmatmul.bf16.gmra.mxu0 %v1153
    %v1324 = vpop.f32.mrf.mxu0
    %v1325 = vadd.f32 0.0, %v1324
    %v1326 = vpop.f32.mrf.mxu0
    %1327 = vdwg.mxu0
    %1328 = vmatpush.bf16.msra.mxu0 %v1280
    %1329 = vmatpush.bf16.msra.mxu0 %v1276
    %1330 = vmatpush.bf16.msra.mxu0 %v1272
    %1331 = vmatpush.bf16.msra.mxu0 %v1268
    %1332 = vmatpush.bf16.msra.mxu0 %v1264
    %1333 = vmatpush.bf16.msra.mxu0 %v1260
    %1334 = vmatpush.bf16.msra.mxu0 %v1256
    %1335 = vmatpush.bf16.msra.mxu0 %v1252
    %1336 = vmatmul.bf16.gmra.mxu0 %v1153
    %v1337 = vpop.f32.mrf.mxu0
    %v1338 = vadd.f32 0.0, %v1337
    %v1339 = vpop.f32.mrf.mxu0
    %1340 = vdwg.mxu0
    %1341 = vmatpush.bf16.msra.mxu0 %v1281
    %1342 = vmatpush.bf16.msra.mxu0 %v1277
    %1343 = vmatpush.bf16.msra.mxu0 %v1273
    %1344 = vmatpush.bf16.msra.mxu0 %v1269
    %1345 = vmatpush.bf16.msra.mxu0 %v1265
    %1346 = vmatpush.bf16.msra.mxu0 %v1261
    %1347 = vmatpush.bf16.msra.mxu0 %v1257
    %1348 = vmatpush.bf16.msra.mxu0 %v1253
    %1349 = vmatmul.bf16.gmra.mxu0 %v1153
    %v1350 = vpop.f32.mrf.mxu0
    %v1351 = vadd.f32 0.0, %v1350
    %v1352 = vpop.f32.mrf.mxu0
    %1353 = vdwg.mxu0
    %1354 = vmatpush.bf16.msra.mxu0 %v1282
    %1355 = vmatpush.bf16.msra.mxu0 %v1278
    %1356 = vmatpush.bf16.msra.mxu0 %v1274
    %1357 = vmatpush.bf16.msra.mxu0 %v1270
    %1358 = vmatpush.bf16.msra.mxu0 %v1266
    %1359 = vmatpush.bf16.msra.mxu0 %v1262
    %1360 = vmatpush.bf16.msra.mxu0 %v1258
    %1361 = vmatpush.bf16.msra.mxu0 %v1254
    %1362 = vmatmul.bf16.gmra.mxu0 %v1153
    %v1363 = vpop.f32.mrf.mxu0
    %v1364 = vadd.f32 0.0, %v1363
    %v1365 = vpop.f32.mrf.mxu0
    %1366 = vdwg.mxu0
    %v1371 = vrot.slane %v1325, 4
    %v1372 = vrot.slane %v1338, 4
    %v1373 = vrot.slane %v1351, 4
    %v1374 = vrot.slane %v1364, 4
    %v1379 = vadd.f32 %v1114, %v1371
    %v1380 = vadd.f32 %v1115, %v1372
    %v1381 = vadd.f32 %v1116, %v1373
    %v1382 = vadd.f32 %v1117, %v1374
    %v1383 = vxor.u32 %v1379, 2147483648
    %v1384 = vmul.f32 %v1383, 1.442695
    %v1385 = vpow.pop %v1384
    %v1386 = vadd.f32 %v1385, 1.0
    %v1387 = vrcp.pop %v1386
    %v1388 = vmul.f32 %v1386, %v1387
    %v1389 = vsub.f32 1.0, %v1388
    %v1390 = vmul.f32 %v1387, %v1389
    %v1391 = vadd.f32 %v1387, %v1390
    %vm1392 = vweird.f32 %v1386
    %vm1393 = vweird.f32 %v1387
    %vm1394 = vmor %vm1392, %vm1393
    %v1395 = vsel %vm1394, %v1387, %v1391
    %v1396 = vand.u32 2147483647, %v1386
    %vm1397 = vcmp.eq.f32.partialorder %v1396, 8.507059e+37
    %v1398 = vand.u32 %v1386, 2147483648
    %v1399 = vor.u32 1.1754944e-38, %v1398
    %v1400 = vsel %vm1397, %v1399, %v1395
    %v1401 = vmul.f32 1.0, %v1400
    %v1402 = vxor.u32 %v1380, 2147483648
    %v1403 = vmul.f32 %v1402, 1.442695
    %v1404 = vpow.pop %v1403
    %v1405 = vadd.f32 %v1404, 1.0
    %v1406 = vrcp.pop %v1405
    %v1407 = vmul.f32 %v1405, %v1406
    %v1408 = vsub.f32 1.0, %v1407
    %v1409 = vmul.f32 %v1406, %v1408
    %v1410 = vadd.f32 %v1406, %v1409
    %vm1411 = vweird.f32 %v1405
    %vm1412 = vweird.f32 %v1406
    %vm1413 = vmor %vm1411, %vm1412
    %v1414 = vsel %vm1413, %v1406, %v1410
    %v1415 = vand.u32 2147483647, %v1405
    %vm1416 = vcmp.eq.f32.partialorder %v1415, 8.507059e+37
    %v1417 = vand.u32 %v1405, 2147483648
    %v1418 = vor.u32 1.1754944e-38, %v1417
    %v1419 = vsel %vm1416, %v1418, %v1414
    %v1420 = vmul.f32 1.0, %v1419
    %v1421 = vtanh.pop %v1381
    %v1422 = vxor.u32 %v1382, 2147483648
    %v1423 = vmul.f32 %v1422, 1.442695
    %v1424 = vpow.pop %v1423
    %v1425 = vadd.f32 %v1424, 1.0
    %v1426 = vrcp.pop %v1425
    %v1427 = vmul.f32 %v1425, %v1426
    %v1428 = vsub.f32 1.0, %v1427
    %v1429 = vmul.f32 %v1426, %v1428
    %v1430 = vadd.f32 %v1426, %v1429
    %vm1431 = vweird.f32 %v1425
    %vm1432 = vweird.f32 %v1426
    %vm1433 = vmor %vm1431, %vm1432
    %v1434 = vsel %vm1433, %v1426, %v1430
    %v1435 = vand.u32 2147483647, %v1425
    %vm1436 = vcmp.eq.f32.partialorder %v1435, 8.507059e+37
    %v1437 = vand.u32 %v1425, 2147483648
    %v1438 = vor.u32 1.1754944e-38, %v1437
    %v1439 = vsel %vm1436, %v1438, %v1434
    %v1440 = vmul.f32 1.0, %v1439
    %v1442 = vrot.slane %v777, 2
    %v1444 = vmul.f32 %v1420, %v1442
    %v1445 = vmul.f32 %v1401, %v1421
    %v1446 = vadd.f32 %v1444, %v1445
    %v1447 = vtanh.pop %v1446
    %v1448 = vmul.f32 %v1440, %v1447
    %v1449 = vpack.c.bf16 %v1113, %v1113
    %1450 = vst [vmem:[%s3] sm:$0x2] %v1449
    %v1451 = vpack.c.bf16 %v1448, %v1448
    %1452 = vst [vmem:[%s117 + $0x4] sm:$0x4] %v1451
    %v1453 = vld [vmem:[#allocation6] sm:$0x30]
    %v1454 = vld [vmem:[#allocation6 + $0x8] sm:$0x30]
    %v1455 = vld [vmem:[#allocation6 + $0x10] sm:$0x30]
    %v1456 = vld [vmem:[#allocation6 + $0x18] sm:$0x30]
    %v1457 = vld [vmem:[#allocation8] sm:$0xff]
    %v1458 = vld [vmem:[#allocation8 + $0x8] sm:$0xff]
    %v1459 = vld [vmem:[#allocation8 + $0x10] sm:$0xff]
    %v1460 = vld [vmem:[#allocation8 + $0x18] sm:$0xff]
    %v1461 = vld [vmem:[#allocation8 + $0x20] sm:$0xff]
    %v1462 = vld [vmem:[#allocation8 + $0x28] sm:$0xff]
    %v1463 = vld [vmem:[#allocation8 + $0x30] sm:$0xff]
    %v1464 = vld [vmem:[#allocation8 + $0x38] sm:$0xff]
    %v1465 = vld [vmem:[#allocation8 + $0x40] sm:$0xff]
    %v1466 = vld [vmem:[#allocation8 + $0x48] sm:$0xff]
    %v1467 = vld [vmem:[#allocation8 + $0x50] sm:$0xff]
    %v1468 = vld [vmem:[#allocation8 + $0x58] sm:$0xff]
    %v1469 = vld [vmem:[#allocation8 + $0x60] sm:$0xff]
    %v1470 = vld [vmem:[#allocation8 + $0x68] sm:$0xff]
    %v1471 = vld [vmem:[#allocation8 + $0x70] sm:$0xff]
    %v1472 = vld [vmem:[#allocation8 + $0x78] sm:$0xff]
    %v1473 = vld [vmem:[#allocation8 + $0x80] sm:$0xff]
    %v1474 = vld [vmem:[#allocation8 + $0x88] sm:$0xff]
    %v1475 = vld [vmem:[#allocation8 + $0x90] sm:$0xff]
    %v1476 = vld [vmem:[#allocation8 + $0x98] sm:$0xff]
    %v1477 = vld [vmem:[#allocation8 + $0xa0] sm:$0xff]
    %v1478 = vld [vmem:[#allocation8 + $0xa8] sm:$0xff]
    %v1479 = vld [vmem:[#allocation8 + $0xb0] sm:$0xff]
    %v1480 = vld [vmem:[#allocation8 + $0xb8] sm:$0xff]
    %v1481 = vld [vmem:[#allocation8 + $0xc0] sm:$0xff]
    %v1482 = vld [vmem:[#allocation8 + $0xc8] sm:$0xff]
    %v1483 = vld [vmem:[#allocation8 + $0xd0] sm:$0xff]
    %v1484 = vld [vmem:[#allocation8 + $0xd8] sm:$0xff]
    %v1485 = vld [vmem:[#allocation8 + $0xe0] sm:$0xff]
    %v1486 = vld [vmem:[#allocation8 + $0xe8] sm:$0xff]
    %v1487 = vld [vmem:[#allocation8 + $0xf0] sm:$0xff]
    %v1488 = vld [vmem:[#allocation8 + $0xf8] sm:$0xff]
    %v1490 = vunpack.c.l.b16 %v1449
    %v1491 = vpack.c.b16 %v1490, %v1490
    %v1492 = vrot.slane %v1491, 1
    %v1526 = vunpack.c.l.b16 %v1457
    %v1527 = vunpack.c.h.b16 %v1457
    %v1528 = vunpack.c.l.b16 %v1458
    %v1529 = vunpack.c.h.b16 %v1458
    %v1530 = vunpack.c.l.b16 %v1459
    %v1531 = vunpack.c.h.b16 %v1459
    %v1532 = vunpack.c.l.b16 %v1460
    %v1533 = vunpack.c.h.b16 %v1460
    %v1534 = vunpack.c.l.b16 %v1461
    %v1535 = vunpack.c.h.b16 %v1461
    %v1536 = vunpack.c.l.b16 %v1462
    %v1537 = vunpack.c.h.b16 %v1462
    %v1538 = vunpack.c.l.b16 %v1463
    %v1539 = vunpack.c.h.b16 %v1463
    %v1540 = vunpack.c.l.b16 %v1464
    %v1541 = vunpack.c.h.b16 %v1464
    %v1542 = vunpack.c.l.b16 %v1465
    %v1543 = vunpack.c.h.b16 %v1465
    %v1544 = vunpack.c.l.b16 %v1466
    %v1545 = vunpack.c.h.b16 %v1466
    %v1546 = vunpack.c.l.b16 %v1467
    %v1547 = vunpack.c.h.b16 %v1467
    %v1548 = vunpack.c.l.b16 %v1468
    %v1549 = vunpack.c.h.b16 %v1468
    %v1550 = vunpack.c.l.b16 %v1469
    %v1551 = vunpack.c.h.b16 %v1469
    %v1552 = vunpack.c.l.b16 %v1470
    %v1553 = vunpack.c.h.b16 %v1470
    %v1554 = vunpack.c.l.b16 %v1471
    %v1555 = vunpack.c.h.b16 %v1471
    %v1556 = vunpack.c.l.b16 %v1472
    %v1557 = vunpack.c.h.b16 %v1472
    %v1558 = vunpack.c.l.b16 %v1473
    %v1559 = vunpack.c.h.b16 %v1473
    %v1560 = vunpack.c.l.b16 %v1474
    %v1561 = vunpack.c.h.b16 %v1474
    %v1562 = vunpack.c.l.b16 %v1475
    %v1563 = vunpack.c.h.b16 %v1475
    %v1564 = vunpack.c.l.b16 %v1476
    %v1565 = vunpack.c.h.b16 %v1476
    %v1566 = vunpack.c.l.b16 %v1477
    %v1567 = vunpack.c.h.b16 %v1477
    %v1568 = vunpack.c.l.b16 %v1478
    %v1569 = vunpack.c.h.b16 %v1478
    %v1570 = vunpack.c.l.b16 %v1479
    %v1571 = vunpack.c.h.b16 %v1479
    %v1572 = vunpack.c.l.b16 %v1480
    %v1573 = vunpack.c.h.b16 %v1480
    %v1574 = vunpack.c.l.b16 %v1481
    %v1575 = vunpack.c.h.b16 %v1481
    %v1576 = vunpack.c.l.b16 %v1482
    %v1577 = vunpack.c.h.b16 %v1482
    %v1578 = vunpack.c.l.b16 %v1483
    %v1579 = vunpack.c.h.b16 %v1483
    %v1580 = vunpack.c.l.b16 %v1484
    %v1581 = vunpack.c.h.b16 %v1484
    %v1582 = vunpack.c.l.b16 %v1485
    %v1583 = vunpack.c.h.b16 %v1485
    %v1584 = vunpack.c.l.b16 %v1486
    %v1585 = vunpack.c.h.b16 %v1486
    %v1586 = vunpack.c.l.b16 %v1487
    %v1587 = vunpack.c.h.b16 %v1487
    %v1588 = vunpack.c.l.b16 %v1488
    %v1589 = vunpack.c.h.b16 %v1488
    %v1590 = vpack.c.b16 %v1530, %v1526
    %v1591 = vpack.c.b16 %v1531, %v1527
    %v1592 = vpack.c.b16 %v1532, %v1528
    %v1593 = vpack.c.b16 %v1533, %v1529
    %v1594 = vpack.c.b16 %v1538, %v1534
    %v1595 = vpack.c.b16 %v1539, %v1535
    %v1596 = vpack.c.b16 %v1540, %v1536
    %v1597 = vpack.c.b16 %v1541, %v1537
    %v1598 = vpack.c.b16 %v1546, %v1542
    %v1599 = vpack.c.b16 %v1547, %v1543
    %v1600 = vpack.c.b16 %v1548, %v1544
    %v1601 = vpack.c.b16 %v1549, %v1545
    %v1602 = vpack.c.b16 %v1554, %v1550
    %v1603 = vpack.c.b16 %v1555, %v1551
    %v1604 = vpack.c.b16 %v1556, %v1552
    %v1605 = vpack.c.b16 %v1557, %v1553
    %v1606 = vpack.c.b16 %v1562, %v1558
    %v1607 = vpack.c.b16 %v1563, %v1559
    %v1608 = vpack.c.b16 %v1564, %v1560
    %v1609 = vpack.c.b16 %v1565, %v1561
    %v1610 = vpack.c.b16 %v1570, %v1566
    %v1611 = vpack.c.b16 %v1571, %v1567
    %v1612 = vpack.c.b16 %v1572, %v1568
    %v1613 = vpack.c.b16 %v1573, %v1569
    %v1614 = vpack.c.b16 %v1578, %v1574
    %v1615 = vpack.c.b16 %v1579, %v1575
    %v1616 = vpack.c.b16 %v1580, %v1576
    %v1617 = vpack.c.b16 %v1581, %v1577
    %v1618 = vpack.c.b16 %v1586, %v1582
    %v1619 = vpack.c.b16 %v1587, %v1583
    %v1620 = vpack.c.b16 %v1588, %v1584
    %v1621 = vpack.c.b16 %v1589, %v1585
    %1654 = vmatpush.bf16.msra.mxu0 %v1618
    %1655 = vmatpush.bf16.msra.mxu0 %v1614
    %1656 = vmatpush.bf16.msra.mxu0 %v1610
    %1657 = vmatpush.bf16.msra.mxu0 %v1606
    %1658 = vmatpush.bf16.msra.mxu0 %v1602
    %1659 = vmatpush.bf16.msra.mxu0 %v1598
    %1660 = vmatpush.bf16.msra.mxu0 %v1594
    %1661 = vmatpush.bf16.msra.mxu0 %v1590
    %1662 = vmatmul.bf16.gmra.mxu0 %v1492
    %v1663 = vpop.f32.mrf.mxu0
    %v1664 = vadd.f32 0.0, %v1663
    %v1665 = vpop.f32.mrf.mxu0
    %1666 = vdwg.mxu0
    %1667 = vmatpush.bf16.msra.mxu0 %v1619
    %1668 = vmatpush.bf16.msra.mxu0 %v1615
    %1669 = vmatpush.bf16.msra.mxu0 %v1611
    %1670 = vmatpush.bf16.msra.mxu0 %v1607
    %1671 = vmatpush.bf16.msra.mxu0 %v1603
    %1672 = vmatpush.bf16.msra.mxu0 %v1599
    %1673 = vmatpush.bf16.msra.mxu0 %v1595
    %1674 = vmatpush.bf16.msra.mxu0 %v1591
    %1675 = vmatmul.bf16.gmra.mxu0 %v1492
    %v1676 = vpop.f32.mrf.mxu0
    %v1677 = vadd.f32 0.0, %v1676
    %v1678 = vpop.f32.mrf.mxu0
    %1679 = vdwg.mxu0
    %1680 = vmatpush.bf16.msra.mxu0 %v1620
    %1681 = vmatpush.bf16.msra.mxu0 %v1616
    %1682 = vmatpush.bf16.msra.mxu0 %v1612
    %1683 = vmatpush.bf16.msra.mxu0 %v1608
    %1684 = vmatpush.bf16.msra.mxu0 %v1604
    %1685 = vmatpush.bf16.msra.mxu0 %v1600
    %1686 = vmatpush.bf16.msra.mxu0 %v1596
    %1687 = vmatpush.bf16.msra.mxu0 %v1592
    %1688 = vmatmul.bf16.gmra.mxu0 %v1492
    %v1689 = vpop.f32.mrf.mxu0
    %v1690 = vadd.f32 0.0, %v1689
    %v1691 = vpop.f32.mrf.mxu0
    %1692 = vdwg.mxu0
    %1693 = vmatpush.bf16.msra.mxu0 %v1621
    %1694 = vmatpush.bf16.msra.mxu0 %v1617
    %1695 = vmatpush.bf16.msra.mxu0 %v1613
    %1696 = vmatpush.bf16.msra.mxu0 %v1609
    %1697 = vmatpush.bf16.msra.mxu0 %v1605
    %1698 = vmatpush.bf16.msra.mxu0 %v1601
    %1699 = vmatpush.bf16.msra.mxu0 %v1597
    %1700 = vmatpush.bf16.msra.mxu0 %v1593
    %1701 = vmatmul.bf16.gmra.mxu0 %v1492
    %v1702 = vpop.f32.mrf.mxu0
    %v1703 = vadd.f32 0.0, %v1702
    %v1704 = vpop.f32.mrf.mxu0
    %1705 = vdwg.mxu0
    %v1710 = vrot.slane %v1664, 4
    %v1711 = vrot.slane %v1677, 4
    %v1712 = vrot.slane %v1690, 4
    %v1713 = vrot.slane %v1703, 4
    %v1718 = vadd.f32 %v1453, %v1710
    %v1719 = vadd.f32 %v1454, %v1711
    %v1720 = vadd.f32 %v1455, %v1712
    %v1721 = vadd.f32 %v1456, %v1713
    %v1722 = vxor.u32 %v1718, 2147483648
    %v1723 = vmul.f32 %v1722, 1.442695
    %v1724 = vpow.pop %v1723
    %v1725 = vadd.f32 %v1724, 1.0
    %v1726 = vrcp.pop %v1725
    %v1727 = vmul.f32 %v1725, %v1726
    %v1728 = vsub.f32 1.0, %v1727
    %v1729 = vmul.f32 %v1726, %v1728
    %v1730 = vadd.f32 %v1726, %v1729
    %vm1731 = vweird.f32 %v1725
    %vm1732 = vweird.f32 %v1726
    %vm1733 = vmor %vm1731, %vm1732
    %v1734 = vsel %vm1733, %v1726, %v1730
    %v1735 = vand.u32 2147483647, %v1725
    %vm1736 = vcmp.eq.f32.partialorder %v1735, 8.507059e+37
    %v1737 = vand.u32 %v1725, 2147483648
    %v1738 = vor.u32 1.1754944e-38, %v1737
    %v1739 = vsel %vm1736, %v1738, %v1734
    %v1740 = vmul.f32 1.0, %v1739
    %v1741 = vxor.u32 %v1719, 2147483648
    %v1742 = vmul.f32 %v1741, 1.442695
    %v1743 = vpow.pop %v1742
    %v1744 = vadd.f32 %v1743, 1.0
    %v1745 = vrcp.pop %v1744
    %v1746 = vmul.f32 %v1744, %v1745
    %v1747 = vsub.f32 1.0, %v1746
    %v1748 = vmul.f32 %v1745, %v1747
    %v1749 = vadd.f32 %v1745, %v1748
    %vm1750 = vweird.f32 %v1744
    %vm1751 = vweird.f32 %v1745
    %vm1752 = vmor %vm1750, %vm1751
    %v1753 = vsel %vm1752, %v1745, %v1749
    %v1754 = vand.u32 2147483647, %v1744
    %vm1755 = vcmp.eq.f32.partialorder %v1754, 8.507059e+37
    %v1756 = vand.u32 %v1744, 2147483648
    %v1757 = vor.u32 1.1754944e-38, %v1756
    %v1758 = vsel %vm1755, %v1757, %v1753
    %v1759 = vmul.f32 1.0, %v1758
    %v1760 = vtanh.pop %v1720
    %v1761 = vxor.u32 %v1721, 2147483648
    %v1762 = vmul.f32 %v1761, 1.442695
    %v1763 = vpow.pop %v1762
    %v1764 = vadd.f32 %v1763, 1.0
    %v1765 = vrcp.pop %v1764
    %v1766 = vmul.f32 %v1764, %v1765
    %v1767 = vsub.f32 1.0, %v1766
    %v1768 = vmul.f32 %v1765, %v1767
    %v1769 = vadd.f32 %v1765, %v1768
    %vm1770 = vweird.f32 %v1764
    %vm1771 = vweird.f32 %v1765
    %vm1772 = vmor %vm1770, %vm1771
    %v1773 = vsel %vm1772, %v1765, %v1769
    %v1774 = vand.u32 2147483647, %v1764
    %vm1775 = vcmp.eq.f32.partialorder %v1774, 8.507059e+37
    %v1776 = vand.u32 %v1764, 2147483648
    %v1777 = vor.u32 1.1754944e-38, %v1776
    %v1778 = vsel %vm1775, %v1777, %v1773
    %v1779 = vmul.f32 1.0, %v1778
    %v1781 = vrot.slane %v1111, 6
    %v1783 = vmul.f32 %v1759, %v1781
    %v1784 = vmul.f32 %v1740, %v1760
    %v1785 = vadd.f32 %v1783, %v1784
    %v1786 = vtanh.pop %v1785
    %v1787 = vmul.f32 %v1779, %v1786
    %v1788 = vld [vmem:[#allocation7 + $0x20] sm:$0xc]
    %v1789 = vld [vmem:[#allocation7 + $0x28] sm:$0xc]
    %v1790 = vld [vmem:[#allocation7 + $0x30] sm:$0xc]
    %v1791 = vld [vmem:[#allocation7 + $0x38] sm:$0xc]
    %v1792 = vld [vmem:[%s452] sm:$0xff]
    %v1793 = vld [vmem:[%s452 + $0x8] sm:$0xff]
    %v1794 = vld [vmem:[%s452 + $0x10] sm:$0xff]
    %v1795 = vld [vmem:[%s452 + $0x18] sm:$0xff]
    %v1796 = vld [vmem:[%s452 + $0x20] sm:$0xff]
    %v1797 = vld [vmem:[%s452 + $0x28] sm:$0xff]
    %v1798 = vld [vmem:[%s452 + $0x30] sm:$0xff]
    %v1799 = vld [vmem:[%s452 + $0x38] sm:$0xff]
    %v1800 = vld [vmem:[%s452 + $0x40] sm:$0xff]
    %v1801 = vld [vmem:[%s452 + $0x48] sm:$0xff]
    %v1802 = vld [vmem:[%s452 + $0x50] sm:$0xff]
    %v1803 = vld [vmem:[%s452 + $0x58] sm:$0xff]
    %v1804 = vld [vmem:[%s452 + $0x60] sm:$0xff]
    %v1805 = vld [vmem:[%s452 + $0x68] sm:$0xff]
    %v1806 = vld [vmem:[%s452 + $0x70] sm:$0xff]
    %v1807 = vld [vmem:[%s452 + $0x78] sm:$0xff]
    %v1808 = vld [vmem:[%s452 + $0x80] sm:$0xff]
    %v1809 = vld [vmem:[%s452 + $0x88] sm:$0xff]
    %v1810 = vld [vmem:[%s452 + $0x90] sm:$0xff]
    %v1811 = vld [vmem:[%s452 + $0x98] sm:$0xff]
    %v1812 = vld [vmem:[%s452 + $0xa0] sm:$0xff]
    %v1813 = vld [vmem:[%s452 + $0xa8] sm:$0xff]
    %v1814 = vld [vmem:[%s452 + $0xb0] sm:$0xff]
    %v1815 = vld [vmem:[%s452 + $0xb8] sm:$0xff]
    %v1816 = vld [vmem:[%s452 + $0xc0] sm:$0xff]
    %v1817 = vld [vmem:[%s452 + $0xc8] sm:$0xff]
    %v1818 = vld [vmem:[%s452 + $0xd0] sm:$0xff]
    %v1819 = vld [vmem:[%s452 + $0xd8] sm:$0xff]
    %v1820 = vld [vmem:[%s452 + $0xe0] sm:$0xff]
    %v1821 = vld [vmem:[%s452 + $0xe8] sm:$0xff]
    %v1822 = vld [vmem:[%s452 + $0xf0] sm:$0xff]
    %v1823 = vld [vmem:[%s452 + $0xf8] sm:$0xff]
    %v1825 = vunpack.c.l.b16 %v1451
    %v1826 = vpack.c.b16 %v1825, %v1825
    %v1827 = vrot.slane %v1826, 2
    %v1861 = vunpack.c.l.b16 %v1792
    %v1862 = vunpack.c.h.b16 %v1792
    %v1863 = vunpack.c.l.b16 %v1793
    %v1864 = vunpack.c.h.b16 %v1793
    %v1865 = vunpack.c.l.b16 %v1794
    %v1866 = vunpack.c.h.b16 %v1794
    %v1867 = vunpack.c.l.b16 %v1795
    %v1868 = vunpack.c.h.b16 %v1795
    %v1869 = vunpack.c.l.b16 %v1796
    %v1870 = vunpack.c.h.b16 %v1796
    %v1871 = vunpack.c.l.b16 %v1797
    %v1872 = vunpack.c.h.b16 %v1797
    %v1873 = vunpack.c.l.b16 %v1798
    %v1874 = vunpack.c.h.b16 %v1798
    %v1875 = vunpack.c.l.b16 %v1799
    %v1876 = vunpack.c.h.b16 %v1799
    %v1877 = vunpack.c.l.b16 %v1800
    %v1878 = vunpack.c.h.b16 %v1800
    %v1879 = vunpack.c.l.b16 %v1801
    %v1880 = vunpack.c.h.b16 %v1801
    %v1881 = vunpack.c.l.b16 %v1802
    %v1882 = vunpack.c.h.b16 %v1802
    %v1883 = vunpack.c.l.b16 %v1803
    %v1884 = vunpack.c.h.b16 %v1803
    %v1885 = vunpack.c.l.b16 %v1804
    %v1886 = vunpack.c.h.b16 %v1804
    %v1887 = vunpack.c.l.b16 %v1805
    %v1888 = vunpack.c.h.b16 %v1805
    %v1889 = vunpack.c.l.b16 %v1806
    %v1890 = vunpack.c.h.b16 %v1806
    %v1891 = vunpack.c.l.b16 %v1807
    %v1892 = vunpack.c.h.b16 %v1807
    %v1893 = vunpack.c.l.b16 %v1808
    %v1894 = vunpack.c.h.b16 %v1808
    %v1895 = vunpack.c.l.b16 %v1809
    %v1896 = vunpack.c.h.b16 %v1809
    %v1897 = vunpack.c.l.b16 %v1810
    %v1898 = vunpack.c.h.b16 %v1810
    %v1899 = vunpack.c.l.b16 %v1811
    %v1900 = vunpack.c.h.b16 %v1811
    %v1901 = vunpack.c.l.b16 %v1812
    %v1902 = vunpack.c.h.b16 %v1812
    %v1903 = vunpack.c.l.b16 %v1813
    %v1904 = vunpack.c.h.b16 %v1813
    %v1905 = vunpack.c.l.b16 %v1814
    %v1906 = vunpack.c.h.b16 %v1814
    %v1907 = vunpack.c.l.b16 %v1815
    %v1908 = vunpack.c.h.b16 %v1815
    %v1909 = vunpack.c.l.b16 %v1816
    %v1910 = vunpack.c.h.b16 %v1816
    %v1911 = vunpack.c.l.b16 %v1817
    %v1912 = vunpack.c.h.b16 %v1817
    %v1913 = vunpack.c.l.b16 %v1818
    %v1914 = vunpack.c.h.b16 %v1818
    %v1915 = vunpack.c.l.b16 %v1819
    %v1916 = vunpack.c.h.b16 %v1819
    %v1917 = vunpack.c.l.b16 %v1820
    %v1918 = vunpack.c.h.b16 %v1820
    %v1919 = vunpack.c.l.b16 %v1821
    %v1920 = vunpack.c.h.b16 %v1821
    %v1921 = vunpack.c.l.b16 %v1822
    %v1922 = vunpack.c.h.b16 %v1822
    %v1923 = vunpack.c.l.b16 %v1823
    %v1924 = vunpack.c.h.b16 %v1823
    %v1925 = vpack.c.b16 %v1865, %v1861
    %v1926 = vpack.c.b16 %v1866, %v1862
    %v1927 = vpack.c.b16 %v1867, %v1863
    %v1928 = vpack.c.b16 %v1868, %v1864
    %v1929 = vpack.c.b16 %v1873, %v1869
    %v1930 = vpack.c.b16 %v1874, %v1870
    %v1931 = vpack.c.b16 %v1875, %v1871
    %v1932 = vpack.c.b16 %v1876, %v1872
    %v1933 = vpack.c.b16 %v1881, %v1877
    %v1934 = vpack.c.b16 %v1882, %v1878
    %v1935 = vpack.c.b16 %v1883, %v1879
    %v1936 = vpack.c.b16 %v1884, %v1880
    %v1937 = vpack.c.b16 %v1889, %v1885
    %v1938 = vpack.c.b16 %v1890, %v1886
    %v1939 = vpack.c.b16 %v1891, %v1887
    %v1940 = vpack.c.b16 %v1892, %v1888
    %v1941 = vpack.c.b16 %v1897, %v1893
    %v1942 = vpack.c.b16 %v1898, %v1894
    %v1943 = vpack.c.b16 %v1899, %v1895
    %v1944 = vpack.c.b16 %v1900, %v1896
    %v1945 = vpack.c.b16 %v1905, %v1901
    %v1946 = vpack.c.b16 %v1906, %v1902
    %v1947 = vpack.c.b16 %v1907, %v1903
    %v1948 = vpack.c.b16 %v1908, %v1904
    %v1949 = vpack.c.b16 %v1913, %v1909
    %v1950 = vpack.c.b16 %v1914, %v1910
    %v1951 = vpack.c.b16 %v1915, %v1911
    %v1952 = vpack.c.b16 %v1916, %v1912
    %v1953 = vpack.c.b16 %v1921, %v1917
    %v1954 = vpack.c.b16 %v1922, %v1918
    %v1955 = vpack.c.b16 %v1923, %v1919
    %v1956 = vpack.c.b16 %v1924, %v1920
    %1989 = vmatpush.bf16.msra.mxu0 %v1953
    %1990 = vmatpush.bf16.msra.mxu0 %v1949
    %1991 = vmatpush.bf16.msra.mxu0 %v1945
    %1992 = vmatpush.bf16.msra.mxu0 %v1941
    %1993 = vmatpush.bf16.msra.mxu0 %v1937
    %1994 = vmatpush.bf16.msra.mxu0 %v1933
    %1995 = vmatpush.bf16.msra.mxu0 %v1929
    %1996 = vmatpush.bf16.msra.mxu0 %v1925
    %1997 = vmatmul.bf16.gmra.mxu0 %v1827
    %v1998 = vpop.f32.mrf.mxu0
    %v1999 = vadd.f32 0.0, %v1998
    %v2000 = vpop.f32.mrf.mxu0
    %2001 = vdwg.mxu0
    %2002 = vmatpush.bf16.msra.mxu0 %v1954
    %2003 = vmatpush.bf16.msra.mxu0 %v1950
    %2004 = vmatpush.bf16.msra.mxu0 %v1946
    %2005 = vmatpush.bf16.msra.mxu0 %v1942
    %2006 = vmatpush.bf16.msra.mxu0 %v1938
    %2007 = vmatpush.bf16.msra.mxu0 %v1934
    %2008 = vmatpush.bf16.msra.mxu0 %v1930
    %2009 = vmatpush.bf16.msra.mxu0 %v1926
    %2010 = vmatmul.bf16.gmra.mxu0 %v1827
    %v2011 = vpop.f32.mrf.mxu0
    %v2012 = vadd.f32 0.0, %v2011
    %v2013 = vpop.f32.mrf.mxu0
    %2014 = vdwg.mxu0
    %2015 = vmatpush.bf16.msra.mxu0 %v1955
    %2016 = vmatpush.bf16.msra.mxu0 %v1951
    %2017 = vmatpush.bf16.msra.mxu0 %v1947
    %2018 = vmatpush.bf16.msra.mxu0 %v1943
    %2019 = vmatpush.bf16.msra.mxu0 %v1939
    %2020 = vmatpush.bf16.msra.mxu0 %v1935
    %2021 = vmatpush.bf16.msra.mxu0 %v1931
    %2022 = vmatpush.bf16.msra.mxu0 %v1927
    %2023 = vmatmul.bf16.gmra.mxu0 %v1827
    %v2024 = vpop.f32.mrf.mxu0
    %v2025 = vadd.f32 0.0, %v2024
    %v2026 = vpop.f32.mrf.mxu0
    %2027 = vdwg.mxu0
    %2028 = vmatpush.bf16.msra.mxu0 %v1956
    %2029 = vmatpush.bf16.msra.mxu0 %v1952
    %2030 = vmatpush.bf16.msra.mxu0 %v1948
    %2031 = vmatpush.bf16.msra.mxu0 %v1944
    %2032 = vmatpush.bf16.msra.mxu0 %v1940
    %2033 = vmatpush.bf16.msra.mxu0 %v1936
    %2034 = vmatpush.bf16.msra.mxu0 %v1932
    %2035 = vmatpush.bf16.msra.mxu0 %v1928
    %2036 = vmatmul.bf16.gmra.mxu0 %v1827
    %v2037 = vpop.f32.mrf.mxu0
    %v2038 = vadd.f32 0.0, %v2037
    %v2039 = vpop.f32.mrf.mxu0
    %2040 = vdwg.mxu0
    %v2045 = vrot.slane %v1999, 6
    %v2046 = vrot.slane %v2012, 6
    %v2047 = vrot.slane %v2025, 6
    %v2048 = vrot.slane %v2038, 6
    %v2053 = vadd.f32 %v1788, %v2045
    %v2054 = vadd.f32 %v1789, %v2046
    %v2055 = vadd.f32 %v1790, %v2047
    %v2056 = vadd.f32 %v1791, %v2048
    %v2057 = vxor.u32 %v2053, 2147483648
    %v2058 = vmul.f32 %v2057, 1.442695
    %v2059 = vpow.pop %v2058
    %v2060 = vadd.f32 %v2059, 1.0
    %v2061 = vrcp.pop %v2060
    %v2062 = vmul.f32 %v2060, %v2061
    %v2063 = vsub.f32 1.0, %v2062
    %v2064 = vmul.f32 %v2061, %v2063
    %v2065 = vadd.f32 %v2061, %v2064
    %vm2066 = vweird.f32 %v2060
    %vm2067 = vweird.f32 %v2061
    %vm2068 = vmor %vm2066, %vm2067
    %v2069 = vsel %vm2068, %v2061, %v2065
    %v2070 = vand.u32 2147483647, %v2060
    %vm2071 = vcmp.eq.f32.partialorder %v2070, 8.507059e+37
    %v2072 = vand.u32 %v2060, 2147483648
    %v2073 = vor.u32 1.1754944e-38, %v2072
    %v2074 = vsel %vm2071, %v2073, %v2069
    %v2075 = vmul.f32 1.0, %v2074
    %v2076 = vxor.u32 %v2054, 2147483648
    %v2077 = vmul.f32 %v2076, 1.442695
    %v2078 = vpow.pop %v2077
    %v2079 = vadd.f32 %v2078, 1.0
    %v2080 = vrcp.pop %v2079
    %v2081 = vmul.f32 %v2079, %v2080
    %v2082 = vsub.f32 1.0, %v2081
    %v2083 = vmul.f32 %v2080, %v2082
    %v2084 = vadd.f32 %v2080, %v2083
    %vm2085 = vweird.f32 %v2079
    %vm2086 = vweird.f32 %v2080
    %vm2087 = vmor %vm2085, %vm2086
    %v2088 = vsel %vm2087, %v2080, %v2084
    %v2089 = vand.u32 2147483647, %v2079
    %vm2090 = vcmp.eq.f32.partialorder %v2089, 8.507059e+37
    %v2091 = vand.u32 %v2079, 2147483648
    %v2092 = vor.u32 1.1754944e-38, %v2091
    %v2093 = vsel %vm2090, %v2092, %v2088
    %v2094 = vmul.f32 1.0, %v2093
    %v2095 = vtanh.pop %v2055
    %v2096 = vxor.u32 %v2056, 2147483648
    %v2097 = vmul.f32 %v2096, 1.442695
    %v2098 = vpow.pop %v2097
    %v2099 = vadd.f32 %v2098, 1.0
    %v2100 = vrcp.pop %v2099
    %v2101 = vmul.f32 %v2099, %v2100
    %v2102 = vsub.f32 1.0, %v2101
    %v2103 = vmul.f32 %v2100, %v2102
    %v2104 = vadd.f32 %v2100, %v2103
    %vm2105 = vweird.f32 %v2099
    %vm2106 = vweird.f32 %v2100
    %vm2107 = vmor %vm2105, %vm2106
    %v2108 = vsel %vm2107, %v2100, %v2104
    %v2109 = vand.u32 2147483647, %v2099
    %vm2110 = vcmp.eq.f32.partialorder %v2109, 8.507059e+37
    %v2111 = vand.u32 %v2099, 2147483648
    %v2112 = vor.u32 1.1754944e-38, %v2111
    %v2113 = vsel %vm2110, %v2112, %v2108
    %v2114 = vmul.f32 1.0, %v2113
    %v2116 = vrot.slane %v1446, 2
    %v2118 = vmul.f32 %v2094, %v2116
    %v2119 = vmul.f32 %v2075, %v2095
    %v2120 = vadd.f32 %v2118, %v2119
    %v2121 = vtanh.pop %v2120
    %v2122 = vmul.f32 %v2114, %v2121
    %v2123 = vpack.c.bf16 %v1787, %v1787
    %2124 = vst [vmem:[%s3] sm:$0x4] %v2123
    %v2125 = vpack.c.bf16 %v2122, %v2122
    %2126 = vst [vmem:[%s117 + $0x4] sm:$0x2] %v2125
    %v2127 = vld [vmem:[#allocation6] sm:$0xc0]
    %v2128 = vld [vmem:[#allocation6 + $0x8] sm:$0xc0]
    %v2129 = vld [vmem:[#allocation6 + $0x10] sm:$0xc0]
    %v2130 = vld [vmem:[#allocation6 + $0x18] sm:$0xc0]
    %v2131 = vld [vmem:[#allocation8] sm:$0xff]
    %v2132 = vld [vmem:[#allocation8 + $0x8] sm:$0xff]
    %v2133 = vld [vmem:[#allocation8 + $0x10] sm:$0xff]
    %v2134 = vld [vmem:[#allocation8 + $0x18] sm:$0xff]
    %v2135 = vld [vmem:[#allocation8 + $0x20] sm:$0xff]
    %v2136 = vld [vmem:[#allocation8 + $0x28] sm:$0xff]
    %v2137 = vld [vmem:[#allocation8 + $0x30] sm:$0xff]
    %v2138 = vld [vmem:[#allocation8 + $0x38] sm:$0xff]
    %v2139 = vld [vmem:[#allocation8 + $0x40] sm:$0xff]
    %v2140 = vld [vmem:[#allocation8 + $0x48] sm:$0xff]
    %v2141 = vld [vmem:[#allocation8 + $0x50] sm:$0xff]
    %v2142 = vld [vmem:[#allocation8 + $0x58] sm:$0xff]
    %v2143 = vld [vmem:[#allocation8 + $0x60] sm:$0xff]
    %v2144 = vld [vmem:[#allocation8 + $0x68] sm:$0xff]
    %v2145 = vld [vmem:[#allocation8 + $0x70] sm:$0xff]
    %v2146 = vld [vmem:[#allocation8 + $0x78] sm:$0xff]
    %v2147 = vld [vmem:[#allocation8 + $0x80] sm:$0xff]
    %v2148 = vld [vmem:[#allocation8 + $0x88] sm:$0xff]
    %v2149 = vld [vmem:[#allocation8 + $0x90] sm:$0xff]
    %v2150 = vld [vmem:[#allocation8 + $0x98] sm:$0xff]
    %v2151 = vld [vmem:[#allocation8 + $0xa0] sm:$0xff]
    %v2152 = vld [vmem:[#allocation8 + $0xa8] sm:$0xff]
    %v2153 = vld [vmem:[#allocation8 + $0xb0] sm:$0xff]
    %v2154 = vld [vmem:[#allocation8 + $0xb8] sm:$0xff]
    %v2155 = vld [vmem:[#allocation8 + $0xc0] sm:$0xff]
    %v2156 = vld [vmem:[#allocation8 + $0xc8] sm:$0xff]
    %v2157 = vld [vmem:[#allocation8 + $0xd0] sm:$0xff]
    %v2158 = vld [vmem:[#allocation8 + $0xd8] sm:$0xff]
    %v2159 = vld [vmem:[#allocation8 + $0xe0] sm:$0xff]
    %v2160 = vld [vmem:[#allocation8 + $0xe8] sm:$0xff]
    %v2161 = vld [vmem:[#allocation8 + $0xf0] sm:$0xff]
    %v2162 = vld [vmem:[#allocation8 + $0xf8] sm:$0xff]
    %v2164 = vunpack.c.l.b16 %v2123
    %v2165 = vpack.c.b16 %v2164, %v2164
    %v2166 = vrot.slane %v2165, 2
    %v2200 = vunpack.c.l.b16 %v2131
    %v2201 = vunpack.c.h.b16 %v2131
    %v2202 = vunpack.c.l.b16 %v2132
    %v2203 = vunpack.c.h.b16 %v2132
    %v2204 = vunpack.c.l.b16 %v2133
    %v2205 = vunpack.c.h.b16 %v2133
    %v2206 = vunpack.c.l.b16 %v2134
    %v2207 = vunpack.c.h.b16 %v2134
    %v2208 = vunpack.c.l.b16 %v2135
    %v2209 = vunpack.c.h.b16 %v2135
    %v2210 = vunpack.c.l.b16 %v2136
    %v2211 = vunpack.c.h.b16 %v2136
    %v2212 = vunpack.c.l.b16 %v2137
    %v2213 = vunpack.c.h.b16 %v2137
    %v2214 = vunpack.c.l.b16 %v2138
    %v2215 = vunpack.c.h.b16 %v2138
    %v2216 = vunpack.c.l.b16 %v2139
    %v2217 = vunpack.c.h.b16 %v2139
    %v2218 = vunpack.c.l.b16 %v2140
    %v2219 = vunpack.c.h.b16 %v2140
    %v2220 = vunpack.c.l.b16 %v2141
    %v2221 = vunpack.c.h.b16 %v2141
    %v2222 = vunpack.c.l.b16 %v2142
    %v2223 = vunpack.c.h.b16 %v2142
    %v2224 = vunpack.c.l.b16 %v2143
    %v2225 = vunpack.c.h.b16 %v2143
    %v2226 = vunpack.c.l.b16 %v2144
    %v2227 = vunpack.c.h.b16 %v2144
    %v2228 = vunpack.c.l.b16 %v2145
    %v2229 = vunpack.c.h.b16 %v2145
    %v2230 = vunpack.c.l.b16 %v2146
    %v2231 = vunpack.c.h.b16 %v2146
    %v2232 = vunpack.c.l.b16 %v2147
    %v2233 = vunpack.c.h.b16 %v2147
    %v2234 = vunpack.c.l.b16 %v2148
    %v2235 = vunpack.c.h.b16 %v2148
    %v2236 = vunpack.c.l.b16 %v2149
    %v2237 = vunpack.c.h.b16 %v2149
    %v2238 = vunpack.c.l.b16 %v2150
    %v2239 = vunpack.c.h.b16 %v2150
    %v2240 = vunpack.c.l.b16 %v2151
    %v2241 = vunpack.c.h.b16 %v2151
    %v2242 = vunpack.c.l.b16 %v2152
    %v2243 = vunpack.c.h.b16 %v2152
    %v2244 = vunpack.c.l.b16 %v2153
    %v2245 = vunpack.c.h.b16 %v2153
    %v2246 = vunpack.c.l.b16 %v2154
    %v2247 = vunpack.c.h.b16 %v2154
    %v2248 = vunpack.c.l.b16 %v2155
    %v2249 = vunpack.c.h.b16 %v2155
    %v2250 = vunpack.c.l.b16 %v2156
    %v2251 = vunpack.c.h.b16 %v2156
    %v2252 = vunpack.c.l.b16 %v2157
    %v2253 = vunpack.c.h.b16 %v2157
    %v2254 = vunpack.c.l.b16 %v2158
    %v2255 = vunpack.c.h.b16 %v2158
    %v2256 = vunpack.c.l.b16 %v2159
    %v2257 = vunpack.c.h.b16 %v2159
    %v2258 = vunpack.c.l.b16 %v2160
    %v2259 = vunpack.c.h.b16 %v2160
    %v2260 = vunpack.c.l.b16 %v2161
    %v2261 = vunpack.c.h.b16 %v2161
    %v2262 = vunpack.c.l.b16 %v2162
    %v2263 = vunpack.c.h.b16 %v2162
    %v2264 = vpack.c.b16 %v2204, %v2200
    %v2265 = vpack.c.b16 %v2205, %v2201
    %v2266 = vpack.c.b16 %v2206, %v2202
    %v2267 = vpack.c.b16 %v2207, %v2203
    %v2268 = vpack.c.b16 %v2212, %v2208
    %v2269 = vpack.c.b16 %v2213, %v2209
    %v2270 = vpack.c.b16 %v2214, %v2210
    %v2271 = vpack.c.b16 %v2215, %v2211
    %v2272 = vpack.c.b16 %v2220, %v2216
    %v2273 = vpack.c.b16 %v2221, %v2217
    %v2274 = vpack.c.b16 %v2222, %v2218
    %v2275 = vpack.c.b16 %v2223, %v2219
    %v2276 = vpack.c.b16 %v2228, %v2224
    %v2277 = vpack.c.b16 %v2229, %v2225
    %v2278 = vpack.c.b16 %v2230, %v2226
    %v2279 = vpack.c.b16 %v2231, %v2227
    %v2280 = vpack.c.b16 %v2236, %v2232
    %v2281 = vpack.c.b16 %v2237, %v2233
    %v2282 = vpack.c.b16 %v2238, %v2234
    %v2283 = vpack.c.b16 %v2239, %v2235
    %v2284 = vpack.c.b16 %v2244, %v2240
    %v2285 = vpack.c.b16 %v2245, %v2241
    %v2286 = vpack.c.b16 %v2246, %v2242
    %v2287 = vpack.c.b16 %v2247, %v2243
    %v2288 = vpack.c.b16 %v2252, %v2248
    %v2289 = vpack.c.b16 %v2253, %v2249
    %v2290 = vpack.c.b16 %v2254, %v2250
    %v2291 = vpack.c.b16 %v2255, %v2251
    %v2292 = vpack.c.b16 %v2260, %v2256
    %v2293 = vpack.c.b16 %v2261, %v2257
    %v2294 = vpack.c.b16 %v2262, %v2258
    %v2295 = vpack.c.b16 %v2263, %v2259
    %2328 = vmatpush.bf16.msra.mxu0 %v2292
    %2329 = vmatpush.bf16.msra.mxu0 %v2288
    %2330 = vmatpush.bf16.msra.mxu0 %v2284
    %2331 = vmatpush.bf16.msra.mxu0 %v2280
    %2332 = vmatpush.bf16.msra.mxu0 %v2276
    %2333 = vmatpush.bf16.msra.mxu0 %v2272
    %2334 = vmatpush.bf16.msra.mxu0 %v2268
    %2335 = vmatpush.bf16.msra.mxu0 %v2264
    %2336 = vmatmul.bf16.gmra.mxu0 %v2166
    %v2337 = vpop.f32.mrf.mxu0
    %v2338 = vadd.f32 0.0, %v2337
    %v2339 = vpop.f32.mrf.mxu0
    %2340 = vdwg.mxu0
    %2341 = vmatpush.bf16.msra.mxu0 %v2293
    %2342 = vmatpush.bf16.msra.mxu0 %v2289
    %2343 = vmatpush.bf16.msra.mxu0 %v2285
    %2344 = vmatpush.bf16.msra.mxu0 %v2281
    %2345 = vmatpush.bf16.msra.mxu0 %v2277
    %2346 = vmatpush.bf16.msra.mxu0 %v2273
    %2347 = vmatpush.bf16.msra.mxu0 %v2269
    %2348 = vmatpush.bf16.msra.mxu0 %v2265
    %2349 = vmatmul.bf16.gmra.mxu0 %v2166
    %v2350 = vpop.f32.mrf.mxu0
    %v2351 = vadd.f32 0.0, %v2350
    %v2352 = vpop.f32.mrf.mxu0
    %2353 = vdwg.mxu0
    %2354 = vmatpush.bf16.msra.mxu0 %v2294
    %2355 = vmatpush.bf16.msra.mxu0 %v2290
    %2356 = vmatpush.bf16.msra.mxu0 %v2286
    %2357 = vmatpush.bf16.msra.mxu0 %v2282
    %2358 = vmatpush.bf16.msra.mxu0 %v2278
    %2359 = vmatpush.bf16.msra.mxu0 %v2274
    %2360 = vmatpush.bf16.msra.mxu0 %v2270
    %2361 = vmatpush.bf16.msra.mxu0 %v2266
    %2362 = vmatmul.bf16.gmra.mxu0 %v2166
    %v2363 = vpop.f32.mrf.mxu0
    %v2364 = vadd.f32 0.0, %v2363
    %v2365 = vpop.f32.mrf.mxu0
    %2366 = vdwg.mxu0
    %2367 = vmatpush.bf16.msra.mxu0 %v2295
    %2368 = vmatpush.bf16.msra.mxu0 %v2291
    %2369 = vmatpush.bf16.msra.mxu0 %v2287
    %2370 = vmatpush.bf16.msra.mxu0 %v2283
    %2371 = vmatpush.bf16.msra.mxu0 %v2279
    %2372 = vmatpush.bf16.msra.mxu0 %v2275
    %2373 = vmatpush.bf16.msra.mxu0 %v2271
    %2374 = vmatpush.bf16.msra.mxu0 %v2267
    %2375 = vmatmul.bf16.gmra.mxu0 %v2166
    %v2376 = vpop.f32.mrf.mxu0
    %v2377 = vadd.f32 0.0, %v2376
    %v2378 = vpop.f32.mrf.mxu0
    %2379 = vdwg.mxu0
    %v2384 = vrot.slane %v2338, 2
    %v2385 = vrot.slane %v2351, 2
    %v2386 = vrot.slane %v2364, 2
    %v2387 = vrot.slane %v2377, 2
    %v2392 = vadd.f32 %v2127, %v2384
    %v2393 = vadd.f32 %v2128, %v2385
    %v2394 = vadd.f32 %v2129, %v2386
    %v2395 = vadd.f32 %v2130, %v2387
    %v2396 = vxor.u32 %v2392, 2147483648
    %v2397 = vmul.f32 %v2396, 1.442695
    %v2398 = vpow.pop %v2397
    %v2399 = vadd.f32 %v2398, 1.0
    %v2400 = vrcp.pop %v2399
    %v2401 = vmul.f32 %v2399, %v2400
    %v2402 = vsub.f32 1.0, %v2401
    %v2403 = vmul.f32 %v2400, %v2402
    %v2404 = vadd.f32 %v2400, %v2403
    %vm2405 = vweird.f32 %v2399
    %vm2406 = vweird.f32 %v2400
    %vm2407 = vmor %vm2405, %vm2406
    %v2408 = vsel %vm2407, %v2400, %v2404
    %v2409 = vand.u32 2147483647, %v2399
    %vm2410 = vcmp.eq.f32.partialorder %v2409, 8.507059e+37
    %v2411 = vand.u32 %v2399, 2147483648
    %v2412 = vor.u32 1.1754944e-38, %v2411
    %v2413 = vsel %vm2410, %v2412, %v2408
    %v2414 = vmul.f32 1.0, %v2413
    %v2415 = vxor.u32 %v2393, 2147483648
    %v2416 = vmul.f32 %v2415, 1.442695
    %v2417 = vpow.pop %v2416
    %v2418 = vadd.f32 %v2417, 1.0
    %v2419 = vrcp.pop %v2418
    %v2420 = vmul.f32 %v2418, %v2419
    %v2421 = vsub.f32 1.0, %v2420
    %v2422 = vmul.f32 %v2419, %v2421
    %v2423 = vadd.f32 %v2419, %v2422
    %vm2424 = vweird.f32 %v2418
    %vm2425 = vweird.f32 %v2419
    %vm2426 = vmor %vm2424, %vm2425
    %v2427 = vsel %vm2426, %v2419, %v2423
    %v2428 = vand.u32 2147483647, %v2418
    %vm2429 = vcmp.eq.f32.partialorder %v2428, 8.507059e+37
    %v2430 = vand.u32 %v2418, 2147483648
    %v2431 = vor.u32 1.1754944e-38, %v2430
    %v2432 = vsel %vm2429, %v2431, %v2427
    %v2433 = vmul.f32 1.0, %v2432
    %v2434 = vtanh.pop %v2394
    %v2435 = vxor.u32 %v2395, 2147483648
    %v2436 = vmul.f32 %v2435, 1.442695
    %v2437 = vpow.pop %v2436
    %v2438 = vadd.f32 %v2437, 1.0
    %v2439 = vrcp.pop %v2438
    %v2440 = vmul.f32 %v2438, %v2439
    %v2441 = vsub.f32 1.0, %v2440
    %v2442 = vmul.f32 %v2439, %v2441
    %v2443 = vadd.f32 %v2439, %v2442
    %vm2444 = vweird.f32 %v2438
    %vm2445 = vweird.f32 %v2439
    %vm2446 = vmor %vm2444, %vm2445
    %v2447 = vsel %vm2446, %v2439, %v2443
    %v2448 = vand.u32 2147483647, %v2438
    %vm2449 = vcmp.eq.f32.partialorder %v2448, 8.507059e+37
    %v2450 = vand.u32 %v2438, 2147483648
    %v2451 = vor.u32 1.1754944e-38, %v2450
    %v2452 = vsel %vm2449, %v2451, %v2447
    %v2453 = vmul.f32 1.0, %v2452
    %v2455 = vrot.slane %v1785, 6
    %v2457 = vmul.f32 %v2433, %v2455
    %v2458 = vmul.f32 %v2414, %v2434
    %v2459 = vadd.f32 %v2457, %v2458
    %v2460 = vtanh.pop %v2459
    %v2461 = vmul.f32 %v2453, %v2460
    %v2462 = vld [vmem:[#allocation7 + $0x20] sm:$0x3]
    %v2463 = vld [vmem:[#allocation7 + $0x28] sm:$0x3]
    %v2464 = vld [vmem:[#allocation7 + $0x30] sm:$0x3]
    %v2465 = vld [vmem:[#allocation7 + $0x38] sm:$0x3]
    %v2466 = vld [vmem:[%s452] sm:$0xff]
    %v2467 = vld [vmem:[%s452 + $0x8] sm:$0xff]
    %v2468 = vld [vmem:[%s452 + $0x10] sm:$0xff]
    %v2469 = vld [vmem:[%s452 + $0x18] sm:$0xff]
    %v2470 = vld [vmem:[%s452 + $0x20] sm:$0xff]
    %v2471 = vld [vmem:[%s452 + $0x28] sm:$0xff]
    %v2472 = vld [vmem:[%s452 + $0x30] sm:$0xff]
    %v2473 = vld [vmem:[%s452 + $0x38] sm:$0xff]
    %v2474 = vld [vmem:[%s452 + $0x40] sm:$0xff]
    %v2475 = vld [vmem:[%s452 + $0x48] sm:$0xff]
    %v2476 = vld [vmem:[%s452 + $0x50] sm:$0xff]
    %v2477 = vld [vmem:[%s452 + $0x58] sm:$0xff]
    %v2478 = vld [vmem:[%s452 + $0x60] sm:$0xff]
    %v2479 = vld [vmem:[%s452 + $0x68] sm:$0xff]
    %v2480 = vld [vmem:[%s452 + $0x70] sm:$0xff]
    %v2481 = vld [vmem:[%s452 + $0x78] sm:$0xff]
    %v2482 = vld [vmem:[%s452 + $0x80] sm:$0xff]
    %v2483 = vld [vmem:[%s452 + $0x88] sm:$0xff]
    %v2484 = vld [vmem:[%s452 + $0x90] sm:$0xff]
    %v2485 = vld [vmem:[%s452 + $0x98] sm:$0xff]
    %v2486 = vld [vmem:[%s452 + $0xa0] sm:$0xff]
    %v2487 = vld [vmem:[%s452 + $0xa8] sm:$0xff]
    %v2488 = vld [vmem:[%s452 + $0xb0] sm:$0xff]
    %v2489 = vld [vmem:[%s452 + $0xb8] sm:$0xff]
    %v2490 = vld [vmem:[%s452 + $0xc0] sm:$0xff]
    %v2491 = vld [vmem:[%s452 + $0xc8] sm:$0xff]
    %v2492 = vld [vmem:[%s452 + $0xd0] sm:$0xff]
    %v2493 = vld [vmem:[%s452 + $0xd8] sm:$0xff]
    %v2494 = vld [vmem:[%s452 + $0xe0] sm:$0xff]
    %v2495 = vld [vmem:[%s452 + $0xe8] sm:$0xff]
    %v2496 = vld [vmem:[%s452 + $0xf0] sm:$0xff]
    %v2497 = vld [vmem:[%s452 + $0xf8] sm:$0xff]
    %v2499 = vunpack.c.l.b16 %v2125
    %v2500 = vpack.c.b16 %v2499, %v2499
    %v2501 = vrot.slane %v2500, 1
    %v2535 = vunpack.c.l.b16 %v2466
    %v2536 = vunpack.c.h.b16 %v2466
    %v2537 = vunpack.c.l.b16 %v2467
    %v2538 = vunpack.c.h.b16 %v2467
    %v2539 = vunpack.c.l.b16 %v2468
    %v2540 = vunpack.c.h.b16 %v2468
    %v2541 = vunpack.c.l.b16 %v2469
    %v2542 = vunpack.c.h.b16 %v2469
    %v2543 = vunpack.c.l.b16 %v2470
    %v2544 = vunpack.c.h.b16 %v2470
    %v2545 = vunpack.c.l.b16 %v2471
    %v2546 = vunpack.c.h.b16 %v2471
    %v2547 = vunpack.c.l.b16 %v2472
    %v2548 = vunpack.c.h.b16 %v2472
    %v2549 = vunpack.c.l.b16 %v2473
    %v2550 = vunpack.c.h.b16 %v2473
    %v2551 = vunpack.c.l.b16 %v2474
    %v2552 = vunpack.c.h.b16 %v2474
    %v2553 = vunpack.c.l.b16 %v2475
    %v2554 = vunpack.c.h.b16 %v2475
    %v2555 = vunpack.c.l.b16 %v2476
    %v2556 = vunpack.c.h.b16 %v2476
    %v2557 = vunpack.c.l.b16 %v2477
    %v2558 = vunpack.c.h.b16 %v2477
    %v2559 = vunpack.c.l.b16 %v2478
    %v2560 = vunpack.c.h.b16 %v2478
    %v2561 = vunpack.c.l.b16 %v2479
    %v2562 = vunpack.c.h.b16 %v2479
    %v2563 = vunpack.c.l.b16 %v2480
    %v2564 = vunpack.c.h.b16 %v2480
    %v2565 = vunpack.c.l.b16 %v2481
    %v2566 = vunpack.c.h.b16 %v2481
    %v2567 = vunpack.c.l.b16 %v2482
    %v2568 = vunpack.c.h.b16 %v2482
    %v2569 = vunpack.c.l.b16 %v2483
    %v2570 = vunpack.c.h.b16 %v2483
    %v2571 = vunpack.c.l.b16 %v2484
    %v2572 = vunpack.c.h.b16 %v2484
    %v2573 = vunpack.c.l.b16 %v2485
    %v2574 = vunpack.c.h.b16 %v2485
    %v2575 = vunpack.c.l.b16 %v2486
    %v2576 = vunpack.c.h.b16 %v2486
    %v2577 = vunpack.c.l.b16 %v2487
    %v2578 = vunpack.c.h.b16 %v2487
    %v2579 = vunpack.c.l.b16 %v2488
    %v2580 = vunpack.c.h.b16 %v2488
    %v2581 = vunpack.c.l.b16 %v2489
    %v2582 = vunpack.c.h.b16 %v2489
    %v2583 = vunpack.c.l.b16 %v2490
    %v2584 = vunpack.c.h.b16 %v2490
    %v2585 = vunpack.c.l.b16 %v2491
    %v2586 = vunpack.c.h.b16 %v2491
    %v2587 = vunpack.c.l.b16 %v2492
    %v2588 = vunpack.c.h.b16 %v2492
    %v2589 = vunpack.c.l.b16 %v2493
    %v2590 = vunpack.c.h.b16 %v2493
    %v2591 = vunpack.c.l.b16 %v2494
    %v2592 = vunpack.c.h.b16 %v2494
    %v2593 = vunpack.c.l.b16 %v2495
    %v2594 = vunpack.c.h.b16 %v2495
    %v2595 = vunpack.c.l.b16 %v2496
    %v2596 = vunpack.c.h.b16 %v2496
    %v2597 = vunpack.c.l.b16 %v2497
    %v2598 = vunpack.c.h.b16 %v2497
    %v2599 = vpack.c.b16 %v2539, %v2535
    %v2600 = vpack.c.b16 %v2540, %v2536
    %v2601 = vpack.c.b16 %v2541, %v2537
    %v2602 = vpack.c.b16 %v2542, %v2538
    %v2603 = vpack.c.b16 %v2547, %v2543
    %v2604 = vpack.c.b16 %v2548, %v2544
    %v2605 = vpack.c.b16 %v2549, %v2545
    %v2606 = vpack.c.b16 %v2550, %v2546
    %v2607 = vpack.c.b16 %v2555, %v2551
    %v2608 = vpack.c.b16 %v2556, %v2552
    %v2609 = vpack.c.b16 %v2557, %v2553
    %v2610 = vpack.c.b16 %v2558, %v2554
    %v2611 = vpack.c.b16 %v2563, %v2559
    %v2612 = vpack.c.b16 %v2564, %v2560
    %v2613 = vpack.c.b16 %v2565, %v2561
    %v2614 = vpack.c.b16 %v2566, %v2562
    %v2615 = vpack.c.b16 %v2571, %v2567
    %v2616 = vpack.c.b16 %v2572, %v2568
    %v2617 = vpack.c.b16 %v2573, %v2569
    %v2618 = vpack.c.b16 %v2574, %v2570
    %v2619 = vpack.c.b16 %v2579, %v2575
    %v2620 = vpack.c.b16 %v2580, %v2576
    %v2621 = vpack.c.b16 %v2581, %v2577
    %v2622 = vpack.c.b16 %v2582, %v2578
    %v2623 = vpack.c.b16 %v2587, %v2583
    %v2624 = vpack.c.b16 %v2588, %v2584
    %v2625 = vpack.c.b16 %v2589, %v2585
    %v2626 = vpack.c.b16 %v2590, %v2586
    %v2627 = vpack.c.b16 %v2595, %v2591
    %v2628 = vpack.c.b16 %v2596, %v2592
    %v2629 = vpack.c.b16 %v2597, %v2593
    %v2630 = vpack.c.b16 %v2598, %v2594
    %2663 = vmatpush.bf16.msra.mxu0 %v2627
    %2664 = vmatpush.bf16.msra.mxu0 %v2623
    %2665 = vmatpush.bf16.msra.mxu0 %v2619
    %2666 = vmatpush.bf16.msra.mxu0 %v2615
    %2667 = vmatpush.bf16.msra.mxu0 %v2611
    %2668 = vmatpush.bf16.msra.mxu0 %v2607
    %2669 = vmatpush.bf16.msra.mxu0 %v2603
    %2670 = vmatpush.bf16.msra.mxu0 %v2599
    %2671 = vmatmul.bf16.gmra.mxu0 %v2501
    %v2672 = vpop.f32.mrf.mxu0
    %v2673 = vadd.f32 0.0, %v2672
    %v2674 = vpop.f32.mrf.mxu0
    %2675 = vdwg.mxu0
    %2676 = vmatpush.bf16.msra.mxu0 %v2628
    %2677 = vmatpush.bf16.msra.mxu0 %v2624
    %2678 = vmatpush.bf16.msra.mxu0 %v2620
    %2679 = vmatpush.bf16.msra.mxu0 %v2616
    %2680 = vmatpush.bf16.msra.mxu0 %v2612
    %2681 = vmatpush.bf16.msra.mxu0 %v2608
    %2682 = vmatpush.bf16.msra.mxu0 %v2604
    %2683 = vmatpush.bf16.msra.mxu0 %v2600
    %2684 = vmatmul.bf16.gmra.mxu0 %v2501
    %v2685 = vpop.f32.mrf.mxu0
    %v2686 = vadd.f32 0.0, %v2685
    %v2687 = vpop.f32.mrf.mxu0
    %2688 = vdwg.mxu0
    %2689 = vmatpush.bf16.msra.mxu0 %v2629
    %2690 = vmatpush.bf16.msra.mxu0 %v2625
    %2691 = vmatpush.bf16.msra.mxu0 %v2621
    %2692 = vmatpush.bf16.msra.mxu0 %v2617
    %2693 = vmatpush.bf16.msra.mxu0 %v2613
    %2694 = vmatpush.bf16.msra.mxu0 %v2609
    %2695 = vmatpush.bf16.msra.mxu0 %v2605
    %2696 = vmatpush.bf16.msra.mxu0 %v2601
    %2697 = vmatmul.bf16.gmra.mxu0 %v2501
    %v2698 = vpop.f32.mrf.mxu0
    %v2699 = vadd.f32 0.0, %v2698
    %v2700 = vpop.f32.mrf.mxu0
    %2701 = vdwg.mxu0
    %2702 = vmatpush.bf16.msra.mxu0 %v2630
    %2703 = vmatpush.bf16.msra.mxu0 %v2626
    %2704 = vmatpush.bf16.msra.mxu0 %v2622
    %2705 = vmatpush.bf16.msra.mxu0 %v2618
    %2706 = vmatpush.bf16.msra.mxu0 %v2614
    %2707 = vmatpush.bf16.msra.mxu0 %v2610
    %2708 = vmatpush.bf16.msra.mxu0 %v2606
    %2709 = vmatpush.bf16.msra.mxu0 %v2602
    %2710 = vmatmul.bf16.gmra.mxu0 %v2501
    %v2711 = vpop.f32.mrf.mxu0
    %v2712 = vadd.f32 0.0, %v2711
    %v2713 = vpop.f32.mrf.mxu0
    %2714 = vdwg.mxu0
    %v2715 = vadd.f32 %v2462, %v2673
    %v2716 = vadd.f32 %v2463, %v2686
    %v2717 = vadd.f32 %v2464, %v2699
    %v2718 = vadd.f32 %v2465, %v2712
    %v2719 = vxor.u32 %v2715, 2147483648
    %v2720 = vmul.f32 %v2719, 1.442695
    %v2721 = vpow.pop %v2720
    %v2722 = vadd.f32 %v2721, 1.0
    %v2723 = vrcp.pop %v2722
    %v2724 = vmul.f32 %v2722, %v2723
    %v2725 = vsub.f32 1.0, %v2724
    %v2726 = vmul.f32 %v2723, %v2725
    %v2727 = vadd.f32 %v2723, %v2726
    %vm2728 = vweird.f32 %v2722
    %vm2729 = vweird.f32 %v2723
    %vm2730 = vmor %vm2728, %vm2729
    %v2731 = vsel %vm2730, %v2723, %v2727
    %v2732 = vand.u32 2147483647, %v2722
    %vm2733 = vcmp.eq.f32.partialorder %v2732, 8.507059e+37
    %v2734 = vand.u32 %v2722, 2147483648
    %v2735 = vor.u32 1.1754944e-38, %v2734
    %v2736 = vsel %vm2733, %v2735, %v2731
    %v2737 = vmul.f32 1.0, %v2736
    %v2738 = vxor.u32 %v2716, 2147483648
    %v2739 = vmul.f32 %v2738, 1.442695
    %v2740 = vpow.pop %v2739
    %v2741 = vadd.f32 %v2740, 1.0
    %v2742 = vrcp.pop %v2741
    %v2743 = vmul.f32 %v2741, %v2742
    %v2744 = vsub.f32 1.0, %v2743
    %v2745 = vmul.f32 %v2742, %v2744
    %v2746 = vadd.f32 %v2742, %v2745
    %vm2747 = vweird.f32 %v2741
    %vm2748 = vweird.f32 %v2742
    %vm2749 = vmor %vm2747, %vm2748
    %v2750 = vsel %vm2749, %v2742, %v2746
    %v2751 = vand.u32 2147483647, %v2741
    %vm2752 = vcmp.eq.f32.partialorder %v2751, 8.507059e+37
    %v2753 = vand.u32 %v2741, 2147483648
    %v2754 = vor.u32 1.1754944e-38, %v2753
    %v2755 = vsel %vm2752, %v2754, %v2750
    %v2756 = vmul.f32 1.0, %v2755
    %v2757 = vtanh.pop %v2717
    %v2758 = vxor.u32 %v2718, 2147483648
    %v2759 = vmul.f32 %v2758, 1.442695
    %v2760 = vpow.pop %v2759
    %v2761 = vadd.f32 %v2760, 1.0
    %v2762 = vrcp.pop %v2761
    %v2763 = vmul.f32 %v2761, %v2762
    %v2764 = vsub.f32 1.0, %v2763
    %v2765 = vmul.f32 %v2762, %v2764
    %v2766 = vadd.f32 %v2762, %v2765
    %vm2767 = vweird.f32 %v2761
    %vm2768 = vweird.f32 %v2762
    %vm2769 = vmor %vm2767, %vm2768
    %v2770 = vsel %vm2769, %v2762, %v2766
    %v2771 = vand.u32 2147483647, %v2761
    %vm2772 = vcmp.eq.f32.partialorder %v2771, 8.507059e+37
    %v2773 = vand.u32 %v2761, 2147483648
    %v2774 = vor.u32 1.1754944e-38, %v2773
    %v2775 = vsel %vm2772, %v2774, %v2770
    %v2776 = vmul.f32 1.0, %v2775
    %v2778 = vrot.slane %v2120, 2
    %v2780 = vmul.f32 %v2756, %v2778
    %v2781 = vmul.f32 %v2737, %v2757
    %v2782 = vadd.f32 %v2780, %v2781
    %v2783 = vtanh.pop %v2782
    %v2784 = vmul.f32 %v2776, %v2783
    %v2785 = vpack.c.bf16 %v2461, %v2461
    %2786 = vst [vmem:[%s3] sm:$0x8] %v2785
    %v2787 = vpack.c.bf16 %v2784, %v2784
    %2788 = vst [vmem:[%s117 + $0x4] sm:$0x1] %v2787
    %v2789 = vld [vmem:[#allocation6 + $0x20] sm:$0x3]
    %v2790 = vld [vmem:[#allocation6 + $0x28] sm:$0x3]
    %v2791 = vld [vmem:[#allocation6 + $0x30] sm:$0x3]
    %v2792 = vld [vmem:[#allocation6 + $0x38] sm:$0x3]
    %v2793 = vld [vmem:[#allocation8] sm:$0xff]
    %v2794 = vld [vmem:[#allocation8 + $0x8] sm:$0xff]
    %v2795 = vld [vmem:[#allocation8 + $0x10] sm:$0xff]
    %v2796 = vld [vmem:[#allocation8 + $0x18] sm:$0xff]
    %v2797 = vld [vmem:[#allocation8 + $0x20] sm:$0xff]
    %v2798 = vld [vmem:[#allocation8 + $0x28] sm:$0xff]
    %v2799 = vld [vmem:[#allocation8 + $0x30] sm:$0xff]
    %v2800 = vld [vmem:[#allocation8 + $0x38] sm:$0xff]
    %v2801 = vld [vmem:[#allocation8 + $0x40] sm:$0xff]
    %v2802 = vld [vmem:[#allocation8 + $0x48] sm:$0xff]
    %v2803 = vld [vmem:[#allocation8 + $0x50] sm:$0xff]
    %v2804 = vld [vmem:[#allocation8 + $0x58] sm:$0xff]
    %v2805 = vld [vmem:[#allocation8 + $0x60] sm:$0xff]
    %v2806 = vld [vmem:[#allocation8 + $0x68] sm:$0xff]
    %v2807 = vld [vmem:[#allocation8 + $0x70] sm:$0xff]
    %v2808 = vld [vmem:[#allocation8 + $0x78] sm:$0xff]
    %v2809 = vld [vmem:[#allocation8 + $0x80] sm:$0xff]
    %v2810 = vld [vmem:[#allocation8 + $0x88] sm:$0xff]
    %v2811 = vld [vmem:[#allocation8 + $0x90] sm:$0xff]
    %v2812 = vld [vmem:[#allocation8 + $0x98] sm:$0xff]
    %v2813 = vld [vmem:[#allocation8 + $0xa0] sm:$0xff]
    %v2814 = vld [vmem:[#allocation8 + $0xa8] sm:$0xff]
    %v2815 = vld [vmem:[#allocation8 + $0xb0] sm:$0xff]
    %v2816 = vld [vmem:[#allocation8 + $0xb8] sm:$0xff]
    %v2817 = vld [vmem:[#allocation8 + $0xc0] sm:$0xff]
    %v2818 = vld [vmem:[#allocation8 + $0xc8] sm:$0xff]
    %v2819 = vld [vmem:[#allocation8 + $0xd0] sm:$0xff]
    %v2820 = vld [vmem:[#allocation8 + $0xd8] sm:$0xff]
    %v2821 = vld [vmem:[#allocation8 + $0xe0] sm:$0xff]
    %v2822 = vld [vmem:[#allocation8 + $0xe8] sm:$0xff]
    %v2823 = vld [vmem:[#allocation8 + $0xf0] sm:$0xff]
    %v2824 = vld [vmem:[#allocation8 + $0xf8] sm:$0xff]
    %v2826 = vunpack.c.l.b16 %v2785
    %v2827 = vpack.c.b16 %v2826, %v2826
    %v2828 = vrot.slane %v2827, 3
    %v2862 = vunpack.c.l.b16 %v2793
    %v2863 = vunpack.c.h.b16 %v2793
    %v2864 = vunpack.c.l.b16 %v2794
    %v2865 = vunpack.c.h.b16 %v2794
    %v2866 = vunpack.c.l.b16 %v2795
    %v2867 = vunpack.c.h.b16 %v2795
    %v2868 = vunpack.c.l.b16 %v2796
    %v2869 = vunpack.c.h.b16 %v2796
    %v2870 = vunpack.c.l.b16 %v2797
    %v2871 = vunpack.c.h.b16 %v2797
    %v2872 = vunpack.c.l.b16 %v2798
    %v2873 = vunpack.c.h.b16 %v2798
    %v2874 = vunpack.c.l.b16 %v2799
    %v2875 = vunpack.c.h.b16 %v2799
    %v2876 = vunpack.c.l.b16 %v2800
    %v2877 = vunpack.c.h.b16 %v2800
    %v2878 = vunpack.c.l.b16 %v2801
    %v2879 = vunpack.c.h.b16 %v2801
    %v2880 = vunpack.c.l.b16 %v2802
    %v2881 = vunpack.c.h.b16 %v2802
    %v2882 = vunpack.c.l.b16 %v2803
    %v2883 = vunpack.c.h.b16 %v2803
    %v2884 = vunpack.c.l.b16 %v2804
    %v2885 = vunpack.c.h.b16 %v2804
    %v2886 = vunpack.c.l.b16 %v2805
    %v2887 = vunpack.c.h.b16 %v2805
    %v2888 = vunpack.c.l.b16 %v2806
    %v2889 = vunpack.c.h.b16 %v2806
    %v2890 = vunpack.c.l.b16 %v2807
    %v2891 = vunpack.c.h.b16 %v2807
    %v2892 = vunpack.c.l.b16 %v2808
    %v2893 = vunpack.c.h.b16 %v2808
    %v2894 = vunpack.c.l.b16 %v2809
    %v2895 = vunpack.c.h.b16 %v2809
    %v2896 = vunpack.c.l.b16 %v2810
    %v2897 = vunpack.c.h.b16 %v2810
    %v2898 = vunpack.c.l.b16 %v2811
    %v2899 = vunpack.c.h.b16 %v2811
    %v2900 = vunpack.c.l.b16 %v2812
    %v2901 = vunpack.c.h.b16 %v2812
    %v2902 = vunpack.c.l.b16 %v2813
    %v2903 = vunpack.c.h.b16 %v2813
    %v2904 = vunpack.c.l.b16 %v2814
    %v2905 = vunpack.c.h.b16 %v2814
    %v2906 = vunpack.c.l.b16 %v2815
    %v2907 = vunpack.c.h.b16 %v2815
    %v2908 = vunpack.c.l.b16 %v2816
    %v2909 = vunpack.c.h.b16 %v2816
    %v2910 = vunpack.c.l.b16 %v2817
    %v2911 = vunpack.c.h.b16 %v2817
    %v2912 = vunpack.c.l.b16 %v2818
    %v2913 = vunpack.c.h.b16 %v2818
    %v2914 = vunpack.c.l.b16 %v2819
    %v2915 = vunpack.c.h.b16 %v2819
    %v2916 = vunpack.c.l.b16 %v2820
    %v2917 = vunpack.c.h.b16 %v2820
    %v2918 = vunpack.c.l.b16 %v2821
    %v2919 = vunpack.c.h.b16 %v2821
    %v2920 = vunpack.c.l.b16 %v2822
    %v2921 = vunpack.c.h.b16 %v2822
    %v2922 = vunpack.c.l.b16 %v2823
    %v2923 = vunpack.c.h.b16 %v2823
    %v2924 = vunpack.c.l.b16 %v2824
    %v2925 = vunpack.c.h.b16 %v2824
    %v2926 = vpack.c.b16 %v2866, %v2862
    %v2927 = vpack.c.b16 %v2867, %v2863
    %v2928 = vpack.c.b16 %v2868, %v2864
    %v2929 = vpack.c.b16 %v2869, %v2865
    %v2930 = vpack.c.b16 %v2874, %v2870
    %v2931 = vpack.c.b16 %v2875, %v2871
    %v2932 = vpack.c.b16 %v2876, %v2872
    %v2933 = vpack.c.b16 %v2877, %v2873
    %v2934 = vpack.c.b16 %v2882, %v2878
    %v2935 = vpack.c.b16 %v2883, %v2879
    %v2936 = vpack.c.b16 %v2884, %v2880
    %v2937 = vpack.c.b16 %v2885, %v2881
    %v2938 = vpack.c.b16 %v2890, %v2886
    %v2939 = vpack.c.b16 %v2891, %v2887
    %v2940 = vpack.c.b16 %v2892, %v2888
    %v2941 = vpack.c.b16 %v2893, %v2889
    %v2942 = vpack.c.b16 %v2898, %v2894
    %v2943 = vpack.c.b16 %v2899, %v2895
    %v2944 = vpack.c.b16 %v2900, %v2896
    %v2945 = vpack.c.b16 %v2901, %v2897
    %v2946 = vpack.c.b16 %v2906, %v2902
    %v2947 = vpack.c.b16 %v2907, %v2903
    %v2948 = vpack.c.b16 %v2908, %v2904
    %v2949 = vpack.c.b16 %v2909, %v2905
    %v2950 = vpack.c.b16 %v2914, %v2910
    %v2951 = vpack.c.b16 %v2915, %v2911
    %v2952 = vpack.c.b16 %v2916, %v2912
    %v2953 = vpack.c.b16 %v2917, %v2913
    %v2954 = vpack.c.b16 %v2922, %v2918
    %v2955 = vpack.c.b16 %v2923, %v2919
    %v2956 = vpack.c.b16 %v2924, %v2920
    %v2957 = vpack.c.b16 %v2925, %v2921
    %2990 = vmatpush.bf16.msra.mxu0 %v2954
    %2991 = vmatpush.bf16.msra.mxu0 %v2950
    %2992 = vmatpush.bf16.msra.mxu0 %v2946
    %2993 = vmatpush.bf16.msra.mxu0 %v2942
    %2994 = vmatpush.bf16.msra.mxu0 %v2938
    %2995 = vmatpush.bf16.msra.mxu0 %v2934
    %2996 = vmatpush.bf16.msra.mxu0 %v2930
    %2997 = vmatpush.bf16.msra.mxu0 %v2926
    %2998 = vmatmul.bf16.gmra.mxu0 %v2828
    %v2999 = vpop.f32.mrf.mxu0
    %v3000 = vadd.f32 0.0, %v2999
    %v3001 = vpop.f32.mrf.mxu0
    %3002 = vdwg.mxu0
    %3003 = vmatpush.bf16.msra.mxu0 %v2955
    %3004 = vmatpush.bf16.msra.mxu0 %v2951
    %3005 = vmatpush.bf16.msra.mxu0 %v2947
    %3006 = vmatpush.bf16.msra.mxu0 %v2943
    %3007 = vmatpush.bf16.msra.mxu0 %v2939
    %3008 = vmatpush.bf16.msra.mxu0 %v2935
    %3009 = vmatpush.bf16.msra.mxu0 %v2931
    %3010 = vmatpush.bf16.msra.mxu0 %v2927
    %3011 = vmatmul.bf16.gmra.mxu0 %v2828
    %v3012 = vpop.f32.mrf.mxu0
    %v3013 = vadd.f32 0.0, %v3012
    %v3014 = vpop.f32.mrf.mxu0
    %3015 = vdwg.mxu0
    %3016 = vmatpush.bf16.msra.mxu0 %v2956
    %3017 = vmatpush.bf16.msra.mxu0 %v2952
    %3018 = vmatpush.bf16.msra.mxu0 %v2948
    %3019 = vmatpush.bf16.msra.mxu0 %v2944
    %3020 = vmatpush.bf16.msra.mxu0 %v2940
    %3021 = vmatpush.bf16.msra.mxu0 %v2936
    %3022 = vmatpush.bf16.msra.mxu0 %v2932
    %3023 = vmatpush.bf16.msra.mxu0 %v2928
    %3024 = vmatmul.bf16.gmra.mxu0 %v2828
    %v3025 = vpop.f32.mrf.mxu0
    %v3026 = vadd.f32 0.0, %v3025
    %v3027 = vpop.f32.mrf.mxu0
    %3028 = vdwg.mxu0
    %3029 = vmatpush.bf16.msra.mxu0 %v2957
    %3030 = vmatpush.bf16.msra.mxu0 %v2953
    %3031 = vmatpush.bf16.msra.mxu0 %v2949
    %3032 = vmatpush.bf16.msra.mxu0 %v2945
    %3033 = vmatpush.bf16.msra.mxu0 %v2941
    %3034 = vmatpush.bf16.msra.mxu0 %v2937
    %3035 = vmatpush.bf16.msra.mxu0 %v2933
    %3036 = vmatpush.bf16.msra.mxu0 %v2929
    %3037 = vmatmul.bf16.gmra.mxu0 %v2828
    %v3038 = vpop.f32.mrf.mxu0
    %v3039 = vadd.f32 0.0, %v3038
    %v3040 = vpop.f32.mrf.mxu0
    %3041 = vdwg.mxu0
    %v3042 = vadd.f32 %v2789, %v3000
    %v3043 = vadd.f32 %v2790, %v3013
    %v3044 = vadd.f32 %v2791, %v3026
    %v3045 = vadd.f32 %v2792, %v3039
    %v3046 = vxor.u32 %v3042, 2147483648
    %v3047 = vmul.f32 %v3046, 1.442695
    %v3048 = vpow.pop %v3047
    %v3049 = vadd.f32 %v3048, 1.0
    %v3050 = vrcp.pop %v3049
    %v3051 = vmul.f32 %v3049, %v3050
    %v3052 = vsub.f32 1.0, %v3051
    %v3053 = vmul.f32 %v3050, %v3052
    %v3054 = vadd.f32 %v3050, %v3053
    %vm3055 = vweird.f32 %v3049
    %vm3056 = vweird.f32 %v3050
    %vm3057 = vmor %vm3055, %vm3056
    %v3058 = vsel %vm3057, %v3050, %v3054
    %v3059 = vand.u32 2147483647, %v3049
    %vm3060 = vcmp.eq.f32.partialorder %v3059, 8.507059e+37
    %v3061 = vand.u32 %v3049, 2147483648
    %v3062 = vor.u32 1.1754944e-38, %v3061
    %v3063 = vsel %vm3060, %v3062, %v3058
    %v3064 = vmul.f32 1.0, %v3063
    %v3065 = vxor.u32 %v3043, 2147483648
    %v3066 = vmul.f32 %v3065, 1.442695
    %v3067 = vpow.pop %v3066
    %v3068 = vadd.f32 %v3067, 1.0
    %v3069 = vrcp.pop %v3068
    %v3070 = vmul.f32 %v3068, %v3069
    %v3071 = vsub.f32 1.0, %v3070
    %v3072 = vmul.f32 %v3069, %v3071
    %v3073 = vadd.f32 %v3069, %v3072
    %vm3074 = vweird.f32 %v3068
    %vm3075 = vweird.f32 %v3069
    %vm3076 = vmor %vm3074, %vm3075
    %v3077 = vsel %vm3076, %v3069, %v3073
    %v3078 = vand.u32 2147483647, %v3068
    %vm3079 = vcmp.eq.f32.partialorder %v3078, 8.507059e+37
    %v3080 = vand.u32 %v3068, 2147483648
    %v3081 = vor.u32 1.1754944e-38, %v3080
    %v3082 = vsel %vm3079, %v3081, %v3077
    %v3083 = vmul.f32 1.0, %v3082
    %v3084 = vtanh.pop %v3044
    %v3085 = vxor.u32 %v3045, 2147483648
    %v3086 = vmul.f32 %v3085, 1.442695
    %v3087 = vpow.pop %v3086
    %v3088 = vadd.f32 %v3087, 1.0
    %v3089 = vrcp.pop %v3088
    %v3090 = vmul.f32 %v3088, %v3089
    %v3091 = vsub.f32 1.0, %v3090
    %v3092 = vmul.f32 %v3089, %v3091
    %v3093 = vadd.f32 %v3089, %v3092
    %vm3094 = vweird.f32 %v3088
    %vm3095 = vweird.f32 %v3089
    %vm3096 = vmor %vm3094, %vm3095
    %v3097 = vsel %vm3096, %v3089, %v3093
    %v3098 = vand.u32 2147483647, %v3088
    %vm3099 = vcmp.eq.f32.partialorder %v3098, 8.507059e+37
    %v3100 = vand.u32 %v3088, 2147483648
    %v3101 = vor.u32 1.1754944e-38, %v3100
    %v3102 = vsel %vm3099, %v3101, %v3097
    %v3103 = vmul.f32 1.0, %v3102
    %v3105 = vrot.slane %v2459, 6
    %v3107 = vmul.f32 %v3083, %v3105
    %v3108 = vmul.f32 %v3064, %v3084
    %v3109 = vadd.f32 %v3107, %v3108
    %v3110 = vtanh.pop %v3109
    %v3111 = vmul.f32 %v3103, %v3110
    %v3112 = vld [vmem:[#allocation7] sm:$0xc0]
    %v3113 = vld [vmem:[#allocation7 + $0x8] sm:$0xc0]
    %v3114 = vld [vmem:[#allocation7 + $0x10] sm:$0xc0]
    %v3115 = vld [vmem:[#allocation7 + $0x18] sm:$0xc0]
    %v3116 = vld [vmem:[%s452] sm:$0xff]
    %v3117 = vld [vmem:[%s452 + $0x8] sm:$0xff]
    %v3118 = vld [vmem:[%s452 + $0x10] sm:$0xff]
    %v3119 = vld [vmem:[%s452 + $0x18] sm:$0xff]
    %v3120 = vld [vmem:[%s452 + $0x20] sm:$0xff]
    %v3121 = vld [vmem:[%s452 + $0x28] sm:$0xff]
    %v3122 = vld [vmem:[%s452 + $0x30] sm:$0xff]
    %v3123 = vld [vmem:[%s452 + $0x38] sm:$0xff]
    %v3124 = vld [vmem:[%s452 + $0x40] sm:$0xff]
    %v3125 = vld [vmem:[%s452 + $0x48] sm:$0xff]
    %v3126 = vld [vmem:[%s452 + $0x50] sm:$0xff]
    %v3127 = vld [vmem:[%s452 + $0x58] sm:$0xff]
    %v3128 = vld [vmem:[%s452 + $0x60] sm:$0xff]
    %v3129 = vld [vmem:[%s452 + $0x68] sm:$0xff]
    %v3130 = vld [vmem:[%s452 + $0x70] sm:$0xff]
    %v3131 = vld [vmem:[%s452 + $0x78] sm:$0xff]
    %v3132 = vld [vmem:[%s452 + $0x80] sm:$0xff]
    %v3133 = vld [vmem:[%s452 + $0x88] sm:$0xff]
    %v3134 = vld [vmem:[%s452 + $0x90] sm:$0xff]
    %v3135 = vld [vmem:[%s452 + $0x98] sm:$0xff]
    %v3136 = vld [vmem:[%s452 + $0xa0] sm:$0xff]
    %v3137 = vld [vmem:[%s452 + $0xa8] sm:$0xff]
    %v3138 = vld [vmem:[%s452 + $0xb0] sm:$0xff]
    %v3139 = vld [vmem:[%s452 + $0xb8] sm:$0xff]
    %v3140 = vld [vmem:[%s452 + $0xc0] sm:$0xff]
    %v3141 = vld [vmem:[%s452 + $0xc8] sm:$0xff]
    %v3142 = vld [vmem:[%s452 + $0xd0] sm:$0xff]
    %v3143 = vld [vmem:[%s452 + $0xd8] sm:$0xff]
    %v3144 = vld [vmem:[%s452 + $0xe0] sm:$0xff]
    %v3145 = vld [vmem:[%s452 + $0xe8] sm:$0xff]
    %v3146 = vld [vmem:[%s452 + $0xf0] sm:$0xff]
    %v3147 = vld [vmem:[%s452 + $0xf8] sm:$0xff]
    %v3180 = vunpack.c.l.b16 %v3116
    %v3181 = vunpack.c.h.b16 %v3116
    %v3182 = vunpack.c.l.b16 %v3117
    %v3183 = vunpack.c.h.b16 %v3117
    %v3184 = vunpack.c.l.b16 %v3118
    %v3185 = vunpack.c.h.b16 %v3118
    %v3186 = vunpack.c.l.b16 %v3119
    %v3187 = vunpack.c.h.b16 %v3119
    %v3188 = vunpack.c.l.b16 %v3120
    %v3189 = vunpack.c.h.b16 %v3120
    %v3190 = vunpack.c.l.b16 %v3121
    %v3191 = vunpack.c.h.b16 %v3121
    %v3192 = vunpack.c.l.b16 %v3122
    %v3193 = vunpack.c.h.b16 %v3122
    %v3194 = vunpack.c.l.b16 %v3123
    %v3195 = vunpack.c.h.b16 %v3123
    %v3196 = vunpack.c.l.b16 %v3124
    %v3197 = vunpack.c.h.b16 %v3124
    %v3198 = vunpack.c.l.b16 %v3125
    %v3199 = vunpack.c.h.b16 %v3125
    %v3200 = vunpack.c.l.b16 %v3126
    %v3201 = vunpack.c.h.b16 %v3126
    %v3202 = vunpack.c.l.b16 %v3127
    %v3203 = vunpack.c.h.b16 %v3127
    %v3204 = vunpack.c.l.b16 %v3128
    %v3205 = vunpack.c.h.b16 %v3128
    %v3206 = vunpack.c.l.b16 %v3129
    %v3207 = vunpack.c.h.b16 %v3129
    %v3208 = vunpack.c.l.b16 %v3130
    %v3209 = vunpack.c.h.b16 %v3130
    %v3210 = vunpack.c.l.b16 %v3131
    %v3211 = vunpack.c.h.b16 %v3131
    %v3212 = vunpack.c.l.b16 %v3132
    %v3213 = vunpack.c.h.b16 %v3132
    %v3214 = vunpack.c.l.b16 %v3133
    %v3215 = vunpack.c.h.b16 %v3133
    %v3216 = vunpack.c.l.b16 %v3134
    %v3217 = vunpack.c.h.b16 %v3134
    %v3218 = vunpack.c.l.b16 %v3135
    %v3219 = vunpack.c.h.b16 %v3135
    %v3220 = vunpack.c.l.b16 %v3136
    %v3221 = vunpack.c.h.b16 %v3136
    %v3222 = vunpack.c.l.b16 %v3137
    %v3223 = vunpack.c.h.b16 %v3137
    %v3224 = vunpack.c.l.b16 %v3138
    %v3225 = vunpack.c.h.b16 %v3138
    %v3226 = vunpack.c.l.b16 %v3139
    %v3227 = vunpack.c.h.b16 %v3139
    %v3228 = vunpack.c.l.b16 %v3140
    %v3229 = vunpack.c.h.b16 %v3140
    %v3230 = vunpack.c.l.b16 %v3141
    %v3231 = vunpack.c.h.b16 %v3141
    %v3232 = vunpack.c.l.b16 %v3142
    %v3233 = vunpack.c.h.b16 %v3142
    %v3234 = vunpack.c.l.b16 %v3143
    %v3235 = vunpack.c.h.b16 %v3143
    %v3236 = vunpack.c.l.b16 %v3144
    %v3237 = vunpack.c.h.b16 %v3144
    %v3238 = vunpack.c.l.b16 %v3145
    %v3239 = vunpack.c.h.b16 %v3145
    %v3240 = vunpack.c.l.b16 %v3146
    %v3241 = vunpack.c.h.b16 %v3146
    %v3242 = vunpack.c.l.b16 %v3147
    %v3243 = vunpack.c.h.b16 %v3147
    %v3244 = vpack.c.b16 %v3184, %v3180
    %v3245 = vpack.c.b16 %v3185, %v3181
    %v3246 = vpack.c.b16 %v3186, %v3182
    %v3247 = vpack.c.b16 %v3187, %v3183
    %v3248 = vpack.c.b16 %v3192, %v3188
    %v3249 = vpack.c.b16 %v3193, %v3189
    %v3250 = vpack.c.b16 %v3194, %v3190
    %v3251 = vpack.c.b16 %v3195, %v3191
    %v3252 = vpack.c.b16 %v3200, %v3196
    %v3253 = vpack.c.b16 %v3201, %v3197
    %v3254 = vpack.c.b16 %v3202, %v3198
    %v3255 = vpack.c.b16 %v3203, %v3199
    %v3256 = vpack.c.b16 %v3208, %v3204
    %v3257 = vpack.c.b16 %v3209, %v3205
    %v3258 = vpack.c.b16 %v3210, %v3206
    %v3259 = vpack.c.b16 %v3211, %v3207
    %v3260 = vpack.c.b16 %v3216, %v3212
    %v3261 = vpack.c.b16 %v3217, %v3213
    %v3262 = vpack.c.b16 %v3218, %v3214
    %v3263 = vpack.c.b16 %v3219, %v3215
    %v3264 = vpack.c.b16 %v3224, %v3220
    %v3265 = vpack.c.b16 %v3225, %v3221
    %v3266 = vpack.c.b16 %v3226, %v3222
    %v3267 = vpack.c.b16 %v3227, %v3223
    %v3268 = vpack.c.b16 %v3232, %v3228
    %v3269 = vpack.c.b16 %v3233, %v3229
    %v3270 = vpack.c.b16 %v3234, %v3230
    %v3271 = vpack.c.b16 %v3235, %v3231
    %v3272 = vpack.c.b16 %v3240, %v3236
    %v3273 = vpack.c.b16 %v3241, %v3237
    %v3274 = vpack.c.b16 %v3242, %v3238
    %v3275 = vpack.c.b16 %v3243, %v3239
    %3308 = vmatpush.bf16.msra.mxu0 %v3272
    %3309 = vmatpush.bf16.msra.mxu0 %v3268
    %3310 = vmatpush.bf16.msra.mxu0 %v3264
    %3311 = vmatpush.bf16.msra.mxu0 %v3260
    %3312 = vmatpush.bf16.msra.mxu0 %v3256
    %3313 = vmatpush.bf16.msra.mxu0 %v3252
    %3314 = vmatpush.bf16.msra.mxu0 %v3248
    %3315 = vmatpush.bf16.msra.mxu0 %v3244
    %3316 = vmatmul.bf16.gmra.mxu0 %v2787
    %v3317 = vpop.f32.mrf.mxu0
    %v3318 = vadd.f32 0.0, %v3317
    %v3319 = vpop.f32.mrf.mxu0
    %3320 = vdwg.mxu0
    %3321 = vmatpush.bf16.msra.mxu0 %v3273
    %3322 = vmatpush.bf16.msra.mxu0 %v3269
    %3323 = vmatpush.bf16.msra.mxu0 %v3265
    %3324 = vmatpush.bf16.msra.mxu0 %v3261
    %3325 = vmatpush.bf16.msra.mxu0 %v3257
    %3326 = vmatpush.bf16.msra.mxu0 %v3253
    %3327 = vmatpush.bf16.msra.mxu0 %v3249
    %3328 = vmatpush.bf16.msra.mxu0 %v3245
    %3329 = vmatmul.bf16.gmra.mxu0 %v2787
    %v3330 = vpop.f32.mrf.mxu0
    %v3331 = vadd.f32 0.0, %v3330
    %v3332 = vpop.f32.mrf.mxu0
    %3333 = vdwg.mxu0
    %3334 = vmatpush.bf16.msra.mxu0 %v3274
    %3335 = vmatpush.bf16.msra.mxu0 %v3270
    %3336 = vmatpush.bf16.msra.mxu0 %v3266
    %3337 = vmatpush.bf16.msra.mxu0 %v3262
    %3338 = vmatpush.bf16.msra.mxu0 %v3258
    %3339 = vmatpush.bf16.msra.mxu0 %v3254
    %3340 = vmatpush.bf16.msra.mxu0 %v3250
    %3341 = vmatpush.bf16.msra.mxu0 %v3246
    %3342 = vmatmul.bf16.gmra.mxu0 %v2787
    %v3343 = vpop.f32.mrf.mxu0
    %v3344 = vadd.f32 0.0, %v3343
    %v3345 = vpop.f32.mrf.mxu0
    %3346 = vdwg.mxu0
    %3347 = vmatpush.bf16.msra.mxu0 %v3275
    %3348 = vmatpush.bf16.msra.mxu0 %v3271
    %3349 = vmatpush.bf16.msra.mxu0 %v3267
    %3350 = vmatpush.bf16.msra.mxu0 %v3263
    %3351 = vmatpush.bf16.msra.mxu0 %v3259
    %3352 = vmatpush.bf16.msra.mxu0 %v3255
    %3353 = vmatpush.bf16.msra.mxu0 %v3251
    %3354 = vmatpush.bf16.msra.mxu0 %v3247
    %3355 = vmatmul.bf16.gmra.mxu0 %v2787
    %v3356 = vpop.f32.mrf.mxu0
    %v3357 = vadd.f32 0.0, %v3356
    %v3358 = vpop.f32.mrf.mxu0
    %3359 = vdwg.mxu0
    %v3364 = vrot.slane %v3318, 2
    %v3365 = vrot.slane %v3331, 2
    %v3366 = vrot.slane %v3344, 2
    %v3367 = vrot.slane %v3357, 2
    %v3372 = vadd.f32 %v3112, %v3364
    %v3373 = vadd.f32 %v3113, %v3365
    %v3374 = vadd.f32 %v3114, %v3366
    %v3375 = vadd.f32 %v3115, %v3367
    %v3376 = vxor.u32 %v3372, 2147483648
    %v3377 = vmul.f32 %v3376, 1.442695
    %v3378 = vpow.pop %v3377
    %v3379 = vadd.f32 %v3378, 1.0
    %v3380 = vrcp.pop %v3379
    %v3381 = vmul.f32 %v3379, %v3380
    %v3382 = vsub.f32 1.0, %v3381
    %v3383 = vmul.f32 %v3380, %v3382
    %v3384 = vadd.f32 %v3380, %v3383
    %vm3385 = vweird.f32 %v3379
    %vm3386 = vweird.f32 %v3380
    %vm3387 = vmor %vm3385, %vm3386
    %v3388 = vsel %vm3387, %v3380, %v3384
    %v3389 = vand.u32 2147483647, %v3379
    %vm3390 = vcmp.eq.f32.partialorder %v3389, 8.507059e+37
    %v3391 = vand.u32 %v3379, 2147483648
    %v3392 = vor.u32 1.1754944e-38, %v3391
    %v3393 = vsel %vm3390, %v3392, %v3388
    %v3394 = vmul.f32 1.0, %v3393
    %v3395 = vxor.u32 %v3373, 2147483648
    %v3396 = vmul.f32 %v3395, 1.442695
    %v3397 = vpow.pop %v3396
    %v3398 = vadd.f32 %v3397, 1.0
    %v3399 = vrcp.pop %v3398
    %v3400 = vmul.f32 %v3398, %v3399
    %v3401 = vsub.f32 1.0, %v3400
    %v3402 = vmul.f32 %v3399, %v3401
    %v3403 = vadd.f32 %v3399, %v3402
    %vm3404 = vweird.f32 %v3398
    %vm3405 = vweird.f32 %v3399
    %vm3406 = vmor %vm3404, %vm3405
    %v3407 = vsel %vm3406, %v3399, %v3403
    %v3408 = vand.u32 2147483647, %v3398
    %vm3409 = vcmp.eq.f32.partialorder %v3408, 8.507059e+37
    %v3410 = vand.u32 %v3398, 2147483648
    %v3411 = vor.u32 1.1754944e-38, %v3410
    %v3412 = vsel %vm3409, %v3411, %v3407
    %v3413 = vmul.f32 1.0, %v3412
    %v3414 = vtanh.pop %v3374
    %v3415 = vxor.u32 %v3375, 2147483648
    %v3416 = vmul.f32 %v3415, 1.442695
    %v3417 = vpow.pop %v3416
    %v3418 = vadd.f32 %v3417, 1.0
    %v3419 = vrcp.pop %v3418
    %v3420 = vmul.f32 %v3418, %v3419
    %v3421 = vsub.f32 1.0, %v3420
    %v3422 = vmul.f32 %v3419, %v3421
    %v3423 = vadd.f32 %v3419, %v3422
    %vm3424 = vweird.f32 %v3418
    %vm3425 = vweird.f32 %v3419
    %vm3426 = vmor %vm3424, %vm3425
    %v3427 = vsel %vm3426, %v3419, %v3423
    %v3428 = vand.u32 2147483647, %v3418
    %vm3429 = vcmp.eq.f32.partialorder %v3428, 8.507059e+37
    %v3430 = vand.u32 %v3418, 2147483648
    %v3431 = vor.u32 1.1754944e-38, %v3430
    %v3432 = vsel %vm3429, %v3431, %v3427
    %v3433 = vmul.f32 1.0, %v3432
    %v3435 = vrot.slane %v2782, 2
    %v3437 = vmul.f32 %v3413, %v3435
    %v3438 = vmul.f32 %v3394, %v3414
    %v3439 = vadd.f32 %v3437, %v3438
    %v3440 = vtanh.pop %v3439
    %v3441 = vmul.f32 %v3433, %v3440
    %v3442 = vpack.c.bf16 %v3111, %v3111
    %3443 = vst [vmem:[%s3 + $0x4] sm:$0x1] %v3442
    %v3444 = vpack.c.bf16 %v3441, %v3441
    %3445 = vst [vmem:[%s117] sm:$0x8] %v3444
    %v3446 = vld [vmem:[#allocation6 + $0x20] sm:$0xc]
    %v3447 = vld [vmem:[#allocation6 + $0x28] sm:$0xc]
    %v3448 = vld [vmem:[#allocation6 + $0x30] sm:$0xc]
    %v3449 = vld [vmem:[#allocation6 + $0x38] sm:$0xc]
    %v3450 = vld [vmem:[#allocation8] sm:$0xff]
    %v3451 = vld [vmem:[#allocation8 + $0x8] sm:$0xff]
    %v3452 = vld [vmem:[#allocation8 + $0x10] sm:$0xff]
    %v3453 = vld [vmem:[#allocation8 + $0x18] sm:$0xff]
    %v3454 = vld [vmem:[#allocation8 + $0x20] sm:$0xff]
    %v3455 = vld [vmem:[#allocation8 + $0x28] sm:$0xff]
    %v3456 = vld [vmem:[#allocation8 + $0x30] sm:$0xff]
    %v3457 = vld [vmem:[#allocation8 + $0x38] sm:$0xff]
    %v3458 = vld [vmem:[#allocation8 + $0x40] sm:$0xff]
    %v3459 = vld [vmem:[#allocation8 + $0x48] sm:$0xff]
    %v3460 = vld [vmem:[#allocation8 + $0x50] sm:$0xff]
    %v3461 = vld [vmem:[#allocation8 + $0x58] sm:$0xff]
    %v3462 = vld [vmem:[#allocation8 + $0x60] sm:$0xff]
    %v3463 = vld [vmem:[#allocation8 + $0x68] sm:$0xff]
    %v3464 = vld [vmem:[#allocation8 + $0x70] sm:$0xff]
    %v3465 = vld [vmem:[#allocation8 + $0x78] sm:$0xff]
    %v3466 = vld [vmem:[#allocation8 + $0x80] sm:$0xff]
    %v3467 = vld [vmem:[#allocation8 + $0x88] sm:$0xff]
    %v3468 = vld [vmem:[#allocation8 + $0x90] sm:$0xff]
    %v3469 = vld [vmem:[#allocation8 + $0x98] sm:$0xff]
    %v3470 = vld [vmem:[#allocation8 + $0xa0] sm:$0xff]
    %v3471 = vld [vmem:[#allocation8 + $0xa8] sm:$0xff]
    %v3472 = vld [vmem:[#allocation8 + $0xb0] sm:$0xff]
    %v3473 = vld [vmem:[#allocation8 + $0xb8] sm:$0xff]
    %v3474 = vld [vmem:[#allocation8 + $0xc0] sm:$0xff]
    %v3475 = vld [vmem:[#allocation8 + $0xc8] sm:$0xff]
    %v3476 = vld [vmem:[#allocation8 + $0xd0] sm:$0xff]
    %v3477 = vld [vmem:[#allocation8 + $0xd8] sm:$0xff]
    %v3478 = vld [vmem:[#allocation8 + $0xe0] sm:$0xff]
    %v3479 = vld [vmem:[#allocation8 + $0xe8] sm:$0xff]
    %v3480 = vld [vmem:[#allocation8 + $0xf0] sm:$0xff]
    %v3481 = vld [vmem:[#allocation8 + $0xf8] sm:$0xff]
    %v3514 = vunpack.c.l.b16 %v3450
    %v3515 = vunpack.c.h.b16 %v3450
    %v3516 = vunpack.c.l.b16 %v3451
    %v3517 = vunpack.c.h.b16 %v3451
    %v3518 = vunpack.c.l.b16 %v3452
    %v3519 = vunpack.c.h.b16 %v3452
    %v3520 = vunpack.c.l.b16 %v3453
    %v3521 = vunpack.c.h.b16 %v3453
    %v3522 = vunpack.c.l.b16 %v3454
    %v3523 = vunpack.c.h.b16 %v3454
    %v3524 = vunpack.c.l.b16 %v3455
    %v3525 = vunpack.c.h.b16 %v3455
    %v3526 = vunpack.c.l.b16 %v3456
    %v3527 = vunpack.c.h.b16 %v3456
    %v3528 = vunpack.c.l.b16 %v3457
    %v3529 = vunpack.c.h.b16 %v3457
    %v3530 = vunpack.c.l.b16 %v3458
    %v3531 = vunpack.c.h.b16 %v3458
    %v3532 = vunpack.c.l.b16 %v3459
    %v3533 = vunpack.c.h.b16 %v3459
    %v3534 = vunpack.c.l.b16 %v3460
    %v3535 = vunpack.c.h.b16 %v3460
    %v3536 = vunpack.c.l.b16 %v3461
    %v3537 = vunpack.c.h.b16 %v3461
    %v3538 = vunpack.c.l.b16 %v3462
    %v3539 = vunpack.c.h.b16 %v3462
    %v3540 = vunpack.c.l.b16 %v3463
    %v3541 = vunpack.c.h.b16 %v3463
    %v3542 = vunpack.c.l.b16 %v3464
    %v3543 = vunpack.c.h.b16 %v3464
    %v3544 = vunpack.c.l.b16 %v3465
    %v3545 = vunpack.c.h.b16 %v3465
    %v3546 = vunpack.c.l.b16 %v3466
    %v3547 = vunpack.c.h.b16 %v3466
    %v3548 = vunpack.c.l.b16 %v3467
    %v3549 = vunpack.c.h.b16 %v3467
    %v3550 = vunpack.c.l.b16 %v3468
    %v3551 = vunpack.c.h.b16 %v3468
    %v3552 = vunpack.c.l.b16 %v3469
    %v3553 = vunpack.c.h.b16 %v3469
    %v3554 = vunpack.c.l.b16 %v3470
    %v3555 = vunpack.c.h.b16 %v3470
    %v3556 = vunpack.c.l.b16 %v3471
    %v3557 = vunpack.c.h.b16 %v3471
    %v3558 = vunpack.c.l.b16 %v3472
    %v3559 = vunpack.c.h.b16 %v3472
    %v3560 = vunpack.c.l.b16 %v3473
    %v3561 = vunpack.c.h.b16 %v3473
    %v3562 = vunpack.c.l.b16 %v3474
    %v3563 = vunpack.c.h.b16 %v3474
    %v3564 = vunpack.c.l.b16 %v3475
    %v3565 = vunpack.c.h.b16 %v3475
    %v3566 = vunpack.c.l.b16 %v3476
    %v3567 = vunpack.c.h.b16 %v3476
    %v3568 = vunpack.c.l.b16 %v3477
    %v3569 = vunpack.c.h.b16 %v3477
    %v3570 = vunpack.c.l.b16 %v3478
    %v3571 = vunpack.c.h.b16 %v3478
    %v3572 = vunpack.c.l.b16 %v3479
    %v3573 = vunpack.c.h.b16 %v3479
    %v3574 = vunpack.c.l.b16 %v3480
    %v3575 = vunpack.c.h.b16 %v3480
    %v3576 = vunpack.c.l.b16 %v3481
    %v3577 = vunpack.c.h.b16 %v3481
    %v3578 = vpack.c.b16 %v3518, %v3514
    %v3579 = vpack.c.b16 %v3519, %v3515
    %v3580 = vpack.c.b16 %v3520, %v3516
    %v3581 = vpack.c.b16 %v3521, %v3517
    %v3582 = vpack.c.b16 %v3526, %v3522
    %v3583 = vpack.c.b16 %v3527, %v3523
    %v3584 = vpack.c.b16 %v3528, %v3524
    %v3585 = vpack.c.b16 %v3529, %v3525
    %v3586 = vpack.c.b16 %v3534, %v3530
    %v3587 = vpack.c.b16 %v3535, %v3531
    %v3588 = vpack.c.b16 %v3536, %v3532
    %v3589 = vpack.c.b16 %v3537, %v3533
    %v3590 = vpack.c.b16 %v3542, %v3538
    %v3591 = vpack.c.b16 %v3543, %v3539
    %v3592 = vpack.c.b16 %v3544, %v3540
    %v3593 = vpack.c.b16 %v3545, %v3541
    %v3594 = vpack.c.b16 %v3550, %v3546
    %v3595 = vpack.c.b16 %v3551, %v3547
    %v3596 = vpack.c.b16 %v3552, %v3548
    %v3597 = vpack.c.b16 %v3553, %v3549
    %v3598 = vpack.c.b16 %v3558, %v3554
    %v3599 = vpack.c.b16 %v3559, %v3555
    %v3600 = vpack.c.b16 %v3560, %v3556
    %v3601 = vpack.c.b16 %v3561, %v3557
    %v3602 = vpack.c.b16 %v3566, %v3562
    %v3603 = vpack.c.b16 %v3567, %v3563
    %v3604 = vpack.c.b16 %v3568, %v3564
    %v3605 = vpack.c.b16 %v3569, %v3565
    %v3606 = vpack.c.b16 %v3574, %v3570
    %v3607 = vpack.c.b16 %v3575, %v3571
    %v3608 = vpack.c.b16 %v3576, %v3572
    %v3609 = vpack.c.b16 %v3577, %v3573
    %3642 = vmatpush.bf16.msra.mxu0 %v3606
    %3643 = vmatpush.bf16.msra.mxu0 %v3602
    %3644 = vmatpush.bf16.msra.mxu0 %v3598
    %3645 = vmatpush.bf16.msra.mxu0 %v3594
    %3646 = vmatpush.bf16.msra.mxu0 %v3590
    %3647 = vmatpush.bf16.msra.mxu0 %v3586
    %3648 = vmatpush.bf16.msra.mxu0 %v3582
    %3649 = vmatpush.bf16.msra.mxu0 %v3578
    %3650 = vmatmul.bf16.gmra.mxu0 %v3442
    %v3651 = vpop.f32.mrf.mxu0
    %v3652 = vadd.f32 0.0, %v3651
    %v3653 = vpop.f32.mrf.mxu0
    %3654 = vdwg.mxu0
    %3655 = vmatpush.bf16.msra.mxu0 %v3607
    %3656 = vmatpush.bf16.msra.mxu0 %v3603
    %3657 = vmatpush.bf16.msra.mxu0 %v3599
    %3658 = vmatpush.bf16.msra.mxu0 %v3595
    %3659 = vmatpush.bf16.msra.mxu0 %v3591
    %3660 = vmatpush.bf16.msra.mxu0 %v3587
    %3661 = vmatpush.bf16.msra.mxu0 %v3583
    %3662 = vmatpush.bf16.msra.mxu0 %v3579
    %3663 = vmatmul.bf16.gmra.mxu0 %v3442
    %v3664 = vpop.f32.mrf.mxu0
    %v3665 = vadd.f32 0.0, %v3664
    %v3666 = vpop.f32.mrf.mxu0
    %3667 = vdwg.mxu0
    %3668 = vmatpush.bf16.msra.mxu0 %v3608
    %3669 = vmatpush.bf16.msra.mxu0 %v3604
    %3670 = vmatpush.bf16.msra.mxu0 %v3600
    %3671 = vmatpush.bf16.msra.mxu0 %v3596
    %3672 = vmatpush.bf16.msra.mxu0 %v3592
    %3673 = vmatpush.bf16.msra.mxu0 %v3588
    %3674 = vmatpush.bf16.msra.mxu0 %v3584
    %3675 = vmatpush.bf16.msra.mxu0 %v3580
    %3676 = vmatmul.bf16.gmra.mxu0 %v3442
    %v3677 = vpop.f32.mrf.mxu0
    %v3678 = vadd.f32 0.0, %v3677
    %v3679 = vpop.f32.mrf.mxu0
    %3680 = vdwg.mxu0
    %3681 = vmatpush.bf16.msra.mxu0 %v3609
    %3682 = vmatpush.bf16.msra.mxu0 %v3605
    %3683 = vmatpush.bf16.msra.mxu0 %v3601
    %3684 = vmatpush.bf16.msra.mxu0 %v3597
    %3685 = vmatpush.bf16.msra.mxu0 %v3593
    %3686 = vmatpush.bf16.msra.mxu0 %v3589
    %3687 = vmatpush.bf16.msra.mxu0 %v3585
    %3688 = vmatpush.bf16.msra.mxu0 %v3581
    %3689 = vmatmul.bf16.gmra.mxu0 %v3442
    %v3690 = vpop.f32.mrf.mxu0
    %v3691 = vadd.f32 0.0, %v3690
    %v3692 = vpop.f32.mrf.mxu0
    %3693 = vdwg.mxu0
    %v3698 = vrot.slane %v3652, 6
    %v3699 = vrot.slane %v3665, 6
    %v3700 = vrot.slane %v3678, 6
    %v3701 = vrot.slane %v3691, 6
    %v3706 = vadd.f32 %v3446, %v3698
    %v3707 = vadd.f32 %v3447, %v3699
    %v3708 = vadd.f32 %v3448, %v3700
    %v3709 = vadd.f32 %v3449, %v3701
    %v3710 = vxor.u32 %v3706, 2147483648
    %v3711 = vmul.f32 %v3710, 1.442695
    %v3712 = vpow.pop %v3711
    %v3713 = vadd.f32 %v3712, 1.0
    %v3714 = vrcp.pop %v3713
    %v3715 = vmul.f32 %v3713, %v3714
    %v3716 = vsub.f32 1.0, %v3715
    %v3717 = vmul.f32 %v3714, %v3716
    %v3718 = vadd.f32 %v3714, %v3717
    %vm3719 = vweird.f32 %v3713
    %vm3720 = vweird.f32 %v3714
    %vm3721 = vmor %vm3719, %vm3720
    %v3722 = vsel %vm3721, %v3714, %v3718
    %v3723 = vand.u32 2147483647, %v3713
    %vm3724 = vcmp.eq.f32.partialorder %v3723, 8.507059e+37
    %v3725 = vand.u32 %v3713, 2147483648
    %v3726 = vor.u32 1.1754944e-38, %v3725
    %v3727 = vsel %vm3724, %v3726, %v3722
    %v3728 = vmul.f32 1.0, %v3727
    %v3729 = vxor.u32 %v3707, 2147483648
    %v3730 = vmul.f32 %v3729, 1.442695
    %v3731 = vpow.pop %v3730
    %v3732 = vadd.f32 %v3731, 1.0
    %v3733 = vrcp.pop %v3732
    %v3734 = vmul.f32 %v3732, %v3733
    %v3735 = vsub.f32 1.0, %v3734
    %v3736 = vmul.f32 %v3733, %v3735
    %v3737 = vadd.f32 %v3733, %v3736
    %vm3738 = vweird.f32 %v3732
    %vm3739 = vweird.f32 %v3733
    %vm3740 = vmor %vm3738, %vm3739
    %v3741 = vsel %vm3740, %v3733, %v3737
    %v3742 = vand.u32 2147483647, %v3732
    %vm3743 = vcmp.eq.f32.partialorder %v3742, 8.507059e+37
    %v3744 = vand.u32 %v3732, 2147483648
    %v3745 = vor.u32 1.1754944e-38, %v3744
    %v3746 = vsel %vm3743, %v3745, %v3741
    %v3747 = vmul.f32 1.0, %v3746
    %v3748 = vtanh.pop %v3708
    %v3749 = vxor.u32 %v3709, 2147483648
    %v3750 = vmul.f32 %v3749, 1.442695
    %v3751 = vpow.pop %v3750
    %v3752 = vadd.f32 %v3751, 1.0
    %v3753 = vrcp.pop %v3752
    %v3754 = vmul.f32 %v3752, %v3753
    %v3755 = vsub.f32 1.0, %v3754
    %v3756 = vmul.f32 %v3753, %v3755
    %v3757 = vadd.f32 %v3753, %v3756
    %vm3758 = vweird.f32 %v3752
    %vm3759 = vweird.f32 %v3753
    %vm3760 = vmor %vm3758, %vm3759
    %v3761 = vsel %vm3760, %v3753, %v3757
    %v3762 = vand.u32 2147483647, %v3752
    %vm3763 = vcmp.eq.f32.partialorder %v3762, 8.507059e+37
    %v3764 = vand.u32 %v3752, 2147483648
    %v3765 = vor.u32 1.1754944e-38, %v3764
    %v3766 = vsel %vm3763, %v3765, %v3761
    %v3767 = vmul.f32 1.0, %v3766
    %v3769 = vrot.slane %v3109, 6
    %v3771 = vmul.f32 %v3747, %v3769
    %v3772 = vmul.f32 %v3728, %v3748
    %v3773 = vadd.f32 %v3771, %v3772
    %v3774 = vtanh.pop %v3773
    %v3775 = vmul.f32 %v3767, %v3774
    %v3776 = vld [vmem:[#allocation7] sm:$0x30]
    %v3777 = vld [vmem:[#allocation7 + $0x8] sm:$0x30]
    %v3778 = vld [vmem:[#allocation7 + $0x10] sm:$0x30]
    %v3779 = vld [vmem:[#allocation7 + $0x18] sm:$0x30]
    %v3780 = vld [vmem:[%s452] sm:$0xff]
    %v3781 = vld [vmem:[%s452 + $0x8] sm:$0xff]
    %v3782 = vld [vmem:[%s452 + $0x10] sm:$0xff]
    %v3783 = vld [vmem:[%s452 + $0x18] sm:$0xff]
    %v3784 = vld [vmem:[%s452 + $0x20] sm:$0xff]
    %v3785 = vld [vmem:[%s452 + $0x28] sm:$0xff]
    %v3786 = vld [vmem:[%s452 + $0x30] sm:$0xff]
    %v3787 = vld [vmem:[%s452 + $0x38] sm:$0xff]
    %v3788 = vld [vmem:[%s452 + $0x40] sm:$0xff]
    %v3789 = vld [vmem:[%s452 + $0x48] sm:$0xff]
    %v3790 = vld [vmem:[%s452 + $0x50] sm:$0xff]
    %v3791 = vld [vmem:[%s452 + $0x58] sm:$0xff]
    %v3792 = vld [vmem:[%s452 + $0x60] sm:$0xff]
    %v3793 = vld [vmem:[%s452 + $0x68] sm:$0xff]
    %v3794 = vld [vmem:[%s452 + $0x70] sm:$0xff]
    %v3795 = vld [vmem:[%s452 + $0x78] sm:$0xff]
    %v3796 = vld [vmem:[%s452 + $0x80] sm:$0xff]
    %v3797 = vld [vmem:[%s452 + $0x88] sm:$0xff]
    %v3798 = vld [vmem:[%s452 + $0x90] sm:$0xff]
    %v3799 = vld [vmem:[%s452 + $0x98] sm:$0xff]
    %v3800 = vld [vmem:[%s452 + $0xa0] sm:$0xff]
    %v3801 = vld [vmem:[%s452 + $0xa8] sm:$0xff]
    %v3802 = vld [vmem:[%s452 + $0xb0] sm:$0xff]
    %v3803 = vld [vmem:[%s452 + $0xb8] sm:$0xff]
    %v3804 = vld [vmem:[%s452 + $0xc0] sm:$0xff]
    %v3805 = vld [vmem:[%s452 + $0xc8] sm:$0xff]
    %v3806 = vld [vmem:[%s452 + $0xd0] sm:$0xff]
    %v3807 = vld [vmem:[%s452 + $0xd8] sm:$0xff]
    %v3808 = vld [vmem:[%s452 + $0xe0] sm:$0xff]
    %v3809 = vld [vmem:[%s452 + $0xe8] sm:$0xff]
    %v3810 = vld [vmem:[%s452 + $0xf0] sm:$0xff]
    %v3811 = vld [vmem:[%s452 + $0xf8] sm:$0xff]
    %v3813 = vunpack.c.l.b16 %v3444
    %v3814 = vpack.c.b16 %v3813, %v3813
    %v3815 = vrot.slane %v3814, 3
    %v3849 = vunpack.c.l.b16 %v3780
    %v3850 = vunpack.c.h.b16 %v3780
    %v3851 = vunpack.c.l.b16 %v3781
    %v3852 = vunpack.c.h.b16 %v3781
    %v3853 = vunpack.c.l.b16 %v3782
    %v3854 = vunpack.c.h.b16 %v3782
    %v3855 = vunpack.c.l.b16 %v3783
    %v3856 = vunpack.c.h.b16 %v3783
    %v3857 = vunpack.c.l.b16 %v3784
    %v3858 = vunpack.c.h.b16 %v3784
    %v3859 = vunpack.c.l.b16 %v3785
    %v3860 = vunpack.c.h.b16 %v3785
    %v3861 = vunpack.c.l.b16 %v3786
    %v3862 = vunpack.c.h.b16 %v3786
    %v3863 = vunpack.c.l.b16 %v3787
    %v3864 = vunpack.c.h.b16 %v3787
    %v3865 = vunpack.c.l.b16 %v3788
    %v3866 = vunpack.c.h.b16 %v3788
    %v3867 = vunpack.c.l.b16 %v3789
    %v3868 = vunpack.c.h.b16 %v3789
    %v3869 = vunpack.c.l.b16 %v3790
    %v3870 = vunpack.c.h.b16 %v3790
    %v3871 = vunpack.c.l.b16 %v3791
    %v3872 = vunpack.c.h.b16 %v3791
    %v3873 = vunpack.c.l.b16 %v3792
    %v3874 = vunpack.c.h.b16 %v3792
    %v3875 = vunpack.c.l.b16 %v3793
    %v3876 = vunpack.c.h.b16 %v3793
    %v3877 = vunpack.c.l.b16 %v3794
    %v3878 = vunpack.c.h.b16 %v3794
    %v3879 = vunpack.c.l.b16 %v3795
    %v3880 = vunpack.c.h.b16 %v3795
    %v3881 = vunpack.c.l.b16 %v3796
    %v3882 = vunpack.c.h.b16 %v3796
    %v3883 = vunpack.c.l.b16 %v3797
    %v3884 = vunpack.c.h.b16 %v3797
    %v3885 = vunpack.c.l.b16 %v3798
    %v3886 = vunpack.c.h.b16 %v3798
    %v3887 = vunpack.c.l.b16 %v3799
    %v3888 = vunpack.c.h.b16 %v3799
    %v3889 = vunpack.c.l.b16 %v3800
    %v3890 = vunpack.c.h.b16 %v3800
    %v3891 = vunpack.c.l.b16 %v3801
    %v3892 = vunpack.c.h.b16 %v3801
    %v3893 = vunpack.c.l.b16 %v3802
    %v3894 = vunpack.c.h.b16 %v3802
    %v3895 = vunpack.c.l.b16 %v3803
    %v3896 = vunpack.c.h.b16 %v3803
    %v3897 = vunpack.c.l.b16 %v3804
    %v3898 = vunpack.c.h.b16 %v3804
    %v3899 = vunpack.c.l.b16 %v3805
    %v3900 = vunpack.c.h.b16 %v3805
    %v3901 = vunpack.c.l.b16 %v3806
    %v3902 = vunpack.c.h.b16 %v3806
    %v3903 = vunpack.c.l.b16 %v3807
    %v3904 = vunpack.c.h.b16 %v3807
    %v3905 = vunpack.c.l.b16 %v3808
    %v3906 = vunpack.c.h.b16 %v3808
    %v3907 = vunpack.c.l.b16 %v3809
    %v3908 = vunpack.c.h.b16 %v3809
    %v3909 = vunpack.c.l.b16 %v3810
    %v3910 = vunpack.c.h.b16 %v3810
    %v3911 = vunpack.c.l.b16 %v3811
    %v3912 = vunpack.c.h.b16 %v3811
    %v3913 = vpack.c.b16 %v3853, %v3849
    %v3914 = vpack.c.b16 %v3854, %v3850
    %v3915 = vpack.c.b16 %v3855, %v3851
    %v3916 = vpack.c.b16 %v3856, %v3852
    %v3917 = vpack.c.b16 %v3861, %v3857
    %v3918 = vpack.c.b16 %v3862, %v3858
    %v3919 = vpack.c.b16 %v3863, %v3859
    %v3920 = vpack.c.b16 %v3864, %v3860
    %v3921 = vpack.c.b16 %v3869, %v3865
    %v3922 = vpack.c.b16 %v3870, %v3866
    %v3923 = vpack.c.b16 %v3871, %v3867
    %v3924 = vpack.c.b16 %v3872, %v3868
    %v3925 = vpack.c.b16 %v3877, %v3873
    %v3926 = vpack.c.b16 %v3878, %v3874
    %v3927 = vpack.c.b16 %v3879, %v3875
    %v3928 = vpack.c.b16 %v3880, %v3876
    %v3929 = vpack.c.b16 %v3885, %v3881
    %v3930 = vpack.c.b16 %v3886, %v3882
    %v3931 = vpack.c.b16 %v3887, %v3883
    %v3932 = vpack.c.b16 %v3888, %v3884
    %v3933 = vpack.c.b16 %v3893, %v3889
    %v3934 = vpack.c.b16 %v3894, %v3890
    %v3935 = vpack.c.b16 %v3895, %v3891
    %v3936 = vpack.c.b16 %v3896, %v3892
    %v3937 = vpack.c.b16 %v3901, %v3897
    %v3938 = vpack.c.b16 %v3902, %v3898
    %v3939 = vpack.c.b16 %v3903, %v3899
    %v3940 = vpack.c.b16 %v3904, %v3900
    %v3941 = vpack.c.b16 %v3909, %v3905
    %v3942 = vpack.c.b16 %v3910, %v3906
    %v3943 = vpack.c.b16 %v3911, %v3907
    %v3944 = vpack.c.b16 %v3912, %v3908
    %3977 = vmatpush.bf16.msra.mxu0 %v3941
    %3978 = vmatpush.bf16.msra.mxu0 %v3937
    %3979 = vmatpush.bf16.msra.mxu0 %v3933
    %3980 = vmatpush.bf16.msra.mxu0 %v3929
    %3981 = vmatpush.bf16.msra.mxu0 %v3925
    %3982 = vmatpush.bf16.msra.mxu0 %v3921
    %3983 = vmatpush.bf16.msra.mxu0 %v3917
    %3984 = vmatpush.bf16.msra.mxu0 %v3913
    %3985 = vmatmul.bf16.gmra.mxu0 %v3815
    %v3986 = vpop.f32.mrf.mxu0
    %v3987 = vadd.f32 0.0, %v3986
    %v3988 = vpop.f32.mrf.mxu0
    %3989 = vdwg.mxu0
    %3990 = vmatpush.bf16.msra.mxu0 %v3942
    %3991 = vmatpush.bf16.msra.mxu0 %v3938
    %3992 = vmatpush.bf16.msra.mxu0 %v3934
    %3993 = vmatpush.bf16.msra.mxu0 %v3930
    %3994 = vmatpush.bf16.msra.mxu0 %v3926
    %3995 = vmatpush.bf16.msra.mxu0 %v3922
    %3996 = vmatpush.bf16.msra.mxu0 %v3918
    %3997 = vmatpush.bf16.msra.mxu0 %v3914
    %3998 = vmatmul.bf16.gmra.mxu0 %v3815
    %v3999 = vpop.f32.mrf.mxu0
    %v4000 = vadd.f32 0.0, %v3999
    %v4001 = vpop.f32.mrf.mxu0
    %4002 = vdwg.mxu0
    %4003 = vmatpush.bf16.msra.mxu0 %v3943
    %4004 = vmatpush.bf16.msra.mxu0 %v3939
    %4005 = vmatpush.bf16.msra.mxu0 %v3935
    %4006 = vmatpush.bf16.msra.mxu0 %v3931
    %4007 = vmatpush.bf16.msra.mxu0 %v3927
    %4008 = vmatpush.bf16.msra.mxu0 %v3923
    %4009 = vmatpush.bf16.msra.mxu0 %v3919
    %4010 = vmatpush.bf16.msra.mxu0 %v3915
    %4011 = vmatmul.bf16.gmra.mxu0 %v3815
    %v4012 = vpop.f32.mrf.mxu0
    %v4013 = vadd.f32 0.0, %v4012
    %v4014 = vpop.f32.mrf.mxu0
    %4015 = vdwg.mxu0
    %4016 = vmatpush.bf16.msra.mxu0 %v3944
    %4017 = vmatpush.bf16.msra.mxu0 %v3940
    %4018 = vmatpush.bf16.msra.mxu0 %v3936
    %4019 = vmatpush.bf16.msra.mxu0 %v3932
    %4020 = vmatpush.bf16.msra.mxu0 %v3928
    %4021 = vmatpush.bf16.msra.mxu0 %v3924
    %4022 = vmatpush.bf16.msra.mxu0 %v3920
    %4023 = vmatpush.bf16.msra.mxu0 %v3916
    %4024 = vmatmul.bf16.gmra.mxu0 %v3815
    %v4025 = vpop.f32.mrf.mxu0
    %v4026 = vadd.f32 0.0, %v4025
    %v4027 = vpop.f32.mrf.mxu0
    %4028 = vdwg.mxu0
    %v4033 = vrot.slane %v3987, 4
    %v4034 = vrot.slane %v4000, 4
    %v4035 = vrot.slane %v4013, 4
    %v4036 = vrot.slane %v4026, 4
    %v4041 = vadd.f32 %v3776, %v4033
    %v4042 = vadd.f32 %v3777, %v4034
    %v4043 = vadd.f32 %v3778, %v4035
    %v4044 = vadd.f32 %v3779, %v4036
    %v4045 = vxor.u32 %v4041, 2147483648
    %v4046 = vmul.f32 %v4045, 1.442695
    %v4047 = vpow.pop %v4046
    %v4048 = vadd.f32 %v4047, 1.0
    %v4049 = vrcp.pop %v4048
    %v4050 = vmul.f32 %v4048, %v4049
    %v4051 = vsub.f32 1.0, %v4050
    %v4052 = vmul.f32 %v4049, %v4051
    %v4053 = vadd.f32 %v4049, %v4052
    %vm4054 = vweird.f32 %v4048
    %vm4055 = vweird.f32 %v4049
    %vm4056 = vmor %vm4054, %vm4055
    %v4057 = vsel %vm4056, %v4049, %v4053
    %v4058 = vand.u32 2147483647, %v4048
    %vm4059 = vcmp.eq.f32.partialorder %v4058, 8.507059e+37
    %v4060 = vand.u32 %v4048, 2147483648
    %v4061 = vor.u32 1.1754944e-38, %v4060
    %v4062 = vsel %vm4059, %v4061, %v4057
    %v4063 = vmul.f32 1.0, %v4062
    %v4064 = vxor.u32 %v4042, 2147483648
    %v4065 = vmul.f32 %v4064, 1.442695
    %v4066 = vpow.pop %v4065
    %v4067 = vadd.f32 %v4066, 1.0
    %v4068 = vrcp.pop %v4067
    %v4069 = vmul.f32 %v4067, %v4068
    %v4070 = vsub.f32 1.0, %v4069
    %v4071 = vmul.f32 %v4068, %v4070
    %v4072 = vadd.f32 %v4068, %v4071
    %vm4073 = vweird.f32 %v4067
    %vm4074 = vweird.f32 %v4068
    %vm4075 = vmor %vm4073, %vm4074
    %v4076 = vsel %vm4075, %v4068, %v4072
    %v4077 = vand.u32 2147483647, %v4067
    %vm4078 = vcmp.eq.f32.partialorder %v4077, 8.507059e+37
    %v4079 = vand.u32 %v4067, 2147483648
    %v4080 = vor.u32 1.1754944e-38, %v4079
    %v4081 = vsel %vm4078, %v4080, %v4076
    %v4082 = vmul.f32 1.0, %v4081
    %v4083 = vtanh.pop %v4043
    %v4084 = vxor.u32 %v4044, 2147483648
    %v4085 = vmul.f32 %v4084, 1.442695
    %v4086 = vpow.pop %v4085
    %v4087 = vadd.f32 %v4086, 1.0
    %v4088 = vrcp.pop %v4087
    %v4089 = vmul.f32 %v4087, %v4088
    %v4090 = vsub.f32 1.0, %v4089
    %v4091 = vmul.f32 %v4088, %v4090
    %v4092 = vadd.f32 %v4088, %v4091
    %vm4093 = vweird.f32 %v4087
    %vm4094 = vweird.f32 %v4088
    %vm4095 = vmor %vm4093, %vm4094
    %v4096 = vsel %vm4095, %v4088, %v4092
    %v4097 = vand.u32 2147483647, %v4087
    %vm4098 = vcmp.eq.f32.partialorder %v4097, 8.507059e+37
    %v4099 = vand.u32 %v4087, 2147483648
    %v4100 = vor.u32 1.1754944e-38, %v4099
    %v4101 = vsel %vm4098, %v4100, %v4096
    %v4102 = vmul.f32 1.0, %v4101
    %v4104 = vrot.slane %v3439, 2
    %v4106 = vmul.f32 %v4082, %v4104
    %v4107 = vmul.f32 %v4063, %v4083
    %v4108 = vadd.f32 %v4106, %v4107
    %v4109 = vtanh.pop %v4108
    %v4110 = vmul.f32 %v4102, %v4109
    %v4111 = vpack.c.bf16 %v3775, %v3775
    %4112 = vst [vmem:[%s3 + $0x4] sm:$0x2] %v4111
    %v4113 = vpack.c.bf16 %v4110, %v4110
    %4114 = vst [vmem:[%s117] sm:$0x4] %v4113
    %v4115 = vld [vmem:[#allocation6 + $0x20] sm:$0x30]
    %v4116 = vld [vmem:[#allocation6 + $0x28] sm:$0x30]
    %v4117 = vld [vmem:[#allocation6 + $0x30] sm:$0x30]
    %v4118 = vld [vmem:[#allocation6 + $0x38] sm:$0x30]
    %v4119 = vld [vmem:[#allocation8] sm:$0xff]
    %v4120 = vld [vmem:[#allocation8 + $0x8] sm:$0xff]
    %v4121 = vld [vmem:[#allocation8 + $0x10] sm:$0xff]
    %v4122 = vld [vmem:[#allocation8 + $0x18] sm:$0xff]
    %v4123 = vld [vmem:[#allocation8 + $0x20] sm:$0xff]
    %v4124 = vld [vmem:[#allocation8 + $0x28] sm:$0xff]
    %v4125 = vld [vmem:[#allocation8 + $0x30] sm:$0xff]
    %v4126 = vld [vmem:[#allocation8 + $0x38] sm:$0xff]
    %v4127 = vld [vmem:[#allocation8 + $0x40] sm:$0xff]
    %v4128 = vld [vmem:[#allocation8 + $0x48] sm:$0xff]
    %v4129 = vld [vmem:[#allocation8 + $0x50] sm:$0xff]
    %v4130 = vld [vmem:[#allocation8 + $0x58] sm:$0xff]
    %v4131 = vld [vmem:[#allocation8 + $0x60] sm:$0xff]
    %v4132 = vld [vmem:[#allocation8 + $0x68] sm:$0xff]
    %v4133 = vld [vmem:[#allocation8 + $0x70] sm:$0xff]
    %v4134 = vld [vmem:[#allocation8 + $0x78] sm:$0xff]
    %v4135 = vld [vmem:[#allocation8 + $0x80] sm:$0xff]
    %v4136 = vld [vmem:[#allocation8 + $0x88] sm:$0xff]
    %v4137 = vld [vmem:[#allocation8 + $0x90] sm:$0xff]
    %v4138 = vld [vmem:[#allocation8 + $0x98] sm:$0xff]
    %v4139 = vld [vmem:[#allocation8 + $0xa0] sm:$0xff]
    %v4140 = vld [vmem:[#allocation8 + $0xa8] sm:$0xff]
    %v4141 = vld [vmem:[#allocation8 + $0xb0] sm:$0xff]
    %v4142 = vld [vmem:[#allocation8 + $0xb8] sm:$0xff]
    %v4143 = vld [vmem:[#allocation8 + $0xc0] sm:$0xff]
    %v4144 = vld [vmem:[#allocation8 + $0xc8] sm:$0xff]
    %v4145 = vld [vmem:[#allocation8 + $0xd0] sm:$0xff]
    %v4146 = vld [vmem:[#allocation8 + $0xd8] sm:$0xff]
    %v4147 = vld [vmem:[#allocation8 + $0xe0] sm:$0xff]
    %v4148 = vld [vmem:[#allocation8 + $0xe8] sm:$0xff]
    %v4149 = vld [vmem:[#allocation8 + $0xf0] sm:$0xff]
    %v4150 = vld [vmem:[#allocation8 + $0xf8] sm:$0xff]
    %v4152 = vunpack.c.l.b16 %v4111
    %v4153 = vpack.c.b16 %v4152, %v4152
    %v4154 = vrot.slane %v4153, 1
    %v4188 = vunpack.c.l.b16 %v4119
    %v4189 = vunpack.c.h.b16 %v4119
    %v4190 = vunpack.c.l.b16 %v4120
    %v4191 = vunpack.c.h.b16 %v4120
    %v4192 = vunpack.c.l.b16 %v4121
    %v4193 = vunpack.c.h.b16 %v4121
    %v4194 = vunpack.c.l.b16 %v4122
    %v4195 = vunpack.c.h.b16 %v4122
    %v4196 = vunpack.c.l.b16 %v4123
    %v4197 = vunpack.c.h.b16 %v4123
    %v4198 = vunpack.c.l.b16 %v4124
    %v4199 = vunpack.c.h.b16 %v4124
    %v4200 = vunpack.c.l.b16 %v4125
    %v4201 = vunpack.c.h.b16 %v4125
    %v4202 = vunpack.c.l.b16 %v4126
    %v4203 = vunpack.c.h.b16 %v4126
    %v4204 = vunpack.c.l.b16 %v4127
    %v4205 = vunpack.c.h.b16 %v4127
    %v4206 = vunpack.c.l.b16 %v4128
    %v4207 = vunpack.c.h.b16 %v4128
    %v4208 = vunpack.c.l.b16 %v4129
    %v4209 = vunpack.c.h.b16 %v4129
    %v4210 = vunpack.c.l.b16 %v4130
    %v4211 = vunpack.c.h.b16 %v4130
    %v4212 = vunpack.c.l.b16 %v4131
    %v4213 = vunpack.c.h.b16 %v4131
    %v4214 = vunpack.c.l.b16 %v4132
    %v4215 = vunpack.c.h.b16 %v4132
    %v4216 = vunpack.c.l.b16 %v4133
    %v4217 = vunpack.c.h.b16 %v4133
    %v4218 = vunpack.c.l.b16 %v4134
    %v4219 = vunpack.c.h.b16 %v4134
    %v4220 = vunpack.c.l.b16 %v4135
    %v4221 = vunpack.c.h.b16 %v4135
    %v4222 = vunpack.c.l.b16 %v4136
    %v4223 = vunpack.c.h.b16 %v4136
    %v4224 = vunpack.c.l.b16 %v4137
    %v4225 = vunpack.c.h.b16 %v4137
    %v4226 = vunpack.c.l.b16 %v4138
    %v4227 = vunpack.c.h.b16 %v4138
    %v4228 = vunpack.c.l.b16 %v4139
    %v4229 = vunpack.c.h.b16 %v4139
    %v4230 = vunpack.c.l.b16 %v4140
    %v4231 = vunpack.c.h.b16 %v4140
    %v4232 = vunpack.c.l.b16 %v4141
    %v4233 = vunpack.c.h.b16 %v4141
    %v4234 = vunpack.c.l.b16 %v4142
    %v4235 = vunpack.c.h.b16 %v4142
    %v4236 = vunpack.c.l.b16 %v4143
    %v4237 = vunpack.c.h.b16 %v4143
    %v4238 = vunpack.c.l.b16 %v4144
    %v4239 = vunpack.c.h.b16 %v4144
    %v4240 = vunpack.c.l.b16 %v4145
    %v4241 = vunpack.c.h.b16 %v4145
    %v4242 = vunpack.c.l.b16 %v4146
    %v4243 = vunpack.c.h.b16 %v4146
    %v4244 = vunpack.c.l.b16 %v4147
    %v4245 = vunpack.c.h.b16 %v4147
    %v4246 = vunpack.c.l.b16 %v4148
    %v4247 = vunpack.c.h.b16 %v4148
    %v4248 = vunpack.c.l.b16 %v4149
    %v4249 = vunpack.c.h.b16 %v4149
    %v4250 = vunpack.c.l.b16 %v4150
    %v4251 = vunpack.c.h.b16 %v4150
    %v4252 = vpack.c.b16 %v4192, %v4188
    %v4253 = vpack.c.b16 %v4193, %v4189
    %v4254 = vpack.c.b16 %v4194, %v4190
    %v4255 = vpack.c.b16 %v4195, %v4191
    %v4256 = vpack.c.b16 %v4200, %v4196
    %v4257 = vpack.c.b16 %v4201, %v4197
    %v4258 = vpack.c.b16 %v4202, %v4198
    %v4259 = vpack.c.b16 %v4203, %v4199
    %v4260 = vpack.c.b16 %v4208, %v4204
    %v4261 = vpack.c.b16 %v4209, %v4205
    %v4262 = vpack.c.b16 %v4210, %v4206
    %v4263 = vpack.c.b16 %v4211, %v4207
    %v4264 = vpack.c.b16 %v4216, %v4212
    %v4265 = vpack.c.b16 %v4217, %v4213
    %v4266 = vpack.c.b16 %v4218, %v4214
    %v4267 = vpack.c.b16 %v4219, %v4215
    %v4268 = vpack.c.b16 %v4224, %v4220
    %v4269 = vpack.c.b16 %v4225, %v4221
    %v4270 = vpack.c.b16 %v4226, %v4222
    %v4271 = vpack.c.b16 %v4227, %v4223
    %v4272 = vpack.c.b16 %v4232, %v4228
    %v4273 = vpack.c.b16 %v4233, %v4229
    %v4274 = vpack.c.b16 %v4234, %v4230
    %v4275 = vpack.c.b16 %v4235, %v4231
    %v4276 = vpack.c.b16 %v4240, %v4236
    %v4277 = vpack.c.b16 %v4241, %v4237
    %v4278 = vpack.c.b16 %v4242, %v4238
    %v4279 = vpack.c.b16 %v4243, %v4239
    %v4280 = vpack.c.b16 %v4248, %v4244
    %v4281 = vpack.c.b16 %v4249, %v4245
    %v4282 = vpack.c.b16 %v4250, %v4246
    %v4283 = vpack.c.b16 %v4251, %v4247
    %4316 = vmatpush.bf16.msra.mxu0 %v4280
    %4317 = vmatpush.bf16.msra.mxu0 %v4276
    %4318 = vmatpush.bf16.msra.mxu0 %v4272
    %4319 = vmatpush.bf16.msra.mxu0 %v4268
    %4320 = vmatpush.bf16.msra.mxu0 %v4264
    %4321 = vmatpush.bf16.msra.mxu0 %v4260
    %4322 = vmatpush.bf16.msra.mxu0 %v4256
    %4323 = vmatpush.bf16.msra.mxu0 %v4252
    %4324 = vmatmul.bf16.gmra.mxu0 %v4154
    %v4325 = vpop.f32.mrf.mxu0
    %v4326 = vadd.f32 0.0, %v4325
    %v4327 = vpop.f32.mrf.mxu0
    %4328 = vdwg.mxu0
    %4329 = vmatpush.bf16.msra.mxu0 %v4281
    %4330 = vmatpush.bf16.msra.mxu0 %v4277
    %4331 = vmatpush.bf16.msra.mxu0 %v4273
    %4332 = vmatpush.bf16.msra.mxu0 %v4269
    %4333 = vmatpush.bf16.msra.mxu0 %v4265
    %4334 = vmatpush.bf16.msra.mxu0 %v4261
    %4335 = vmatpush.bf16.msra.mxu0 %v4257
    %4336 = vmatpush.bf16.msra.mxu0 %v4253
    %4337 = vmatmul.bf16.gmra.mxu0 %v4154
    %v4338 = vpop.f32.mrf.mxu0
    %v4339 = vadd.f32 0.0, %v4338
    %v4340 = vpop.f32.mrf.mxu0
    %4341 = vdwg.mxu0
    %4342 = vmatpush.bf16.msra.mxu0 %v4282
    %4343 = vmatpush.bf16.msra.mxu0 %v4278
    %4344 = vmatpush.bf16.msra.mxu0 %v4274
    %4345 = vmatpush.bf16.msra.mxu0 %v4270
    %4346 = vmatpush.bf16.msra.mxu0 %v4266
    %4347 = vmatpush.bf16.msra.mxu0 %v4262
    %4348 = vmatpush.bf16.msra.mxu0 %v4258
    %4349 = vmatpush.bf16.msra.mxu0 %v4254
    %4350 = vmatmul.bf16.gmra.mxu0 %v4154
    %v4351 = vpop.f32.mrf.mxu0
    %v4352 = vadd.f32 0.0, %v4351
    %v4353 = vpop.f32.mrf.mxu0
    %4354 = vdwg.mxu0
    %4355 = vmatpush.bf16.msra.mxu0 %v4283
    %4356 = vmatpush.bf16.msra.mxu0 %v4279
    %4357 = vmatpush.bf16.msra.mxu0 %v4275
    %4358 = vmatpush.bf16.msra.mxu0 %v4271
    %4359 = vmatpush.bf16.msra.mxu0 %v4267
    %4360 = vmatpush.bf16.msra.mxu0 %v4263
    %4361 = vmatpush.bf16.msra.mxu0 %v4259
    %4362 = vmatpush.bf16.msra.mxu0 %v4255
    %4363 = vmatmul.bf16.gmra.mxu0 %v4154
    %v4364 = vpop.f32.mrf.mxu0
    %v4365 = vadd.f32 0.0, %v4364
    %v4366 = vpop.f32.mrf.mxu0
    %4367 = vdwg.mxu0
    %v4372 = vrot.slane %v4326, 4
    %v4373 = vrot.slane %v4339, 4
    %v4374 = vrot.slane %v4352, 4
    %v4375 = vrot.slane %v4365, 4
    %v4380 = vadd.f32 %v4115, %v4372
    %v4381 = vadd.f32 %v4116, %v4373
    %v4382 = vadd.f32 %v4117, %v4374
    %v4383 = vadd.f32 %v4118, %v4375
    %v4384 = vxor.u32 %v4380, 2147483648
    %v4385 = vmul.f32 %v4384, 1.442695
    %v4386 = vpow.pop %v4385
    %v4387 = vadd.f32 %v4386, 1.0
    %v4388 = vrcp.pop %v4387
    %v4389 = vmul.f32 %v4387, %v4388
    %v4390 = vsub.f32 1.0, %v4389
    %v4391 = vmul.f32 %v4388, %v4390
    %v4392 = vadd.f32 %v4388, %v4391
    %vm4393 = vweird.f32 %v4387
    %vm4394 = vweird.f32 %v4388
    %vm4395 = vmor %vm4393, %vm4394
    %v4396 = vsel %vm4395, %v4388, %v4392
    %v4397 = vand.u32 2147483647, %v4387
    %vm4398 = vcmp.eq.f32.partialorder %v4397, 8.507059e+37
    %v4399 = vand.u32 %v4387, 2147483648
    %v4400 = vor.u32 1.1754944e-38, %v4399
    %v4401 = vsel %vm4398, %v4400, %v4396
    %v4402 = vmul.f32 1.0, %v4401
    %v4403 = vxor.u32 %v4381, 2147483648
    %v4404 = vmul.f32 %v4403, 1.442695
    %v4405 = vpow.pop %v4404
    %v4406 = vadd.f32 %v4405, 1.0
    %v4407 = vrcp.pop %v4406
    %v4408 = vmul.f32 %v4406, %v4407
    %v4409 = vsub.f32 1.0, %v4408
    %v4410 = vmul.f32 %v4407, %v4409
    %v4411 = vadd.f32 %v4407, %v4410
    %vm4412 = vweird.f32 %v4406
    %vm4413 = vweird.f32 %v4407
    %vm4414 = vmor %vm4412, %vm4413
    %v4415 = vsel %vm4414, %v4407, %v4411
    %v4416 = vand.u32 2147483647, %v4406
    %vm4417 = vcmp.eq.f32.partialorder %v4416, 8.507059e+37
    %v4418 = vand.u32 %v4406, 2147483648
    %v4419 = vor.u32 1.1754944e-38, %v4418
    %v4420 = vsel %vm4417, %v4419, %v4415
    %v4421 = vmul.f32 1.0, %v4420
    %v4422 = vtanh.pop %v4382
    %v4423 = vxor.u32 %v4383, 2147483648
    %v4424 = vmul.f32 %v4423, 1.442695
    %v4425 = vpow.pop %v4424
    %v4426 = vadd.f32 %v4425, 1.0
    %v4427 = vrcp.pop %v4426
    %v4428 = vmul.f32 %v4426, %v4427
    %v4429 = vsub.f32 1.0, %v4428
    %v4430 = vmul.f32 %v4427, %v4429
    %v4431 = vadd.f32 %v4427, %v4430
    %vm4432 = vweird.f32 %v4426
    %vm4433 = vweird.f32 %v4427
    %vm4434 = vmor %vm4432, %vm4433
    %v4435 = vsel %vm4434, %v4427, %v4431
    %v4436 = vand.u32 2147483647, %v4426
    %vm4437 = vcmp.eq.f32.partialorder %v4436, 8.507059e+37
    %v4438 = vand.u32 %v4426, 2147483648
    %v4439 = vor.u32 1.1754944e-38, %v4438
    %v4440 = vsel %vm4437, %v4439, %v4435
    %v4441 = vmul.f32 1.0, %v4440
    %v4443 = vrot.slane %v3773, 6
    %v4445 = vmul.f32 %v4421, %v4443
    %v4446 = vmul.f32 %v4402, %v4422
    %v4447 = vadd.f32 %v4445, %v4446
    %v4448 = vtanh.pop %v4447
    %v4449 = vmul.f32 %v4441, %v4448
    %v4450 = vld [vmem:[#allocation7] sm:$0xc]
    %v4451 = vld [vmem:[#allocation7 + $0x8] sm:$0xc]
    %v4452 = vld [vmem:[#allocation7 + $0x10] sm:$0xc]
    %v4453 = vld [vmem:[#allocation7 + $0x18] sm:$0xc]
    %v4454 = vld [vmem:[%s452] sm:$0xff]
    %v4455 = vld [vmem:[%s452 + $0x8] sm:$0xff]
    %v4456 = vld [vmem:[%s452 + $0x10] sm:$0xff]
    %v4457 = vld [vmem:[%s452 + $0x18] sm:$0xff]
    %v4458 = vld [vmem:[%s452 + $0x20] sm:$0xff]
    %v4459 = vld [vmem:[%s452 + $0x28] sm:$0xff]
    %v4460 = vld [vmem:[%s452 + $0x30] sm:$0xff]
    %v4461 = vld [vmem:[%s452 + $0x38] sm:$0xff]
    %v4462 = vld [vmem:[%s452 + $0x40] sm:$0xff]
    %v4463 = vld [vmem:[%s452 + $0x48] sm:$0xff]
    %v4464 = vld [vmem:[%s452 + $0x50] sm:$0xff]
    %v4465 = vld [vmem:[%s452 + $0x58] sm:$0xff]
    %v4466 = vld [vmem:[%s452 + $0x60] sm:$0xff]
    %v4467 = vld [vmem:[%s452 + $0x68] sm:$0xff]
    %v4468 = vld [vmem:[%s452 + $0x70] sm:$0xff]
    %v4469 = vld [vmem:[%s452 + $0x78] sm:$0xff]
    %v4470 = vld [vmem:[%s452 + $0x80] sm:$0xff]
    %v4471 = vld [vmem:[%s452 + $0x88] sm:$0xff]
    %v4472 = vld [vmem:[%s452 + $0x90] sm:$0xff]
    %v4473 = vld [vmem:[%s452 + $0x98] sm:$0xff]
    %v4474 = vld [vmem:[%s452 + $0xa0] sm:$0xff]
    %v4475 = vld [vmem:[%s452 + $0xa8] sm:$0xff]
    %v4476 = vld [vmem:[%s452 + $0xb0] sm:$0xff]
    %v4477 = vld [vmem:[%s452 + $0xb8] sm:$0xff]
    %v4478 = vld [vmem:[%s452 + $0xc0] sm:$0xff]
    %v4479 = vld [vmem:[%s452 + $0xc8] sm:$0xff]
    %v4480 = vld [vmem:[%s452 + $0xd0] sm:$0xff]
    %v4481 = vld [vmem:[%s452 + $0xd8] sm:$0xff]
    %v4482 = vld [vmem:[%s452 + $0xe0] sm:$0xff]
    %v4483 = vld [vmem:[%s452 + $0xe8] sm:$0xff]
    %v4484 = vld [vmem:[%s452 + $0xf0] sm:$0xff]
    %v4485 = vld [vmem:[%s452 + $0xf8] sm:$0xff]
    %v4487 = vunpack.c.l.b16 %v4113
    %v4488 = vpack.c.b16 %v4487, %v4487
    %v4489 = vrot.slane %v4488, 2
    %v4523 = vunpack.c.l.b16 %v4454
    %v4524 = vunpack.c.h.b16 %v4454
    %v4525 = vunpack.c.l.b16 %v4455
    %v4526 = vunpack.c.h.b16 %v4455
    %v4527 = vunpack.c.l.b16 %v4456
    %v4528 = vunpack.c.h.b16 %v4456
    %v4529 = vunpack.c.l.b16 %v4457
    %v4530 = vunpack.c.h.b16 %v4457
    %v4531 = vunpack.c.l.b16 %v4458
    %v4532 = vunpack.c.h.b16 %v4458
    %v4533 = vunpack.c.l.b16 %v4459
    %v4534 = vunpack.c.h.b16 %v4459
    %v4535 = vunpack.c.l.b16 %v4460
    %v4536 = vunpack.c.h.b16 %v4460
    %v4537 = vunpack.c.l.b16 %v4461
    %v4538 = vunpack.c.h.b16 %v4461
    %v4539 = vunpack.c.l.b16 %v4462
    %v4540 = vunpack.c.h.b16 %v4462
    %v4541 = vunpack.c.l.b16 %v4463
    %v4542 = vunpack.c.h.b16 %v4463
    %v4543 = vunpack.c.l.b16 %v4464
    %v4544 = vunpack.c.h.b16 %v4464
    %v4545 = vunpack.c.l.b16 %v4465
    %v4546 = vunpack.c.h.b16 %v4465
    %v4547 = vunpack.c.l.b16 %v4466
    %v4548 = vunpack.c.h.b16 %v4466
    %v4549 = vunpack.c.l.b16 %v4467
    %v4550 = vunpack.c.h.b16 %v4467
    %v4551 = vunpack.c.l.b16 %v4468
    %v4552 = vunpack.c.h.b16 %v4468
    %v4553 = vunpack.c.l.b16 %v4469
    %v4554 = vunpack.c.h.b16 %v4469
    %v4555 = vunpack.c.l.b16 %v4470
    %v4556 = vunpack.c.h.b16 %v4470
    %v4557 = vunpack.c.l.b16 %v4471
    %v4558 = vunpack.c.h.b16 %v4471
    %v4559 = vunpack.c.l.b16 %v4472
    %v4560 = vunpack.c.h.b16 %v4472
    %v4561 = vunpack.c.l.b16 %v4473
    %v4562 = vunpack.c.h.b16 %v4473
    %v4563 = vunpack.c.l.b16 %v4474
    %v4564 = vunpack.c.h.b16 %v4474
    %v4565 = vunpack.c.l.b16 %v4475
    %v4566 = vunpack.c.h.b16 %v4475
    %v4567 = vunpack.c.l.b16 %v4476
    %v4568 = vunpack.c.h.b16 %v4476
    %v4569 = vunpack.c.l.b16 %v4477
    %v4570 = vunpack.c.h.b16 %v4477
    %v4571 = vunpack.c.l.b16 %v4478
    %v4572 = vunpack.c.h.b16 %v4478
    %v4573 = vunpack.c.l.b16 %v4479
    %v4574 = vunpack.c.h.b16 %v4479
    %v4575 = vunpack.c.l.b16 %v4480
    %v4576 = vunpack.c.h.b16 %v4480
    %v4577 = vunpack.c.l.b16 %v4481
    %v4578 = vunpack.c.h.b16 %v4481
    %v4579 = vunpack.c.l.b16 %v4482
    %v4580 = vunpack.c.h.b16 %v4482
    %v4581 = vunpack.c.l.b16 %v4483
    %v4582 = vunpack.c.h.b16 %v4483
    %v4583 = vunpack.c.l.b16 %v4484
    %v4584 = vunpack.c.h.b16 %v4484
    %v4585 = vunpack.c.l.b16 %v4485
    %v4586 = vunpack.c.h.b16 %v4485
    %v4587 = vpack.c.b16 %v4527, %v4523
    %v4588 = vpack.c.b16 %v4528, %v4524
    %v4589 = vpack.c.b16 %v4529, %v4525
    %v4590 = vpack.c.b16 %v4530, %v4526
    %v4591 = vpack.c.b16 %v4535, %v4531
    %v4592 = vpack.c.b16 %v4536, %v4532
    %v4593 = vpack.c.b16 %v4537, %v4533
    %v4594 = vpack.c.b16 %v4538, %v4534
    %v4595 = vpack.c.b16 %v4543, %v4539
    %v4596 = vpack.c.b16 %v4544, %v4540
    %v4597 = vpack.c.b16 %v4545, %v4541
    %v4598 = vpack.c.b16 %v4546, %v4542
    %v4599 = vpack.c.b16 %v4551, %v4547
    %v4600 = vpack.c.b16 %v4552, %v4548
    %v4601 = vpack.c.b16 %v4553, %v4549
    %v4602 = vpack.c.b16 %v4554, %v4550
    %v4603 = vpack.c.b16 %v4559, %v4555
    %v4604 = vpack.c.b16 %v4560, %v4556
    %v4605 = vpack.c.b16 %v4561, %v4557
    %v4606 = vpack.c.b16 %v4562, %v4558
    %v4607 = vpack.c.b16 %v4567, %v4563
    %v4608 = vpack.c.b16 %v4568, %v4564
    %v4609 = vpack.c.b16 %v4569, %v4565
    %v4610 = vpack.c.b16 %v4570, %v4566
    %v4611 = vpack.c.b16 %v4575, %v4571
    %v4612 = vpack.c.b16 %v4576, %v4572
    %v4613 = vpack.c.b16 %v4577, %v4573
    %v4614 = vpack.c.b16 %v4578, %v4574
    %v4615 = vpack.c.b16 %v4583, %v4579
    %v4616 = vpack.c.b16 %v4584, %v4580
    %v4617 = vpack.c.b16 %v4585, %v4581
    %v4618 = vpack.c.b16 %v4586, %v4582
    %4651 = vmatpush.bf16.msra.mxu0 %v4615
    %4652 = vmatpush.bf16.msra.mxu0 %v4611
    %4653 = vmatpush.bf16.msra.mxu0 %v4607
    %4654 = vmatpush.bf16.msra.mxu0 %v4603
    %4655 = vmatpush.bf16.msra.mxu0 %v4599
    %4656 = vmatpush.bf16.msra.mxu0 %v4595
    %4657 = vmatpush.bf16.msra.mxu0 %v4591
    %4658 = vmatpush.bf16.msra.mxu0 %v4587
    %4659 = vmatmul.bf16.gmra.mxu0 %v4489
    %v4660 = vpop.f32.mrf.mxu0
    %v4661 = vadd.f32 0.0, %v4660
    %v4662 = vpop.f32.mrf.mxu0
    %4663 = vdwg.mxu0
    %4664 = vmatpush.bf16.msra.mxu0 %v4616
    %4665 = vmatpush.bf16.msra.mxu0 %v4612
    %4666 = vmatpush.bf16.msra.mxu0 %v4608
    %4667 = vmatpush.bf16.msra.mxu0 %v4604
    %4668 = vmatpush.bf16.msra.mxu0 %v4600
    %4669 = vmatpush.bf16.msra.mxu0 %v4596
    %4670 = vmatpush.bf16.msra.mxu0 %v4592
    %4671 = vmatpush.bf16.msra.mxu0 %v4588
    %4672 = vmatmul.bf16.gmra.mxu0 %v4489
    %v4673 = vpop.f32.mrf.mxu0
    %v4674 = vadd.f32 0.0, %v4673
    %v4675 = vpop.f32.mrf.mxu0
    %4676 = vdwg.mxu0
    %4677 = vmatpush.bf16.msra.mxu0 %v4617
    %4678 = vmatpush.bf16.msra.mxu0 %v4613
    %4679 = vmatpush.bf16.msra.mxu0 %v4609
    %4680 = vmatpush.bf16.msra.mxu0 %v4605
    %4681 = vmatpush.bf16.msra.mxu0 %v4601
    %4682 = vmatpush.bf16.msra.mxu0 %v4597
    %4683 = vmatpush.bf16.msra.mxu0 %v4593
    %4684 = vmatpush.bf16.msra.mxu0 %v4589
    %4685 = vmatmul.bf16.gmra.mxu0 %v4489
    %v4686 = vpop.f32.mrf.mxu0
    %v4687 = vadd.f32 0.0, %v4686
    %v4688 = vpop.f32.mrf.mxu0
    %4689 = vdwg.mxu0
    %4690 = vmatpush.bf16.msra.mxu0 %v4618
    %4691 = vmatpush.bf16.msra.mxu0 %v4614
    %4692 = vmatpush.bf16.msra.mxu0 %v4610
    %4693 = vmatpush.bf16.msra.mxu0 %v4606
    %4694 = vmatpush.bf16.msra.mxu0 %v4602
    %4695 = vmatpush.bf16.msra.mxu0 %v4598
    %4696 = vmatpush.bf16.msra.mxu0 %v4594
    %4697 = vmatpush.bf16.msra.mxu0 %v4590
    %4698 = vmatmul.bf16.gmra.mxu0 %v4489
    %v4699 = vpop.f32.mrf.mxu0
    %v4700 = vadd.f32 0.0, %v4699
    %v4701 = vpop.f32.mrf.mxu0
    %4702 = vdwg.mxu0
    %v4707 = vrot.slane %v4661, 6
    %v4708 = vrot.slane %v4674, 6
    %v4709 = vrot.slane %v4687, 6
    %v4710 = vrot.slane %v4700, 6
    %v4715 = vadd.f32 %v4450, %v4707
    %v4716 = vadd.f32 %v4451, %v4708
    %v4717 = vadd.f32 %v4452, %v4709
    %v4718 = vadd.f32 %v4453, %v4710
    %v4719 = vxor.u32 %v4715, 2147483648
    %v4720 = vmul.f32 %v4719, 1.442695
    %v4721 = vpow.pop %v4720
    %v4722 = vadd.f32 %v4721, 1.0
    %v4723 = vrcp.pop %v4722
    %v4724 = vmul.f32 %v4722, %v4723
    %v4725 = vsub.f32 1.0, %v4724
    %v4726 = vmul.f32 %v4723, %v4725
    %v4727 = vadd.f32 %v4723, %v4726
    %vm4728 = vweird.f32 %v4722
    %vm4729 = vweird.f32 %v4723
    %vm4730 = vmor %vm4728, %vm4729
    %v4731 = vsel %vm4730, %v4723, %v4727
    %v4732 = vand.u32 2147483647, %v4722
    %vm4733 = vcmp.eq.f32.partialorder %v4732, 8.507059e+37
    %v4734 = vand.u32 %v4722, 2147483648
    %v4735 = vor.u32 1.1754944e-38, %v4734
    %v4736 = vsel %vm4733, %v4735, %v4731
    %v4737 = vmul.f32 1.0, %v4736
    %v4738 = vxor.u32 %v4716, 2147483648
    %v4739 = vmul.f32 %v4738, 1.442695
    %v4740 = vpow.pop %v4739
    %v4741 = vadd.f32 %v4740, 1.0
    %v4742 = vrcp.pop %v4741
    %v4743 = vmul.f32 %v4741, %v4742
    %v4744 = vsub.f32 1.0, %v4743
    %v4745 = vmul.f32 %v4742, %v4744
    %v4746 = vadd.f32 %v4742, %v4745
    %vm4747 = vweird.f32 %v4741
    %vm4748 = vweird.f32 %v4742
    %vm4749 = vmor %vm4747, %vm4748
    %v4750 = vsel %vm4749, %v4742, %v4746
    %v4751 = vand.u32 2147483647, %v4741
    %vm4752 = vcmp.eq.f32.partialorder %v4751, 8.507059e+37
    %v4753 = vand.u32 %v4741, 2147483648
    %v4754 = vor.u32 1.1754944e-38, %v4753
    %v4755 = vsel %vm4752, %v4754, %v4750
    %v4756 = vmul.f32 1.0, %v4755
    %v4757 = vtanh.pop %v4717
    %v4758 = vxor.u32 %v4718, 2147483648
    %v4759 = vmul.f32 %v4758, 1.442695
    %v4760 = vpow.pop %v4759
    %v4761 = vadd.f32 %v4760, 1.0
    %v4762 = vrcp.pop %v4761
    %v4763 = vmul.f32 %v4761, %v4762
    %v4764 = vsub.f32 1.0, %v4763
    %v4765 = vmul.f32 %v4762, %v4764
    %v4766 = vadd.f32 %v4762, %v4765
    %vm4767 = vweird.f32 %v4761
    %vm4768 = vweird.f32 %v4762
    %vm4769 = vmor %vm4767, %vm4768
    %v4770 = vsel %vm4769, %v4762, %v4766
    %v4771 = vand.u32 2147483647, %v4761
    %vm4772 = vcmp.eq.f32.partialorder %v4771, 8.507059e+37
    %v4773 = vand.u32 %v4761, 2147483648
    %v4774 = vor.u32 1.1754944e-38, %v4773
    %v4775 = vsel %vm4772, %v4774, %v4770
    %v4776 = vmul.f32 1.0, %v4775
    %v4778 = vrot.slane %v4108, 2
    %v4780 = vmul.f32 %v4756, %v4778
    %v4781 = vmul.f32 %v4737, %v4757
    %v4782 = vadd.f32 %v4780, %v4781
    %v4783 = vtanh.pop %v4782
    %v4784 = vmul.f32 %v4776, %v4783
    %v4785 = vpack.c.bf16 %v4449, %v4449
    %4786 = vst [vmem:[%s3 + $0x4] sm:$0x4] %v4785
    %v4787 = vpack.c.bf16 %v4784, %v4784
    %4788 = vst [vmem:[%s117] sm:$0x2] %v4787
    %v4789 = vld [vmem:[#allocation6 + $0x20] sm:$0xc0]
    %v4790 = vld [vmem:[#allocation6 + $0x28] sm:$0xc0]
    %v4791 = vld [vmem:[#allocation6 + $0x30] sm:$0xc0]
    %v4792 = vld [vmem:[#allocation6 + $0x38] sm:$0xc0]
    %v4793 = vld [vmem:[#allocation8] sm:$0xff]
    %v4794 = vld [vmem:[#allocation8 + $0x8] sm:$0xff]
    %v4795 = vld [vmem:[#allocation8 + $0x10] sm:$0xff]
    %v4796 = vld [vmem:[#allocation8 + $0x18] sm:$0xff]
    %v4797 = vld [vmem:[#allocation8 + $0x20] sm:$0xff]
    %v4798 = vld [vmem:[#allocation8 + $0x28] sm:$0xff]
    %v4799 = vld [vmem:[#allocation8 + $0x30] sm:$0xff]
    %v4800 = vld [vmem:[#allocation8 + $0x38] sm:$0xff]
    %v4801 = vld [vmem:[#allocation8 + $0x40] sm:$0xff]
    %v4802 = vld [vmem:[#allocation8 + $0x48] sm:$0xff]
    %v4803 = vld [vmem:[#allocation8 + $0x50] sm:$0xff]
    %v4804 = vld [vmem:[#allocation8 + $0x58] sm:$0xff]
    %v4805 = vld [vmem:[#allocation8 + $0x60] sm:$0xff]
    %v4806 = vld [vmem:[#allocation8 + $0x68] sm:$0xff]
    %v4807 = vld [vmem:[#allocation8 + $0x70] sm:$0xff]
    %v4808 = vld [vmem:[#allocation8 + $0x78] sm:$0xff]
    %v4809 = vld [vmem:[#allocation8 + $0x80] sm:$0xff]
    %v4810 = vld [vmem:[#allocation8 + $0x88] sm:$0xff]
    %v4811 = vld [vmem:[#allocation8 + $0x90] sm:$0xff]
    %v4812 = vld [vmem:[#allocation8 + $0x98] sm:$0xff]
    %v4813 = vld [vmem:[#allocation8 + $0xa0] sm:$0xff]
    %v4814 = vld [vmem:[#allocation8 + $0xa8] sm:$0xff]
    %v4815 = vld [vmem:[#allocation8 + $0xb0] sm:$0xff]
    %v4816 = vld [vmem:[#allocation8 + $0xb8] sm:$0xff]
    %v4817 = vld [vmem:[#allocation8 + $0xc0] sm:$0xff]
    %v4818 = vld [vmem:[#allocation8 + $0xc8] sm:$0xff]
    %v4819 = vld [vmem:[#allocation8 + $0xd0] sm:$0xff]
    %v4820 = vld [vmem:[#allocation8 + $0xd8] sm:$0xff]
    %v4821 = vld [vmem:[#allocation8 + $0xe0] sm:$0xff]
    %v4822 = vld [vmem:[#allocation8 + $0xe8] sm:$0xff]
    %v4823 = vld [vmem:[#allocation8 + $0xf0] sm:$0xff]
    %v4824 = vld [vmem:[#allocation8 + $0xf8] sm:$0xff]
    %v4826 = vunpack.c.l.b16 %v4785
    %v4827 = vpack.c.b16 %v4826, %v4826
    %v4828 = vrot.slane %v4827, 2
    %v4862 = vunpack.c.l.b16 %v4793
    %v4863 = vunpack.c.h.b16 %v4793
    %v4864 = vunpack.c.l.b16 %v4794
    %v4865 = vunpack.c.h.b16 %v4794
    %v4866 = vunpack.c.l.b16 %v4795
    %v4867 = vunpack.c.h.b16 %v4795
    %v4868 = vunpack.c.l.b16 %v4796
    %v4869 = vunpack.c.h.b16 %v4796
    %v4870 = vunpack.c.l.b16 %v4797
    %v4871 = vunpack.c.h.b16 %v4797
    %v4872 = vunpack.c.l.b16 %v4798
    %v4873 = vunpack.c.h.b16 %v4798
    %v4874 = vunpack.c.l.b16 %v4799
    %v4875 = vunpack.c.h.b16 %v4799
    %v4876 = vunpack.c.l.b16 %v4800
    %v4877 = vunpack.c.h.b16 %v4800
    %v4878 = vunpack.c.l.b16 %v4801
    %v4879 = vunpack.c.h.b16 %v4801
    %v4880 = vunpack.c.l.b16 %v4802
    %v4881 = vunpack.c.h.b16 %v4802
    %v4882 = vunpack.c.l.b16 %v4803
    %v4883 = vunpack.c.h.b16 %v4803
    %v4884 = vunpack.c.l.b16 %v4804
    %v4885 = vunpack.c.h.b16 %v4804
    %v4886 = vunpack.c.l.b16 %v4805
    %v4887 = vunpack.c.h.b16 %v4805
    %v4888 = vunpack.c.l.b16 %v4806
    %v4889 = vunpack.c.h.b16 %v4806
    %v4890 = vunpack.c.l.b16 %v4807
    %v4891 = vunpack.c.h.b16 %v4807
    %v4892 = vunpack.c.l.b16 %v4808
    %v4893 = vunpack.c.h.b16 %v4808
    %v4894 = vunpack.c.l.b16 %v4809
    %v4895 = vunpack.c.h.b16 %v4809
    %v4896 = vunpack.c.l.b16 %v4810
    %v4897 = vunpack.c.h.b16 %v4810
    %v4898 = vunpack.c.l.b16 %v4811
    %v4899 = vunpack.c.h.b16 %v4811
    %v4900 = vunpack.c.l.b16 %v4812
    %v4901 = vunpack.c.h.b16 %v4812
    %v4902 = vunpack.c.l.b16 %v4813
    %v4903 = vunpack.c.h.b16 %v4813
    %v4904 = vunpack.c.l.b16 %v4814
    %v4905 = vunpack.c.h.b16 %v4814
    %v4906 = vunpack.c.l.b16 %v4815
    %v4907 = vunpack.c.h.b16 %v4815
    %v4908 = vunpack.c.l.b16 %v4816
    %v4909 = vunpack.c.h.b16 %v4816
    %v4910 = vunpack.c.l.b16 %v4817
    %v4911 = vunpack.c.h.b16 %v4817
    %v4912 = vunpack.c.l.b16 %v4818
    %v4913 = vunpack.c.h.b16 %v4818
    %v4914 = vunpack.c.l.b16 %v4819
    %v4915 = vunpack.c.h.b16 %v4819
    %v4916 = vunpack.c.l.b16 %v4820
    %v4917 = vunpack.c.h.b16 %v4820
    %v4918 = vunpack.c.l.b16 %v4821
    %v4919 = vunpack.c.h.b16 %v4821
    %v4920 = vunpack.c.l.b16 %v4822
    %v4921 = vunpack.c.h.b16 %v4822
    %v4922 = vunpack.c.l.b16 %v4823
    %v4923 = vunpack.c.h.b16 %v4823
    %v4924 = vunpack.c.l.b16 %v4824
    %v4925 = vunpack.c.h.b16 %v4824
    %v4926 = vpack.c.b16 %v4866, %v4862
    %v4927 = vpack.c.b16 %v4867, %v4863
    %v4928 = vpack.c.b16 %v4868, %v4864
    %v4929 = vpack.c.b16 %v4869, %v4865
    %v4930 = vpack.c.b16 %v4874, %v4870
    %v4931 = vpack.c.b16 %v4875, %v4871
    %v4932 = vpack.c.b16 %v4876, %v4872
    %v4933 = vpack.c.b16 %v4877, %v4873
    %v4934 = vpack.c.b16 %v4882, %v4878
    %v4935 = vpack.c.b16 %v4883, %v4879
    %v4936 = vpack.c.b16 %v4884, %v4880
    %v4937 = vpack.c.b16 %v4885, %v4881
    %v4938 = vpack.c.b16 %v4890, %v4886
    %v4939 = vpack.c.b16 %v4891, %v4887
    %v4940 = vpack.c.b16 %v4892, %v4888
    %v4941 = vpack.c.b16 %v4893, %v4889
    %v4942 = vpack.c.b16 %v4898, %v4894
    %v4943 = vpack.c.b16 %v4899, %v4895
    %v4944 = vpack.c.b16 %v4900, %v4896
    %v4945 = vpack.c.b16 %v4901, %v4897
    %v4946 = vpack.c.b16 %v4906, %v4902
    %v4947 = vpack.c.b16 %v4907, %v4903
    %v4948 = vpack.c.b16 %v4908, %v4904
    %v4949 = vpack.c.b16 %v4909, %v4905
    %v4950 = vpack.c.b16 %v4914, %v4910
    %v4951 = vpack.c.b16 %v4915, %v4911
    %v4952 = vpack.c.b16 %v4916, %v4912
    %v4953 = vpack.c.b16 %v4917, %v4913
    %v4954 = vpack.c.b16 %v4922, %v4918
    %v4955 = vpack.c.b16 %v4923, %v4919
    %v4956 = vpack.c.b16 %v4924, %v4920
    %v4957 = vpack.c.b16 %v4925, %v4921
    %4990 = vmatpush.bf16.msra.mxu0 %v4954
    %4991 = vmatpush.bf16.msra.mxu0 %v4950
    %4992 = vmatpush.bf16.msra.mxu0 %v4946
    %4993 = vmatpush.bf16.msra.mxu0 %v4942
    %4994 = vmatpush.bf16.msra.mxu0 %v4938
    %4995 = vmatpush.bf16.msra.mxu0 %v4934
    %4996 = vmatpush.bf16.msra.mxu0 %v4930
    %4997 = vmatpush.bf16.msra.mxu0 %v4926
    %4998 = vmatmul.bf16.gmra.mxu0 %v4828
    %v4999 = vpop.f32.mrf.mxu0
    %v5000 = vadd.f32 0.0, %v4999
    %v5001 = vpop.f32.mrf.mxu0
    %5002 = vdwg.mxu0
    %5003 = vmatpush.bf16.msra.mxu0 %v4955
    %5004 = vmatpush.bf16.msra.mxu0 %v4951
    %5005 = vmatpush.bf16.msra.mxu0 %v4947
    %5006 = vmatpush.bf16.msra.mxu0 %v4943
    %5007 = vmatpush.bf16.msra.mxu0 %v4939
    %5008 = vmatpush.bf16.msra.mxu0 %v4935
    %5009 = vmatpush.bf16.msra.mxu0 %v4931
    %5010 = vmatpush.bf16.msra.mxu0 %v4927
    %5011 = vmatmul.bf16.gmra.mxu0 %v4828
    %v5012 = vpop.f32.mrf.mxu0
    %v5013 = vadd.f32 0.0, %v5012
    %v5014 = vpop.f32.mrf.mxu0
    %5015 = vdwg.mxu0
    %5016 = vmatpush.bf16.msra.mxu0 %v4956
    %5017 = vmatpush.bf16.msra.mxu0 %v4952
    %5018 = vmatpush.bf16.msra.mxu0 %v4948
    %5019 = vmatpush.bf16.msra.mxu0 %v4944
    %5020 = vmatpush.bf16.msra.mxu0 %v4940
    %5021 = vmatpush.bf16.msra.mxu0 %v4936
    %5022 = vmatpush.bf16.msra.mxu0 %v4932
    %5023 = vmatpush.bf16.msra.mxu0 %v4928
    %5024 = vmatmul.bf16.gmra.mxu0 %v4828
    %v5025 = vpop.f32.mrf.mxu0
    %v5026 = vadd.f32 0.0, %v5025
    %v5027 = vpop.f32.mrf.mxu0
    %5028 = vdwg.mxu0
    %5029 = vmatpush.bf16.msra.mxu0 %v4957
    %5030 = vmatpush.bf16.msra.mxu0 %v4953
    %5031 = vmatpush.bf16.msra.mxu0 %v4949
    %5032 = vmatpush.bf16.msra.mxu0 %v4945
    %5033 = vmatpush.bf16.msra.mxu0 %v4941
    %5034 = vmatpush.bf16.msra.mxu0 %v4937
    %5035 = vmatpush.bf16.msra.mxu0 %v4933
    %5036 = vmatpush.bf16.msra.mxu0 %v4929
    %5037 = vmatmul.bf16.gmra.mxu0 %v4828
    %v5038 = vpop.f32.mrf.mxu0
    %v5039 = vadd.f32 0.0, %v5038
    %v5040 = vpop.f32.mrf.mxu0
    %5041 = vdwg.mxu0
    %v5046 = vrot.slane %v5000, 2
    %v5047 = vrot.slane %v5013, 2
    %v5048 = vrot.slane %v5026, 2
    %v5049 = vrot.slane %v5039, 2
    %v5054 = vadd.f32 %v4789, %v5046
    %v5055 = vadd.f32 %v4790, %v5047
    %v5056 = vadd.f32 %v4791, %v5048
    %v5057 = vadd.f32 %v4792, %v5049
    %v5058 = vxor.u32 %v5054, 2147483648
    %v5059 = vmul.f32 %v5058, 1.442695
    %v5060 = vpow.pop %v5059
    %v5061 = vadd.f32 %v5060, 1.0
    %v5062 = vrcp.pop %v5061
    %v5063 = vmul.f32 %v5061, %v5062
    %v5064 = vsub.f32 1.0, %v5063
    %v5065 = vmul.f32 %v5062, %v5064
    %v5066 = vadd.f32 %v5062, %v5065
    %vm5067 = vweird.f32 %v5061
    %vm5068 = vweird.f32 %v5062
    %vm5069 = vmor %vm5067, %vm5068
    %v5070 = vsel %vm5069, %v5062, %v5066
    %v5071 = vand.u32 2147483647, %v5061
    %vm5072 = vcmp.eq.f32.partialorder %v5071, 8.507059e+37
    %v5073 = vand.u32 %v5061, 2147483648
    %v5074 = vor.u32 1.1754944e-38, %v5073
    %v5075 = vsel %vm5072, %v5074, %v5070
    %v5076 = vmul.f32 1.0, %v5075
    %v5077 = vxor.u32 %v5055, 2147483648
    %v5078 = vmul.f32 %v5077, 1.442695
    %v5079 = vpow.pop %v5078
    %v5080 = vadd.f32 %v5079, 1.0
    %v5081 = vrcp.pop %v5080
    %v5082 = vmul.f32 %v5080, %v5081
    %v5083 = vsub.f32 1.0, %v5082
    %v5084 = vmul.f32 %v5081, %v5083
    %v5085 = vadd.f32 %v5081, %v5084
    %vm5086 = vweird.f32 %v5080
    %vm5087 = vweird.f32 %v5081
    %vm5088 = vmor %vm5086, %vm5087
    %v5089 = vsel %vm5088, %v5081, %v5085
    %v5090 = vand.u32 2147483647, %v5080
    %vm5091 = vcmp.eq.f32.partialorder %v5090, 8.507059e+37
    %v5092 = vand.u32 %v5080, 2147483648
    %v5093 = vor.u32 1.1754944e-38, %v5092
    %v5094 = vsel %vm5091, %v5093, %v5089
    %v5095 = vmul.f32 1.0, %v5094
    %v5096 = vtanh.pop %v5056
    %v5097 = vxor.u32 %v5057, 2147483648
    %v5098 = vmul.f32 %v5097, 1.442695
    %v5099 = vpow.pop %v5098
    %v5100 = vadd.f32 %v5099, 1.0
    %v5101 = vrcp.pop %v5100
    %v5102 = vmul.f32 %v5100, %v5101
    %v5103 = vsub.f32 1.0, %v5102
    %v5104 = vmul.f32 %v5101, %v5103
    %v5105 = vadd.f32 %v5101, %v5104
    %vm5106 = vweird.f32 %v5100
    %vm5107 = vweird.f32 %v5101
    %vm5108 = vmor %vm5106, %vm5107
    %v5109 = vsel %vm5108, %v5101, %v5105
    %v5110 = vand.u32 2147483647, %v5100
    %vm5111 = vcmp.eq.f32.partialorder %v5110, 8.507059e+37
    %v5112 = vand.u32 %v5100, 2147483648
    %v5113 = vor.u32 1.1754944e-38, %v5112
    %v5114 = vsel %vm5111, %v5113, %v5109
    %v5115 = vmul.f32 1.0, %v5114
    %v5117 = vrot.slane %v4447, 6
    %v5119 = vmul.f32 %v5095, %v5117
    %v5120 = vmul.f32 %v5076, %v5096
    %v5121 = vadd.f32 %v5119, %v5120
    %v5122 = vtanh.pop %v5121
    %v5123 = vmul.f32 %v5115, %v5122
    %v5124 = vld [vmem:[#allocation7] sm:$0x3]
    %v5125 = vld [vmem:[#allocation7 + $0x8] sm:$0x3]
    %v5126 = vld [vmem:[#allocation7 + $0x10] sm:$0x3]
    %v5127 = vld [vmem:[#allocation7 + $0x18] sm:$0x3]
    %v5128 = vld [vmem:[%s452] sm:$0xff]
    %v5129 = vld [vmem:[%s452 + $0x8] sm:$0xff]
    %v5130 = vld [vmem:[%s452 + $0x10] sm:$0xff]
    %v5131 = vld [vmem:[%s452 + $0x18] sm:$0xff]
    %v5132 = vld [vmem:[%s452 + $0x20] sm:$0xff]
    %v5133 = vld [vmem:[%s452 + $0x28] sm:$0xff]
    %v5134 = vld [vmem:[%s452 + $0x30] sm:$0xff]
    %v5135 = vld [vmem:[%s452 + $0x38] sm:$0xff]
    %v5136 = vld [vmem:[%s452 + $0x40] sm:$0xff]
    %v5137 = vld [vmem:[%s452 + $0x48] sm:$0xff]
    %v5138 = vld [vmem:[%s452 + $0x50] sm:$0xff]
    %v5139 = vld [vmem:[%s452 + $0x58] sm:$0xff]
    %v5140 = vld [vmem:[%s452 + $0x60] sm:$0xff]
    %v5141 = vld [vmem:[%s452 + $0x68] sm:$0xff]
    %v5142 = vld [vmem:[%s452 + $0x70] sm:$0xff]
    %v5143 = vld [vmem:[%s452 + $0x78] sm:$0xff]
    %v5144 = vld [vmem:[%s452 + $0x80] sm:$0xff]
    %v5145 = vld [vmem:[%s452 + $0x88] sm:$0xff]
    %v5146 = vld [vmem:[%s452 + $0x90] sm:$0xff]
    %v5147 = vld [vmem:[%s452 + $0x98] sm:$0xff]
    %v5148 = vld [vmem:[%s452 + $0xa0] sm:$0xff]
    %v5149 = vld [vmem:[%s452 + $0xa8] sm:$0xff]
    %v5150 = vld [vmem:[%s452 + $0xb0] sm:$0xff]
    %v5151 = vld [vmem:[%s452 + $0xb8] sm:$0xff]
    %v5152 = vld [vmem:[%s452 + $0xc0] sm:$0xff]
    %v5153 = vld [vmem:[%s452 + $0xc8] sm:$0xff]
    %v5154 = vld [vmem:[%s452 + $0xd0] sm:$0xff]
    %v5155 = vld [vmem:[%s452 + $0xd8] sm:$0xff]
    %v5156 = vld [vmem:[%s452 + $0xe0] sm:$0xff]
    %v5157 = vld [vmem:[%s452 + $0xe8] sm:$0xff]
    %v5158 = vld [vmem:[%s452 + $0xf0] sm:$0xff]
    %v5159 = vld [vmem:[%s452 + $0xf8] sm:$0xff]
    %v5161 = vunpack.c.l.b16 %v4787
    %v5162 = vpack.c.b16 %v5161, %v5161
    %v5163 = vrot.slane %v5162, 1
    %v5197 = vunpack.c.l.b16 %v5128
    %v5198 = vunpack.c.h.b16 %v5128
    %v5199 = vunpack.c.l.b16 %v5129
    %v5200 = vunpack.c.h.b16 %v5129
    %v5201 = vunpack.c.l.b16 %v5130
    %v5202 = vunpack.c.h.b16 %v5130
    %v5203 = vunpack.c.l.b16 %v5131
    %v5204 = vunpack.c.h.b16 %v5131
    %v5205 = vunpack.c.l.b16 %v5132
    %v5206 = vunpack.c.h.b16 %v5132
    %v5207 = vunpack.c.l.b16 %v5133
    %v5208 = vunpack.c.h.b16 %v5133
    %v5209 = vunpack.c.l.b16 %v5134
    %v5210 = vunpack.c.h.b16 %v5134
    %v5211 = vunpack.c.l.b16 %v5135
    %v5212 = vunpack.c.h.b16 %v5135
    %v5213 = vunpack.c.l.b16 %v5136
    %v5214 = vunpack.c.h.b16 %v5136
    %v5215 = vunpack.c.l.b16 %v5137
    %v5216 = vunpack.c.h.b16 %v5137
    %v5217 = vunpack.c.l.b16 %v5138
    %v5218 = vunpack.c.h.b16 %v5138
    %v5219 = vunpack.c.l.b16 %v5139
    %v5220 = vunpack.c.h.b16 %v5139
    %v5221 = vunpack.c.l.b16 %v5140
    %v5222 = vunpack.c.h.b16 %v5140
    %v5223 = vunpack.c.l.b16 %v5141
    %v5224 = vunpack.c.h.b16 %v5141
    %v5225 = vunpack.c.l.b16 %v5142
    %v5226 = vunpack.c.h.b16 %v5142
    %v5227 = vunpack.c.l.b16 %v5143
    %v5228 = vunpack.c.h.b16 %v5143
    %v5229 = vunpack.c.l.b16 %v5144
    %v5230 = vunpack.c.h.b16 %v5144
    %v5231 = vunpack.c.l.b16 %v5145
    %v5232 = vunpack.c.h.b16 %v5145
    %v5233 = vunpack.c.l.b16 %v5146
    %v5234 = vunpack.c.h.b16 %v5146
    %v5235 = vunpack.c.l.b16 %v5147
    %v5236 = vunpack.c.h.b16 %v5147
    %v5237 = vunpack.c.l.b16 %v5148
    %v5238 = vunpack.c.h.b16 %v5148
    %v5239 = vunpack.c.l.b16 %v5149
    %v5240 = vunpack.c.h.b16 %v5149
    %v5241 = vunpack.c.l.b16 %v5150
    %v5242 = vunpack.c.h.b16 %v5150
    %v5243 = vunpack.c.l.b16 %v5151
    %v5244 = vunpack.c.h.b16 %v5151
    %v5245 = vunpack.c.l.b16 %v5152
    %v5246 = vunpack.c.h.b16 %v5152
    %v5247 = vunpack.c.l.b16 %v5153
    %v5248 = vunpack.c.h.b16 %v5153
    %v5249 = vunpack.c.l.b16 %v5154
    %v5250 = vunpack.c.h.b16 %v5154
    %v5251 = vunpack.c.l.b16 %v5155
    %v5252 = vunpack.c.h.b16 %v5155
    %v5253 = vunpack.c.l.b16 %v5156
    %v5254 = vunpack.c.h.b16 %v5156
    %v5255 = vunpack.c.l.b16 %v5157
    %v5256 = vunpack.c.h.b16 %v5157
    %v5257 = vunpack.c.l.b16 %v5158
    %v5258 = vunpack.c.h.b16 %v5158
    %v5259 = vunpack.c.l.b16 %v5159
    %v5260 = vunpack.c.h.b16 %v5159
    %v5261 = vpack.c.b16 %v5201, %v5197
    %v5262 = vpack.c.b16 %v5202, %v5198
    %v5263 = vpack.c.b16 %v5203, %v5199
    %v5264 = vpack.c.b16 %v5204, %v5200
    %v5265 = vpack.c.b16 %v5209, %v5205
    %v5266 = vpack.c.b16 %v5210, %v5206
    %v5267 = vpack.c.b16 %v5211, %v5207
    %v5268 = vpack.c.b16 %v5212, %v5208
    %v5269 = vpack.c.b16 %v5217, %v5213
    %v5270 = vpack.c.b16 %v5218, %v5214
    %v5271 = vpack.c.b16 %v5219, %v5215
    %v5272 = vpack.c.b16 %v5220, %v5216
    %v5273 = vpack.c.b16 %v5225, %v5221
    %v5274 = vpack.c.b16 %v5226, %v5222
    %v5275 = vpack.c.b16 %v5227, %v5223
    %v5276 = vpack.c.b16 %v5228, %v5224
    %v5277 = vpack.c.b16 %v5233, %v5229
    %v5278 = vpack.c.b16 %v5234, %v5230
    %v5279 = vpack.c.b16 %v5235, %v5231
    %v5280 = vpack.c.b16 %v5236, %v5232
    %v5281 = vpack.c.b16 %v5241, %v5237
    %v5282 = vpack.c.b16 %v5242, %v5238
    %v5283 = vpack.c.b16 %v5243, %v5239
    %v5284 = vpack.c.b16 %v5244, %v5240
    %v5285 = vpack.c.b16 %v5249, %v5245
    %v5286 = vpack.c.b16 %v5250, %v5246
    %v5287 = vpack.c.b16 %v5251, %v5247
    %v5288 = vpack.c.b16 %v5252, %v5248
    %v5289 = vpack.c.b16 %v5257, %v5253
    %v5290 = vpack.c.b16 %v5258, %v5254
    %v5291 = vpack.c.b16 %v5259, %v5255
    %v5292 = vpack.c.b16 %v5260, %v5256
    %5325 = vmatpush.bf16.msra.mxu0 %v5289
    %5326 = vmatpush.bf16.msra.mxu0 %v5285
    %5327 = vmatpush.bf16.msra.mxu0 %v5281
    %5328 = vmatpush.bf16.msra.mxu0 %v5277
    %5329 = vmatpush.bf16.msra.mxu0 %v5273
    %5330 = vmatpush.bf16.msra.mxu0 %v5269
    %5331 = vmatpush.bf16.msra.mxu0 %v5265
    %5332 = vmatpush.bf16.msra.mxu0 %v5261
    %5333 = vmatmul.bf16.gmra.mxu0 %v5163
    %v5334 = vpop.f32.mrf.mxu0
    %v5335 = vadd.f32 0.0, %v5334
    %v5336 = vpop.f32.mrf.mxu0
    %5337 = vdwg.mxu0
    %5338 = vmatpush.bf16.msra.mxu0 %v5290
    %5339 = vmatpush.bf16.msra.mxu0 %v5286
    %5340 = vmatpush.bf16.msra.mxu0 %v5282
    %5341 = vmatpush.bf16.msra.mxu0 %v5278
    %5342 = vmatpush.bf16.msra.mxu0 %v5274
    %5343 = vmatpush.bf16.msra.mxu0 %v5270
    %5344 = vmatpush.bf16.msra.mxu0 %v5266
    %5345 = vmatpush.bf16.msra.mxu0 %v5262
    %5346 = vmatmul.bf16.gmra.mxu0 %v5163
    %v5347 = vpop.f32.mrf.mxu0
    %v5348 = vadd.f32 0.0, %v5347
    %v5349 = vpop.f32.mrf.mxu0
    %5350 = vdwg.mxu0
    %5351 = vmatpush.bf16.msra.mxu0 %v5291
    %5352 = vmatpush.bf16.msra.mxu0 %v5287
    %5353 = vmatpush.bf16.msra.mxu0 %v5283
    %5354 = vmatpush.bf16.msra.mxu0 %v5279
    %5355 = vmatpush.bf16.msra.mxu0 %v5275
    %5356 = vmatpush.bf16.msra.mxu0 %v5271
    %5357 = vmatpush.bf16.msra.mxu0 %v5267
    %5358 = vmatpush.bf16.msra.mxu0 %v5263
    %5359 = vmatmul.bf16.gmra.mxu0 %v5163
    %v5360 = vpop.f32.mrf.mxu0
    %v5361 = vadd.f32 0.0, %v5360
    %v5362 = vpop.f32.mrf.mxu0
    %5363 = vdwg.mxu0
    %5364 = vmatpush.bf16.msra.mxu0 %v5292
    %5365 = vmatpush.bf16.msra.mxu0 %v5288
    %5366 = vmatpush.bf16.msra.mxu0 %v5284
    %5367 = vmatpush.bf16.msra.mxu0 %v5280
    %5368 = vmatpush.bf16.msra.mxu0 %v5276
    %5369 = vmatpush.bf16.msra.mxu0 %v5272
    %5370 = vmatpush.bf16.msra.mxu0 %v5268
    %5371 = vmatpush.bf16.msra.mxu0 %v5264
    %5372 = vmatmul.bf16.gmra.mxu0 %v5163
    %v5373 = vpop.f32.mrf.mxu0
    %v5374 = vadd.f32 0.0, %v5373
    %v5375 = vpop.f32.mrf.mxu0
    %5376 = vdwg.mxu0
    %v5377 = vadd.f32 %v5124, %v5335
    %v5378 = vadd.f32 %v5125, %v5348
    %v5379 = vadd.f32 %v5126, %v5361
    %v5380 = vadd.f32 %v5127, %v5374
    %v5381 = vxor.u32 %v5377, 2147483648
    %v5382 = vmul.f32 %v5381, 1.442695
    %v5383 = vpow.pop %v5382
    %v5384 = vadd.f32 %v5383, 1.0
    %v5385 = vrcp.pop %v5384
    %v5386 = vmul.f32 %v5384, %v5385
    %v5387 = vsub.f32 1.0, %v5386
    %v5388 = vmul.f32 %v5385, %v5387
    %v5389 = vadd.f32 %v5385, %v5388
    %vm5390 = vweird.f32 %v5384
    %vm5391 = vweird.f32 %v5385
    %vm5392 = vmor %vm5390, %vm5391
    %v5393 = vsel %vm5392, %v5385, %v5389
    %v5394 = vand.u32 2147483647, %v5384
    %vm5395 = vcmp.eq.f32.partialorder %v5394, 8.507059e+37
    %v5396 = vand.u32 %v5384, 2147483648
    %v5397 = vor.u32 1.1754944e-38, %v5396
    %v5398 = vsel %vm5395, %v5397, %v5393
    %v5399 = vmul.f32 1.0, %v5398
    %v5400 = vxor.u32 %v5378, 2147483648
    %v5401 = vmul.f32 %v5400, 1.442695
    %v5402 = vpow.pop %v5401
    %v5403 = vadd.f32 %v5402, 1.0
    %v5404 = vrcp.pop %v5403
    %v5405 = vmul.f32 %v5403, %v5404
    %v5406 = vsub.f32 1.0, %v5405
    %v5407 = vmul.f32 %v5404, %v5406
    %v5408 = vadd.f32 %v5404, %v5407
    %vm5409 = vweird.f32 %v5403
    %vm5410 = vweird.f32 %v5404
    %vm5411 = vmor %vm5409, %vm5410
    %v5412 = vsel %vm5411, %v5404, %v5408
    %v5413 = vand.u32 2147483647, %v5403
    %vm5414 = vcmp.eq.f32.partialorder %v5413, 8.507059e+37
    %v5415 = vand.u32 %v5403, 2147483648
    %v5416 = vor.u32 1.1754944e-38, %v5415
    %v5417 = vsel %vm5414, %v5416, %v5412
    %v5418 = vmul.f32 1.0, %v5417
    %v5419 = vtanh.pop %v5379
    %v5420 = vxor.u32 %v5380, 2147483648
    %v5421 = vmul.f32 %v5420, 1.442695
    %v5422 = vpow.pop %v5421
    %v5423 = vadd.f32 %v5422, 1.0
    %v5424 = vrcp.pop %v5423
    %v5425 = vmul.f32 %v5423, %v5424
    %v5426 = vsub.f32 1.0, %v5425
    %v5427 = vmul.f32 %v5424, %v5426
    %v5428 = vadd.f32 %v5424, %v5427
    %vm5429 = vweird.f32 %v5423
    %vm5430 = vweird.f32 %v5424
    %vm5431 = vmor %vm5429, %vm5430
    %v5432 = vsel %vm5431, %v5424, %v5428
    %v5433 = vand.u32 2147483647, %v5423
    %vm5434 = vcmp.eq.f32.partialorder %v5433, 8.507059e+37
    %v5435 = vand.u32 %v5423, 2147483648
    %v5436 = vor.u32 1.1754944e-38, %v5435
    %v5437 = vsel %vm5434, %v5436, %v5432
    %v5438 = vmul.f32 1.0, %v5437
    %v5440 = vrot.slane %v4782, 2
    %v5442 = vmul.f32 %v5418, %v5440
    %v5443 = vmul.f32 %v5399, %v5419
    %v5444 = vadd.f32 %v5442, %v5443
    %v5445 = vtanh.pop %v5444
    %v5446 = vmul.f32 %v5438, %v5445
    %v5447 = vpack.c.bf16 %v5123, %v5123
    %5448 = vst [vmem:[%s3 + $0x4] sm:$0x8] %v5447
    %v5449 = vpack.c.bf16 %v5446, %v5446
    %5450 = vst [vmem:[%s117] sm:$0x1] %v5449
    %5451 = vst [vmem:[#allocation2 - $0x6] sm:$0xc0] %v5123
    %5452 = vst [vmem:[#allocation3 - $0x6] sm:$0xc0] %v5121
    %5453 = vst [vmem:[#allocation4] sm:$0x3] %v5446
    %5454 = vst [vmem:[#allocation5] sm:$0x3] %v5444
    %s5455 = ssub.s32 0, 0
    %s5456 = smul.u32 2, %s5455
    %p5457 = scmp.lt.s32.totalorder %s5456, 1
    %s5458 = scalar_select %p5457, %s5456, 1
    %s5459 = smul.addr %s5458, 4
    %s5460 = scalar_lea.vmem %s4, %s5459
    // Predicated region
    $region68: #{bilstm_forward.6} parent=1 // pred_check
      _
    $region69: #{bilstm_forward.6} parent=1 // pred_check_branch
      %5462 = sbr.rel (0) target = $region71
    $region70: #{bilstm_forward.6} parent=1 // pred_region
      _
    $region71: #{bilstm_forward.6} parent=1 // pred_fallthru
      _
    // Predicated region
    $region72: #{bilstm_forward.6} parent=1 // pred_check
      _
    $region73: #{bilstm_forward.6} parent=1 // pred_check_branch
      %5464 = sbr.rel (0) target = $region75
    $region74: #{bilstm_forward.6} parent=1 // pred_region
      %s5465 = ssub.s32 0, 0
      %s5466 = smul.u32 2, %s5465
    $region75: #{bilstm_forward.6} parent=1 // pred_fallthru
      _
    // Predicated region
    $region76: #{bilstm_forward.6} parent=1 // pred_check
      _
    $region77: #{bilstm_forward.6} parent=1 // pred_check_branch
      %5468 = sbr.rel (0) target = $region79
    $region78: #{bilstm_forward.6} parent=1 // pred_region
      _
    $region79: #{bilstm_forward.6} parent=1 // pred_fallthru
      _
    // Predicated region
    $region80: #{bilstm_forward.6} parent=1 // pred_check
      _
    $region81: #{bilstm_forward.6} parent=1 // pred_check_branch
      %5470 = sbr.rel (0) target = $region83
    $region82: #{bilstm_forward.6} parent=1 // pred_region
      %s5471 = ssub.s32 0, 0
      %s5472 = smul.u32 2, %s5471
      %p5473 = scmp.lt.s32.totalorder %s5472, 1
      %s5474 = scalar_select %p5473, %s5472, 1
      %s5475 = smul.addr %s5474, 4
      %s5476 = scalar_lea.vmem %s4, %s5475
    $region83: #{bilstm_forward.6} parent=1 // pred_fallthru
      _
    %5477 = vsyncpa [#allocation9], 1

</llo_original>
